<compile_context>
chip_gen: v7x
topology: tpu7x:2x2x1
jax: 0.10.0
libtpu: 0.0.40
codegen_flags: <defaults>
</compile_context>

<pallas_src>
import functools
import math

import jax
import jax.numpy as jnp
from jax.experimental import pallas as pl
from jax.experimental.pallas import tpu as pltpu

NUM_HEADS = 8


def fused_kernel(x_ref, reg_ref,
                 wih0_ref, whh0_ref, b0_ref,
                 w1_ref, b1_ref,
                 wattn_ref, battn_ref, hmask_ref, hmaskt_ref,
                 rw1_ref, rb1_ref, rw2_ref, rb2_ref,
                 fw1a_ref, fw1b_ref, fb1_ref, fw2_ref, fb2_ref,
                 ow_ref, ob_ref,
                 out_ref,
                 gx0_scratch, lo1_scratch,
                 *, T, Bp, H):
    dh = H // NUM_HEADS
    scale = 1.0 / math.sqrt(dh)

    def lstm_cell(gates, c):
        # PyTorch gate order: i, f, g, o (bias b_ih + b_hh already folded in).
        i_g = jax.nn.sigmoid(gates[:, 0 * H:1 * H])
        f_g = jax.nn.sigmoid(gates[:, 1 * H:2 * H])
        g_g = jnp.tanh(gates[:, 2 * H:3 * H])
        o_g = jax.nn.sigmoid(gates[:, 3 * H:4 * H])
        c_new = f_g * c + i_g * g_g
        h_new = o_g * jnp.tanh(c_new)
        return h_new, c_new

    # Hoisted layer-0 input projection for the whole sequence -> VMEM scratch.
    gx0_scratch[...] = jnp.dot(x_ref[...].astype(jnp.bfloat16), wih0_ref[...],
                               preferred_element_type=jnp.float32) + b0_ref[...]

    # ----------------------- wavefronted stacked LSTM ----------------------
    h0 = jnp.zeros((Bp, H), jnp.float32)
    c0 = jnp.zeros((Bp, H), jnp.float32)
    c1 = jnp.zeros((Bp, H), jnp.float32)
    h0_bf = jnp.zeros((Bp, H), jnp.bfloat16)
    h1_bf = jnp.zeros((Bp, H), jnp.bfloat16)

    for wave in range(T + 1):           # static unroll (T is small and fixed)
        h0_prev_bf = h0_bf              # layer-0 output of the previous wave
        if wave < T:
            # Layer-0 step `wave`: depends only on previous-wave h0.
            gates0 = gx0_scratch[wave * Bp:(wave + 1) * Bp, :] + jnp.dot(
                h0_bf, whh0_ref[...], preferred_element_type=jnp.float32)
            h0, c0 = lstm_cell(gates0, c0)
            h0_bf = h0.astype(jnp.bfloat16)
        if wave >= 1:
            # Layer-1 step `wave-1`: fused K=2H matmul of [x1_t | h1_prev]
            # against the stacked [wih1; whh1] slab.  Independent of the
            # layer-0 matmul above (both read only previous-wave state).
            x1 = jnp.concatenate([h0_prev_bf, h1_bf], axis=1)        # (Bp, 2H)
            gates1 = jnp.dot(x1, w1_ref[...],
                             preferred_element_type=jnp.float32) + b1_ref[...]
            h1, c1 = lstm_cell(gates1, c1)
            h1_bf = h1.astype(jnp.bfloat16)
            lo1_scratch[(wave - 1) * Bp:wave * Bp, :] = h1_bf

    # -------------------- multi-head self-attention ------------------------
    # Only the last query position matters (model keeps attended_out[:, -1, :]),
    # and lstm_out[:, -1, :] == final layer-1 hidden state.
    lo1_bf = lo1_scratch[...]                                         # (T*Bp, H)
    wq = wattn_ref[:, 0 * H:1 * H]
    wk = wattn_ref[:, 1 * H:2 * H]
    wv = wattn_ref[:, 2 * H:3 * H]
    wo = wattn_ref[:, 3 * H:4 * H]
    bq = battn_ref[:, 0 * H:1 * H]
    bk = battn_ref[:, 1 * H:2 * H]
    bv = battn_ref[:, 2 * H:3 * H]
    bo = battn_ref[:, 3 * H:4 * H]

    q = jnp.dot(h1_bf, wq, preferred_element_type=jnp.float32) + bq  # (Bp, H)
    k = jnp.dot(lo1_bf, wk, preferred_element_type=jnp.float32) + bk  # (T*Bp, H)
    v = jnp.dot(lo1_bf, wv, preferred_element_type=jnp.float32) + bv  # (T*Bp, H)

    # Broadcast q over time (no materializing concat), per-head dot products
    # via a single bf16 0/1 head-membership matmul.
    kq = (k.reshape(T, Bp, H) * q[None, :, :]).reshape(T * Bp, H)
    s = jnp.dot(kq.astype(jnp.bfloat16), hmask_ref[...],
                preferred_element_type=jnp.float32) * scale          # (T*Bp, NH)
    s3 = s.reshape(T, Bp, NUM_HEADS)
    s3 = s3 - jnp.max(s3, axis=0, keepdims=True)
    p3 = jnp.exp(s3)
    a3 = p3 / jnp.sum(p3, axis=0, keepdims=True)                     # softmax over time
    a = a3.reshape(T * Bp, NUM_HEADS)
    a_full = jnp.dot(a.astype(jnp.bfloat16), hmaskt_ref[...],
                     preferred_element_type=jnp.float32)             # (T*Bp, H)
    ctx = jnp.sum((a_full * v).reshape(T, Bp, H), axis=0)            # (Bp, H)
    global_feat = jnp.dot(ctx.astype(jnp.bfloat16), wo,
                          preferred_element_type=jnp.float32) + bo   # (Bp, H)

    # ------------------------------ regional MLP ---------------------------
    reg = reg_ref[...].astype(jnp.bfloat16)
    r1 = jnp.maximum(jnp.dot(reg, rw1_ref[...],
                             preferred_element_type=jnp.float32) + rb1_ref[...], 0.0)
    r2 = jnp.maximum(jnp.dot(r1.astype(jnp.bfloat16), rw2_ref[...],
                             preferred_element_type=jnp.float32) + rb2_ref[...], 0.0)

    # --------------------------- fusion + output head ----------------------
    # Split-weight form of Linear(H+32, 128): avoids the K=160 lane concat.
    f1 = jnp.maximum(
        jnp.dot(global_feat.astype(jnp.bfloat16), fw1a_ref[...],
                preferred_element_type=jnp.float32)
        + jnp.dot(r2.astype(jnp.bfloat16), fw1b_ref[...],
                  preferred_element_type=jnp.float32)
        + fb1_ref[...], 0.0)
    f2 = jnp.maximum(jnp.dot(f1.astype(jnp.bfloat16), fw2_ref[...],
                             preferred_element_type=jnp.float32) + fb2_ref[...], 0.0)
    logits = jnp.dot(f2.astype(jnp.bfloat16), ow_ref[...],
                     preferred_element_type=jnp.float32) + ob_ref[...]
    out_ref[...] = jax.nn.sigmoid(logits)


def lstm_climate_predictor(global_sequence, regional_features, params):
    """global_sequence: (B, T, Dg) batch-first; regional_features: (B, Dr)."""
    B, T, Dg = global_sequence.shape
    H = params["whh0"].shape[0]
    out_dim = params["ob"].shape[1]
    Bp = max(16, ((B + 15) // 16) * 16)   # pad batch to the bf16 (16,128) tile

    x = jnp.transpose(global_sequence.astype(jnp.float32), (1, 0, 2))   # (T, B, Dg)
    x = jnp.pad(x, ((0, 0), (0, Bp - B), (0, 0)))
    x_flat = x.reshape(T * Bp, Dg)                                      # time-major rows
    reg = jnp.pad(regional_features.astype(jnp.float32), ((0, Bp - B), (0, 0)))

    args = (
        x_flat, reg,
        params["wih0"], params["whh0"], params["b0"],
        params["w1"], params["b1"],
        params["wattn"], params["battn"], params["hmask"], params["hmask_t"],
        params["rw1"], params["rb1"], params["rw2"], params["rb2"],
        params["fw1a"], params["fw1b"], params["fb1"], params["fw2"], params["fb2"],
        params["ow"], params["ob"],
    )
    vmem = pl.BlockSpec(memory_space=pltpu.MemorySpace.VMEM)
    out = pl.pallas_call(
        functools.partial(fused_kernel, T=T, Bp=Bp, H=H),
        out_shape=jax.ShapeDtypeStruct((Bp, out_dim), jnp.float32),
        in_specs=[vmem] * len(args),
        out_specs=vmem,
        scratch_shapes=[
            pltpu.VMEM((T * Bp, 4 * H), jnp.float32),   # hoisted layer-0 gate proj
            pltpu.VMEM((T * Bp, H), jnp.bfloat16),      # layer-1 hidden trajectory
        ],
        cost_estimate=pl.CostEstimate(flops=60_000_000,
                                      transcendentals=200_000,
                                      bytes_accessed=800_000),
    )(*args)
    return out[:B]


# ---------------------------------------------------------------------------
# Parameter construction (deterministic, PyTorch-like uniform init).
# Weights are pre-transposed to (in, out), packed into slabs and pre-cast to
# bf16 (biases stay f32).  Layer-1 LSTM weights are stacked [wih1; whh1] for
# the fused K=2H recurrence matmul; fusion fw1 is split into (H,128)+(32,128).
# ---------------------------------------------------------------------------
def make_params(key, global_dim=10, regional_dim=10, hidden=128, num_layers=2,
                output_dim=10):
    assert num_layers == 2, "kernel is specialized for the module default (2 layers)"

    def uni(k, shape, scale):
        return jax.random.uniform(k, shape, jnp.float32, -scale, scale)

    keys = iter(jax.random.split(key, 64))
    p = {}

    # LSTM (weights transposed to (in, 4H); b_ih + b_hh combined).
    s = 1.0 / math.sqrt(hidden)
    w_ih0 = uni(next(keys), (4 * hidden, global_dim), s)
    w_hh0 = uni(next(keys), (4 * hidden, hidden), s)
    b_ih0 = uni(next(keys), (4 * hidden,), s)
    b_hh0 = uni(next(keys), (4 * hidden,), s)
    p["wih0"] = w_ih0.T.astype(jnp.bfloat16)                       # (Dg, 4H)
    p["whh0"] = w_hh0.T.astype(jnp.bfloat16)                       # (H, 4H)
    p["b0"] = (b_ih0 + b_hh0).reshape(1, 4 * hidden)               # f32

    w_ih1 = uni(next(keys), (4 * hidden, hidden), s)
    w_hh1 = uni(next(keys), (4 * hidden, hidden), s)
    b_ih1 = uni(next(keys), (4 * hidden,), s)
    b_hh1 = uni(next(keys), (4 * hidden,), s)
    p["w1"] = jnp.concatenate([w_ih1.T, w_hh1.T], axis=0).astype(jnp.bfloat16)  # (2H,4H)
    p["b1"] = (b_ih1 + b_hh1).reshape(1, 4 * hidden)               # f32

    # MultiheadAttention, packed as [Wq|Wk|Wv|Wo] and [bq|bk|bv|bo].
    sh = 1.0 / math.sqrt(hidden)
    in_w = uni(next(keys), (3 * hidden, hidden), sh)
    in_b = uni(next(keys), (3 * hidden,), sh)
    out_w = uni(next(keys), (hidden, hidden), sh)
    out_b = uni(next(keys), (hidden,), sh)
    p["wattn"] = jnp.concatenate(
        [in_w[0:hidden].T, in_w[hidden:2 * hidden].T,
         in_w[2 * hidden:3 * hidden].T, out_w.T], axis=1).astype(jnp.bfloat16)  # (H, 4H)
    p["battn"] = jnp.concatenate(
        [in_b[0:hidden], in_b[hidden:2 * hidden],
         in_b[2 * hidden:3 * hidden], out_b]).reshape(1, 4 * hidden)            # f32

    # 0/1 head-membership masks, precomputed host-side in bf16.
    dh = hidden // NUM_HEADS
    e = jnp.arange(hidden)
    hsel = (e[:, None] // dh) == jnp.arange(NUM_HEADS)[None, :]
    p["hmask"] = hsel.astype(jnp.bfloat16)                         # (H, NH)
    p["hmask_t"] = hsel.T.astype(jnp.bfloat16)                     # (NH, H)

    def linear(kw, kb, din, dout):
        sc = 1.0 / math.sqrt(din)
        return (uni(kw, (dout, din), sc).T.astype(jnp.bfloat16),
                uni(kb, (dout,), sc).reshape(1, dout))

    p["rw1"], p["rb1"] = linear(next(keys), next(keys), regional_dim, 64)
    p["rw2"], p["rb2"] = linear(next(keys), next(keys), 64, 32)
    fw1, p["fb1"] = linear(next(keys), next(keys), hidden + 32, 128)
    p["fw1a"] = fw1[:hidden]                                       # (H, 128)
    p["fw1b"] = fw1[hidden:]                                       # (32, 128)
    p["fw2"], p["fb2"] = linear(next(keys), next(keys), 128, 64)
    p["ow"], p["ob"] = linear(next(keys), next(keys), 64, output_dim)
    return p


if __name__ == "__main__":
    B, T = 2, 8
    GLOBAL_DIM, REGIONAL_DIM, HIDDEN, OUT_DIM = 10, 10, 128, 10

    key = jax.random.PRNGKey(0)
    k_seq, k_reg, k_par = jax.random.split(key, 3)
    global_sequence = jax.random.normal(k_seq, (B, T, GLOBAL_DIM), jnp.float32)
    regional_features = jax.random.normal(k_reg, (B, REGIONAL_DIM), jnp.float32)
    params = make_params(k_par, GLOBAL_DIM, REGIONAL_DIM, HIDDEN, 2, OUT_DIM)

    out = lstm_climate_predictor(global_sequence, regional_features, params)
    out = jax.block_until_ready(out)
    assert out.shape == (B, OUT_DIM)
    assert bool(jnp.all(jnp.isfinite(out)))
    print("KERNEL_OK")
</pallas_src>

<mosaic_0001>
module attributes {stable_mosaic.version = 11 : i64} {
  func.func @fused_kernel(%arg0: memref<128x10xf32, #tpu.memory_space<vmem>>, %arg1: memref<16x10xf32, #tpu.memory_space<vmem>>, %arg2: memref<10x512xbf16, #tpu.memory_space<vmem>>, %arg3: memref<128x512xbf16, #tpu.memory_space<vmem>>, %arg4: memref<1x512xf32, #tpu.memory_space<vmem>>, %arg5: memref<256x512xbf16, #tpu.memory_space<vmem>>, %arg6: memref<1x512xf32, #tpu.memory_space<vmem>>, %arg7: memref<128x512xbf16, #tpu.memory_space<vmem>>, %arg8: memref<1x512xf32, #tpu.memory_space<vmem>>, %arg9: memref<128x8xbf16, #tpu.memory_space<vmem>>, %arg10: memref<8x128xbf16, #tpu.memory_space<vmem>>, %arg11: memref<10x64xbf16, #tpu.memory_space<vmem>>, %arg12: memref<1x64xf32, #tpu.memory_space<vmem>>, %arg13: memref<64x32xbf16, #tpu.memory_space<vmem>>, %arg14: memref<1x32xf32, #tpu.memory_space<vmem>>, %arg15: memref<128x128xbf16, #tpu.memory_space<vmem>>, %arg16: memref<32x128xbf16, #tpu.memory_space<vmem>>, %arg17: memref<1x128xf32, #tpu.memory_space<vmem>>, %arg18: memref<128x64xbf16, #tpu.memory_space<vmem>>, %arg19: memref<1x64xf32, #tpu.memory_space<vmem>>, %arg20: memref<64x10xbf16, #tpu.memory_space<vmem>>, %arg21: memref<1x10xf32, #tpu.memory_space<vmem>>, %arg22: memref<16x10xf32, #tpu.memory_space<vmem>>, %arg23: memref<128x512xf32, #tpu.memory_space<vmem>>, %arg24: memref<128x128xbf16, #tpu.memory_space<vmem>>) attributes {dimension_semantics = [], scalar_prefetch = 0 : i64, scratch_operands = 2 : i64, tpu.core_type = #tpu.core_type<tc>} {
    %c0 = arith.constant 0 : index
    %c0_0 = arith.constant 0 : index
    %0 = vector.load %arg0[%c0, %c0_0] : memref<128x10xf32, #tpu.memory_space<vmem>>, vector<128x10xf32>
    %1 = arith.truncf %0 : vector<128x10xf32> to vector<128x10xbf16>
    %c0_1 = arith.constant 0 : index
    %c0_2 = arith.constant 0 : index
    %2 = vector.load %arg2[%c0_1, %c0_2] : memref<10x512xbf16, #tpu.memory_space<vmem>>, vector<10x512xbf16>
    %cst = arith.constant dense<0.000000e+00> : vector<128x512xf32>
    %3 = tpu.matmul %1, %2, %cst {dimension_numbers = #tpu.dot_dimension_numbers<[1], [0], [0], [1], [0, 0, 1, 1], [], []>} : vector<128x10xbf16>, vector<10x512xbf16>, vector<128x512xf32> -> vector<128x512xf32>
    %c0_3 = arith.constant 0 : index
    %c0_4 = arith.constant 0 : index
    %4 = vector.load %arg4[%c0_3, %c0_4] : memref<1x512xf32, #tpu.memory_space<vmem>>, vector<1x512xf32>
    %5 = vector.broadcast %4 : vector<1x512xf32> to vector<128x512xf32>
    %6 = arith.addf %3, %5 : vector<128x512xf32>
    %c0_5 = arith.constant 0 : index
    %c0_6 = arith.constant 0 : index
    %7 = vector.load %arg23[%c0_5, %c0_6] : memref<128x512xf32, #tpu.memory_space<vmem>>, vector<128x512xf32>
    tpu.vector_store %arg23[%c0_5, %c0_6], %6 {strides = array<i32>} : memref<128x512xf32, #tpu.memory_space<vmem>>, vector<128x512xf32>,
    %cst_7 = arith.constant 0.000000e+00 : f32
    %8 = vector.broadcast %cst_7 : f32 to vector<16x128xf32>
    %cst_8 = arith.constant 0.000000e+00 : f32
    %9 = vector.broadcast %cst_8 : f32 to vector<16x128xf32>
    %cst_9 = arith.constant 0.000000e+00 : bf16
    %10 = vector.broadcast %cst_9 : bf16 to vector<16x128xbf16>
    %cst_10 = arith.constant 0.000000e+00 : bf16
    %11 = vector.broadcast %cst_10 : bf16 to vector<16x128xbf16>
    %c0_11 = arith.constant 0 : index
    %c0_12 = arith.constant 0 : index
    %12 = vector.load %arg23[%c0_11, %c0_12] : memref<128x512xf32, #tpu.memory_space<vmem>>, vector<16x512xf32>
    %c0_13 = arith.constant 0 : index
    %c0_14 = arith.constant 0 : index
    %13 = vector.load %arg3[%c0_13, %c0_14] : memref<128x512xbf16, #tpu.memory_space<vmem>>, vector<128x512xbf16>
    %cst_15 = arith.constant dense<0.000000e+00> : vector<16x512xf32>
    %14 = tpu.matmul %10, %13, %cst_15 {dimension_numbers = #tpu.dot_dimension_numbers<[1], [0], [0], [1], [0, 0, 1, 1], [], []>} : vector<16x128xbf16>, vector<128x512xbf16>, vector<16x512xf32> -> vector<16x512xf32>
    %15 = arith.addf %12, %14 : vector<16x512xf32>
    %16 = vector.extract_strided_slice %15 {offsets = [0, 0], sizes = [16, 128], strides = [1, 1]} : vector<16x512xf32> to vector<16x128xf32>
    %17 = arith.negf %16 : vector<16x128xf32>
    %18 = math.exp %17 : vector<16x128xf32>
    %cst_16 = arith.constant 1.000000e+00 : f32
    %19 = vector.broadcast %cst_16 : f32 to vector<16x128xf32>
    %20 = arith.addf %19, %18 : vector<16x128xf32>
    %21 = arith.divf %19, %20 : vector<16x128xf32>
    %22 = vector.extract_strided_slice %15 {offsets = [0, 128], sizes = [16, 128], strides = [1, 1]} : vector<16x512xf32> to vector<16x128xf32>
    %23 = arith.negf %22 : vector<16x128xf32>
    %24 = math.exp %23 : vector<16x128xf32>
    %cst_17 = arith.constant 1.000000e+00 : f32
    %25 = vector.broadcast %cst_17 : f32 to vector<16x128xf32>
    %26 = arith.addf %25, %24 : vector<16x128xf32>
    %27 = arith.divf %25, %26 : vector<16x128xf32>
    %28 = vector.extract_strided_slice %15 {offsets = [0, 256], sizes = [16, 128], strides = [1, 1]} : vector<16x512xf32> to vector<16x128xf32>
    %29 = math.tanh %28 : vector<16x128xf32>
    %30 = vector.extract_strided_slice %15 {offsets = [0, 384], sizes = [16, 128], strides = [1, 1]} : vector<16x512xf32> to vector<16x128xf32>
    %31 = arith.negf %30 : vector<16x128xf32>
    %32 = math.exp %31 : vector<16x128xf32>
    %cst_18 = arith.constant 1.000000e+00 : f32
    %33 = vector.broadcast %cst_18 : f32 to vector<16x128xf32>
    %34 = arith.addf %33, %32 : vector<16x128xf32>
    %35 = arith.divf %33, %34 : vector<16x128xf32>
    %36 = arith.mulf %27, %8 : vector<16x128xf32>
    %37 = arith.mulf %21, %29 : vector<16x128xf32>
    %38 = arith.addf %36, %37 : vector<16x128xf32>
    %39 = math.tanh %38 : vector<16x128xf32>
    %40 = arith.mulf %35, %39 : vector<16x128xf32>
    %41 = arith.truncf %40 : vector<16x128xf32> to vector<16x128xbf16>
    %c16 = arith.constant 16 : index
    %c0_19 = arith.constant 0 : index
    %42 = vector.load %arg23[%c16, %c0_19] : memref<128x512xf32, #tpu.memory_space<vmem>>, vector<16x512xf32>
    %c0_20 = arith.constant 0 : index
    %c0_21 = arith.constant 0 : index
    %43 = vector.load %arg3[%c0_20, %c0_21] : memref<128x512xbf16, #tpu.memory_space<vmem>>, vector<128x512xbf16>
    %cst_22 = arith.constant dense<0.000000e+00> : vector<16x512xf32>
    %44 = tpu.matmul %41, %43, %cst_22 {dimension_numbers = #tpu.dot_dimension_numbers<[1], [0], [0], [1], [0, 0, 1, 1], [], []>} : vector<16x128xbf16>, vector<128x512xbf16>, vector<16x512xf32> -> vector<16x512xf32>
    %45 = arith.addf %42, %44 : vector<16x512xf32>
    %46 = vector.extract_strided_slice %45 {offsets = [0, 0], sizes = [16, 128], strides = [1, 1]} : vector<16x512xf32> to vector<16x128xf32>
    %47 = arith.negf %46 : vector<16x128xf32>
    %48 = math.exp %47 : vector<16x128xf32>
    %cst_23 = arith.constant 1.000000e+00 : f32
    %49 = vector.broadcast %cst_23 : f32 to vector<16x128xf32>
    %50 = arith.addf %49, %48 : vector<16x128xf32>
    %51 = arith.divf %49, %50 : vector<16x128xf32>
    %52 = vector.extract_strided_slice %45 {offsets = [0, 128], sizes = [16, 128], strides = [1, 1]} : vector<16x512xf32> to vector<16x128xf32>
    %53 = arith.negf %52 : vector<16x128xf32>
    %54 = math.exp %53 : vector<16x128xf32>
    %cst_24 = arith.constant 1.000000e+00 : f32
    %55 = vector.broadcast %cst_24 : f32 to vector<16x128xf32>
    %56 = arith.addf %55, %54 : vector<16x128xf32>
    %57 = arith.divf %55, %56 : vector<16x128xf32>
    %58 = vector.extract_strided_slice %45 {offsets = [0, 256], sizes = [16, 128], strides = [1, 1]} : vector<16x512xf32> to vector<16x128xf32>
    %59 = math.tanh %58 : vector<16x128xf32>
    %60 = vector.extract_strided_slice %45 {offsets = [0, 384], sizes = [16, 128], strides = [1, 1]} : vector<16x512xf32> to vector<16x128xf32>
    %61 = arith.negf %60 : vector<16x128xf32>
    %62 = math.exp %61 : vector<16x128xf32>
    %cst_25 = arith.constant 1.000000e+00 : f32
    %63 = vector.broadcast %cst_25 : f32 to vector<16x128xf32>
    %64 = arith.addf %63, %62 : vector<16x128xf32>
    %65 = arith.divf %63, %64 : vector<16x128xf32>
    %66 = arith.mulf %57, %38 : vector<16x128xf32>
    %67 = arith.mulf %51, %59 : vector<16x128xf32>
    %68 = arith.addf %66, %67 : vector<16x128xf32>
    %69 = math.tanh %68 : vector<16x128xf32>
    %70 = arith.mulf %65, %69 : vector<16x128xf32>
    %71 = arith.truncf %70 : vector<16x128xf32> to vector<16x128xbf16>
    %72 = tpu.concatenate %41, %11 in 1 : vector<16x128xbf16>, vector<16x128xbf16> -> vector<16x256xbf16>
    %c0_26 = arith.constant 0 : index
    %c0_27 = arith.constant 0 : index
    %73 = vector.load %arg5[%c0_26, %c0_27] : memref<256x512xbf16, #tpu.memory_space<vmem>>, vector<256x512xbf16>
    %cst_28 = arith.constant dense<0.000000e+00> : vector<16x512xf32>
    %74 = tpu.matmul %72, %73, %cst_28 {dimension_numbers = #tpu.dot_dimension_numbers<[1], [0], [0], [1], [0, 0, 1, 1], [], []>} : vector<16x256xbf16>, vector<256x512xbf16>, vector<16x512xf32> -> vector<16x512xf32>
    %c0_29 = arith.constant 0 : index
    %c0_30 = arith.constant 0 : index
    %75 = vector.load %arg6[%c0_29, %c0_30] : memref<1x512xf32, #tpu.memory_space<vmem>>, vector<1x512xf32>
    %76 = vector.broadcast %75 : vector<1x512xf32> to vector<16x512xf32>
    %77 = arith.addf %74, %76 : vector<16x512xf32>
    %78 = vector.extract_strided_slice %77 {offsets = [0, 0], sizes = [16, 128], strides = [1, 1]} : vector<16x512xf32> to vector<16x128xf32>
    %79 = arith.negf %78 : vector<16x128xf32>
    %80 = math.exp %79 : vector<16x128xf32>
    %cst_31 = arith.constant 1.000000e+00 : f32
    %81 = vector.broadcast %cst_31 : f32 to vector<16x128xf32>
    %82 = arith.addf %81, %80 : vector<16x128xf32>
    %83 = arith.divf %81, %82 : vector<16x128xf32>
    %84 = vector.extract_strided_slice %77 {offsets = [0, 128], sizes = [16, 128], strides = [1, 1]} : vector<16x512xf32> to vector<16x128xf32>
    %85 = arith.negf %84 : vector<16x128xf32>
    %86 = math.exp %85 : vector<16x128xf32>
    %cst_32 = arith.constant 1.000000e+00 : f32
    %87 = vector.broadcast %cst_32 : f32 to vector<16x128xf32>
    %88 = arith.addf %87, %86 : vector<16x128xf32>
    %89 = arith.divf %87, %88 : vector<16x128xf32>
    %90 = vector.extract_strided_slice %77 {offsets = [0, 256], sizes = [16, 128], strides = [1, 1]} : vector<16x512xf32> to vector<16x128xf32>
    %91 = math.tanh %90 : vector<16x128xf32>
    %92 = vector.extract_strided_slice %77 {offsets = [0, 384], sizes = [16, 128], strides = [1, 1]} : vector<16x512xf32> to vector<16x128xf32>
    %93 = arith.negf %92 : vector<16x128xf32>
    %94 = math.exp %93 : vector<16x128xf32>
    %cst_33 = arith.constant 1.000000e+00 : f32
    %95 = vector.broadcast %cst_33 : f32 to vector<16x128xf32>
    %96 = arith.addf %95, %94 : vector<16x128xf32>
    %97 = arith.divf %95, %96 : vector<16x128xf32>
    %98 = arith.mulf %89, %9 : vector<16x128xf32>
    %99 = arith.mulf %83, %91 : vector<16x128xf32>
    %100 = arith.addf %98, %99 : vector<16x128xf32>
    %101 = math.tanh %100 : vector<16x128xf32>
    %102 = arith.mulf %97, %101 : vector<16x128xf32>
    %103 = arith.truncf %102 : vector<16x128xf32> to vector<16x128xbf16>
    %c0_34 = arith.constant 0 : index
    %c0_35 = arith.constant 0 : index
    %104 = vector.load %arg24[%c0_34, %c0_35] : memref<128x128xbf16, #tpu.memory_space<vmem>>, vector<16x128xbf16>
    tpu.vector_store %arg24[%c0_34, %c0_35], %103 {strides = array<i32>} : memref<128x128xbf16, #tpu.memory_space<vmem>>, vector<16x128xbf16>,
    %c32 = arith.constant 32 : index
    %c0_36 = arith.constant 0 : index
    %105 = vector.load %arg23[%c32, %c0_36] : memref<128x512xf32, #tpu.memory_space<vmem>>, vector<16x512xf32>
    %c0_37 = arith.constant 0 : index
    %c0_38 = arith.constant 0 : index
    %106 = vector.load %arg3[%c0_37, %c0_38] : memref<128x512xbf16, #tpu.memory_space<vmem>>, vector<128x512xbf16>
    %cst_39 = arith.constant dense<0.000000e+00> : vector<16x512xf32>
    %107 = tpu.matmul %71, %106, %cst_39 {dimension_numbers = #tpu.dot_dimension_numbers<[1], [0], [0], [1], [0, 0, 1, 1], [], []>} : vector<16x128xbf16>, vector<128x512xbf16>, vector<16x512xf32> -> vector<16x512xf32>
    %108 = arith.addf %105, %107 : vector<16x512xf32>
    %109 = vector.extract_strided_slice %108 {offsets = [0, 0], sizes = [16, 128], strides = [1, 1]} : vector<16x512xf32> to vector<16x128xf32>
    %110 = arith.negf %109 : vector<16x128xf32>
    %111 = math.exp %110 : vector<16x128xf32>
    %cst_40 = arith.constant 1.000000e+00 : f32
    %112 = vector.broadcast %cst_40 : f32 to vector<16x128xf32>
    %113 = arith.addf %112, %111 : vector<16x128xf32>
    %114 = arith.divf %112, %113 : vector<16x128xf32>
    %115 = vector.extract_strided_slice %108 {offsets = [0, 128], sizes = [16, 128], strides = [1, 1]} : vector<16x512xf32> to vector<16x128xf32>
    %116 = arith.negf %115 : vector<16x128xf32>
    %117 = math.exp %116 : vector<16x128xf32>
    %cst_41 = arith.constant 1.000000e+00 : f32
    %118 = vector.broadcast %cst_41 : f32 to vector<16x128xf32>
    %119 = arith.addf %118, %117 : vector<16x128xf32>
    %120 = arith.divf %118, %119 : vector<16x128xf32>
    %121 = vector.extract_strided_slice %108 {offsets = [0, 256], sizes = [16, 128], strides = [1, 1]} : vector<16x512xf32> to vector<16x128xf32>
    %122 = math.tanh %121 : vector<16x128xf32>
    %123 = vector.extract_strided_slice %108 {offsets = [0, 384], sizes = [16, 128], strides = [1, 1]} : vector<16x512xf32> to vector<16x128xf32>
    %124 = arith.negf %123 : vector<16x128xf32>
    %125 = math.exp %124 : vector<16x128xf32>
    %cst_42 = arith.constant 1.000000e+00 : f32
    %126 = vector.broadcast %cst_42 : f32 to vector<16x128xf32>
    %127 = arith.addf %126, %125 : vector<16x128xf32>
    %128 = arith.divf %126, %127 : vector<16x128xf32>
    %129 = arith.mulf %120, %68 : vector<16x128xf32>
    %130 = arith.mulf %114, %122 : vector<16x128xf32>
    %131 = arith.addf %129, %130 : vector<16x128xf32>
    %132 = math.tanh %131 : vector<16x128xf32>
    %133 = arith.mulf %128, %132 : vector<16x128xf32>
    %134 = arith.truncf %133 : vector<16x128xf32> to vector<16x128xbf16>
    %135 = tpu.concatenate %71, %103 in 1 : vector<16x128xbf16>, vector<16x128xbf16> -> vector<16x256xbf16>
    %c0_43 = arith.constant 0 : index
    %c0_44 = arith.constant 0 : index
    %136 = vector.load %arg5[%c0_43, %c0_44] : memref<256x512xbf16, #tpu.memory_space<vmem>>, vector<256x512xbf16>
    %cst_45 = arith.constant dense<0.000000e+00> : vector<16x512xf32>
    %137 = tpu.matmul %135, %136, %cst_45 {dimension_numbers = #tpu.dot_dimension_numbers<[1], [0], [0], [1], [0, 0, 1, 1], [], []>} : vector<16x256xbf16>, vector<256x512xbf16>, vector<16x512xf32> -> vector<16x512xf32>
    %c0_46 = arith.constant 0 : index
    %c0_47 = arith.constant 0 : index
    %138 = vector.load %arg6[%c0_46, %c0_47] : memref<1x512xf32, #tpu.memory_space<vmem>>, vector<1x512xf32>
    %139 = vector.broadcast %138 : vector<1x512xf32> to vector<16x512xf32>
    %140 = arith.addf %137, %139 : vector<16x512xf32>
    %141 = vector.extract_strided_slice %140 {offsets = [0, 0], sizes = [16, 128], strides = [1, 1]} : vector<16x512xf32> to vector<16x128xf32>
    %142 = arith.negf %141 : vector<16x128xf32>
    %143 = math.exp %142 : vector<16x128xf32>
    %cst_48 = arith.constant 1.000000e+00 : f32
    %144 = vector.broadcast %cst_48 : f32 to vector<16x128xf32>
    %145 = arith.addf %144, %143 : vector<16x128xf32>
    %146 = arith.divf %144, %145 : vector<16x128xf32>
    %147 = vector.extract_strided_slice %140 {offsets = [0, 128], sizes = [16, 128], strides = [1, 1]} : vector<16x512xf32> to vector<16x128xf32>
    %148 = arith.negf %147 : vector<16x128xf32>
    %149 = math.exp %148 : vector<16x128xf32>
    %cst_49 = arith.constant 1.000000e+00 : f32
    %150 = vector.broadcast %cst_49 : f32 to vector<16x128xf32>
    %151 = arith.addf %150, %149 : vector<16x128xf32>
    %152 = arith.divf %150, %151 : vector<16x128xf32>
    %153 = vector.extract_strided_slice %140 {offsets = [0, 256], sizes = [16, 128], strides = [1, 1]} : vector<16x512xf32> to vector<16x128xf32>
    %154 = math.tanh %153 : vector<16x128xf32>
    %155 = vector.extract_strided_slice %140 {offsets = [0, 384], sizes = [16, 128], strides = [1, 1]} : vector<16x512xf32> to vector<16x128xf32>
    %156 = arith.negf %155 : vector<16x128xf32>
    %157 = math.exp %156 : vector<16x128xf32>
    %cst_50 = arith.constant 1.000000e+00 : f32
    %158 = vector.broadcast %cst_50 : f32 to vector<16x128xf32>
    %159 = arith.addf %158, %157 : vector<16x128xf32>
    %160 = arith.divf %158, %159 : vector<16x128xf32>
    %161 = arith.mulf %152, %100 : vector<16x128xf32>
    %162 = arith.mulf %146, %154 : vector<16x128xf32>
    %163 = arith.addf %161, %162 : vector<16x128xf32>
    %164 = math.tanh %163 : vector<16x128xf32>
    %165 = arith.mulf %160, %164 : vector<16x128xf32>
    %166 = arith.truncf %165 : vector<16x128xf32> to vector<16x128xbf16>
    %c16_51 = arith.constant 16 : index
    %c0_52 = arith.constant 0 : index
    %167 = vector.load %arg24[%c16_51, %c0_52] : memref<128x128xbf16, #tpu.memory_space<vmem>>, vector<16x128xbf16>
    tpu.vector_store %arg24[%c16_51, %c0_52], %166 {strides = array<i32>} : memref<128x128xbf16, #tpu.memory_space<vmem>>, vector<16x128xbf16>,
    %c48 = arith.constant 48 : index
    %c0_53 = arith.constant 0 : index
    %168 = vector.load %arg23[%c48, %c0_53] : memref<128x512xf32, #tpu.memory_space<vmem>>, vector<16x512xf32>
    %c0_54 = arith.constant 0 : index
    %c0_55 = arith.constant 0 : index
    %169 = vector.load %arg3[%c0_54, %c0_55] : memref<128x512xbf16, #tpu.memory_space<vmem>>, vector<128x512xbf16>
    %cst_56 = arith.constant dense<0.000000e+00> : vector<16x512xf32>
    %170 = tpu.matmul %134, %169, %cst_56 {dimension_numbers = #tpu.dot_dimension_numbers<[1], [0], [0], [1], [0, 0, 1, 1], [], []>} : vector<16x128xbf16>, vector<128x512xbf16>, vector<16x512xf32> -> vector<16x512xf32>
    %171 = arith.addf %168, %170 : vector<16x512xf32>
    %172 = vector.extract_strided_slice %171 {offsets = [0, 0], sizes = [16, 128], strides = [1, 1]} : vector<16x512xf32> to vector<16x128xf32>
    %173 = arith.negf %172 : vector<16x128xf32>
    %174 = math.exp %173 : vector<16x128xf32>
    %cst_57 = arith.constant 1.000000e+00 : f32
    %175 = vector.broadcast %cst_57 : f32 to vector<16x128xf32>
    %176 = arith.addf %175, %174 : vector<16x128xf32>
    %177 = arith.divf %175, %176 : vector<16x128xf32>
    %178 = vector.extract_strided_slice %171 {offsets = [0, 128], sizes = [16, 128], strides = [1, 1]} : vector<16x512xf32> to vector<16x128xf32>
    %179 = arith.negf %178 : vector<16x128xf32>
    %180 = math.exp %179 : vector<16x128xf32>
    %cst_58 = arith.constant 1.000000e+00 : f32
    %181 = vector.broadcast %cst_58 : f32 to vector<16x128xf32>
    %182 = arith.addf %181, %180 : vector<16x128xf32>
    %183 = arith.divf %181, %182 : vector<16x128xf32>
    %184 = vector.extract_strided_slice %171 {offsets = [0, 256], sizes = [16, 128], strides = [1, 1]} : vector<16x512xf32> to vector<16x128xf32>
    %185 = math.tanh %184 : vector<16x128xf32>
    %186 = vector.extract_strided_slice %171 {offsets = [0, 384], sizes = [16, 128], strides = [1, 1]} : vector<16x512xf32> to vector<16x128xf32>
    %187 = arith.negf %186 : vector<16x128xf32>
    %188 = math.exp %187 : vector<16x128xf32>
    %cst_59 = arith.constant 1.000000e+00 : f32
    %189 = vector.broadcast %cst_59 : f32 to vector<16x128xf32>
    %190 = arith.addf %189, %188 : vector<16x128xf32>
    %191 = arith.divf %189, %190 : vector<16x128xf32>
    %192 = arith.mulf %183, %131 : vector<16x128xf32>
    %193 = arith.mulf %177, %185 : vector<16x128xf32>
    %194 = arith.addf %192, %193 : vector<16x128xf32>
    %195 = math.tanh %194 : vector<16x128xf32>
    %196 = arith.mulf %191, %195 : vector<16x128xf32>
    %197 = arith.truncf %196 : vector<16x128xf32> to vector<16x128xbf16>
    %198 = tpu.concatenate %134, %166 in 1 : vector<16x128xbf16>, vector<16x128xbf16> -> vector<16x256xbf16>
    %c0_60 = arith.constant 0 : index
    %c0_61 = arith.constant 0 : index
    %199 = vector.load %arg5[%c0_60, %c0_61] : memref<256x512xbf16, #tpu.memory_space<vmem>>, vector<256x512xbf16>
    %cst_62 = arith.constant dense<0.000000e+00> : vector<16x512xf32>
    %200 = tpu.matmul %198, %199, %cst_62 {dimension_numbers = #tpu.dot_dimension_numbers<[1], [0], [0], [1], [0, 0, 1, 1], [], []>} : vector<16x256xbf16>, vector<256x512xbf16>, vector<16x512xf32> -> vector<16x512xf32>
    %c0_63 = arith.constant 0 : index
    %c0_64 = arith.constant 0 : index
    %201 = vector.load %arg6[%c0_63, %c0_64] : memref<1x512xf32, #tpu.memory_space<vmem>>, vector<1x512xf32>
    %202 = vector.broadcast %201 : vector<1x512xf32> to vector<16x512xf32>
    %203 = arith.addf %200, %202 : vector<16x512xf32>
    %204 = vector.extract_strided_slice %203 {offsets = [0, 0], sizes = [16, 128], strides = [1, 1]} : vector<16x512xf32> to vector<16x128xf32>
    %205 = arith.negf %204 : vector<16x128xf32>
    %206 = math.exp %205 : vector<16x128xf32>
    %cst_65 = arith.constant 1.000000e+00 : f32
    %207 = vector.broadcast %cst_65 : f32 to vector<16x128xf32>
    %208 = arith.addf %207, %206 : vector<16x128xf32>
    %209 = arith.divf %207, %208 : vector<16x128xf32>
    %210 = vector.extract_strided_slice %203 {offsets = [0, 128], sizes = [16, 128], strides = [1, 1]} : vector<16x512xf32> to vector<16x128xf32>
    %211 = arith.negf %210 : vector<16x128xf32>
    %212 = math.exp %211 : vector<16x128xf32>
    %cst_66 = arith.constant 1.000000e+00 : f32
    %213 = vector.broadcast %cst_66 : f32 to vector<16x128xf32>
    %214 = arith.addf %213, %212 : vector<16x128xf32>
    %215 = arith.divf %213, %214 : vector<16x128xf32>
    %216 = vector.extract_strided_slice %203 {offsets = [0, 256], sizes = [16, 128], strides = [1, 1]} : vector<16x512xf32> to vector<16x128xf32>
    %217 = math.tanh %216 : vector<16x128xf32>
    %218 = vector.extract_strided_slice %203 {offsets = [0, 384], sizes = [16, 128], strides = [1, 1]} : vector<16x512xf32> to vector<16x128xf32>
    %219 = arith.negf %218 : vector<16x128xf32>
    %220 = math.exp %219 : vector<16x128xf32>
    %cst_67 = arith.constant 1.000000e+00 : f32
    %221 = vector.broadcast %cst_67 : f32 to vector<16x128xf32>
    %222 = arith.addf %221, %220 : vector<16x128xf32>
    %223 = arith.divf %221, %222 : vector<16x128xf32>
    %224 = arith.mulf %215, %163 : vector<16x128xf32>
    %225 = arith.mulf %209, %217 : vector<16x128xf32>
    %226 = arith.addf %224, %225 : vector<16x128xf32>
    %227 = math.tanh %226 : vector<16x128xf32>
    %228 = arith.mulf %223, %227 : vector<16x128xf32>
    %229 = arith.truncf %228 : vector<16x128xf32> to vector<16x128xbf16>
    %c32_68 = arith.constant 32 : index
    %c0_69 = arith.constant 0 : index
    %230 = vector.load %arg24[%c32_68, %c0_69] : memref<128x128xbf16, #tpu.memory_space<vmem>>, vector<16x128xbf16>
    tpu.vector_store %arg24[%c32_68, %c0_69], %229 {strides = array<i32>} : memref<128x128xbf16, #tpu.memory_space<vmem>>, vector<16x128xbf16>,
    %c64 = arith.constant 64 : index
    %c0_70 = arith.constant 0 : index
    %231 = vector.load %arg23[%c64, %c0_70] : memref<128x512xf32, #tpu.memory_space<vmem>>, vector<16x512xf32>
    %c0_71 = arith.constant 0 : index
    %c0_72 = arith.constant 0 : index
    %232 = vector.load %arg3[%c0_71, %c0_72] : memref<128x512xbf16, #tpu.memory_space<vmem>>, vector<128x512xbf16>
    %cst_73 = arith.constant dense<0.000000e+00> : vector<16x512xf32>
    %233 = tpu.matmul %197, %232, %cst_73 {dimension_numbers = #tpu.dot_dimension_numbers<[1], [0], [0], [1], [0, 0, 1, 1], [], []>} : vector<16x128xbf16>, vector<128x512xbf16>, vector<16x512xf32> -> vector<16x512xf32>
    %234 = arith.addf %231, %233 : vector<16x512xf32>
    %235 = vector.extract_strided_slice %234 {offsets = [0, 0], sizes = [16, 128], strides = [1, 1]} : vector<16x512xf32> to vector<16x128xf32>
    %236 = arith.negf %235 : vector<16x128xf32>
    %237 = math.exp %236 : vector<16x128xf32>
    %cst_74 = arith.constant 1.000000e+00 : f32
    %238 = vector.broadcast %cst_74 : f32 to vector<16x128xf32>
    %239 = arith.addf %238, %237 : vector<16x128xf32>
    %240 = arith.divf %238, %239 : vector<16x128xf32>
    %241 = vector.extract_strided_slice %234 {offsets = [0, 128], sizes = [16, 128], strides = [1, 1]} : vector<16x512xf32> to vector<16x128xf32>
    %242 = arith.negf %241 : vector<16x128xf32>
    %243 = math.exp %242 : vector<16x128xf32>
    %cst_75 = arith.constant 1.000000e+00 : f32
    %244 = vector.broadcast %cst_75 : f32 to vector<16x128xf32>
    %245 = arith.addf %244, %243 : vector<16x128xf32>
    %246 = arith.divf %244, %245 : vector<16x128xf32>
    %247 = vector.extract_strided_slice %234 {offsets = [0, 256], sizes = [16, 128], strides = [1, 1]} : vector<16x512xf32> to vector<16x128xf32>
    %248 = math.tanh %247 : vector<16x128xf32>
    %249 = vector.extract_strided_slice %234 {offsets = [0, 384], sizes = [16, 128], strides = [1, 1]} : vector<16x512xf32> to vector<16x128xf32>
    %250 = arith.negf %249 : vector<16x128xf32>
    %251 = math.exp %250 : vector<16x128xf32>
    %cst_76 = arith.constant 1.000000e+00 : f32
    %252 = vector.broadcast %cst_76 : f32 to vector<16x128xf32>
    %253 = arith.addf %252, %251 : vector<16x128xf32>
    %254 = arith.divf %252, %253 : vector<16x128xf32>
    %255 = arith.mulf %246, %194 : vector<16x128xf32>
    %256 = arith.mulf %240, %248 : vector<16x128xf32>
    %257 = arith.addf %255, %256 : vector<16x128xf32>
    %258 = math.tanh %257 : vector<16x128xf32>
    %259 = arith.mulf %254, %258 : vector<16x128xf32>
    %260 = arith.truncf %259 : vector<16x128xf32> to vector<16x128xbf16>
    %261 = tpu.concatenate %197, %229 in 1 : vector<16x128xbf16>, vector<16x128xbf16> -> vector<16x256xbf16>
    %c0_77 = arith.constant 0 : index
    %c0_78 = arith.constant 0 : index
    %262 = vector.load %arg5[%c0_77, %c0_78] : memref<256x512xbf16, #tpu.memory_space<vmem>>, vector<256x512xbf16>
    %cst_79 = arith.constant dense<0.000000e+00> : vector<16x512xf32>
    %263 = tpu.matmul %261, %262, %cst_79 {dimension_numbers = #tpu.dot_dimension_numbers<[1], [0], [0], [1], [0, 0, 1, 1], [], []>} : vector<16x256xbf16>, vector<256x512xbf16>, vector<16x512xf32> -> vector<16x512xf32>
    %c0_80 = arith.constant 0 : index
    %c0_81 = arith.constant 0 : index
    %264 = vector.load %arg6[%c0_80, %c0_81] : memref<1x512xf32, #tpu.memory_space<vmem>>, vector<1x512xf32>
    %265 = vector.broadcast %264 : vector<1x512xf32> to vector<16x512xf32>
    %266 = arith.addf %263, %265 : vector<16x512xf32>
    %267 = vector.extract_strided_slice %266 {offsets = [0, 0], sizes = [16, 128], strides = [1, 1]} : vector<16x512xf32> to vector<16x128xf32>
    %268 = arith.negf %267 : vector<16x128xf32>
    %269 = math.exp %268 : vector<16x128xf32>
    %cst_82 = arith.constant 1.000000e+00 : f32
    %270 = vector.broadcast %cst_82 : f32 to vector<16x128xf32>
    %271 = arith.addf %270, %269 : vector<16x128xf32>
    %272 = arith.divf %270, %271 : vector<16x128xf32>
    %273 = vector.extract_strided_slice %266 {offsets = [0, 128], sizes = [16, 128], strides = [1, 1]} : vector<16x512xf32> to vector<16x128xf32>
    %274 = arith.negf %273 : vector<16x128xf32>
    %275 = math.exp %274 : vector<16x128xf32>
    %cst_83 = arith.constant 1.000000e+00 : f32
    %276 = vector.broadcast %cst_83 : f32 to vector<16x128xf32>
    %277 = arith.addf %276, %275 : vector<16x128xf32>
    %278 = arith.divf %276, %277 : vector<16x128xf32>
    %279 = vector.extract_strided_slice %266 {offsets = [0, 256], sizes = [16, 128], strides = [1, 1]} : vector<16x512xf32> to vector<16x128xf32>
    %280 = math.tanh %279 : vector<16x128xf32>
    %281 = vector.extract_strided_slice %266 {offsets = [0, 384], sizes = [16, 128], strides = [1, 1]} : vector<16x512xf32> to vector<16x128xf32>
    %282 = arith.negf %281 : vector<16x128xf32>
    %283 = math.exp %282 : vector<16x128xf32>
    %cst_84 = arith.constant 1.000000e+00 : f32
    %284 = vector.broadcast %cst_84 : f32 to vector<16x128xf32>
    %285 = arith.addf %284, %283 : vector<16x128xf32>
    %286 = arith.divf %284, %285 : vector<16x128xf32>
    %287 = arith.mulf %278, %226 : vector<16x128xf32>
    %288 = arith.mulf %272, %280 : vector<16x128xf32>
    %289 = arith.addf %287, %288 : vector<16x128xf32>
    %290 = math.tanh %289 : vector<16x128xf32>
    %291 = arith.mulf %286, %290 : vector<16x128xf32>
    %292 = arith.truncf %291 : vector<16x128xf32> to vector<16x128xbf16>
    %c48_85 = arith.constant 48 : index
    %c0_86 = arith.constant 0 : index
    %293 = vector.load %arg24[%c48_85, %c0_86] : memref<128x128xbf16, #tpu.memory_space<vmem>>, vector<16x128xbf16>
    tpu.vector_store %arg24[%c48_85, %c0_86], %292 {strides = array<i32>} : memref<128x128xbf16, #tpu.memory_space<vmem>>, vector<16x128xbf16>,
    %c80 = arith.constant 80 : index
    %c0_87 = arith.constant 0 : index
    %294 = vector.load %arg23[%c80, %c0_87] : memref<128x512xf32, #tpu.memory_space<vmem>>, vector<16x512xf32>
    %c0_88 = arith.constant 0 : index
    %c0_89 = arith.constant 0 : index
    %295 = vector.load %arg3[%c0_88, %c0_89] : memref<128x512xbf16, #tpu.memory_space<vmem>>, vector<128x512xbf16>
    %cst_90 = arith.constant dense<0.000000e+00> : vector<16x512xf32>
    %296 = tpu.matmul %260, %295, %cst_90 {dimension_numbers = #tpu.dot_dimension_numbers<[1], [0], [0], [1], [0, 0, 1, 1], [], []>} : vector<16x128xbf16>, vector<128x512xbf16>, vector<16x512xf32> -> vector<16x512xf32>
    %297 = arith.addf %294, %296 : vector<16x512xf32>
    %298 = vector.extract_strided_slice %297 {offsets = [0, 0], sizes = [16, 128], strides = [1, 1]} : vector<16x512xf32> to vector<16x128xf32>
    %299 = arith.negf %298 : vector<16x128xf32>
    %300 = math.exp %299 : vector<16x128xf32>
    %cst_91 = arith.constant 1.000000e+00 : f32
    %301 = vector.broadcast %cst_91 : f32 to vector<16x128xf32>
    %302 = arith.addf %301, %300 : vector<16x128xf32>
    %303 = arith.divf %301, %302 : vector<16x128xf32>
    %304 = vector.extract_strided_slice %297 {offsets = [0, 128], sizes = [16, 128], strides = [1, 1]} : vector<16x512xf32> to vector<16x128xf32>
    %305 = arith.negf %304 : vector<16x128xf32>
    %306 = math.exp %305 : vector<16x128xf32>
    %cst_92 = arith.constant 1.000000e+00 : f32
    %307 = vector.broadcast %cst_92 : f32 to vector<16x128xf32>
    %308 = arith.addf %307, %306 : vector<16x128xf32>
    %309 = arith.divf %307, %308 : vector<16x128xf32>
    %310 = vector.extract_strided_slice %297 {offsets = [0, 256], sizes = [16, 128], strides = [1, 1]} : vector<16x512xf32> to vector<16x128xf32>
    %311 = math.tanh %310 : vector<16x128xf32>
    %312 = vector.extract_strided_slice %297 {offsets = [0, 384], sizes = [16, 128], strides = [1, 1]} : vector<16x512xf32> to vector<16x128xf32>
    %313 = arith.negf %312 : vector<16x128xf32>
    %314 = math.exp %313 : vector<16x128xf32>
    %cst_93 = arith.constant 1.000000e+00 : f32
    %315 = vector.broadcast %cst_93 : f32 to vector<16x128xf32>
    %316 = arith.addf %315, %314 : vector<16x128xf32>
    %317 = arith.divf %315, %316 : vector<16x128xf32>
    %318 = arith.mulf %309, %257 : vector<16x128xf32>
    %319 = arith.mulf %303, %311 : vector<16x128xf32>
    %320 = arith.addf %318, %319 : vector<16x128xf32>
    %321 = math.tanh %320 : vector<16x128xf32>
    %322 = arith.mulf %317, %321 : vector<16x128xf32>
    %323 = arith.truncf %322 : vector<16x128xf32> to vector<16x128xbf16>
    %324 = tpu.concatenate %260, %292 in 1 : vector<16x128xbf16>, vector<16x128xbf16> -> vector<16x256xbf16>
    %c0_94 = arith.constant 0 : index
    %c0_95 = arith.constant 0 : index
    %325 = vector.load %arg5[%c0_94, %c0_95] : memref<256x512xbf16, #tpu.memory_space<vmem>>, vector<256x512xbf16>
    %cst_96 = arith.constant dense<0.000000e+00> : vector<16x512xf32>
    %326 = tpu.matmul %324, %325, %cst_96 {dimension_numbers = #tpu.dot_dimension_numbers<[1], [0], [0], [1], [0, 0, 1, 1], [], []>} : vector<16x256xbf16>, vector<256x512xbf16>, vector<16x512xf32> -> vector<16x512xf32>
    %c0_97 = arith.constant 0 : index
    %c0_98 = arith.constant 0 : index
    %327 = vector.load %arg6[%c0_97, %c0_98] : memref<1x512xf32, #tpu.memory_space<vmem>>, vector<1x512xf32>
    %328 = vector.broadcast %327 : vector<1x512xf32> to vector<16x512xf32>
    %329 = arith.addf %326, %328 : vector<16x512xf32>
    %330 = vector.extract_strided_slice %329 {offsets = [0, 0], sizes = [16, 128], strides = [1, 1]} : vector<16x512xf32> to vector<16x128xf32>
    %331 = arith.negf %330 : vector<16x128xf32>
    %332 = math.exp %331 : vector<16x128xf32>
    %cst_99 = arith.constant 1.000000e+00 : f32
    %333 = vector.broadcast %cst_99 : f32 to vector<16x128xf32>
    %334 = arith.addf %333, %332 : vector<16x128xf32>
    %335 = arith.divf %333, %334 : vector<16x128xf32>
    %336 = vector.extract_strided_slice %329 {offsets = [0, 128], sizes = [16, 128], strides = [1, 1]} : vector<16x512xf32> to vector<16x128xf32>
    %337 = arith.negf %336 : vector<16x128xf32>
    %338 = math.exp %337 : vector<16x128xf32>
    %cst_100 = arith.constant 1.000000e+00 : f32
    %339 = vector.broadcast %cst_100 : f32 to vector<16x128xf32>
    %340 = arith.addf %339, %338 : vector<16x128xf32>
    %341 = arith.divf %339, %340 : vector<16x128xf32>
    %342 = vector.extract_strided_slice %329 {offsets = [0, 256], sizes = [16, 128], strides = [1, 1]} : vector<16x512xf32> to vector<16x128xf32>
    %343 = math.tanh %342 : vector<16x128xf32>
    %344 = vector.extract_strided_slice %329 {offsets = [0, 384], sizes = [16, 128], strides = [1, 1]} : vector<16x512xf32> to vector<16x128xf32>
    %345 = arith.negf %344 : vector<16x128xf32>
    %346 = math.exp %345 : vector<16x128xf32>
    %cst_101 = arith.constant 1.000000e+00 : f32
    %347 = vector.broadcast %cst_101 : f32 to vector<16x128xf32>
    %348 = arith.addf %347, %346 : vector<16x128xf32>
    %349 = arith.divf %347, %348 : vector<16x128xf32>
    %350 = arith.mulf %341, %289 : vector<16x128xf32>
    %351 = arith.mulf %335, %343 : vector<16x128xf32>
    %352 = arith.addf %350, %351 : vector<16x128xf32>
    %353 = math.tanh %352 : vector<16x128xf32>
    %354 = arith.mulf %349, %353 : vector<16x128xf32>
    %355 = arith.truncf %354 : vector<16x128xf32> to vector<16x128xbf16>
    %c64_102 = arith.constant 64 : index
    %c0_103 = arith.constant 0 : index
    %356 = vector.load %arg24[%c64_102, %c0_103] : memref<128x128xbf16, #tpu.memory_space<vmem>>, vector<16x128xbf16>
    tpu.vector_store %arg24[%c64_102, %c0_103], %355 {strides = array<i32>} : memref<128x128xbf16, #tpu.memory_space<vmem>>, vector<16x128xbf16>,
    %c96 = arith.constant 96 : index
    %c0_104 = arith.constant 0 : index
    %357 = vector.load %arg23[%c96, %c0_104] : memref<128x512xf32, #tpu.memory_space<vmem>>, vector<16x512xf32>
    %c0_105 = arith.constant 0 : index
    %c0_106 = arith.constant 0 : index
    %358 = vector.load %arg3[%c0_105, %c0_106] : memref<128x512xbf16, #tpu.memory_space<vmem>>, vector<128x512xbf16>
    %cst_107 = arith.constant dense<0.000000e+00> : vector<16x512xf32>
    %359 = tpu.matmul %323, %358, %cst_107 {dimension_numbers = #tpu.dot_dimension_numbers<[1], [0], [0], [1], [0, 0, 1, 1], [], []>} : vector<16x128xbf16>, vector<128x512xbf16>, vector<16x512xf32> -> vector<16x512xf32>
    %360 = arith.addf %357, %359 : vector<16x512xf32>
    %361 = vector.extract_strided_slice %360 {offsets = [0, 0], sizes = [16, 128], strides = [1, 1]} : vector<16x512xf32> to vector<16x128xf32>
    %362 = arith.negf %361 : vector<16x128xf32>
    %363 = math.exp %362 : vector<16x128xf32>
    %cst_108 = arith.constant 1.000000e+00 : f32
    %364 = vector.broadcast %cst_108 : f32 to vector<16x128xf32>
    %365 = arith.addf %364, %363 : vector<16x128xf32>
    %366 = arith.divf %364, %365 : vector<16x128xf32>
    %367 = vector.extract_strided_slice %360 {offsets = [0, 128], sizes = [16, 128], strides = [1, 1]} : vector<16x512xf32> to vector<16x128xf32>
    %368 = arith.negf %367 : vector<16x128xf32>
    %369 = math.exp %368 : vector<16x128xf32>
    %cst_109 = arith.constant 1.000000e+00 : f32
    %370 = vector.broadcast %cst_109 : f32 to vector<16x128xf32>
    %371 = arith.addf %370, %369 : vector<16x128xf32>
    %372 = arith.divf %370, %371 : vector<16x128xf32>
    %373 = vector.extract_strided_slice %360 {offsets = [0, 256], sizes = [16, 128], strides = [1, 1]} : vector<16x512xf32> to vector<16x128xf32>
    %374 = math.tanh %373 : vector<16x128xf32>
    %375 = vector.extract_strided_slice %360 {offsets = [0, 384], sizes = [16, 128], strides = [1, 1]} : vector<16x512xf32> to vector<16x128xf32>
    %376 = arith.negf %375 : vector<16x128xf32>
    %377 = math.exp %376 : vector<16x128xf32>
    %cst_110 = arith.constant 1.000000e+00 : f32
    %378 = vector.broadcast %cst_110 : f32 to vector<16x128xf32>
    %379 = arith.addf %378, %377 : vector<16x128xf32>
    %380 = arith.divf %378, %379 : vector<16x128xf32>
    %381 = arith.mulf %372, %320 : vector<16x128xf32>
    %382 = arith.mulf %366, %374 : vector<16x128xf32>
    %383 = arith.addf %381, %382 : vector<16x128xf32>
    %384 = math.tanh %383 : vector<16x128xf32>
    %385 = arith.mulf %380, %384 : vector<16x128xf32>
    %386 = arith.truncf %385 : vector<16x128xf32> to vector<16x128xbf16>
    %387 = tpu.concatenate %323, %355 in 1 : vector<16x128xbf16>, vector<16x128xbf16> -> vector<16x256xbf16>
    %c0_111 = arith.constant 0 : index
    %c0_112 = arith.constant 0 : index
    %388 = vector.load %arg5[%c0_111, %c0_112] : memref<256x512xbf16, #tpu.memory_space<vmem>>, vector<256x512xbf16>
    %cst_113 = arith.constant dense<0.000000e+00> : vector<16x512xf32>
    %389 = tpu.matmul %387, %388, %cst_113 {dimension_numbers = #tpu.dot_dimension_numbers<[1], [0], [0], [1], [0, 0, 1, 1], [], []>} : vector<16x256xbf16>, vector<256x512xbf16>, vector<16x512xf32> -> vector<16x512xf32>
    %c0_114 = arith.constant 0 : index
    %c0_115 = arith.constant 0 : index
    %390 = vector.load %arg6[%c0_114, %c0_115] : memref<1x512xf32, #tpu.memory_space<vmem>>, vector<1x512xf32>
    %391 = vector.broadcast %390 : vector<1x512xf32> to vector<16x512xf32>
    %392 = arith.addf %389, %391 : vector<16x512xf32>
    %393 = vector.extract_strided_slice %392 {offsets = [0, 0], sizes = [16, 128], strides = [1, 1]} : vector<16x512xf32> to vector<16x128xf32>
    %394 = arith.negf %393 : vector<16x128xf32>
    %395 = math.exp %394 : vector<16x128xf32>
    %cst_116 = arith.constant 1.000000e+00 : f32
    %396 = vector.broadcast %cst_116 : f32 to vector<16x128xf32>
    %397 = arith.addf %396, %395 : vector<16x128xf32>
    %398 = arith.divf %396, %397 : vector<16x128xf32>
    %399 = vector.extract_strided_slice %392 {offsets = [0, 128], sizes = [16, 128], strides = [1, 1]} : vector<16x512xf32> to vector<16x128xf32>
    %400 = arith.negf %399 : vector<16x128xf32>
    %401 = math.exp %400 : vector<16x128xf32>
    %cst_117 = arith.constant 1.000000e+00 : f32
    %402 = vector.broadcast %cst_117 : f32 to vector<16x128xf32>
    %403 = arith.addf %402, %401 : vector<16x128xf32>
    %404 = arith.divf %402, %403 : vector<16x128xf32>
    %405 = vector.extract_strided_slice %392 {offsets = [0, 256], sizes = [16, 128], strides = [1, 1]} : vector<16x512xf32> to vector<16x128xf32>
    %406 = math.tanh %405 : vector<16x128xf32>
    %407 = vector.extract_strided_slice %392 {offsets = [0, 384], sizes = [16, 128], strides = [1, 1]} : vector<16x512xf32> to vector<16x128xf32>
    %408 = arith.negf %407 : vector<16x128xf32>
    %409 = math.exp %408 : vector<16x128xf32>
    %cst_118 = arith.constant 1.000000e+00 : f32
    %410 = vector.broadcast %cst_118 : f32 to vector<16x128xf32>
    %411 = arith.addf %410, %409 : vector<16x128xf32>
    %412 = arith.divf %410, %411 : vector<16x128xf32>
    %413 = arith.mulf %404, %352 : vector<16x128xf32>
    %414 = arith.mulf %398, %406 : vector<16x128xf32>
    %415 = arith.addf %413, %414 : vector<16x128xf32>
    %416 = math.tanh %415 : vector<16x128xf32>
    %417 = arith.mulf %412, %416 : vector<16x128xf32>
    %418 = arith.truncf %417 : vector<16x128xf32> to vector<16x128xbf16>
    %c80_119 = arith.constant 80 : index
    %c0_120 = arith.constant 0 : index
    %419 = vector.load %arg24[%c80_119, %c0_120] : memref<128x128xbf16, #tpu.memory_space<vmem>>, vector<16x128xbf16>
    tpu.vector_store %arg24[%c80_119, %c0_120], %418 {strides = array<i32>} : memref<128x128xbf16, #tpu.memory_space<vmem>>, vector<16x128xbf16>,
    %c112 = arith.constant 112 : index
    %c0_121 = arith.constant 0 : index
    %420 = vector.load %arg23[%c112, %c0_121] : memref<128x512xf32, #tpu.memory_space<vmem>>, vector<16x512xf32>
    %c0_122 = arith.constant 0 : index
    %c0_123 = arith.constant 0 : index
    %421 = vector.load %arg3[%c0_122, %c0_123] : memref<128x512xbf16, #tpu.memory_space<vmem>>, vector<128x512xbf16>
    %cst_124 = arith.constant dense<0.000000e+00> : vector<16x512xf32>
    %422 = tpu.matmul %386, %421, %cst_124 {dimension_numbers = #tpu.dot_dimension_numbers<[1], [0], [0], [1], [0, 0, 1, 1], [], []>} : vector<16x128xbf16>, vector<128x512xbf16>, vector<16x512xf32> -> vector<16x512xf32>
    %423 = arith.addf %420, %422 : vector<16x512xf32>
    %424 = vector.extract_strided_slice %423 {offsets = [0, 0], sizes = [16, 128], strides = [1, 1]} : vector<16x512xf32> to vector<16x128xf32>
    %425 = arith.negf %424 : vector<16x128xf32>
    %426 = math.exp %425 : vector<16x128xf32>
    %cst_125 = arith.constant 1.000000e+00 : f32
    %427 = vector.broadcast %cst_125 : f32 to vector<16x128xf32>
    %428 = arith.addf %427, %426 : vector<16x128xf32>
    %429 = arith.divf %427, %428 : vector<16x128xf32>
    %430 = vector.extract_strided_slice %423 {offsets = [0, 128], sizes = [16, 128], strides = [1, 1]} : vector<16x512xf32> to vector<16x128xf32>
    %431 = arith.negf %430 : vector<16x128xf32>
    %432 = math.exp %431 : vector<16x128xf32>
    %cst_126 = arith.constant 1.000000e+00 : f32
    %433 = vector.broadcast %cst_126 : f32 to vector<16x128xf32>
    %434 = arith.addf %433, %432 : vector<16x128xf32>
    %435 = arith.divf %433, %434 : vector<16x128xf32>
    %436 = vector.extract_strided_slice %423 {offsets = [0, 256], sizes = [16, 128], strides = [1, 1]} : vector<16x512xf32> to vector<16x128xf32>
    %437 = math.tanh %436 : vector<16x128xf32>
    %438 = vector.extract_strided_slice %423 {offsets = [0, 384], sizes = [16, 128], strides = [1, 1]} : vector<16x512xf32> to vector<16x128xf32>
    %439 = arith.negf %438 : vector<16x128xf32>
    %440 = math.exp %439 : vector<16x128xf32>
    %cst_127 = arith.constant 1.000000e+00 : f32
    %441 = vector.broadcast %cst_127 : f32 to vector<16x128xf32>
    %442 = arith.addf %441, %440 : vector<16x128xf32>
    %443 = arith.divf %441, %442 : vector<16x128xf32>
    %444 = arith.mulf %435, %383 : vector<16x128xf32>
    %445 = arith.mulf %429, %437 : vector<16x128xf32>
    %446 = arith.addf %444, %445 : vector<16x128xf32>
    %447 = math.tanh %446 : vector<16x128xf32>
    %448 = arith.mulf %443, %447 : vector<16x128xf32>
    %449 = arith.truncf %448 : vector<16x128xf32> to vector<16x128xbf16>
    %450 = tpu.concatenate %386, %418 in 1 : vector<16x128xbf16>, vector<16x128xbf16> -> vector<16x256xbf16>
    %c0_128 = arith.constant 0 : index
    %c0_129 = arith.constant 0 : index
    %451 = vector.load %arg5[%c0_128, %c0_129] : memref<256x512xbf16, #tpu.memory_space<vmem>>, vector<256x512xbf16>
    %cst_130 = arith.constant dense<0.000000e+00> : vector<16x512xf32>
    %452 = tpu.matmul %450, %451, %cst_130 {dimension_numbers = #tpu.dot_dimension_numbers<[1], [0], [0], [1], [0, 0, 1, 1], [], []>} : vector<16x256xbf16>, vector<256x512xbf16>, vector<16x512xf32> -> vector<16x512xf32>
    %c0_131 = arith.constant 0 : index
    %c0_132 = arith.constant 0 : index
    %453 = vector.load %arg6[%c0_131, %c0_132] : memref<1x512xf32, #tpu.memory_space<vmem>>, vector<1x512xf32>
    %454 = vector.broadcast %453 : vector<1x512xf32> to vector<16x512xf32>
    %455 = arith.addf %452, %454 : vector<16x512xf32>
    %456 = vector.extract_strided_slice %455 {offsets = [0, 0], sizes = [16, 128], strides = [1, 1]} : vector<16x512xf32> to vector<16x128xf32>
    %457 = arith.negf %456 : vector<16x128xf32>
    %458 = math.exp %457 : vector<16x128xf32>
    %cst_133 = arith.constant 1.000000e+00 : f32
    %459 = vector.broadcast %cst_133 : f32 to vector<16x128xf32>
    %460 = arith.addf %459, %458 : vector<16x128xf32>
    %461 = arith.divf %459, %460 : vector<16x128xf32>
    %462 = vector.extract_strided_slice %455 {offsets = [0, 128], sizes = [16, 128], strides = [1, 1]} : vector<16x512xf32> to vector<16x128xf32>
    %463 = arith.negf %462 : vector<16x128xf32>
    %464 = math.exp %463 : vector<16x128xf32>
    %cst_134 = arith.constant 1.000000e+00 : f32
    %465 = vector.broadcast %cst_134 : f32 to vector<16x128xf32>
    %466 = arith.addf %465, %464 : vector<16x128xf32>
    %467 = arith.divf %465, %466 : vector<16x128xf32>
    %468 = vector.extract_strided_slice %455 {offsets = [0, 256], sizes = [16, 128], strides = [1, 1]} : vector<16x512xf32> to vector<16x128xf32>
    %469 = math.tanh %468 : vector<16x128xf32>
    %470 = vector.extract_strided_slice %455 {offsets = [0, 384], sizes = [16, 128], strides = [1, 1]} : vector<16x512xf32> to vector<16x128xf32>
    %471 = arith.negf %470 : vector<16x128xf32>
    %472 = math.exp %471 : vector<16x128xf32>
    %cst_135 = arith.constant 1.000000e+00 : f32
    %473 = vector.broadcast %cst_135 : f32 to vector<16x128xf32>
    %474 = arith.addf %473, %472 : vector<16x128xf32>
    %475 = arith.divf %473, %474 : vector<16x128xf32>
    %476 = arith.mulf %467, %415 : vector<16x128xf32>
    %477 = arith.mulf %461, %469 : vector<16x128xf32>
    %478 = arith.addf %476, %477 : vector<16x128xf32>
    %479 = math.tanh %478 : vector<16x128xf32>
    %480 = arith.mulf %475, %479 : vector<16x128xf32>
    %481 = arith.truncf %480 : vector<16x128xf32> to vector<16x128xbf16>
    %c96_136 = arith.constant 96 : index
    %c0_137 = arith.constant 0 : index
    %482 = vector.load %arg24[%c96_136, %c0_137] : memref<128x128xbf16, #tpu.memory_space<vmem>>, vector<16x128xbf16>
    tpu.vector_store %arg24[%c96_136, %c0_137], %481 {strides = array<i32>} : memref<128x128xbf16, #tpu.memory_space<vmem>>, vector<16x128xbf16>,
    %483 = tpu.concatenate %449, %481 in 1 : vector<16x128xbf16>, vector<16x128xbf16> -> vector<16x256xbf16>
    %c0_138 = arith.constant 0 : index
    %c0_139 = arith.constant 0 : index
    %484 = vector.load %arg5[%c0_138, %c0_139] : memref<256x512xbf16, #tpu.memory_space<vmem>>, vector<256x512xbf16>
    %cst_140 = arith.constant dense<0.000000e+00> : vector<16x512xf32>
    %485 = tpu.matmul %483, %484, %cst_140 {dimension_numbers = #tpu.dot_dimension_numbers<[1], [0], [0], [1], [0, 0, 1, 1], [], []>} : vector<16x256xbf16>, vector<256x512xbf16>, vector<16x512xf32> -> vector<16x512xf32>
    %c0_141 = arith.constant 0 : index
    %c0_142 = arith.constant 0 : index
    %486 = vector.load %arg6[%c0_141, %c0_142] : memref<1x512xf32, #tpu.memory_space<vmem>>, vector<1x512xf32>
    %487 = vector.broadcast %486 : vector<1x512xf32> to vector<16x512xf32>
    %488 = arith.addf %485, %487 : vector<16x512xf32>
    %489 = vector.extract_strided_slice %488 {offsets = [0, 0], sizes = [16, 128], strides = [1, 1]} : vector<16x512xf32> to vector<16x128xf32>
    %490 = arith.negf %489 : vector<16x128xf32>
    %491 = math.exp %490 : vector<16x128xf32>
    %cst_143 = arith.constant 1.000000e+00 : f32
    %492 = vector.broadcast %cst_143 : f32 to vector<16x128xf32>
    %493 = arith.addf %492, %491 : vector<16x128xf32>
    %494 = arith.divf %492, %493 : vector<16x128xf32>
    %495 = vector.extract_strided_slice %488 {offsets = [0, 128], sizes = [16, 128], strides = [1, 1]} : vector<16x512xf32> to vector<16x128xf32>
    %496 = arith.negf %495 : vector<16x128xf32>
    %497 = math.exp %496 : vector<16x128xf32>
    %cst_144 = arith.constant 1.000000e+00 : f32
    %498 = vector.broadcast %cst_144 : f32 to vector<16x128xf32>
    %499 = arith.addf %498, %497 : vector<16x128xf32>
    %500 = arith.divf %498, %499 : vector<16x128xf32>
    %501 = vector.extract_strided_slice %488 {offsets = [0, 256], sizes = [16, 128], strides = [1, 1]} : vector<16x512xf32> to vector<16x128xf32>
    %502 = math.tanh %501 : vector<16x128xf32>
    %503 = vector.extract_strided_slice %488 {offsets = [0, 384], sizes = [16, 128], strides = [1, 1]} : vector<16x512xf32> to vector<16x128xf32>
    %504 = arith.negf %503 : vector<16x128xf32>
    %505 = math.exp %504 : vector<16x128xf32>
    %cst_145 = arith.constant 1.000000e+00 : f32
    %506 = vector.broadcast %cst_145 : f32 to vector<16x128xf32>
    %507 = arith.addf %506, %505 : vector<16x128xf32>
    %508 = arith.divf %506, %507 : vector<16x128xf32>
    %509 = arith.mulf %500, %478 : vector<16x128xf32>
    %510 = arith.mulf %494, %502 : vector<16x128xf32>
    %511 = arith.addf %509, %510 : vector<16x128xf32>
    %512 = math.tanh %511 : vector<16x128xf32>
    %513 = arith.mulf %508, %512 : vector<16x128xf32>
    %514 = arith.truncf %513 : vector<16x128xf32> to vector<16x128xbf16>
    %c112_146 = arith.constant 112 : index
    %c0_147 = arith.constant 0 : index
    %515 = vector.load %arg24[%c112_146, %c0_147] : memref<128x128xbf16, #tpu.memory_space<vmem>>, vector<16x128xbf16>
    tpu.vector_store %arg24[%c112_146, %c0_147], %514 {strides = array<i32>} : memref<128x128xbf16, #tpu.memory_space<vmem>>, vector<16x128xbf16>,
    %c0_148 = arith.constant 0 : index
    %c0_149 = arith.constant 0 : index
    %516 = vector.load %arg24[%c0_148, %c0_149] : memref<128x128xbf16, #tpu.memory_space<vmem>>, vector<128x128xbf16>
    %c0_150 = arith.constant 0 : index
    %c0_151 = arith.constant 0 : index
    %517 = vector.load %arg7[%c0_150, %c0_151] : memref<128x512xbf16, #tpu.memory_space<vmem>>, vector<128x128xbf16>
    %c0_152 = arith.constant 0 : index
    %c128 = arith.constant 128 : index
    %518 = vector.load %arg7[%c0_152, %c128] : memref<128x512xbf16, #tpu.memory_space<vmem>>, vector<128x128xbf16>
    %c0_153 = arith.constant 0 : index
    %c256 = arith.constant 256 : index
    %519 = vector.load %arg7[%c0_153, %c256] : memref<128x512xbf16, #tpu.memory_space<vmem>>, vector<128x128xbf16>
    %c0_154 = arith.constant 0 : index
    %c384 = arith.constant 384 : index
    %520 = vector.load %arg7[%c0_154, %c384] : memref<128x512xbf16, #tpu.memory_space<vmem>>, vector<128x128xbf16>
    %c0_155 = arith.constant 0 : index
    %c0_156 = arith.constant 0 : index
    %521 = vector.load %arg8[%c0_155, %c0_156] : memref<1x512xf32, #tpu.memory_space<vmem>>, vector<1x128xf32>
    %c0_157 = arith.constant 0 : index
    %c128_158 = arith.constant 128 : index
    %522 = vector.load %arg8[%c0_157, %c128_158] : memref<1x512xf32, #tpu.memory_space<vmem>>, vector<1x128xf32>
    %c0_159 = arith.constant 0 : index
    %c256_160 = arith.constant 256 : index
    %523 = vector.load %arg8[%c0_159, %c256_160] : memref<1x512xf32, #tpu.memory_space<vmem>>, vector<1x128xf32>
    %c0_161 = arith.constant 0 : index
    %c384_162 = arith.constant 384 : index
    %524 = vector.load %arg8[%c0_161, %c384_162] : memref<1x512xf32, #tpu.memory_space<vmem>>, vector<1x128xf32>
    %cst_163 = arith.constant dense<0.000000e+00> : vector<16x128xf32>
    %525 = tpu.matmul %514, %517, %cst_163 {dimension_numbers = #tpu.dot_dimension_numbers<[1], [0], [0], [1], [0, 0, 1, 1], [], []>} : vector<16x128xbf16>, vector<128x128xbf16>, vector<16x128xf32> -> vector<16x128xf32>
    %526 = vector.broadcast %521 : vector<1x128xf32> to vector<16x128xf32>
    %527 = arith.addf %525, %526 : vector<16x128xf32>
    %cst_164 = arith.constant dense<0.000000e+00> : vector<128x128xf32>
    %528 = tpu.matmul %516, %518, %cst_164 {dimension_numbers = #tpu.dot_dimension_numbers<[1], [0], [0], [1], [0, 0, 1, 1], [], []>} : vector<128x128xbf16>, vector<128x128xbf16>, vector<128x128xf32> -> vector<128x128xf32>
    %529 = vector.broadcast %522 : vector<1x128xf32> to vector<128x128xf32>
    %530 = arith.addf %528, %529 : vector<128x128xf32>
    %cst_165 = arith.constant dense<0.000000e+00> : vector<128x128xf32>
    %531 = tpu.matmul %516, %519, %cst_165 {dimension_numbers = #tpu.dot_dimension_numbers<[1], [0], [0], [1], [0, 0, 1, 1], [], []>} : vector<128x128xbf16>, vector<128x128xbf16>, vector<128x128xf32> -> vector<128x128xf32>
    %532 = vector.broadcast %523 : vector<1x128xf32> to vector<128x128xf32>
    %533 = arith.addf %531, %532 : vector<128x128xf32>
    %534 = vector.shape_cast %530 : vector<128x128xf32> to vector<8x16x128xf32>
    %535 = vector.shape_cast %527 : vector<16x128xf32> to vector<1x16x128xf32>
    %536 = vector.broadcast %535 : vector<1x16x128xf32> to vector<8x16x128xf32>
    %537 = arith.mulf %534, %536 : vector<8x16x128xf32>
    %538 = vector.shape_cast %537 : vector<8x16x128xf32> to vector<128x128xf32>
    %539 = arith.truncf %538 : vector<128x128xf32> to vector<128x128xbf16>
    %c0_166 = arith.constant 0 : index
    %c0_167 = arith.constant 0 : index
    %540 = vector.load %arg9[%c0_166, %c0_167] : memref<128x8xbf16, #tpu.memory_space<vmem>>, vector<128x8xbf16>
    %cst_168 = arith.constant dense<0.000000e+00> : vector<128x8xf32>
    %541 = tpu.matmul %539, %540, %cst_168 {dimension_numbers = #tpu.dot_dimension_numbers<[1], [0], [0], [1], [0, 0, 1, 1], [], []>} : vector<128x128xbf16>, vector<128x8xbf16>, vector<128x8xf32> -> vector<128x8xf32>
    %cst_169 = arith.constant 2.500000e-01 : f32
    %542 = vector.broadcast %cst_169 : f32 to vector<128x8xf32>
    %543 = arith.mulf %541, %542 : vector<128x8xf32>
    %544 = vector.shape_cast %543 : vector<128x8xf32> to vector<8x16x8xf32>
    %cst_170 = arith.constant dense<0xFF800000> : vector<16x8xf32>
    %545 = vector.multi_reduction <maximumf>, %544, %cst_170 [0] : vector<8x16x8xf32> to vector<16x8xf32>
    %546 = vector.shape_cast %545 : vector<16x8xf32> to vector<1x16x8xf32>
    %547 = vector.broadcast %546 : vector<1x16x8xf32> to vector<8x16x8xf32>
    %548 = arith.subf %544, %547 : vector<8x16x8xf32>
    %549 = math.exp %548 : vector<8x16x8xf32>
    %cst_171 = arith.constant dense<0.000000e+00> : vector<16x8xf32>
    %550 = vector.multi_reduction <add>, %549, %cst_171 [0] : vector<8x16x8xf32> to vector<16x8xf32>
    %551 = vector.shape_cast %550 : vector<16x8xf32> to vector<1x16x8xf32>
    %552 = vector.broadcast %551 : vector<1x16x8xf32> to vector<8x16x8xf32>
    %553 = arith.divf %549, %552 : vector<8x16x8xf32>
    %554 = vector.shape_cast %553 : vector<8x16x8xf32> to vector<128x8xf32>
    %555 = arith.truncf %554 : vector<128x8xf32> to vector<128x8xbf16>
    %c0_172 = arith.constant 0 : index
    %c0_173 = arith.constant 0 : index
    %556 = vector.load %arg10[%c0_172, %c0_173] : memref<8x128xbf16, #tpu.memory_space<vmem>>, vector<8x128xbf16>
    %cst_174 = arith.constant dense<0.000000e+00> : vector<128x128xf32>
    %557 = tpu.matmul %555, %556, %cst_174 {dimension_numbers = #tpu.dot_dimension_numbers<[1], [0], [0], [1], [0, 0, 1, 1], [], []>} : vector<128x8xbf16>, vector<8x128xbf16>, vector<128x128xf32> -> vector<128x128xf32>
    %558 = arith.mulf %557, %533 : vector<128x128xf32>
    %559 = vector.shape_cast %558 : vector<128x128xf32> to vector<8x16x128xf32>
    %cst_175 = arith.constant dense<0.000000e+00> : vector<16x128xf32>
    %560 = vector.multi_reduction <add>, %559, %cst_175 [0] : vector<8x16x128xf32> to vector<16x128xf32>
    %561 = arith.truncf %560 : vector<16x128xf32> to vector<16x128xbf16>
    %cst_176 = arith.constant dense<0.000000e+00> : vector<16x128xf32>
    %562 = tpu.matmul %561, %520, %cst_176 {dimension_numbers = #tpu.dot_dimension_numbers<[1], [0], [0], [1], [0, 0, 1, 1], [], []>} : vector<16x128xbf16>, vector<128x128xbf16>, vector<16x128xf32> -> vector<16x128xf32>
    %563 = vector.broadcast %524 : vector<1x128xf32> to vector<16x128xf32>
    %564 = arith.addf %562, %563 : vector<16x128xf32>
    %c0_177 = arith.constant 0 : index
    %c0_178 = arith.constant 0 : index
    %565 = vector.load %arg1[%c0_177, %c0_178] : memref<16x10xf32, #tpu.memory_space<vmem>>, vector<16x10xf32>
    %566 = arith.truncf %565 : vector<16x10xf32> to vector<16x10xbf16>
    %c0_179 = arith.constant 0 : index
    %c0_180 = arith.constant 0 : index
    %567 = vector.load %arg11[%c0_179, %c0_180] : memref<10x64xbf16, #tpu.memory_space<vmem>>, vector<10x64xbf16>
    %cst_181 = arith.constant dense<0.000000e+00> : vector<16x64xf32>
    %568 = tpu.matmul %566, %567, %cst_181 {dimension_numbers = #tpu.dot_dimension_numbers<[1], [0], [0], [1], [0, 0, 1, 1], [], []>} : vector<16x10xbf16>, vector<10x64xbf16>, vector<16x64xf32> -> vector<16x64xf32>
    %c0_182 = arith.constant 0 : index
    %c0_183 = arith.constant 0 : index
    %569 = vector.load %arg12[%c0_182, %c0_183] : memref<1x64xf32, #tpu.memory_space<vmem>>, vector<1x64xf32>
    %570 = vector.broadcast %569 : vector<1x64xf32> to vector<16x64xf32>
    %571 = arith.addf %568, %570 : vector<16x64xf32>
    %cst_184 = arith.constant 0.000000e+00 : f32
    %572 = vector.broadcast %cst_184 : f32 to vector<16x64xf32>
    %573 = arith.maximumf %571, %572 : vector<16x64xf32>
    %574 = arith.truncf %573 : vector<16x64xf32> to vector<16x64xbf16>
    %c0_185 = arith.constant 0 : index
    %c0_186 = arith.constant 0 : index
    %575 = vector.load %arg13[%c0_185, %c0_186] : memref<64x32xbf16, #tpu.memory_space<vmem>>, vector<64x32xbf16>
    %cst_187 = arith.constant dense<0.000000e+00> : vector<16x32xf32>
    %576 = tpu.matmul %574, %575, %cst_187 {dimension_numbers = #tpu.dot_dimension_numbers<[1], [0], [0], [1], [0, 0, 1, 1], [], []>} : vector<16x64xbf16>, vector<64x32xbf16>, vector<16x32xf32> -> vector<16x32xf32>
    %c0_188 = arith.constant 0 : index
    %c0_189 = arith.constant 0 : index
    %577 = vector.load %arg14[%c0_188, %c0_189] : memref<1x32xf32, #tpu.memory_space<vmem>>, vector<1x32xf32>
    %578 = vector.broadcast %577 : vector<1x32xf32> to vector<16x32xf32>
    %579 = arith.addf %576, %578 : vector<16x32xf32>
    %cst_190 = arith.constant 0.000000e+00 : f32
    %580 = vector.broadcast %cst_190 : f32 to vector<16x32xf32>
    %581 = arith.maximumf %579, %580 : vector<16x32xf32>
    %582 = arith.truncf %564 : vector<16x128xf32> to vector<16x128xbf16>
    %c0_191 = arith.constant 0 : index
    %c0_192 = arith.constant 0 : index
    %583 = vector.load %arg15[%c0_191, %c0_192] : memref<128x128xbf16, #tpu.memory_space<vmem>>, vector<128x128xbf16>
    %cst_193 = arith.constant dense<0.000000e+00> : vector<16x128xf32>
    %584 = tpu.matmul %582, %583, %cst_193 {dimension_numbers = #tpu.dot_dimension_numbers<[1], [0], [0], [1], [0, 0, 1, 1], [], []>} : vector<16x128xbf16>, vector<128x128xbf16>, vector<16x128xf32> -> vector<16x128xf32>
    %585 = arith.truncf %581 : vector<16x32xf32> to vector<16x32xbf16>
    %c0_194 = arith.constant 0 : index
    %c0_195 = arith.constant 0 : index
    %586 = vector.load %arg16[%c0_194, %c0_195] : memref<32x128xbf16, #tpu.memory_space<vmem>>, vector<32x128xbf16>
    %cst_196 = arith.constant dense<0.000000e+00> : vector<16x128xf32>
    %587 = tpu.matmul %585, %586, %cst_196 {dimension_numbers = #tpu.dot_dimension_numbers<[1], [0], [0], [1], [0, 0, 1, 1], [], []>} : vector<16x32xbf16>, vector<32x128xbf16>, vector<16x128xf32> -> vector<16x128xf32>
    %588 = arith.addf %584, %587 : vector<16x128xf32>
    %c0_197 = arith.constant 0 : index
    %c0_198 = arith.constant 0 : index
    %589 = vector.load %arg17[%c0_197, %c0_198] : memref<1x128xf32, #tpu.memory_space<vmem>>, vector<1x128xf32>
    %590 = vector.broadcast %589 : vector<1x128xf32> to vector<16x128xf32>
    %591 = arith.addf %588, %590 : vector<16x128xf32>
    %cst_199 = arith.constant 0.000000e+00 : f32
    %592 = vector.broadcast %cst_199 : f32 to vector<16x128xf32>
    %593 = arith.maximumf %591, %592 : vector<16x128xf32>
    %594 = arith.truncf %593 : vector<16x128xf32> to vector<16x128xbf16>
    %c0_200 = arith.constant 0 : index
    %c0_201 = arith.constant 0 : index
    %595 = vector.load %arg18[%c0_200, %c0_201] : memref<128x64xbf16, #tpu.memory_space<vmem>>, vector<128x64xbf16>
    %cst_202 = arith.constant dense<0.000000e+00> : vector<16x64xf32>
    %596 = tpu.matmul %594, %595, %cst_202 {dimension_numbers = #tpu.dot_dimension_numbers<[1], [0], [0], [1], [0, 0, 1, 1], [], []>} : vector<16x128xbf16>, vector<128x64xbf16>, vector<16x64xf32> -> vector<16x64xf32>
    %c0_203 = arith.constant 0 : index
    %c0_204 = arith.constant 0 : index
    %597 = vector.load %arg19[%c0_203, %c0_204] : memref<1x64xf32, #tpu.memory_space<vmem>>, vector<1x64xf32>
    %598 = vector.broadcast %597 : vector<1x64xf32> to vector<16x64xf32>
    %599 = arith.addf %596, %598 : vector<16x64xf32>
    %cst_205 = arith.constant 0.000000e+00 : f32
    %600 = vector.broadcast %cst_205 : f32 to vector<16x64xf32>
    %601 = arith.maximumf %599, %600 : vector<16x64xf32>
    %602 = arith.truncf %601 : vector<16x64xf32> to vector<16x64xbf16>
    %c0_206 = arith.constant 0 : index
    %c0_207 = arith.constant 0 : index
    %603 = vector.load %arg20[%c0_206, %c0_207] : memref<64x10xbf16, #tpu.memory_space<vmem>>, vector<64x10xbf16>
    %cst_208 = arith.constant dense<0.000000e+00> : vector<16x10xf32>
    %604 = tpu.matmul %602, %603, %cst_208 {dimension_numbers = #tpu.dot_dimension_numbers<[1], [0], [0], [1], [0, 0, 1, 1], [], []>} : vector<16x64xbf16>, vector<64x10xbf16>, vector<16x10xf32> -> vector<16x10xf32>
    %c0_209 = arith.constant 0 : index
    %c0_210 = arith.constant 0 : index
    %605 = vector.load %arg21[%c0_209, %c0_210] : memref<1x10xf32, #tpu.memory_space<vmem>>, vector<1x10xf32>
    %606 = vector.broadcast %605 : vector<1x10xf32> to vector<16x10xf32>
    %607 = arith.addf %604, %606 : vector<16x10xf32>
    %608 = arith.negf %607 : vector<16x10xf32>
    %609 = math.exp %608 : vector<16x10xf32>
    %cst_211 = arith.constant 1.000000e+00 : f32
    %610 = vector.broadcast %cst_211 : f32 to vector<16x10xf32>
    %611 = arith.addf %610, %609 : vector<16x10xf32>
    %612 = arith.divf %610, %611 : vector<16x10xf32>
    %c0_212 = arith.constant 0 : index
    %c0_213 = arith.constant 0 : index
    %613 = vector.load %arg22[%c0_212, %c0_213] : memref<16x10xf32, #tpu.memory_space<vmem>>, vector<16x10xf32>
    tpu.vector_store %arg22[%c0_212, %c0_213], %612 {strides = array<i32>} : memref<16x10xf32, #tpu.memory_space<vmem>>, vector<16x10xf32>,
    return
  }
}

</mosaic_0001>

<llo_original>
// kernel: tpu_custom_call.1
$region0: #{tpu_custom_call.1}
  #allocation0 [shape = 'u32[]', space=smem, size = 0x4, offset = 0x4, fixed_abs, tag = 'smem constant byte address 0x4 - core index']
  #allocation1 [shape = 'u32[144,128]{1,0:T(1,128)}', space=vmem, size = 0x12000, scoped, tag = 'internal scratch']
  #allocation2 [shape = 'f32[128,512]{1,0:T(8,128)}', space=vmem, size = 0x40000, scoped, tag = 'scratch operand']
  #allocation3 [shape = 'bf16[128,128]{1,0:T(16,128)(2,1)}', space=vmem, size = 0x8000, scoped, tag = 'scratch operand']
  %s0 = inlined_call_operand.vmem [shape: f32[128,10], index: 0, kind: input, shape index: {}]
  %s1 = inlined_call_operand.vmem [shape: f32[16,10], index: 1, kind: input, shape index: {}]
  %s2 = inlined_call_operand.vmem [shape: bf16[10,512], index: 2, kind: input, shape index: {}]
  %s3 = inlined_call_operand.vmem [shape: bf16[128,512], index: 3, kind: input, shape index: {}]
  %s4 = inlined_call_operand.hbm [shape: f32[1,512], index: 4, kind: input, shape index: {}]
  %s5 = inlined_call_operand.hbm [shape: bf16[256,512], index: 5, kind: input, shape index: {}]
  %s6 = inlined_call_operand.hbm [shape: f32[1,512], index: 6, kind: input, shape index: {}]
  %s7 = inlined_call_operand.hbm [shape: bf16[128,512], index: 7, kind: input, shape index: {}]
  %s8 = inlined_call_operand.hbm [shape: f32[1,512], index: 8, kind: input, shape index: {}]
  %s9 = inlined_call_operand.vmem [shape: bf16[128,8], index: 9, kind: input, shape index: {}]
  %s10 = inlined_call_operand.hbm [shape: bf16[8,128], index: 10, kind: input, shape index: {}]
  %s11 = inlined_call_operand.hbm [shape: bf16[10,64], index: 11, kind: input, shape index: {}]
  %s12 = inlined_call_operand.vmem [shape: f32[1,64], index: 12, kind: input, shape index: {}]
  %s13 = inlined_call_operand.vmem [shape: bf16[64,32], index: 13, kind: input, shape index: {}]
  %s14 = inlined_call_operand.vmem [shape: f32[1,32], index: 14, kind: input, shape index: {}]
  %s15 = inlined_call_operand.vmem [shape: bf16[128,128], index: 15, kind: input, shape index: {}]
  %s16 = inlined_call_operand.vmem [shape: bf16[32,128], index: 16, kind: input, shape index: {}]
  %s17 = inlined_call_operand.vmem [shape: f32[1,128], index: 17, kind: input, shape index: {}]
  %s18 = inlined_call_operand.vmem [shape: bf16[128,64], index: 18, kind: input, shape index: {}]
  %s19 = inlined_call_operand.vmem [shape: f32[1,64], index: 19, kind: input, shape index: {}]
  %s20 = inlined_call_operand.vmem [shape: bf16[64,10], index: 20, kind: input, shape index: {}]
  %s21 = inlined_call_operand.vmem [shape: f32[1,10], index: 21, kind: input, shape index: {}]
  %s22 = inlined_call_operand.hbm [shape: f32[16,10], index: 22, kind: output, shape index: {}]
  %s23 = sld [smem:[#allocation0]]
  $region126: #{tpu_custom_call.1} parent=0
    _
  %s25 = ssub.s32 1, %s23
  %s26 = scalar_select 0, %s25, %s23
  $region1: #{tpu_custom_call.1} parent=0
    #allocation4 [shape = 'u8[2048]{0}', space=vmem, size = 0x800, scoped, tag = 'input window, operand 4, single buffered']
    #allocation5 [shape = 's32[1]{0}', space=sflag, size = 0x4, scoped, tag = 'scoped memory for tpu_custom_call.1']
    #allocation6 [shape = 's32[1]{0}', space=sflag, size = 0x4, scoped, tag = 'scoped memory for tpu_custom_call.1']
    #allocation7 [shape = 'u8[262144]{0}', space=vmem, size = 0x40000, scoped, tag = 'input window, operand 5, single buffered']
    #allocation8 [shape = 's32[1]{0}', space=sflag, size = 0x4, scoped, tag = 'scoped memory for tpu_custom_call.1']
    #allocation9 [shape = 'u8[2048]{0}', space=vmem, size = 0x800, scoped, tag = 'input window, operand 6, single buffered']
    #allocation10 [shape = 'u8[131072]{0}', space=vmem, size = 0x20000, scoped, tag = 'input window, operand 7, single buffered']
    #allocation11 [shape = 's32[1]{0}', space=sflag, size = 0x4, scoped, tag = 'scoped memory for tpu_custom_call.1']
    #allocation12 [shape = 'u8[2048]{0}', space=vmem, size = 0x800, scoped, tag = 'input window, operand 8, single buffered']
    #allocation13 [shape = 'u8[2048]{0}', space=vmem, size = 0x800, scoped, tag = 'input window, operand 10, single buffered']
    #allocation14 [shape = 's32[1]{0}', space=sflag, size = 0x4, scoped, tag = 'scoped memory for tpu_custom_call.1']
    #allocation15 [shape = 'u8[4096]{0}', space=vmem, size = 0x1000, scoped, tag = 'input window, operand 11, single buffered']
    #allocation16 [shape = 'u8[8192]{0}', space=vmem, size = 0x2000, scoped, tag = 'output window, operand 0, single buffered']
    %27 = vsyncpa [#allocation5], 0
    %28 = vsyncpa [#allocation8], 0
    %29 = vsyncpa [#allocation11], 0
    %30 = vsyncpa [#allocation14], 0
    %31 = vsyncpa [#allocation6], 0
    // Predicated region
    $region2: #{tpu_custom_call.1} parent=1 // pred_check
      _
    $region3: #{tpu_custom_call.1} parent=1 // pred_check_branch
      %33 = sbr.rel (0) target = $region5
    $region4: #{tpu_custom_call.1} parent=1 // pred_region
      _
    $region5: #{tpu_custom_call.1} parent=1 // pred_fallthru
      _
    // Predicated region
    $region6: #{tpu_custom_call.1} parent=1 // pred_check
      _
    $region7: #{tpu_custom_call.1} parent=1 // pred_check_branch
      %35 = sbr.rel (0) target = $region9
    $region8: #{tpu_custom_call.1} parent=1 // pred_region
      _
    $region9: #{tpu_custom_call.1} parent=1 // pred_fallthru
      _
    // Predicated region
    $region10: #{tpu_custom_call.1} parent=1 // pred_check
      _
    $region11: #{tpu_custom_call.1} parent=1 // pred_check_branch
      %37 = sbr.rel (0) target = $region13
    $region12: #{tpu_custom_call.1} parent=1 // pred_region
      _
    $region13: #{tpu_custom_call.1} parent=1 // pred_fallthru
      _
    // Predicated region
    $region14: #{tpu_custom_call.1} parent=1 // pred_check
      _
    $region15: #{tpu_custom_call.1} parent=1 // pred_check_branch
      %39 = sbr.rel (0) target = $region17
    $region16: #{tpu_custom_call.1} parent=1 // pred_region
      _
    $region17: #{tpu_custom_call.1} parent=1 // pred_fallthru
      _
    // Predicated region
    $region18: #{tpu_custom_call.1} parent=1 // pred_check
      _
    $region19: #{tpu_custom_call.1} parent=1 // pred_check_branch
      %41 = sbr.rel (0) target = $region21
    $region20: #{tpu_custom_call.1} parent=1 // pred_region
      %s43 = ssub.s32 64, 64
      %44 = vsyncadd [#allocation5], %s43
      %s46 = sshll.u32 [#allocation4], 4
      %s47 = int_to_ptr.vmem [resolvable:$true] %s46
      %49 = dma.hbm_to_vmem [thread:$0]  %s4, 64, %s47, [#allocation5]
    $region21: #{tpu_custom_call.1} parent=1 // pred_fallthru
      _
    // Predicated region
    $region22: #{tpu_custom_call.1} parent=1 // pred_check
      _
    $region23: #{tpu_custom_call.1} parent=1 // pred_check_branch
      %51 = sbr.rel (0) target = $region25
    $region24: #{tpu_custom_call.1} parent=1 // pred_region
      %s53 = ssub.s32 8192, 8192
      %54 = vsyncadd [#allocation8], %s53
      %s55 = sshll.u32 [#allocation7], 4
      %s56 = int_to_ptr.vmem [resolvable:$true] %s55
      %61 = dma.hbm_to_vmem [thread:$0]  %s5, 8192, %s56, [#allocation8], 256, 256, 16
    $region25: #{tpu_custom_call.1} parent=1 // pred_fallthru
      _
    // Predicated region
    $region26: #{tpu_custom_call.1} parent=1 // pred_check
      _
    $region27: #{tpu_custom_call.1} parent=1 // pred_check_branch
      %63 = sbr.rel (0) target = $region29
    $region28: #{tpu_custom_call.1} parent=1 // pred_region
      %s65 = ssub.s32 64, 64
      %66 = vsyncadd [#allocation8], %s65
      %s68 = sshll.u32 [#allocation9], 4
      %s69 = int_to_ptr.vmem [resolvable:$true] %s68
      %71 = dma.hbm_to_vmem [thread:$0]  %s6, 64, %s69, [#allocation8]
    $region29: #{tpu_custom_call.1} parent=1 // pred_fallthru
      _
    // Predicated region
    $region30: #{tpu_custom_call.1} parent=1 // pred_check
      _
    $region31: #{tpu_custom_call.1} parent=1 // pred_check_branch
      %73 = sbr.rel (0) target = $region33
    $region32: #{tpu_custom_call.1} parent=1 // pred_region
      %s75 = ssub.s32 4096, 4096
      %76 = vsyncadd [#allocation11], %s75
      %s77 = sshll.u32 [#allocation10], 4
      %s78 = int_to_ptr.vmem [resolvable:$true] %s77
      %83 = dma.hbm_to_vmem [thread:$0]  %s7, 4096, %s78, [#allocation11], 256, 256, 16
    $region33: #{tpu_custom_call.1} parent=1 // pred_fallthru
      _
    // Predicated region
    $region34: #{tpu_custom_call.1} parent=1 // pred_check
      _
    $region35: #{tpu_custom_call.1} parent=1 // pred_check_branch
      %85 = sbr.rel (0) target = $region37
    $region36: #{tpu_custom_call.1} parent=1 // pred_region
      %s87 = ssub.s32 64, 64
      %88 = vsyncadd [#allocation11], %s87
      %s90 = sshll.u32 [#allocation12], 4
      %s91 = int_to_ptr.vmem [resolvable:$true] %s90
      %93 = dma.hbm_to_vmem [thread:$0]  %s8, 64, %s91, [#allocation11]
    $region37: #{tpu_custom_call.1} parent=1 // pred_fallthru
      _
    // Predicated region
    $region38: #{tpu_custom_call.1} parent=1 // pred_check
      _
    $region39: #{tpu_custom_call.1} parent=1 // pred_check_branch
      %95 = sbr.rel (0) target = $region41
    $region40: #{tpu_custom_call.1} parent=1 // pred_region
      _
    $region41: #{tpu_custom_call.1} parent=1 // pred_fallthru
      _
    // Predicated region
    $region42: #{tpu_custom_call.1} parent=1 // pred_check
      _
    $region43: #{tpu_custom_call.1} parent=1 // pred_check_branch
      %97 = sbr.rel (0) target = $region45
    $region44: #{tpu_custom_call.1} parent=1 // pred_region
      %s99 = ssub.s32 64, 64
      %100 = vsyncadd [#allocation14], %s99
      %s102 = sshll.u32 [#allocation13], 4
      %s103 = int_to_ptr.vmem [resolvable:$true] %s102
      %105 = dma.hbm_to_vmem [thread:$0]  %s10, 64, %s103, [#allocation14]
    $region45: #{tpu_custom_call.1} parent=1 // pred_fallthru
      _
    // Predicated region
    $region46: #{tpu_custom_call.1} parent=1 // pred_check
      _
    $region47: #{tpu_custom_call.1} parent=1 // pred_check_branch
      %107 = sbr.rel (0) target = $region49
    $region48: #{tpu_custom_call.1} parent=1 // pred_region
      %s109 = ssub.s32 128, 128
      %110 = vsyncadd [#allocation14], %s109
      %s111 = sshll.u32 [#allocation15], 4
      %s112 = int_to_ptr.vmem [resolvable:$true] %s111
      %117 = dma.hbm_to_vmem [thread:$0]  %s11, 128, %s112, [#allocation14], 64, 64, 4
    $region49: #{tpu_custom_call.1} parent=1 // pred_fallthru
      _
    // Predicated region
    $region50: #{tpu_custom_call.1} parent=1 // pred_check
      _
    $region51: #{tpu_custom_call.1} parent=1 // pred_check_branch
      %119 = sbr.rel (0) target = $region53
    $region52: #{tpu_custom_call.1} parent=1 // pred_region
      _
    $region53: #{tpu_custom_call.1} parent=1 // pred_fallthru
      _
    // Predicated region
    $region54: #{tpu_custom_call.1} parent=1 // pred_check
      _
    $region55: #{tpu_custom_call.1} parent=1 // pred_check_branch
      %121 = sbr.rel (0) target = $region57
    $region56: #{tpu_custom_call.1} parent=1 // pred_region
      _
    $region57: #{tpu_custom_call.1} parent=1 // pred_fallthru
      _
    // Predicated region
    $region58: #{tpu_custom_call.1} parent=1 // pred_check
      _
    $region59: #{tpu_custom_call.1} parent=1 // pred_check_branch
      %123 = sbr.rel (0) target = $region61
    $region60: #{tpu_custom_call.1} parent=1 // pred_region
      _
    $region61: #{tpu_custom_call.1} parent=1 // pred_fallthru
      _
    // Predicated region
    $region62: #{tpu_custom_call.1} parent=1 // pred_check
      _
    $region63: #{tpu_custom_call.1} parent=1 // pred_check_branch
      %125 = sbr.rel (0) target = $region65
    $region64: #{tpu_custom_call.1} parent=1 // pred_region
      _
    $region65: #{tpu_custom_call.1} parent=1 // pred_fallthru
      _
    // Predicated region
    $region66: #{tpu_custom_call.1} parent=1 // pred_check
      _
    $region67: #{tpu_custom_call.1} parent=1 // pred_check_branch
      %127 = sbr.rel (0) target = $region69
    $region68: #{tpu_custom_call.1} parent=1 // pred_region
      _
    $region69: #{tpu_custom_call.1} parent=1 // pred_fallthru
      _
    // Predicated region
    $region70: #{tpu_custom_call.1} parent=1 // pred_check
      _
    $region71: #{tpu_custom_call.1} parent=1 // pred_check_branch
      %129 = sbr.rel (0) target = $region73
    $region72: #{tpu_custom_call.1} parent=1 // pred_region
      _
    $region73: #{tpu_custom_call.1} parent=1 // pred_fallthru
      _
    // Predicated region
    $region74: #{tpu_custom_call.1} parent=1 // pred_check
      _
    $region75: #{tpu_custom_call.1} parent=1 // pred_check_branch
      %131 = sbr.rel (0) target = $region77
    $region76: #{tpu_custom_call.1} parent=1 // pred_region
      _
    $region77: #{tpu_custom_call.1} parent=1 // pred_fallthru
      _
    // Predicated region
    $region78: #{tpu_custom_call.1} parent=1 // pred_check
      _
    $region79: #{tpu_custom_call.1} parent=1 // pred_check_branch
      %133 = sbr.rel (0) target = $region81
    $region80: #{tpu_custom_call.1} parent=1 // pred_region
      _
    $region81: #{tpu_custom_call.1} parent=1 // pred_fallthru
      _
    // Predicated region
    $region82: #{tpu_custom_call.1} parent=1 // pred_check
      _
    $region83: #{tpu_custom_call.1} parent=1 // pred_check_branch
      %135 = sbr.rel (0) target = $region85
    $region84: #{tpu_custom_call.1} parent=1 // pred_region
      _
    $region85: #{tpu_custom_call.1} parent=1 // pred_fallthru
      _
    // Predicated region
    $region86: #{tpu_custom_call.1} parent=1 // pred_check
      _
    $region87: #{tpu_custom_call.1} parent=1 // pred_check_branch
      %137 = sbr.rel (0) target = $region89
    $region88: #{tpu_custom_call.1} parent=1 // pred_region
      _
    $region89: #{tpu_custom_call.1} parent=1 // pred_fallthru
      _
    // Predicated region
    $region90: #{tpu_custom_call.1} parent=1 // pred_check
      _
    $region91: #{tpu_custom_call.1} parent=1 // pred_check_branch
      %139 = sbr.rel (0) target = $region93
    $region92: #{tpu_custom_call.1} parent=1 // pred_region
      %140 = dma.done [#allocation5], 64
    $region93: #{tpu_custom_call.1} parent=1 // pred_fallthru
      _
    // Predicated region
    $region94: #{tpu_custom_call.1} parent=1 // pred_check
      _
    $region95: #{tpu_custom_call.1} parent=1 // pred_check_branch
      %142 = sbr.rel (0) target = $region97
    $region96: #{tpu_custom_call.1} parent=1 // pred_region
      %143 = dma.done [#allocation8], 8192
    $region97: #{tpu_custom_call.1} parent=1 // pred_fallthru
      _
    // Predicated region
    $region98: #{tpu_custom_call.1} parent=1 // pred_check
      _
    $region99: #{tpu_custom_call.1} parent=1 // pred_check_branch
      %145 = sbr.rel (0) target = $region101
    $region100: #{tpu_custom_call.1} parent=1 // pred_region
      %146 = dma.done [#allocation8], 64
    $region101: #{tpu_custom_call.1} parent=1 // pred_fallthru
      _
    // Predicated region
    $region102: #{tpu_custom_call.1} parent=1 // pred_check
      _
    $region103: #{tpu_custom_call.1} parent=1 // pred_check_branch
      %148 = sbr.rel (0) target = $region105
    $region104: #{tpu_custom_call.1} parent=1 // pred_region
      %149 = dma.done [#allocation11], 4096
    $region105: #{tpu_custom_call.1} parent=1 // pred_fallthru
      _
    // Predicated region
    $region106: #{tpu_custom_call.1} parent=1 // pred_check
      _
    $region107: #{tpu_custom_call.1} parent=1 // pred_check_branch
      %151 = sbr.rel (0) target = $region109
    $region108: #{tpu_custom_call.1} parent=1 // pred_region
      %152 = dma.done [#allocation11], 64
    $region109: #{tpu_custom_call.1} parent=1 // pred_fallthru
      _
    // Predicated region
    $region110: #{tpu_custom_call.1} parent=1 // pred_check
      _
    $region111: #{tpu_custom_call.1} parent=1 // pred_check_branch
      %154 = sbr.rel (0) target = $region113
    $region112: #{tpu_custom_call.1} parent=1 // pred_region
      %155 = dma.done [#allocation14], 64
    $region113: #{tpu_custom_call.1} parent=1 // pred_fallthru
      _
    // Predicated region
    $region114: #{tpu_custom_call.1} parent=1 // pred_check
      _
    $region115: #{tpu_custom_call.1} parent=1 // pred_check_branch
      %157 = sbr.rel (0) target = $region117
    $region116: #{tpu_custom_call.1} parent=1 // pred_region
      %158 = dma.done [#allocation14], 128
    $region117: #{tpu_custom_call.1} parent=1 // pred_fallthru
      _
    %v160 = vld [vmem:[%s0] sm:$0xff]
    %v161 = vld [vmem:[%s0 + $0x8] sm:$0xff]
    %v162 = vld [vmem:[%s0 + $0x10] sm:$0xff]
    %v163 = vld [vmem:[%s0 + $0x18] sm:$0xff]
    %v164 = vld [vmem:[%s0 + $0x20] sm:$0xff]
    %v165 = vld [vmem:[%s0 + $0x28] sm:$0xff]
    %v166 = vld [vmem:[%s0 + $0x30] sm:$0xff]
    %v167 = vld [vmem:[%s0 + $0x38] sm:$0xff]
    %v168 = vld [vmem:[%s0 + $0x40] sm:$0xff]
    %v169 = vld [vmem:[%s0 + $0x48] sm:$0xff]
    %v170 = vld [vmem:[%s0 + $0x50] sm:$0xff]
    %v171 = vld [vmem:[%s0 + $0x58] sm:$0xff]
    %v172 = vld [vmem:[%s0 + $0x60] sm:$0xff]
    %v173 = vld [vmem:[%s0 + $0x68] sm:$0xff]
    %v174 = vld [vmem:[%s0 + $0x70] sm:$0xff]
    %v175 = vld [vmem:[%s0 + $0x78] sm:$0xff]
    %v176 = vpack.c.bf16 %v161, %v160
    %v177 = vpack.c.bf16 %v163, %v162
    %v178 = vpack.c.bf16 %v165, %v164
    %v179 = vpack.c.bf16 %v167, %v166
    %v180 = vpack.c.bf16 %v169, %v168
    %v181 = vpack.c.bf16 %v171, %v170
    %v182 = vpack.c.bf16 %v173, %v172
    %v183 = vpack.c.bf16 %v175, %v174
    %v184 = vld [vmem:[%s2] sm:$0xff]
    %v185 = vld [vmem:[%s2 + $0x8] sm:$0xff]
    %v186 = vld [vmem:[%s2 + $0x10] sm:$0x11]
    %v187 = vld [vmem:[%s2 + $0x18] sm:$0x11]
    %v188 = vld [vmem:[#allocation4] sm:$0xf]
    %v190 = vlaneseq
    %v191 = vshrl.u32 %v190, 7
    %v192 = vsub.s32 0, %v191
    %v193 = vrot.slane %v188, %v192
    %v194 = vlaneseq
    %v195 = vshrl.u32 %v194, 7
    %v196 = vsub.s32 1, %v195
    %v197 = vrot.slane %v188, %v196
    %v198 = vlaneseq
    %v199 = vshrl.u32 %v198, 7
    %v200 = vsub.s32 2, %v199
    %v201 = vrot.slane %v188, %v200
    %v202 = vlaneseq
    %v203 = vshrl.u32 %v202, 7
    %v204 = vsub.s32 3, %v203
    %v205 = vrot.slane %v188, %v204
    %v214 = vunpack.c.l.b16 %v184
    %v215 = vunpack.c.h.b16 %v184
    %v216 = vunpack.c.l.b16 %v185
    %v217 = vunpack.c.h.b16 %v185
    %v218 = vunpack.c.l.b16 %v186
    %v219 = vunpack.c.h.b16 %v186
    %v220 = vunpack.c.l.b16 %v187
    %v221 = vunpack.c.h.b16 %v187
    %v222 = vpack.c.b16 %v218, %v214
    %v223 = vpack.c.b16 %v219, %v215
    %v224 = vpack.c.b16 %v220, %v216
    %v225 = vpack.c.b16 %v221, %v217
    %vm226 = vcmask 80896
    %v228 = vsel %vm226, %v176, 0
    %v231 = vsel %vm226, %v177, 0
    %v234 = vsel %vm226, %v178, 0
    %v237 = vsel %vm226, %v179, 0
    %v240 = vsel %vm226, %v180, 0
    %v243 = vsel %vm226, %v181, 0
    %v246 = vsel %vm226, %v182, 0
    %v249 = vsel %vm226, %v183, 0
    %vm251 = vcmask 1044480
    %v253 = vsel %vm251, %v222, 0
    %v256 = vsel %vm251, %v223, 0
    %v259 = vsel %vm251, %v224, 0
    %v262 = vsel %vm251, %v225, 0
    %264 = vmatprep.subr.bf16.mxu0 %v256
    %265 = vmatpush1.bf16.msra.mxu0 %v253
    %266 = vmatprep.subr.bf16.mxu0 0
    %267 = vmatpush1.bf16.msra.mxu0 0
    %268 = vmatprep.subr.bf16.mxu0 0
    %269 = vmatpush1.bf16.msra.mxu0 0
    %270 = vmatprep.subr.bf16.mxu0 0
    %271 = vmatpush1.bf16.msra.mxu0 0
    %272 = vmatprep.subr.bf16.mxu0 0
    %273 = vmatpush1.bf16.msra.mxu0 0
    %274 = vmatprep.subr.bf16.mxu0 0
    %275 = vmatpush1.bf16.msra.mxu0 0
    %276 = vmatprep.subr.bf16.mxu0 0
    %277 = vmatpush1.bf16.msra.mxu0 0
    %278 = vmatprep.subr.bf16.mxu0 0
    %279 = vmatpush1.bf16.msra.mxu0 0
    %280 = vmatprep.subr.bf16.mxu0 0
    %281 = vmatpush1.bf16.msra.mxu0 0
    %282 = vmatprep.subr.bf16.mxu0 0
    %283 = vmatpush1.bf16.msra.mxu0 0
    %284 = vmatprep.subr.bf16.mxu0 0
    %285 = vmatpush1.bf16.msra.mxu0 0
    %286 = vmatprep.subr.bf16.mxu0 0
    %287 = vmatpush1.bf16.msra.mxu0 0
    %288 = vmatprep.subr.bf16.mxu0 0
    %289 = vmatpush1.bf16.msra.mxu0 0
    %290 = vmatprep.subr.bf16.mxu0 0
    %291 = vmatpush1.bf16.msra.mxu0 0
    %292 = vmatprep.subr.bf16.mxu0 0
    %293 = vmatpush1.bf16.msra.mxu0 0
    %294 = vmatprep.subr.bf16.mxu0 0
    %295 = vmatpush1.bf16.msra.mxu0 0
    %296 = vmatprep.mubr.bf16.mxu0 0
    %297 = vmatmul.mubr.bf16.gmra.mrb[0].mxu0 %v228
    %v298 = vpop.f32.mrb[0].mxu0
    %v299 = vadd.f32 %v193, %v298
    %v300 = vpop.f32.mrb[0].mxu0
    %v301 = vadd.f32 %v197, %v300
    %v302 = vpop.f32.mrb[0].mxu0
    %v303 = vadd.f32 %v193, %v302
    %v304 = vpop.f32.mrb[0].mxu0
    %v305 = vadd.f32 %v197, %v304
    %306 = vmatprep.mubr.bf16.mxu0 0
    %307 = vmatmul.mubr.bf16.gmra.mrb[0].mxu0 %v231
    %v308 = vpop.f32.mrb[0].mxu0
    %v309 = vadd.f32 %v193, %v308
    %v310 = vpop.f32.mrb[0].mxu0
    %v311 = vadd.f32 %v197, %v310
    %v312 = vpop.f32.mrb[0].mxu0
    %v313 = vadd.f32 %v193, %v312
    %v314 = vpop.f32.mrb[0].mxu0
    %v315 = vadd.f32 %v197, %v314
    %316 = vmatprep.mubr.bf16.mxu0 0
    %317 = vmatmul.mubr.bf16.gmra.mrb[0].mxu0 %v234
    %v318 = vpop.f32.mrb[0].mxu0
    %v319 = vadd.f32 %v193, %v318
    %v320 = vpop.f32.mrb[0].mxu0
    %v321 = vadd.f32 %v197, %v320
    %v322 = vpop.f32.mrb[0].mxu0
    %v323 = vadd.f32 %v193, %v322
    %v324 = vpop.f32.mrb[0].mxu0
    %v325 = vadd.f32 %v197, %v324
    %326 = vmatprep.mubr.bf16.mxu0 0
    %327 = vmatmul.mubr.bf16.gmra.mrb[0].mxu0 %v237
    %v328 = vpop.f32.mrb[0].mxu0
    %v329 = vadd.f32 %v193, %v328
    %v330 = vpop.f32.mrb[0].mxu0
    %v331 = vadd.f32 %v197, %v330
    %v332 = vpop.f32.mrb[0].mxu0
    %v333 = vadd.f32 %v193, %v332
    %v334 = vpop.f32.mrb[0].mxu0
    %v335 = vadd.f32 %v197, %v334
    %336 = vmatprep.mubr.bf16.mxu0 0
    %337 = vmatmul.mubr.bf16.gmra.mrb[0].mxu0 %v240
    %v338 = vpop.f32.mrb[0].mxu0
    %v339 = vadd.f32 %v193, %v338
    %v340 = vpop.f32.mrb[0].mxu0
    %v341 = vadd.f32 %v197, %v340
    %v342 = vpop.f32.mrb[0].mxu0
    %v343 = vadd.f32 %v193, %v342
    %v344 = vpop.f32.mrb[0].mxu0
    %v345 = vadd.f32 %v197, %v344
    %346 = vmatprep.mubr.bf16.mxu0 0
    %347 = vmatmul.mubr.bf16.gmra.mrb[0].mxu0 %v243
    %v348 = vpop.f32.mrb[0].mxu0
    %v349 = vadd.f32 %v193, %v348
    %v350 = vpop.f32.mrb[0].mxu0
    %v351 = vadd.f32 %v197, %v350
    %v352 = vpop.f32.mrb[0].mxu0
    %v353 = vadd.f32 %v193, %v352
    %v354 = vpop.f32.mrb[0].mxu0
    %v355 = vadd.f32 %v197, %v354
    %356 = vmatprep.mubr.bf16.mxu0 0
    %357 = vmatmul.mubr.bf16.gmra.mrb[0].mxu0 %v246
    %v358 = vpop.f32.mrb[0].mxu0
    %v359 = vadd.f32 %v193, %v358
    %v360 = vpop.f32.mrb[0].mxu0
    %v361 = vadd.f32 %v197, %v360
    %v362 = vpop.f32.mrb[0].mxu0
    %v363 = vadd.f32 %v193, %v362
    %v364 = vpop.f32.mrb[0].mxu0
    %v365 = vadd.f32 %v197, %v364
    %366 = vmatprep.mubr.bf16.mxu0 0
    %367 = vmatmul.mubr.bf16.gmra.mrb[0].mxu0 %v249
    %v368 = vpop.f32.mrb[0].mxu0
    %v369 = vadd.f32 %v193, %v368
    %v370 = vpop.f32.mrb[0].mxu0
    %v371 = vadd.f32 %v197, %v370
    %v372 = vpop.f32.mrb[0].mxu0
    %v373 = vadd.f32 %v193, %v372
    %v374 = vpop.f32.mrb[0].mxu0
    %v375 = vadd.f32 %v197, %v374
    %376 = vdwg.mxu0
    %377 = vmatprep.subr.bf16.mxu0 %v262
    %378 = vmatpush1.bf16.msra.mxu0 %v259
    %379 = vmatprep.subr.bf16.mxu0 0
    %380 = vmatpush1.bf16.msra.mxu0 0
    %381 = vmatprep.subr.bf16.mxu0 0
    %382 = vmatpush1.bf16.msra.mxu0 0
    %383 = vmatprep.subr.bf16.mxu0 0
    %384 = vmatpush1.bf16.msra.mxu0 0
    %385 = vmatprep.subr.bf16.mxu0 0
    %386 = vmatpush1.bf16.msra.mxu0 0
    %387 = vmatprep.subr.bf16.mxu0 0
    %388 = vmatpush1.bf16.msra.mxu0 0
    %389 = vmatprep.subr.bf16.mxu0 0
    %390 = vmatpush1.bf16.msra.mxu0 0
    %391 = vmatprep.subr.bf16.mxu0 0
    %392 = vmatpush1.bf16.msra.mxu0 0
    %393 = vmatprep.subr.bf16.mxu0 0
    %394 = vmatpush1.bf16.msra.mxu0 0
    %395 = vmatprep.subr.bf16.mxu0 0
    %396 = vmatpush1.bf16.msra.mxu0 0
    %397 = vmatprep.subr.bf16.mxu0 0
    %398 = vmatpush1.bf16.msra.mxu0 0
    %399 = vmatprep.subr.bf16.mxu0 0
    %400 = vmatpush1.bf16.msra.mxu0 0
    %401 = vmatprep.subr.bf16.mxu0 0
    %402 = vmatpush1.bf16.msra.mxu0 0
    %403 = vmatprep.subr.bf16.mxu0 0
    %404 = vmatpush1.bf16.msra.mxu0 0
    %405 = vmatprep.subr.bf16.mxu0 0
    %406 = vmatpush1.bf16.msra.mxu0 0
    %407 = vmatprep.subr.bf16.mxu0 0
    %408 = vmatpush1.bf16.msra.mxu0 0
    %409 = vmatprep.mubr.bf16.mxu0 0
    %410 = vmatmul.mubr.bf16.gmra.mrb[0].mxu0 %v228
    %v411 = vpop.f32.mrb[0].mxu0
    %v412 = vadd.f32 %v201, %v411
    %v413 = vpop.f32.mrb[0].mxu0
    %v414 = vadd.f32 %v205, %v413
    %v415 = vpop.f32.mrb[0].mxu0
    %v416 = vadd.f32 %v201, %v415
    %v417 = vpop.f32.mrb[0].mxu0
    %v418 = vadd.f32 %v205, %v417
    %419 = vmatprep.mubr.bf16.mxu0 0
    %420 = vmatmul.mubr.bf16.gmra.mrb[0].mxu0 %v231
    %v421 = vpop.f32.mrb[0].mxu0
    %v422 = vadd.f32 %v201, %v421
    %v423 = vpop.f32.mrb[0].mxu0
    %v424 = vadd.f32 %v205, %v423
    %v425 = vpop.f32.mrb[0].mxu0
    %v426 = vadd.f32 %v201, %v425
    %v427 = vpop.f32.mrb[0].mxu0
    %v428 = vadd.f32 %v205, %v427
    %429 = vmatprep.mubr.bf16.mxu0 0
    %430 = vmatmul.mubr.bf16.gmra.mrb[0].mxu0 %v234
    %v431 = vpop.f32.mrb[0].mxu0
    %v432 = vadd.f32 %v201, %v431
    %v433 = vpop.f32.mrb[0].mxu0
    %v434 = vadd.f32 %v205, %v433
    %v435 = vpop.f32.mrb[0].mxu0
    %v436 = vadd.f32 %v201, %v435
    %v437 = vpop.f32.mrb[0].mxu0
    %v438 = vadd.f32 %v205, %v437
    %439 = vmatprep.mubr.bf16.mxu0 0
    %440 = vmatmul.mubr.bf16.gmra.mrb[0].mxu0 %v237
    %v441 = vpop.f32.mrb[0].mxu0
    %v442 = vadd.f32 %v201, %v441
    %v443 = vpop.f32.mrb[0].mxu0
    %v444 = vadd.f32 %v205, %v443
    %v445 = vpop.f32.mrb[0].mxu0
    %v446 = vadd.f32 %v201, %v445
    %v447 = vpop.f32.mrb[0].mxu0
    %v448 = vadd.f32 %v205, %v447
    %449 = vmatprep.mubr.bf16.mxu0 0
    %450 = vmatmul.mubr.bf16.gmra.mrb[0].mxu0 %v240
    %v451 = vpop.f32.mrb[0].mxu0
    %v452 = vadd.f32 %v201, %v451
    %v453 = vpop.f32.mrb[0].mxu0
    %v454 = vadd.f32 %v205, %v453
    %v455 = vpop.f32.mrb[0].mxu0
    %v456 = vadd.f32 %v201, %v455
    %v457 = vpop.f32.mrb[0].mxu0
    %v458 = vadd.f32 %v205, %v457
    %459 = vmatprep.mubr.bf16.mxu0 0
    %460 = vmatmul.mubr.bf16.gmra.mrb[0].mxu0 %v243
    %v461 = vpop.f32.mrb[0].mxu0
    %v462 = vadd.f32 %v201, %v461
    %v463 = vpop.f32.mrb[0].mxu0
    %v464 = vadd.f32 %v205, %v463
    %v465 = vpop.f32.mrb[0].mxu0
    %v466 = vadd.f32 %v201, %v465
    %v467 = vpop.f32.mrb[0].mxu0
    %v468 = vadd.f32 %v205, %v467
    %469 = vmatprep.mubr.bf16.mxu0 0
    %470 = vmatmul.mubr.bf16.gmra.mrb[0].mxu0 %v246
    %v471 = vpop.f32.mrb[0].mxu0
    %v472 = vadd.f32 %v201, %v471
    %v473 = vpop.f32.mrb[0].mxu0
    %v474 = vadd.f32 %v205, %v473
    %v475 = vpop.f32.mrb[0].mxu0
    %v476 = vadd.f32 %v201, %v475
    %v477 = vpop.f32.mrb[0].mxu0
    %v478 = vadd.f32 %v205, %v477
    %479 = vmatprep.mubr.bf16.mxu0 0
    %480 = vmatmul.mubr.bf16.gmra.mrb[0].mxu0 %v249
    %v481 = vpop.f32.mrb[0].mxu0
    %v482 = vadd.f32 %v201, %v481
    %v483 = vpop.f32.mrb[0].mxu0
    %v484 = vadd.f32 %v205, %v483
    %v485 = vpop.f32.mrb[0].mxu0
    %v486 = vadd.f32 %v201, %v485
    %v487 = vpop.f32.mrb[0].mxu0
    %v488 = vadd.f32 %v205, %v487
    %489 = vdwg.mxu0
    %490 = vst [vmem:[#allocation2] sm:$0xff] %v299
    %491 = vst [vmem:[#allocation2 + $0x8] sm:$0xff] %v301
    %492 = vst [vmem:[#allocation2 + $0x10] sm:$0xff] %v412
    %493 = vst [vmem:[#allocation2 + $0x18] sm:$0xff] %v414
    %494 = vst [vmem:[#allocation2 + $0x20] sm:$0xff] %v303
    %495 = vst [vmem:[#allocation2 + $0x28] sm:$0xff] %v305
    %496 = vst [vmem:[#allocation2 + $0x30] sm:$0xff] %v416
    %497 = vst [vmem:[#allocation2 + $0x38] sm:$0xff] %v418
    %498 = vst [vmem:[#allocation2 + $0x40] sm:$0xff] %v309
    %499 = vst [vmem:[#allocation2 + $0x48] sm:$0xff] %v311
    %500 = vst [vmem:[#allocation2 + $0x50] sm:$0xff] %v422
    %501 = vst [vmem:[#allocation2 + $0x58] sm:$0xff] %v424
    %502 = vst [vmem:[#allocation2 + $0x60] sm:$0xff] %v313
    %503 = vst [vmem:[#allocation2 + $0x68] sm:$0xff] %v315
    %504 = vst [vmem:[#allocation2 + $0x70] sm:$0xff] %v426
    %505 = vst [vmem:[#allocation2 + $0x78] sm:$0xff] %v428
    %506 = vst [vmem:[#allocation2 + $0x80] sm:$0xff] %v319
    %507 = vst [vmem:[#allocation2 + $0x88] sm:$0xff] %v321
    %508 = vst [vmem:[#allocation2 + $0x90] sm:$0xff] %v432
    %509 = vst [vmem:[#allocation2 + $0x98] sm:$0xff] %v434
    %510 = vst [vmem:[#allocation2 + $0xa0] sm:$0xff] %v323
    %511 = vst [vmem:[#allocation2 + $0xa8] sm:$0xff] %v325
    %512 = vst [vmem:[#allocation2 + $0xb0] sm:$0xff] %v436
    %513 = vst [vmem:[#allocation2 + $0xb8] sm:$0xff] %v438
    %514 = vst [vmem:[#allocation2 + $0xc0] sm:$0xff] %v329
    %515 = vst [vmem:[#allocation2 + $0xc8] sm:$0xff] %v331
    %516 = vst [vmem:[#allocation2 + $0xd0] sm:$0xff] %v442
    %517 = vst [vmem:[#allocation2 + $0xd8] sm:$0xff] %v444
    %518 = vst [vmem:[#allocation2 + $0xe0] sm:$0xff] %v333
    %519 = vst [vmem:[#allocation2 + $0xe8] sm:$0xff] %v335
    %520 = vst [vmem:[#allocation2 + $0xf0] sm:$0xff] %v446
    %521 = vst [vmem:[#allocation2 + $0xf8] sm:$0xff] %v448
    %522 = vst [vmem:[#allocation2 + $0x100] sm:$0xff] %v339
    %523 = vst [vmem:[#allocation2 + $0x108] sm:$0xff] %v341
    %524 = vst [vmem:[#allocation2 + $0x110] sm:$0xff] %v452
    %525 = vst [vmem:[#allocation2 + $0x118] sm:$0xff] %v454
    %526 = vst [vmem:[#allocation2 + $0x120] sm:$0xff] %v343
    %527 = vst [vmem:[#allocation2 + $0x128] sm:$0xff] %v345
    %528 = vst [vmem:[#allocation2 + $0x130] sm:$0xff] %v456
    %529 = vst [vmem:[#allocation2 + $0x138] sm:$0xff] %v458
    %530 = vst [vmem:[#allocation2 + $0x140] sm:$0xff] %v349
    %531 = vst [vmem:[#allocation2 + $0x148] sm:$0xff] %v351
    %532 = vst [vmem:[#allocation2 + $0x150] sm:$0xff] %v462
    %533 = vst [vmem:[#allocation2 + $0x158] sm:$0xff] %v464
    %534 = vst [vmem:[#allocation2 + $0x160] sm:$0xff] %v353
    %535 = vst [vmem:[#allocation2 + $0x168] sm:$0xff] %v355
    %536 = vst [vmem:[#allocation2 + $0x170] sm:$0xff] %v466
    %537 = vst [vmem:[#allocation2 + $0x178] sm:$0xff] %v468
    %538 = vst [vmem:[#allocation2 + $0x180] sm:$0xff] %v359
    %539 = vst [vmem:[#allocation2 + $0x188] sm:$0xff] %v361
    %540 = vst [vmem:[#allocation2 + $0x190] sm:$0xff] %v472
    %541 = vst [vmem:[#allocation2 + $0x198] sm:$0xff] %v474
    %542 = vst [vmem:[#allocation2 + $0x1a0] sm:$0xff] %v363
    %543 = vst [vmem:[#allocation2 + $0x1a8] sm:$0xff] %v365
    %544 = vst [vmem:[#allocation2 + $0x1b0] sm:$0xff] %v476
    %545 = vst [vmem:[#allocation2 + $0x1b8] sm:$0xff] %v478
    %546 = vst [vmem:[#allocation2 + $0x1c0] sm:$0xff] %v369
    %547 = vst [vmem:[#allocation2 + $0x1c8] sm:$0xff] %v371
    %548 = vst [vmem:[#allocation2 + $0x1d0] sm:$0xff] %v482
    %549 = vst [vmem:[#allocation2 + $0x1d8] sm:$0xff] %v484
    %550 = vst [vmem:[#allocation2 + $0x1e0] sm:$0xff] %v373
    %551 = vst [vmem:[#allocation2 + $0x1e8] sm:$0xff] %v375
    %552 = vst [vmem:[#allocation2 + $0x1f0] sm:$0xff] %v486
    %553 = vst [vmem:[#allocation2 + $0x1f8] sm:$0xff] %v488
    %v554 = vld [vmem:[#allocation2] sm:$0xff]
    %v555 = vld [vmem:[#allocation2 + $0x8] sm:$0xff]
    %v556 = vld [vmem:[#allocation2 + $0x10] sm:$0xff]
    %v557 = vld [vmem:[#allocation2 + $0x18] sm:$0xff]
    %v558 = vld [vmem:[#allocation2 + $0x20] sm:$0xff]
    %v559 = vld [vmem:[#allocation2 + $0x28] sm:$0xff]
    %v560 = vld [vmem:[#allocation2 + $0x30] sm:$0xff]
    %v561 = vld [vmem:[#allocation2 + $0x38] sm:$0xff]
    %v562 = vld [vmem:[%s3] sm:$0xff]
    %v563 = vld [vmem:[%s3 + $0x8] sm:$0xff]
    %v564 = vld [vmem:[%s3 + $0x10] sm:$0xff]
    %v565 = vld [vmem:[%s3 + $0x18] sm:$0xff]
    %v566 = vld [vmem:[%s3 + $0x20] sm:$0xff]
    %v567 = vld [vmem:[%s3 + $0x28] sm:$0xff]
    %v568 = vld [vmem:[%s3 + $0x30] sm:$0xff]
    %v569 = vld [vmem:[%s3 + $0x38] sm:$0xff]
    %v570 = vld [vmem:[%s3 + $0x40] sm:$0xff]
    %v571 = vld [vmem:[%s3 + $0x48] sm:$0xff]
    %v572 = vld [vmem:[%s3 + $0x50] sm:$0xff]
    %v573 = vld [vmem:[%s3 + $0x58] sm:$0xff]
    %v574 = vld [vmem:[%s3 + $0x60] sm:$0xff]
    %v575 = vld [vmem:[%s3 + $0x68] sm:$0xff]
    %v576 = vld [vmem:[%s3 + $0x70] sm:$0xff]
    %v577 = vld [vmem:[%s3 + $0x78] sm:$0xff]
    %v578 = vld [vmem:[%s3 + $0x80] sm:$0xff]
    %v579 = vld [vmem:[%s3 + $0x88] sm:$0xff]
    %v580 = vld [vmem:[%s3 + $0x90] sm:$0xff]
    %v581 = vld [vmem:[%s3 + $0x98] sm:$0xff]
    %v582 = vld [vmem:[%s3 + $0xa0] sm:$0xff]
    %v583 = vld [vmem:[%s3 + $0xa8] sm:$0xff]
    %v584 = vld [vmem:[%s3 + $0xb0] sm:$0xff]
    %v585 = vld [vmem:[%s3 + $0xb8] sm:$0xff]
    %v586 = vld [vmem:[%s3 + $0xc0] sm:$0xff]
    %v587 = vld [vmem:[%s3 + $0xc8] sm:$0xff]
    %v588 = vld [vmem:[%s3 + $0xd0] sm:$0xff]
    %v589 = vld [vmem:[%s3 + $0xd8] sm:$0xff]
    %v590 = vld [vmem:[%s3 + $0xe0] sm:$0xff]
    %v591 = vld [vmem:[%s3 + $0xe8] sm:$0xff]
    %v592 = vld [vmem:[%s3 + $0xf0] sm:$0xff]
    %v593 = vld [vmem:[%s3 + $0xf8] sm:$0xff]
    %v626 = vunpack.c.l.b16 %v562
    %v627 = vunpack.c.h.b16 %v562
    %v628 = vunpack.c.l.b16 %v563
    %v629 = vunpack.c.h.b16 %v563
    %v630 = vunpack.c.l.b16 %v564
    %v631 = vunpack.c.h.b16 %v564
    %v632 = vunpack.c.l.b16 %v565
    %v633 = vunpack.c.h.b16 %v565
    %v634 = vunpack.c.l.b16 %v566
    %v635 = vunpack.c.h.b16 %v566
    %v636 = vunpack.c.l.b16 %v567
    %v637 = vunpack.c.h.b16 %v567
    %v638 = vunpack.c.l.b16 %v568
    %v639 = vunpack.c.h.b16 %v568
    %v640 = vunpack.c.l.b16 %v569
    %v641 = vunpack.c.h.b16 %v569
    %v642 = vunpack.c.l.b16 %v570
    %v643 = vunpack.c.h.b16 %v570
    %v644 = vunpack.c.l.b16 %v571
    %v645 = vunpack.c.h.b16 %v571
    %v646 = vunpack.c.l.b16 %v572
    %v647 = vunpack.c.h.b16 %v572
    %v648 = vunpack.c.l.b16 %v573
    %v649 = vunpack.c.h.b16 %v573
    %v650 = vunpack.c.l.b16 %v574
    %v651 = vunpack.c.h.b16 %v574
    %v652 = vunpack.c.l.b16 %v575
    %v653 = vunpack.c.h.b16 %v575
    %v654 = vunpack.c.l.b16 %v576
    %v655 = vunpack.c.h.b16 %v576
    %v656 = vunpack.c.l.b16 %v577
    %v657 = vunpack.c.h.b16 %v577
    %v658 = vunpack.c.l.b16 %v578
    %v659 = vunpack.c.h.b16 %v578
    %v660 = vunpack.c.l.b16 %v579
    %v661 = vunpack.c.h.b16 %v579
    %v662 = vunpack.c.l.b16 %v580
    %v663 = vunpack.c.h.b16 %v580
    %v664 = vunpack.c.l.b16 %v581
    %v665 = vunpack.c.h.b16 %v581
    %v666 = vunpack.c.l.b16 %v582
    %v667 = vunpack.c.h.b16 %v582
    %v668 = vunpack.c.l.b16 %v583
    %v669 = vunpack.c.h.b16 %v583
    %v670 = vunpack.c.l.b16 %v584
    %v671 = vunpack.c.h.b16 %v584
    %v672 = vunpack.c.l.b16 %v585
    %v673 = vunpack.c.h.b16 %v585
    %v674 = vunpack.c.l.b16 %v586
    %v675 = vunpack.c.h.b16 %v586
    %v676 = vunpack.c.l.b16 %v587
    %v677 = vunpack.c.h.b16 %v587
    %v678 = vunpack.c.l.b16 %v588
    %v679 = vunpack.c.h.b16 %v588
    %v680 = vunpack.c.l.b16 %v589
    %v681 = vunpack.c.h.b16 %v589
    %v682 = vunpack.c.l.b16 %v590
    %v683 = vunpack.c.h.b16 %v590
    %v684 = vunpack.c.l.b16 %v591
    %v685 = vunpack.c.h.b16 %v591
    %v686 = vunpack.c.l.b16 %v592
    %v687 = vunpack.c.h.b16 %v592
    %v688 = vunpack.c.l.b16 %v593
    %v689 = vunpack.c.h.b16 %v593
    %v690 = vpack.c.b16 %v630, %v626
    %v691 = vpack.c.b16 %v631, %v627
    %v692 = vpack.c.b16 %v632, %v628
    %v693 = vpack.c.b16 %v633, %v629
    %v694 = vpack.c.b16 %v638, %v634
    %v695 = vpack.c.b16 %v639, %v635
    %v696 = vpack.c.b16 %v640, %v636
    %v697 = vpack.c.b16 %v641, %v637
    %v698 = vpack.c.b16 %v646, %v642
    %v699 = vpack.c.b16 %v647, %v643
    %v700 = vpack.c.b16 %v648, %v644
    %v701 = vpack.c.b16 %v649, %v645
    %v702 = vpack.c.b16 %v654, %v650
    %v703 = vpack.c.b16 %v655, %v651
    %v704 = vpack.c.b16 %v656, %v652
    %v705 = vpack.c.b16 %v657, %v653
    %v706 = vpack.c.b16 %v662, %v658
    %v707 = vpack.c.b16 %v663, %v659
    %v708 = vpack.c.b16 %v664, %v660
    %v709 = vpack.c.b16 %v665, %v661
    %v710 = vpack.c.b16 %v670, %v666
    %v711 = vpack.c.b16 %v671, %v667
    %v712 = vpack.c.b16 %v672, %v668
    %v713 = vpack.c.b16 %v673, %v669
    %v714 = vpack.c.b16 %v678, %v674
    %v715 = vpack.c.b16 %v679, %v675
    %v716 = vpack.c.b16 %v680, %v676
    %v717 = vpack.c.b16 %v681, %v677
    %v718 = vpack.c.b16 %v686, %v682
    %v719 = vpack.c.b16 %v687, %v683
    %v720 = vpack.c.b16 %v688, %v684
    %v721 = vpack.c.b16 %v689, %v685
    %754 = vmatprep.subr.bf16.mxu0 %v691
    %755 = vmatpush1.bf16.msra.mxu0 %v690
    %756 = vmatprep.subr.bf16.mxu0 %v695
    %757 = vmatpush1.bf16.msra.mxu0 %v694
    %758 = vmatprep.subr.bf16.mxu0 %v699
    %759 = vmatpush1.bf16.msra.mxu0 %v698
    %760 = vmatprep.subr.bf16.mxu0 %v703
    %761 = vmatpush1.bf16.msra.mxu0 %v702
    %762 = vmatprep.subr.bf16.mxu0 %v707
    %763 = vmatpush1.bf16.msra.mxu0 %v706
    %764 = vmatprep.subr.bf16.mxu0 %v711
    %765 = vmatpush1.bf16.msra.mxu0 %v710
    %766 = vmatprep.subr.bf16.mxu0 %v715
    %767 = vmatpush1.bf16.msra.mxu0 %v714
    %768 = vmatprep.subr.bf16.mxu0 %v719
    %769 = vmatpush1.bf16.msra.mxu0 %v718
    %770 = vmatprep.subr.bf16.mxu0 0
    %771 = vmatpush1.bf16.msra.mxu0 0
    %772 = vmatprep.subr.bf16.mxu0 0
    %773 = vmatpush1.bf16.msra.mxu0 0
    %774 = vmatprep.subr.bf16.mxu0 0
    %775 = vmatpush1.bf16.msra.mxu0 0
    %776 = vmatprep.subr.bf16.mxu0 0
    %777 = vmatpush1.bf16.msra.mxu0 0
    %778 = vmatprep.subr.bf16.mxu0 0
    %779 = vmatpush1.bf16.msra.mxu0 0
    %780 = vmatprep.subr.bf16.mxu0 0
    %781 = vmatpush1.bf16.msra.mxu0 0
    %782 = vmatprep.subr.bf16.mxu0 0
    %783 = vmatpush1.bf16.msra.mxu0 0
    %784 = vmatprep.subr.bf16.mxu0 0
    %785 = vmatpush1.bf16.msra.mxu0 0
    %786 = vmatprep.mubr.bf16.mxu0 0
    %787 = vmatmul.mubr.bf16.gmra.mrb[0].mxu0 0
    %v788 = vpop.f32.mrb[0].mxu0
    %v789 = vadd.f32 0.0, %v788
    %v790 = vpop.f32.mrb[0].mxu0
    %v791 = vadd.f32 0.0, %v790
    %v792 = vpop.f32.mrb[0].mxu0
    %v793 = vadd.f32 0.0, %v792
    %v794 = vpop.f32.mrb[0].mxu0
    %v795 = vadd.f32 0.0, %v794
    %796 = vdwg.mxu0
    %797 = vmatprep.subr.bf16.mxu0 %v693
    %798 = vmatpush1.bf16.msra.mxu0 %v692
    %799 = vmatprep.subr.bf16.mxu0 %v697
    %800 = vmatpush1.bf16.msra.mxu0 %v696
    %801 = vmatprep.subr.bf16.mxu0 %v701
    %802 = vmatpush1.bf16.msra.mxu0 %v700
    %803 = vmatprep.subr.bf16.mxu0 %v705
    %804 = vmatpush1.bf16.msra.mxu0 %v704
    %805 = vmatprep.subr.bf16.mxu0 %v709
    %806 = vmatpush1.bf16.msra.mxu0 %v708
    %807 = vmatprep.subr.bf16.mxu0 %v713
    %808 = vmatpush1.bf16.msra.mxu0 %v712
    %809 = vmatprep.subr.bf16.mxu0 %v717
    %810 = vmatpush1.bf16.msra.mxu0 %v716
    %811 = vmatprep.subr.bf16.mxu0 %v721
    %812 = vmatpush1.bf16.msra.mxu0 %v720
    %813 = vmatprep.subr.bf16.mxu0 0
    %814 = vmatpush1.bf16.msra.mxu0 0
    %815 = vmatprep.subr.bf16.mxu0 0
    %816 = vmatpush1.bf16.msra.mxu0 0
    %817 = vmatprep.subr.bf16.mxu0 0
    %818 = vmatpush1.bf16.msra.mxu0 0
    %819 = vmatprep.subr.bf16.mxu0 0
    %820 = vmatpush1.bf16.msra.mxu0 0
    %821 = vmatprep.subr.bf16.mxu0 0
    %822 = vmatpush1.bf16.msra.mxu0 0
    %823 = vmatprep.subr.bf16.mxu0 0
    %824 = vmatpush1.bf16.msra.mxu0 0
    %825 = vmatprep.subr.bf16.mxu0 0
    %826 = vmatpush1.bf16.msra.mxu0 0
    %827 = vmatprep.subr.bf16.mxu0 0
    %828 = vmatpush1.bf16.msra.mxu0 0
    %829 = vmatprep.mubr.bf16.mxu0 0
    %830 = vmatmul.mubr.bf16.gmra.mrb[0].mxu0 0
    %v831 = vpop.f32.mrb[0].mxu0
    %v832 = vadd.f32 0.0, %v831
    %v833 = vpop.f32.mrb[0].mxu0
    %v834 = vadd.f32 0.0, %v833
    %v835 = vpop.f32.mrb[0].mxu0
    %v836 = vadd.f32 0.0, %v835
    %v837 = vpop.f32.mrb[0].mxu0
    %v838 = vadd.f32 0.0, %v837
    %839 = vdwg.mxu0
    %v840 = vadd.f32 %v554, %v789
    %v841 = vadd.f32 %v555, %v791
    %v842 = vadd.f32 %v556, %v832
    %v843 = vadd.f32 %v557, %v834
    %v844 = vadd.f32 %v558, %v793
    %v845 = vadd.f32 %v559, %v795
    %v846 = vadd.f32 %v560, %v836
    %v847 = vadd.f32 %v561, %v838
    %v848 = vxor.u32 %v840, 2147483648
    %v849 = vxor.u32 %v844, 2147483648
    %v850 = vmul.f32 %v848, 1.442695
    %v851 = vpow.pop %v850
    %v852 = vmul.f32 %v849, 1.442695
    %v853 = vpow.pop %v852
    %v854 = vadd.f32 %v851, 1.0
    %v855 = vadd.f32 %v853, 1.0
    %v856 = vrcp.pop %v854
    %v857 = vmul.f32 1.0, %v856
    %v858 = vrcp.pop %v855
    %v859 = vmul.f32 1.0, %v858
    %v860 = vxor.u32 %v841, 2147483648
    %v861 = vxor.u32 %v845, 2147483648
    %v862 = vmul.f32 %v860, 1.442695
    %v863 = vpow.pop %v862
    %v864 = vmul.f32 %v861, 1.442695
    %v865 = vpow.pop %v864
    %v866 = vadd.f32 %v863, 1.0
    %v867 = vadd.f32 %v865, 1.0
    %v868 = vrcp.pop %v866
    %v869 = vmul.f32 1.0, %v868
    %v870 = vrcp.pop %v867
    %v871 = vmul.f32 1.0, %v870
    %v872 = vtanh.pop %v842
    %v873 = vtanh.pop %v846
    %v874 = vxor.u32 %v843, 2147483648
    %v875 = vxor.u32 %v847, 2147483648
    %v876 = vmul.f32 %v874, 1.442695
    %v877 = vpow.pop %v876
    %v878 = vmul.f32 %v875, 1.442695
    %v879 = vpow.pop %v878
    %v880 = vadd.f32 %v877, 1.0
    %v881 = vadd.f32 %v879, 1.0
    %v882 = vrcp.pop %v880
    %v883 = vmul.f32 1.0, %v882
    %v884 = vrcp.pop %v881
    %v885 = vmul.f32 1.0, %v884
    %v886 = vmul.f32 %v869, 0.0
    %v887 = vmul.f32 %v871, 0.0
    %v888 = vmul.f32 %v857, %v872
    %v889 = vmul.f32 %v859, %v873
    %v890 = vadd.f32 %v886, %v888
    %v891 = vadd.f32 %v887, %v889
    %v892 = vtanh.pop %v890
    %v893 = vtanh.pop %v891
    %v894 = vmul.f32 %v883, %v892
    %v895 = vmul.f32 %v885, %v893
    %v896 = vpack.c.bf16 %v895, %v894
    %v897 = vld [vmem:[#allocation2 + $0x40] sm:$0xff]
    %v898 = vld [vmem:[#allocation2 + $0x48] sm:$0xff]
    %v899 = vld [vmem:[#allocation2 + $0x50] sm:$0xff]
    %v900 = vld [vmem:[#allocation2 + $0x58] sm:$0xff]
    %v901 = vld [vmem:[#allocation2 + $0x60] sm:$0xff]
    %v902 = vld [vmem:[#allocation2 + $0x68] sm:$0xff]
    %v903 = vld [vmem:[#allocation2 + $0x70] sm:$0xff]
    %v904 = vld [vmem:[#allocation2 + $0x78] sm:$0xff]
    %905 = vmatprep.subr.bf16.mxu0 %v691
    %906 = vmatpush1.bf16.msra.mxu0 %v690
    %907 = vmatprep.subr.bf16.mxu0 %v695
    %908 = vmatpush1.bf16.msra.mxu0 %v694
    %909 = vmatprep.subr.bf16.mxu0 %v699
    %910 = vmatpush1.bf16.msra.mxu0 %v698
    %911 = vmatprep.subr.bf16.mxu0 %v703
    %912 = vmatpush1.bf16.msra.mxu0 %v702
    %913 = vmatprep.subr.bf16.mxu0 %v707
    %914 = vmatpush1.bf16.msra.mxu0 %v706
    %915 = vmatprep.subr.bf16.mxu0 %v711
    %916 = vmatpush1.bf16.msra.mxu0 %v710
    %917 = vmatprep.subr.bf16.mxu0 %v715
    %918 = vmatpush1.bf16.msra.mxu0 %v714
    %919 = vmatprep.subr.bf16.mxu0 %v719
    %920 = vmatpush1.bf16.msra.mxu0 %v718
    %921 = vmatprep.subr.bf16.mxu0 0
    %922 = vmatpush1.bf16.msra.mxu0 0
    %923 = vmatprep.subr.bf16.mxu0 0
    %924 = vmatpush1.bf16.msra.mxu0 0
    %925 = vmatprep.subr.bf16.mxu0 0
    %926 = vmatpush1.bf16.msra.mxu0 0
    %927 = vmatprep.subr.bf16.mxu0 0
    %928 = vmatpush1.bf16.msra.mxu0 0
    %929 = vmatprep.subr.bf16.mxu0 0
    %930 = vmatpush1.bf16.msra.mxu0 0
    %931 = vmatprep.subr.bf16.mxu0 0
    %932 = vmatpush1.bf16.msra.mxu0 0
    %933 = vmatprep.subr.bf16.mxu0 0
    %934 = vmatpush1.bf16.msra.mxu0 0
    %935 = vmatprep.subr.bf16.mxu0 0
    %936 = vmatpush1.bf16.msra.mxu0 0
    %937 = vmatprep.mubr.bf16.mxu0 0
    %938 = vmatmul.mubr.bf16.gmra.mrb[0].mxu0 %v896
    %v939 = vpop.f32.mrb[0].mxu0
    %v940 = vadd.f32 0.0, %v939
    %v941 = vpop.f32.mrb[0].mxu0
    %v942 = vadd.f32 0.0, %v941
    %v943 = vpop.f32.mrb[0].mxu0
    %v944 = vadd.f32 0.0, %v943
    %v945 = vpop.f32.mrb[0].mxu0
    %v946 = vadd.f32 0.0, %v945
    %947 = vdwg.mxu0
    %948 = vmatprep.subr.bf16.mxu0 %v693
    %949 = vmatpush1.bf16.msra.mxu0 %v692
    %950 = vmatprep.subr.bf16.mxu0 %v697
    %951 = vmatpush1.bf16.msra.mxu0 %v696
    %952 = vmatprep.subr.bf16.mxu0 %v701
    %953 = vmatpush1.bf16.msra.mxu0 %v700
    %954 = vmatprep.subr.bf16.mxu0 %v705
    %955 = vmatpush1.bf16.msra.mxu0 %v704
    %956 = vmatprep.subr.bf16.mxu0 %v709
    %957 = vmatpush1.bf16.msra.mxu0 %v708
    %958 = vmatprep.subr.bf16.mxu0 %v713
    %959 = vmatpush1.bf16.msra.mxu0 %v712
    %960 = vmatprep.subr.bf16.mxu0 %v717
    %961 = vmatpush1.bf16.msra.mxu0 %v716
    %962 = vmatprep.subr.bf16.mxu0 %v721
    %963 = vmatpush1.bf16.msra.mxu0 %v720
    %964 = vmatprep.subr.bf16.mxu0 0
    %965 = vmatpush1.bf16.msra.mxu0 0
    %966 = vmatprep.subr.bf16.mxu0 0
    %967 = vmatpush1.bf16.msra.mxu0 0
    %968 = vmatprep.subr.bf16.mxu0 0
    %969 = vmatpush1.bf16.msra.mxu0 0
    %970 = vmatprep.subr.bf16.mxu0 0
    %971 = vmatpush1.bf16.msra.mxu0 0
    %972 = vmatprep.subr.bf16.mxu0 0
    %973 = vmatpush1.bf16.msra.mxu0 0
    %974 = vmatprep.subr.bf16.mxu0 0
    %975 = vmatpush1.bf16.msra.mxu0 0
    %976 = vmatprep.subr.bf16.mxu0 0
    %977 = vmatpush1.bf16.msra.mxu0 0
    %978 = vmatprep.subr.bf16.mxu0 0
    %979 = vmatpush1.bf16.msra.mxu0 0
    %980 = vmatprep.mubr.bf16.mxu0 0
    %981 = vmatmul.mubr.bf16.gmra.mrb[0].mxu0 %v896
    %v982 = vpop.f32.mrb[0].mxu0
    %v983 = vadd.f32 0.0, %v982
    %v984 = vpop.f32.mrb[0].mxu0
    %v985 = vadd.f32 0.0, %v984
    %v986 = vpop.f32.mrb[0].mxu0
    %v987 = vadd.f32 0.0, %v986
    %v988 = vpop.f32.mrb[0].mxu0
    %v989 = vadd.f32 0.0, %v988
    %990 = vdwg.mxu0
    %v991 = vadd.f32 %v897, %v940
    %v992 = vadd.f32 %v898, %v942
    %v993 = vadd.f32 %v899, %v983
    %v994 = vadd.f32 %v900, %v985
    %v995 = vadd.f32 %v901, %v944
    %v996 = vadd.f32 %v902, %v946
    %v997 = vadd.f32 %v903, %v987
    %v998 = vadd.f32 %v904, %v989
    %v999 = vxor.u32 %v991, 2147483648
    %v1000 = vxor.u32 %v995, 2147483648
    %v1001 = vmul.f32 %v999, 1.442695
    %v1002 = vpow.pop %v1001
    %v1003 = vmul.f32 %v1000, 1.442695
    %v1004 = vpow.pop %v1003
    %v1005 = vadd.f32 %v1002, 1.0
    %v1006 = vadd.f32 %v1004, 1.0
    %v1007 = vrcp.pop %v1005
    %v1008 = vmul.f32 1.0, %v1007
    %v1009 = vrcp.pop %v1006
    %v1010 = vmul.f32 1.0, %v1009
    %v1011 = vxor.u32 %v992, 2147483648
    %v1012 = vxor.u32 %v996, 2147483648
    %v1013 = vmul.f32 %v1011, 1.442695
    %v1014 = vpow.pop %v1013
    %v1015 = vmul.f32 %v1012, 1.442695
    %v1016 = vpow.pop %v1015
    %v1017 = vadd.f32 %v1014, 1.0
    %v1018 = vadd.f32 %v1016, 1.0
    %v1019 = vrcp.pop %v1017
    %v1020 = vmul.f32 1.0, %v1019
    %v1021 = vrcp.pop %v1018
    %v1022 = vmul.f32 1.0, %v1021
    %v1023 = vtanh.pop %v993
    %v1024 = vtanh.pop %v997
    %v1025 = vxor.u32 %v994, 2147483648
    %v1026 = vxor.u32 %v998, 2147483648
    %v1027 = vmul.f32 %v1025, 1.442695
    %v1028 = vpow.pop %v1027
    %v1029 = vmul.f32 %v1026, 1.442695
    %v1030 = vpow.pop %v1029
    %v1031 = vadd.f32 %v1028, 1.0
    %v1032 = vadd.f32 %v1030, 1.0
    %v1033 = vrcp.pop %v1031
    %v1034 = vmul.f32 1.0, %v1033
    %v1035 = vrcp.pop %v1032
    %v1036 = vmul.f32 1.0, %v1035
    %v1037 = vmul.f32 %v1020, %v890
    %v1038 = vmul.f32 %v1022, %v891
    %v1039 = vmul.f32 %v1008, %v1023
    %v1040 = vmul.f32 %v1010, %v1024
    %v1041 = vadd.f32 %v1037, %v1039
    %v1042 = vadd.f32 %v1038, %v1040
    %v1043 = vtanh.pop %v1041
    %v1044 = vtanh.pop %v1042
    %v1045 = vmul.f32 %v1034, %v1043
    %v1046 = vmul.f32 %v1036, %v1044
    %v1047 = vpack.c.bf16 %v1046, %v1045
    %v1048 = vld [vmem:[#allocation7] sm:$0xff]
    %v1049 = vld [vmem:[#allocation7 + $0x8] sm:$0xff]
    %v1050 = vld [vmem:[#allocation7 + $0x10] sm:$0xff]
    %v1051 = vld [vmem:[#allocation7 + $0x18] sm:$0xff]
    %v1052 = vld [vmem:[#allocation7 + $0x20] sm:$0xff]
    %v1053 = vld [vmem:[#allocation7 + $0x28] sm:$0xff]
    %v1054 = vld [vmem:[#allocation7 + $0x30] sm:$0xff]
    %v1055 = vld [vmem:[#allocation7 + $0x38] sm:$0xff]
    %v1056 = vld [vmem:[#allocation7 + $0x40] sm:$0xff]
    %v1057 = vld [vmem:[#allocation7 + $0x48] sm:$0xff]
    %v1058 = vld [vmem:[#allocation7 + $0x50] sm:$0xff]
    %v1059 = vld [vmem:[#allocation7 + $0x58] sm:$0xff]
    %v1060 = vld [vmem:[#allocation7 + $0x60] sm:$0xff]
    %v1061 = vld [vmem:[#allocation7 + $0x68] sm:$0xff]
    %v1062 = vld [vmem:[#allocation7 + $0x70] sm:$0xff]
    %v1063 = vld [vmem:[#allocation7 + $0x78] sm:$0xff]
    %v1064 = vld [vmem:[#allocation7 + $0x80] sm:$0xff]
    %v1065 = vld [vmem:[#allocation7 + $0x88] sm:$0xff]
    %v1066 = vld [vmem:[#allocation7 + $0x90] sm:$0xff]
    %v1067 = vld [vmem:[#allocation7 + $0x98] sm:$0xff]
    %v1068 = vld [vmem:[#allocation7 + $0xa0] sm:$0xff]
    %v1069 = vld [vmem:[#allocation7 + $0xa8] sm:$0xff]
    %v1070 = vld [vmem:[#allocation7 + $0xb0] sm:$0xff]
    %v1071 = vld [vmem:[#allocation7 + $0xb8] sm:$0xff]
    %v1072 = vld [vmem:[#allocation7 + $0xc0] sm:$0xff]
    %v1073 = vld [vmem:[#allocation7 + $0xc8] sm:$0xff]
    %v1074 = vld [vmem:[#allocation7 + $0xd0] sm:$0xff]
    %v1075 = vld [vmem:[#allocation7 + $0xd8] sm:$0xff]
    %v1076 = vld [vmem:[#allocation7 + $0xe0] sm:$0xff]
    %v1077 = vld [vmem:[#allocation7 + $0xe8] sm:$0xff]
    %v1078 = vld [vmem:[#allocation7 + $0xf0] sm:$0xff]
    %v1079 = vld [vmem:[#allocation7 + $0xf8] sm:$0xff]
    %v1080 = vld [vmem:[#allocation7 + $0x100] sm:$0xff]
    %v1081 = vld [vmem:[#allocation7 + $0x108] sm:$0xff]
    %v1082 = vld [vmem:[#allocation7 + $0x110] sm:$0xff]
    %v1083 = vld [vmem:[#allocation7 + $0x118] sm:$0xff]
    %v1084 = vld [vmem:[#allocation7 + $0x120] sm:$0xff]
    %v1085 = vld [vmem:[#allocation7 + $0x128] sm:$0xff]
    %v1086 = vld [vmem:[#allocation7 + $0x130] sm:$0xff]
    %v1087 = vld [vmem:[#allocation7 + $0x138] sm:$0xff]
    %v1088 = vld [vmem:[#allocation7 + $0x140] sm:$0xff]
    %v1089 = vld [vmem:[#allocation7 + $0x148] sm:$0xff]
    %v1090 = vld [vmem:[#allocation7 + $0x150] sm:$0xff]
    %v1091 = vld [vmem:[#allocation7 + $0x158] sm:$0xff]
    %v1092 = vld [vmem:[#allocation7 + $0x160] sm:$0xff]
    %v1093 = vld [vmem:[#allocation7 + $0x168] sm:$0xff]
    %v1094 = vld [vmem:[#allocation7 + $0x170] sm:$0xff]
    %v1095 = vld [vmem:[#allocation7 + $0x178] sm:$0xff]
    %v1096 = vld [vmem:[#allocation7 + $0x180] sm:$0xff]
    %v1097 = vld [vmem:[#allocation7 + $0x188] sm:$0xff]
    %v1098 = vld [vmem:[#allocation7 + $0x190] sm:$0xff]
    %v1099 = vld [vmem:[#allocation7 + $0x198] sm:$0xff]
    %v1100 = vld [vmem:[#allocation7 + $0x1a0] sm:$0xff]
    %v1101 = vld [vmem:[#allocation7 + $0x1a8] sm:$0xff]
    %v1102 = vld [vmem:[#allocation7 + $0x1b0] sm:$0xff]
    %v1103 = vld [vmem:[#allocation7 + $0x1b8] sm:$0xff]
    %v1104 = vld [vmem:[#allocation7 + $0x1c0] sm:$0xff]
    %v1105 = vld [vmem:[#allocation7 + $0x1c8] sm:$0xff]
    %v1106 = vld [vmem:[#allocation7 + $0x1d0] sm:$0xff]
    %v1107 = vld [vmem:[#allocation7 + $0x1d8] sm:$0xff]
    %v1108 = vld [vmem:[#allocation7 + $0x1e0] sm:$0xff]
    %v1109 = vld [vmem:[#allocation7 + $0x1e8] sm:$0xff]
    %v1110 = vld [vmem:[#allocation7 + $0x1f0] sm:$0xff]
    %v1111 = vld [vmem:[#allocation7 + $0x1f8] sm:$0xff]
    %v1112 = vld [vmem:[#allocation9] sm:$0xf]
    %v1114 = vlaneseq
    %v1115 = vshrl.u32 %v1114, 7
    %v1116 = vsub.s32 0, %v1115
    %v1117 = vrot.slane %v1112, %v1116
    %v1118 = vlaneseq
    %v1119 = vshrl.u32 %v1118, 7
    %v1120 = vsub.s32 1, %v1119
    %v1121 = vrot.slane %v1112, %v1120
    %v1122 = vlaneseq
    %v1123 = vshrl.u32 %v1122, 7
    %v1124 = vsub.s32 2, %v1123
    %v1125 = vrot.slane %v1112, %v1124
    %v1126 = vlaneseq
    %v1127 = vshrl.u32 %v1126, 7
    %v1128 = vsub.s32 3, %v1127
    %v1129 = vrot.slane %v1112, %v1128
    %v1198 = vunpack.c.l.b16 %v1048
    %v1199 = vunpack.c.h.b16 %v1048
    %v1200 = vunpack.c.l.b16 %v1049
    %v1201 = vunpack.c.h.b16 %v1049
    %v1202 = vunpack.c.l.b16 %v1050
    %v1203 = vunpack.c.h.b16 %v1050
    %v1204 = vunpack.c.l.b16 %v1051
    %v1205 = vunpack.c.h.b16 %v1051
    %v1206 = vunpack.c.l.b16 %v1052
    %v1207 = vunpack.c.h.b16 %v1052
    %v1208 = vunpack.c.l.b16 %v1053
    %v1209 = vunpack.c.h.b16 %v1053
    %v1210 = vunpack.c.l.b16 %v1054
    %v1211 = vunpack.c.h.b16 %v1054
    %v1212 = vunpack.c.l.b16 %v1055
    %v1213 = vunpack.c.h.b16 %v1055
    %v1214 = vunpack.c.l.b16 %v1056
    %v1215 = vunpack.c.h.b16 %v1056
    %v1216 = vunpack.c.l.b16 %v1057
    %v1217 = vunpack.c.h.b16 %v1057
    %v1218 = vunpack.c.l.b16 %v1058
    %v1219 = vunpack.c.h.b16 %v1058
    %v1220 = vunpack.c.l.b16 %v1059
    %v1221 = vunpack.c.h.b16 %v1059
    %v1222 = vunpack.c.l.b16 %v1060
    %v1223 = vunpack.c.h.b16 %v1060
    %v1224 = vunpack.c.l.b16 %v1061
    %v1225 = vunpack.c.h.b16 %v1061
    %v1226 = vunpack.c.l.b16 %v1062
    %v1227 = vunpack.c.h.b16 %v1062
    %v1228 = vunpack.c.l.b16 %v1063
    %v1229 = vunpack.c.h.b16 %v1063
    %v1230 = vunpack.c.l.b16 %v1064
    %v1231 = vunpack.c.h.b16 %v1064
    %v1232 = vunpack.c.l.b16 %v1065
    %v1233 = vunpack.c.h.b16 %v1065
    %v1234 = vunpack.c.l.b16 %v1066
    %v1235 = vunpack.c.h.b16 %v1066
    %v1236 = vunpack.c.l.b16 %v1067
    %v1237 = vunpack.c.h.b16 %v1067
    %v1238 = vunpack.c.l.b16 %v1068
    %v1239 = vunpack.c.h.b16 %v1068
    %v1240 = vunpack.c.l.b16 %v1069
    %v1241 = vunpack.c.h.b16 %v1069
    %v1242 = vunpack.c.l.b16 %v1070
    %v1243 = vunpack.c.h.b16 %v1070
    %v1244 = vunpack.c.l.b16 %v1071
    %v1245 = vunpack.c.h.b16 %v1071
    %v1246 = vunpack.c.l.b16 %v1072
    %v1247 = vunpack.c.h.b16 %v1072
    %v1248 = vunpack.c.l.b16 %v1073
    %v1249 = vunpack.c.h.b16 %v1073
    %v1250 = vunpack.c.l.b16 %v1074
    %v1251 = vunpack.c.h.b16 %v1074
    %v1252 = vunpack.c.l.b16 %v1075
    %v1253 = vunpack.c.h.b16 %v1075
    %v1254 = vunpack.c.l.b16 %v1076
    %v1255 = vunpack.c.h.b16 %v1076
    %v1256 = vunpack.c.l.b16 %v1077
    %v1257 = vunpack.c.h.b16 %v1077
    %v1258 = vunpack.c.l.b16 %v1078
    %v1259 = vunpack.c.h.b16 %v1078
    %v1260 = vunpack.c.l.b16 %v1079
    %v1261 = vunpack.c.h.b16 %v1079
    %v1262 = vunpack.c.l.b16 %v1080
    %v1263 = vunpack.c.h.b16 %v1080
    %v1264 = vunpack.c.l.b16 %v1081
    %v1265 = vunpack.c.h.b16 %v1081
    %v1266 = vunpack.c.l.b16 %v1082
    %v1267 = vunpack.c.h.b16 %v1082
    %v1268 = vunpack.c.l.b16 %v1083
    %v1269 = vunpack.c.h.b16 %v1083
    %v1270 = vunpack.c.l.b16 %v1084
    %v1271 = vunpack.c.h.b16 %v1084
    %v1272 = vunpack.c.l.b16 %v1085
    %v1273 = vunpack.c.h.b16 %v1085
    %v1274 = vunpack.c.l.b16 %v1086
    %v1275 = vunpack.c.h.b16 %v1086
    %v1276 = vunpack.c.l.b16 %v1087
    %v1277 = vunpack.c.h.b16 %v1087
    %v1278 = vunpack.c.l.b16 %v1088
    %v1279 = vunpack.c.h.b16 %v1088
    %v1280 = vunpack.c.l.b16 %v1089
    %v1281 = vunpack.c.h.b16 %v1089
    %v1282 = vunpack.c.l.b16 %v1090
    %v1283 = vunpack.c.h.b16 %v1090
    %v1284 = vunpack.c.l.b16 %v1091
    %v1285 = vunpack.c.h.b16 %v1091
    %v1286 = vunpack.c.l.b16 %v1092
    %v1287 = vunpack.c.h.b16 %v1092
    %v1288 = vunpack.c.l.b16 %v1093
    %v1289 = vunpack.c.h.b16 %v1093
    %v1290 = vunpack.c.l.b16 %v1094
    %v1291 = vunpack.c.h.b16 %v1094
    %v1292 = vunpack.c.l.b16 %v1095
    %v1293 = vunpack.c.h.b16 %v1095
    %v1294 = vunpack.c.l.b16 %v1096
    %v1295 = vunpack.c.h.b16 %v1096
    %v1296 = vunpack.c.l.b16 %v1097
    %v1297 = vunpack.c.h.b16 %v1097
    %v1298 = vunpack.c.l.b16 %v1098
    %v1299 = vunpack.c.h.b16 %v1098
    %v1300 = vunpack.c.l.b16 %v1099
    %v1301 = vunpack.c.h.b16 %v1099
    %v1302 = vunpack.c.l.b16 %v1100
    %v1303 = vunpack.c.h.b16 %v1100
    %v1304 = vunpack.c.l.b16 %v1101
    %v1305 = vunpack.c.h.b16 %v1101
    %v1306 = vunpack.c.l.b16 %v1102
    %v1307 = vunpack.c.h.b16 %v1102
    %v1308 = vunpack.c.l.b16 %v1103
    %v1309 = vunpack.c.h.b16 %v1103
    %v1310 = vunpack.c.l.b16 %v1104
    %v1311 = vunpack.c.h.b16 %v1104
    %v1312 = vunpack.c.l.b16 %v1105
    %v1313 = vunpack.c.h.b16 %v1105
    %v1314 = vunpack.c.l.b16 %v1106
    %v1315 = vunpack.c.h.b16 %v1106
    %v1316 = vunpack.c.l.b16 %v1107
    %v1317 = vunpack.c.h.b16 %v1107
    %v1318 = vunpack.c.l.b16 %v1108
    %v1319 = vunpack.c.h.b16 %v1108
    %v1320 = vunpack.c.l.b16 %v1109
    %v1321 = vunpack.c.h.b16 %v1109
    %v1322 = vunpack.c.l.b16 %v1110
    %v1323 = vunpack.c.h.b16 %v1110
    %v1324 = vunpack.c.l.b16 %v1111
    %v1325 = vunpack.c.h.b16 %v1111
    %v1326 = vpack.c.b16 %v1202, %v1198
    %v1327 = vpack.c.b16 %v1203, %v1199
    %v1328 = vpack.c.b16 %v1204, %v1200
    %v1329 = vpack.c.b16 %v1205, %v1201
    %v1330 = vpack.c.b16 %v1210, %v1206
    %v1331 = vpack.c.b16 %v1211, %v1207
    %v1332 = vpack.c.b16 %v1212, %v1208
    %v1333 = vpack.c.b16 %v1213, %v1209
    %v1334 = vpack.c.b16 %v1218, %v1214
    %v1335 = vpack.c.b16 %v1219, %v1215
    %v1336 = vpack.c.b16 %v1220, %v1216
    %v1337 = vpack.c.b16 %v1221, %v1217
    %v1338 = vpack.c.b16 %v1226, %v1222
    %v1339 = vpack.c.b16 %v1227, %v1223
    %v1340 = vpack.c.b16 %v1228, %v1224
    %v1341 = vpack.c.b16 %v1229, %v1225
    %v1342 = vpack.c.b16 %v1234, %v1230
    %v1343 = vpack.c.b16 %v1235, %v1231
    %v1344 = vpack.c.b16 %v1236, %v1232
    %v1345 = vpack.c.b16 %v1237, %v1233
    %v1346 = vpack.c.b16 %v1242, %v1238
    %v1347 = vpack.c.b16 %v1243, %v1239
    %v1348 = vpack.c.b16 %v1244, %v1240
    %v1349 = vpack.c.b16 %v1245, %v1241
    %v1350 = vpack.c.b16 %v1250, %v1246
    %v1351 = vpack.c.b16 %v1251, %v1247
    %v1352 = vpack.c.b16 %v1252, %v1248
    %v1353 = vpack.c.b16 %v1253, %v1249
    %v1354 = vpack.c.b16 %v1258, %v1254
    %v1355 = vpack.c.b16 %v1259, %v1255
    %v1356 = vpack.c.b16 %v1260, %v1256
    %v1357 = vpack.c.b16 %v1261, %v1257
    %v1358 = vpack.c.b16 %v1266, %v1262
    %v1359 = vpack.c.b16 %v1267, %v1263
    %v1360 = vpack.c.b16 %v1268, %v1264
    %v1361 = vpack.c.b16 %v1269, %v1265
    %v1362 = vpack.c.b16 %v1274, %v1270
    %v1363 = vpack.c.b16 %v1275, %v1271
    %v1364 = vpack.c.b16 %v1276, %v1272
    %v1365 = vpack.c.b16 %v1277, %v1273
    %v1366 = vpack.c.b16 %v1282, %v1278
    %v1367 = vpack.c.b16 %v1283, %v1279
    %v1368 = vpack.c.b16 %v1284, %v1280
    %v1369 = vpack.c.b16 %v1285, %v1281
    %v1370 = vpack.c.b16 %v1290, %v1286
    %v1371 = vpack.c.b16 %v1291, %v1287
    %v1372 = vpack.c.b16 %v1292, %v1288
    %v1373 = vpack.c.b16 %v1293, %v1289
    %v1374 = vpack.c.b16 %v1298, %v1294
    %v1375 = vpack.c.b16 %v1299, %v1295
    %v1376 = vpack.c.b16 %v1300, %v1296
    %v1377 = vpack.c.b16 %v1301, %v1297
    %v1378 = vpack.c.b16 %v1306, %v1302
    %v1379 = vpack.c.b16 %v1307, %v1303
    %v1380 = vpack.c.b16 %v1308, %v1304
    %v1381 = vpack.c.b16 %v1309, %v1305
    %v1382 = vpack.c.b16 %v1314, %v1310
    %v1383 = vpack.c.b16 %v1315, %v1311
    %v1384 = vpack.c.b16 %v1316, %v1312
    %v1385 = vpack.c.b16 %v1317, %v1313
    %v1386 = vpack.c.b16 %v1322, %v1318
    %v1387 = vpack.c.b16 %v1323, %v1319
    %v1388 = vpack.c.b16 %v1324, %v1320
    %v1389 = vpack.c.b16 %v1325, %v1321
    %1454 = vmatprep.subr.bf16.mxu0 %v1327
    %1455 = vmatpush1.bf16.msra.mxu0 %v1326
    %1456 = vmatprep.subr.bf16.mxu0 %v1331
    %1457 = vmatpush1.bf16.msra.mxu0 %v1330
    %1458 = vmatprep.subr.bf16.mxu0 %v1335
    %1459 = vmatpush1.bf16.msra.mxu0 %v1334
    %1460 = vmatprep.subr.bf16.mxu0 %v1339
    %1461 = vmatpush1.bf16.msra.mxu0 %v1338
    %1462 = vmatprep.subr.bf16.mxu0 %v1343
    %1463 = vmatpush1.bf16.msra.mxu0 %v1342
    %1464 = vmatprep.subr.bf16.mxu0 %v1347
    %1465 = vmatpush1.bf16.msra.mxu0 %v1346
    %1466 = vmatprep.subr.bf16.mxu0 %v1351
    %1467 = vmatpush1.bf16.msra.mxu0 %v1350
    %1468 = vmatprep.subr.bf16.mxu0 %v1355
    %1469 = vmatpush1.bf16.msra.mxu0 %v1354
    %1470 = vmatprep.subr.bf16.mxu0 %v1359
    %1471 = vmatpush1.bf16.msra.mxu0 %v1358
    %1472 = vmatprep.subr.bf16.mxu0 %v1363
    %1473 = vmatpush1.bf16.msra.mxu0 %v1362
    %1474 = vmatprep.subr.bf16.mxu0 %v1367
    %1475 = vmatpush1.bf16.msra.mxu0 %v1366
    %1476 = vmatprep.subr.bf16.mxu0 %v1371
    %1477 = vmatpush1.bf16.msra.mxu0 %v1370
    %1478 = vmatprep.subr.bf16.mxu0 %v1375
    %1479 = vmatpush1.bf16.msra.mxu0 %v1374
    %1480 = vmatprep.subr.bf16.mxu0 %v1379
    %1481 = vmatpush1.bf16.msra.mxu0 %v1378
    %1482 = vmatprep.subr.bf16.mxu0 %v1383
    %1483 = vmatpush1.bf16.msra.mxu0 %v1382
    %1484 = vmatprep.subr.bf16.mxu0 %v1387
    %1485 = vmatpush1.bf16.msra.mxu0 %v1386
    %1486 = vmatprep.mubr.bf16.mxu0 0
    %1487 = vmatmul.mubr.bf16.gmra.mrb[0].mxu0 %v896
    %v1488 = vpop.f32.mrb[0].mxu0
    %v1489 = vadd.f32 %v1117, %v1488
    %v1490 = vpop.f32.mrb[0].mxu0
    %v1491 = vadd.f32 %v1121, %v1490
    %v1492 = vpop.f32.mrb[0].mxu0
    %v1493 = vadd.f32 %v1117, %v1492
    %v1494 = vpop.f32.mrb[0].mxu0
    %v1495 = vadd.f32 %v1121, %v1494
    %1496 = vdwg.mxu0
    %1497 = vmatprep.subr.bf16.mxu0 %v1329
    %1498 = vmatpush1.bf16.msra.mxu0 %v1328
    %1499 = vmatprep.subr.bf16.mxu0 %v1333
    %1500 = vmatpush1.bf16.msra.mxu0 %v1332
    %1501 = vmatprep.subr.bf16.mxu0 %v1337
    %1502 = vmatpush1.bf16.msra.mxu0 %v1336
    %1503 = vmatprep.subr.bf16.mxu0 %v1341
    %1504 = vmatpush1.bf16.msra.mxu0 %v1340
    %1505 = vmatprep.subr.bf16.mxu0 %v1345
    %1506 = vmatpush1.bf16.msra.mxu0 %v1344
    %1507 = vmatprep.subr.bf16.mxu0 %v1349
    %1508 = vmatpush1.bf16.msra.mxu0 %v1348
    %1509 = vmatprep.subr.bf16.mxu0 %v1353
    %1510 = vmatpush1.bf16.msra.mxu0 %v1352
    %1511 = vmatprep.subr.bf16.mxu0 %v1357
    %1512 = vmatpush1.bf16.msra.mxu0 %v1356
    %1513 = vmatprep.subr.bf16.mxu0 %v1361
    %1514 = vmatpush1.bf16.msra.mxu0 %v1360
    %1515 = vmatprep.subr.bf16.mxu0 %v1365
    %1516 = vmatpush1.bf16.msra.mxu0 %v1364
    %1517 = vmatprep.subr.bf16.mxu0 %v1369
    %1518 = vmatpush1.bf16.msra.mxu0 %v1368
    %1519 = vmatprep.subr.bf16.mxu0 %v1373
    %1520 = vmatpush1.bf16.msra.mxu0 %v1372
    %1521 = vmatprep.subr.bf16.mxu0 %v1377
    %1522 = vmatpush1.bf16.msra.mxu0 %v1376
    %1523 = vmatprep.subr.bf16.mxu0 %v1381
    %1524 = vmatpush1.bf16.msra.mxu0 %v1380
    %1525 = vmatprep.subr.bf16.mxu0 %v1385
    %1526 = vmatpush1.bf16.msra.mxu0 %v1384
    %1527 = vmatprep.subr.bf16.mxu0 %v1389
    %1528 = vmatpush1.bf16.msra.mxu0 %v1388
    %1529 = vmatprep.mubr.bf16.mxu0 0
    %1530 = vmatmul.mubr.bf16.gmra.mrb[0].mxu0 %v896
    %v1531 = vpop.f32.mrb[0].mxu0
    %v1532 = vadd.f32 %v1125, %v1531
    %v1533 = vpop.f32.mrb[0].mxu0
    %v1534 = vadd.f32 %v1129, %v1533
    %v1535 = vpop.f32.mrb[0].mxu0
    %v1536 = vadd.f32 %v1125, %v1535
    %v1537 = vpop.f32.mrb[0].mxu0
    %v1538 = vadd.f32 %v1129, %v1537
    %1539 = vdwg.mxu0
    %v1540 = vxor.u32 %v1489, 2147483648
    %v1541 = vxor.u32 %v1493, 2147483648
    %v1542 = vmul.f32 %v1540, 1.442695
    %v1543 = vpow.pop %v1542
    %v1544 = vmul.f32 %v1541, 1.442695
    %v1545 = vpow.pop %v1544
    %v1546 = vadd.f32 %v1543, 1.0
    %v1547 = vadd.f32 %v1545, 1.0
    %v1548 = vrcp.pop %v1546
    %v1549 = vmul.f32 1.0, %v1548
    %v1550 = vrcp.pop %v1547
    %v1551 = vmul.f32 1.0, %v1550
    %v1552 = vxor.u32 %v1491, 2147483648
    %v1553 = vxor.u32 %v1495, 2147483648
    %v1554 = vmul.f32 %v1552, 1.442695
    %v1555 = vpow.pop %v1554
    %v1556 = vmul.f32 %v1553, 1.442695
    %v1557 = vpow.pop %v1556
    %v1558 = vadd.f32 %v1555, 1.0
    %v1559 = vadd.f32 %v1557, 1.0
    %v1560 = vrcp.pop %v1558
    %v1561 = vmul.f32 1.0, %v1560
    %v1562 = vrcp.pop %v1559
    %v1563 = vmul.f32 1.0, %v1562
    %v1564 = vtanh.pop %v1532
    %v1565 = vtanh.pop %v1536
    %v1566 = vxor.u32 %v1534, 2147483648
    %v1567 = vxor.u32 %v1538, 2147483648
    %v1568 = vmul.f32 %v1566, 1.442695
    %v1569 = vpow.pop %v1568
    %v1570 = vmul.f32 %v1567, 1.442695
    %v1571 = vpow.pop %v1570
    %v1572 = vadd.f32 %v1569, 1.0
    %v1573 = vadd.f32 %v1571, 1.0
    %v1574 = vrcp.pop %v1572
    %v1575 = vmul.f32 1.0, %v1574
    %v1576 = vrcp.pop %v1573
    %v1577 = vmul.f32 1.0, %v1576
    %v1578 = vmul.f32 %v1561, 0.0
    %v1579 = vmul.f32 %v1563, 0.0
    %v1580 = vmul.f32 %v1549, %v1564
    %v1581 = vmul.f32 %v1551, %v1565
    %v1582 = vadd.f32 %v1578, %v1580
    %v1583 = vadd.f32 %v1579, %v1581
    %v1584 = vtanh.pop %v1582
    %v1585 = vtanh.pop %v1583
    %v1586 = vmul.f32 %v1575, %v1584
    %v1587 = vmul.f32 %v1577, %v1585
    %v1588 = vpack.c.bf16 %v1587, %v1586
    %1589 = vst [vmem:[#allocation3] sm:$0xff] %v1588
    %v1590 = vld [vmem:[#allocation2 + $0x80] sm:$0xff]
    %v1591 = vld [vmem:[#allocation2 + $0x88] sm:$0xff]
    %v1592 = vld [vmem:[#allocation2 + $0x90] sm:$0xff]
    %v1593 = vld [vmem:[#allocation2 + $0x98] sm:$0xff]
    %v1594 = vld [vmem:[#allocation2 + $0xa0] sm:$0xff]
    %v1595 = vld [vmem:[#allocation2 + $0xa8] sm:$0xff]
    %v1596 = vld [vmem:[#allocation2 + $0xb0] sm:$0xff]
    %v1597 = vld [vmem:[#allocation2 + $0xb8] sm:$0xff]
    %v1598 = vld [vmem:[%s3] sm:$0xff]
    %v1599 = vld [vmem:[%s3 + $0x8] sm:$0xff]
    %v1600 = vld [vmem:[%s3 + $0x10] sm:$0xff]
    %v1601 = vld [vmem:[%s3 + $0x18] sm:$0xff]
    %v1602 = vld [vmem:[%s3 + $0x20] sm:$0xff]
    %v1603 = vld [vmem:[%s3 + $0x28] sm:$0xff]
    %v1604 = vld [vmem:[%s3 + $0x30] sm:$0xff]
    %v1605 = vld [vmem:[%s3 + $0x38] sm:$0xff]
    %v1606 = vld [vmem:[%s3 + $0x40] sm:$0xff]
    %v1607 = vld [vmem:[%s3 + $0x48] sm:$0xff]
    %v1608 = vld [vmem:[%s3 + $0x50] sm:$0xff]
    %v1609 = vld [vmem:[%s3 + $0x58] sm:$0xff]
    %v1610 = vld [vmem:[%s3 + $0x60] sm:$0xff]
    %v1611 = vld [vmem:[%s3 + $0x68] sm:$0xff]
    %v1612 = vld [vmem:[%s3 + $0x70] sm:$0xff]
    %v1613 = vld [vmem:[%s3 + $0x78] sm:$0xff]
    %v1614 = vld [vmem:[%s3 + $0x80] sm:$0xff]
    %v1615 = vld [vmem:[%s3 + $0x88] sm:$0xff]
    %v1616 = vld [vmem:[%s3 + $0x90] sm:$0xff]
    %v1617 = vld [vmem:[%s3 + $0x98] sm:$0xff]
    %v1618 = vld [vmem:[%s3 + $0xa0] sm:$0xff]
    %v1619 = vld [vmem:[%s3 + $0xa8] sm:$0xff]
    %v1620 = vld [vmem:[%s3 + $0xb0] sm:$0xff]
    %v1621 = vld [vmem:[%s3 + $0xb8] sm:$0xff]
    %v1622 = vld [vmem:[%s3 + $0xc0] sm:$0xff]
    %v1623 = vld [vmem:[%s3 + $0xc8] sm:$0xff]
    %v1624 = vld [vmem:[%s3 + $0xd0] sm:$0xff]
    %v1625 = vld [vmem:[%s3 + $0xd8] sm:$0xff]
    %v1626 = vld [vmem:[%s3 + $0xe0] sm:$0xff]
    %v1627 = vld [vmem:[%s3 + $0xe8] sm:$0xff]
    %v1628 = vld [vmem:[%s3 + $0xf0] sm:$0xff]
    %v1629 = vld [vmem:[%s3 + $0xf8] sm:$0xff]
    %v1662 = vunpack.c.l.b16 %v1598
    %v1663 = vunpack.c.h.b16 %v1598
    %v1664 = vunpack.c.l.b16 %v1599
    %v1665 = vunpack.c.h.b16 %v1599
    %v1666 = vunpack.c.l.b16 %v1600
    %v1667 = vunpack.c.h.b16 %v1600
    %v1668 = vunpack.c.l.b16 %v1601
    %v1669 = vunpack.c.h.b16 %v1601
    %v1670 = vunpack.c.l.b16 %v1602
    %v1671 = vunpack.c.h.b16 %v1602
    %v1672 = vunpack.c.l.b16 %v1603
    %v1673 = vunpack.c.h.b16 %v1603
    %v1674 = vunpack.c.l.b16 %v1604
    %v1675 = vunpack.c.h.b16 %v1604
    %v1676 = vunpack.c.l.b16 %v1605
    %v1677 = vunpack.c.h.b16 %v1605
    %v1678 = vunpack.c.l.b16 %v1606
    %v1679 = vunpack.c.h.b16 %v1606
    %v1680 = vunpack.c.l.b16 %v1607
    %v1681 = vunpack.c.h.b16 %v1607
    %v1682 = vunpack.c.l.b16 %v1608
    %v1683 = vunpack.c.h.b16 %v1608
    %v1684 = vunpack.c.l.b16 %v1609
    %v1685 = vunpack.c.h.b16 %v1609
    %v1686 = vunpack.c.l.b16 %v1610
    %v1687 = vunpack.c.h.b16 %v1610
    %v1688 = vunpack.c.l.b16 %v1611
    %v1689 = vunpack.c.h.b16 %v1611
    %v1690 = vunpack.c.l.b16 %v1612
    %v1691 = vunpack.c.h.b16 %v1612
    %v1692 = vunpack.c.l.b16 %v1613
    %v1693 = vunpack.c.h.b16 %v1613
    %v1694 = vunpack.c.l.b16 %v1614
    %v1695 = vunpack.c.h.b16 %v1614
    %v1696 = vunpack.c.l.b16 %v1615
    %v1697 = vunpack.c.h.b16 %v1615
    %v1698 = vunpack.c.l.b16 %v1616
    %v1699 = vunpack.c.h.b16 %v1616
    %v1700 = vunpack.c.l.b16 %v1617
    %v1701 = vunpack.c.h.b16 %v1617
    %v1702 = vunpack.c.l.b16 %v1618
    %v1703 = vunpack.c.h.b16 %v1618
    %v1704 = vunpack.c.l.b16 %v1619
    %v1705 = vunpack.c.h.b16 %v1619
    %v1706 = vunpack.c.l.b16 %v1620
    %v1707 = vunpack.c.h.b16 %v1620
    %v1708 = vunpack.c.l.b16 %v1621
    %v1709 = vunpack.c.h.b16 %v1621
    %v1710 = vunpack.c.l.b16 %v1622
    %v1711 = vunpack.c.h.b16 %v1622
    %v1712 = vunpack.c.l.b16 %v1623
    %v1713 = vunpack.c.h.b16 %v1623
    %v1714 = vunpack.c.l.b16 %v1624
    %v1715 = vunpack.c.h.b16 %v1624
    %v1716 = vunpack.c.l.b16 %v1625
    %v1717 = vunpack.c.h.b16 %v1625
    %v1718 = vunpack.c.l.b16 %v1626
    %v1719 = vunpack.c.h.b16 %v1626
    %v1720 = vunpack.c.l.b16 %v1627
    %v1721 = vunpack.c.h.b16 %v1627
    %v1722 = vunpack.c.l.b16 %v1628
    %v1723 = vunpack.c.h.b16 %v1628
    %v1724 = vunpack.c.l.b16 %v1629
    %v1725 = vunpack.c.h.b16 %v1629
    %v1726 = vpack.c.b16 %v1666, %v1662
    %v1727 = vpack.c.b16 %v1667, %v1663
    %v1728 = vpack.c.b16 %v1668, %v1664
    %v1729 = vpack.c.b16 %v1669, %v1665
    %v1730 = vpack.c.b16 %v1674, %v1670
    %v1731 = vpack.c.b16 %v1675, %v1671
    %v1732 = vpack.c.b16 %v1676, %v1672
    %v1733 = vpack.c.b16 %v1677, %v1673
    %v1734 = vpack.c.b16 %v1682, %v1678
    %v1735 = vpack.c.b16 %v1683, %v1679
    %v1736 = vpack.c.b16 %v1684, %v1680
    %v1737 = vpack.c.b16 %v1685, %v1681
    %v1738 = vpack.c.b16 %v1690, %v1686
    %v1739 = vpack.c.b16 %v1691, %v1687
    %v1740 = vpack.c.b16 %v1692, %v1688
    %v1741 = vpack.c.b16 %v1693, %v1689
    %v1742 = vpack.c.b16 %v1698, %v1694
    %v1743 = vpack.c.b16 %v1699, %v1695
    %v1744 = vpack.c.b16 %v1700, %v1696
    %v1745 = vpack.c.b16 %v1701, %v1697
    %v1746 = vpack.c.b16 %v1706, %v1702
    %v1747 = vpack.c.b16 %v1707, %v1703
    %v1748 = vpack.c.b16 %v1708, %v1704
    %v1749 = vpack.c.b16 %v1709, %v1705
    %v1750 = vpack.c.b16 %v1714, %v1710
    %v1751 = vpack.c.b16 %v1715, %v1711
    %v1752 = vpack.c.b16 %v1716, %v1712
    %v1753 = vpack.c.b16 %v1717, %v1713
    %v1754 = vpack.c.b16 %v1722, %v1718
    %v1755 = vpack.c.b16 %v1723, %v1719
    %v1756 = vpack.c.b16 %v1724, %v1720
    %v1757 = vpack.c.b16 %v1725, %v1721
    %1790 = vmatprep.subr.bf16.mxu0 %v1727
    %1791 = vmatpush1.bf16.msra.mxu0 %v1726
    %1792 = vmatprep.subr.bf16.mxu0 %v1731
    %1793 = vmatpush1.bf16.msra.mxu0 %v1730
    %1794 = vmatprep.subr.bf16.mxu0 %v1735
    %1795 = vmatpush1.bf16.msra.mxu0 %v1734
    %1796 = vmatprep.subr.bf16.mxu0 %v1739
    %1797 = vmatpush1.bf16.msra.mxu0 %v1738
    %1798 = vmatprep.subr.bf16.mxu0 %v1743
    %1799 = vmatpush1.bf16.msra.mxu0 %v1742
    %1800 = vmatprep.subr.bf16.mxu0 %v1747
    %1801 = vmatpush1.bf16.msra.mxu0 %v1746
    %1802 = vmatprep.subr.bf16.mxu0 %v1751
    %1803 = vmatpush1.bf16.msra.mxu0 %v1750
    %1804 = vmatprep.subr.bf16.mxu0 %v1755
    %1805 = vmatpush1.bf16.msra.mxu0 %v1754
    %1806 = vmatprep.subr.bf16.mxu0 0
    %1807 = vmatpush1.bf16.msra.mxu0 0
    %1808 = vmatprep.subr.bf16.mxu0 0
    %1809 = vmatpush1.bf16.msra.mxu0 0
    %1810 = vmatprep.subr.bf16.mxu0 0
    %1811 = vmatpush1.bf16.msra.mxu0 0
    %1812 = vmatprep.subr.bf16.mxu0 0
    %1813 = vmatpush1.bf16.msra.mxu0 0
    %1814 = vmatprep.subr.bf16.mxu0 0
    %1815 = vmatpush1.bf16.msra.mxu0 0
    %1816 = vmatprep.subr.bf16.mxu0 0
    %1817 = vmatpush1.bf16.msra.mxu0 0
    %1818 = vmatprep.subr.bf16.mxu0 0
    %1819 = vmatpush1.bf16.msra.mxu0 0
    %1820 = vmatprep.subr.bf16.mxu0 0
    %1821 = vmatpush1.bf16.msra.mxu0 0
    %1822 = vmatprep.mubr.bf16.mxu0 0
    %1823 = vmatmul.mubr.bf16.gmra.mrb[0].mxu0 %v1047
    %v1824 = vpop.f32.mrb[0].mxu0
    %v1825 = vadd.f32 0.0, %v1824
    %v1826 = vpop.f32.mrb[0].mxu0
    %v1827 = vadd.f32 0.0, %v1826
    %v1828 = vpop.f32.mrb[0].mxu0
    %v1829 = vadd.f32 0.0, %v1828
    %v1830 = vpop.f32.mrb[0].mxu0
    %v1831 = vadd.f32 0.0, %v1830
    %1832 = vdwg.mxu0
    %1833 = vmatprep.subr.bf16.mxu0 %v1729
    %1834 = vmatpush1.bf16.msra.mxu0 %v1728
    %1835 = vmatprep.subr.bf16.mxu0 %v1733
    %1836 = vmatpush1.bf16.msra.mxu0 %v1732
    %1837 = vmatprep.subr.bf16.mxu0 %v1737
    %1838 = vmatpush1.bf16.msra.mxu0 %v1736
    %1839 = vmatprep.subr.bf16.mxu0 %v1741
    %1840 = vmatpush1.bf16.msra.mxu0 %v1740
    %1841 = vmatprep.subr.bf16.mxu0 %v1745
    %1842 = vmatpush1.bf16.msra.mxu0 %v1744
    %1843 = vmatprep.subr.bf16.mxu0 %v1749
    %1844 = vmatpush1.bf16.msra.mxu0 %v1748
    %1845 = vmatprep.subr.bf16.mxu0 %v1753
    %1846 = vmatpush1.bf16.msra.mxu0 %v1752
    %1847 = vmatprep.subr.bf16.mxu0 %v1757
    %1848 = vmatpush1.bf16.msra.mxu0 %v1756
    %1849 = vmatprep.subr.bf16.mxu0 0
    %1850 = vmatpush1.bf16.msra.mxu0 0
    %1851 = vmatprep.subr.bf16.mxu0 0
    %1852 = vmatpush1.bf16.msra.mxu0 0
    %1853 = vmatprep.subr.bf16.mxu0 0
    %1854 = vmatpush1.bf16.msra.mxu0 0
    %1855 = vmatprep.subr.bf16.mxu0 0
    %1856 = vmatpush1.bf16.msra.mxu0 0
    %1857 = vmatprep.subr.bf16.mxu0 0
    %1858 = vmatpush1.bf16.msra.mxu0 0
    %1859 = vmatprep.subr.bf16.mxu0 0
    %1860 = vmatpush1.bf16.msra.mxu0 0
    %1861 = vmatprep.subr.bf16.mxu0 0
    %1862 = vmatpush1.bf16.msra.mxu0 0
    %1863 = vmatprep.subr.bf16.mxu0 0
    %1864 = vmatpush1.bf16.msra.mxu0 0
    %1865 = vmatprep.mubr.bf16.mxu0 0
    %1866 = vmatmul.mubr.bf16.gmra.mrb[0].mxu0 %v1047
    %v1867 = vpop.f32.mrb[0].mxu0
    %v1868 = vadd.f32 0.0, %v1867
    %v1869 = vpop.f32.mrb[0].mxu0
    %v1870 = vadd.f32 0.0, %v1869
    %v1871 = vpop.f32.mrb[0].mxu0
    %v1872 = vadd.f32 0.0, %v1871
    %v1873 = vpop.f32.mrb[0].mxu0
    %v1874 = vadd.f32 0.0, %v1873
    %1875 = vdwg.mxu0
    %v1876 = vadd.f32 %v1590, %v1825
    %v1877 = vadd.f32 %v1591, %v1827
    %v1878 = vadd.f32 %v1592, %v1868
    %v1879 = vadd.f32 %v1593, %v1870
    %v1880 = vadd.f32 %v1594, %v1829
    %v1881 = vadd.f32 %v1595, %v1831
    %v1882 = vadd.f32 %v1596, %v1872
    %v1883 = vadd.f32 %v1597, %v1874
    %v1884 = vxor.u32 %v1876, 2147483648
    %v1885 = vxor.u32 %v1880, 2147483648
    %v1886 = vmul.f32 %v1884, 1.442695
    %v1887 = vpow.pop %v1886
    %v1888 = vmul.f32 %v1885, 1.442695
    %v1889 = vpow.pop %v1888
    %v1890 = vadd.f32 %v1887, 1.0
    %v1891 = vadd.f32 %v1889, 1.0
    %v1892 = vrcp.pop %v1890
    %v1893 = vmul.f32 1.0, %v1892
    %v1894 = vrcp.pop %v1891
    %v1895 = vmul.f32 1.0, %v1894
    %v1896 = vxor.u32 %v1877, 2147483648
    %v1897 = vxor.u32 %v1881, 2147483648
    %v1898 = vmul.f32 %v1896, 1.442695
    %v1899 = vpow.pop %v1898
    %v1900 = vmul.f32 %v1897, 1.442695
    %v1901 = vpow.pop %v1900
    %v1902 = vadd.f32 %v1899, 1.0
    %v1903 = vadd.f32 %v1901, 1.0
    %v1904 = vrcp.pop %v1902
    %v1905 = vmul.f32 1.0, %v1904
    %v1906 = vrcp.pop %v1903
    %v1907 = vmul.f32 1.0, %v1906
    %v1908 = vtanh.pop %v1878
    %v1909 = vtanh.pop %v1882
    %v1910 = vxor.u32 %v1879, 2147483648
    %v1911 = vxor.u32 %v1883, 2147483648
    %v1912 = vmul.f32 %v1910, 1.442695
    %v1913 = vpow.pop %v1912
    %v1914 = vmul.f32 %v1911, 1.442695
    %v1915 = vpow.pop %v1914
    %v1916 = vadd.f32 %v1913, 1.0
    %v1917 = vadd.f32 %v1915, 1.0
    %v1918 = vrcp.pop %v1916
    %v1919 = vmul.f32 1.0, %v1918
    %v1920 = vrcp.pop %v1917
    %v1921 = vmul.f32 1.0, %v1920
    %v1922 = vmul.f32 %v1905, %v1041
    %v1923 = vmul.f32 %v1907, %v1042
    %v1924 = vmul.f32 %v1893, %v1908
    %v1925 = vmul.f32 %v1895, %v1909
    %v1926 = vadd.f32 %v1922, %v1924
    %v1927 = vadd.f32 %v1923, %v1925
    %v1928 = vtanh.pop %v1926
    %v1929 = vtanh.pop %v1927
    %v1930 = vmul.f32 %v1919, %v1928
    %v1931 = vmul.f32 %v1921, %v1929
    %v1932 = vpack.c.bf16 %v1931, %v1930
    %v1933 = vld [vmem:[#allocation7] sm:$0xff]
    %v1934 = vld [vmem:[#allocation7 + $0x8] sm:$0xff]
    %v1935 = vld [vmem:[#allocation7 + $0x10] sm:$0xff]
    %v1936 = vld [vmem:[#allocation7 + $0x18] sm:$0xff]
    %v1937 = vld [vmem:[#allocation7 + $0x20] sm:$0xff]
    %v1938 = vld [vmem:[#allocation7 + $0x28] sm:$0xff]
    %v1939 = vld [vmem:[#allocation7 + $0x30] sm:$0xff]
    %v1940 = vld [vmem:[#allocation7 + $0x38] sm:$0xff]
    %v1941 = vld [vmem:[#allocation7 + $0x40] sm:$0xff]
    %v1942 = vld [vmem:[#allocation7 + $0x48] sm:$0xff]
    %v1943 = vld [vmem:[#allocation7 + $0x50] sm:$0xff]
    %v1944 = vld [vmem:[#allocation7 + $0x58] sm:$0xff]
    %v1945 = vld [vmem:[#allocation7 + $0x60] sm:$0xff]
    %v1946 = vld [vmem:[#allocation7 + $0x68] sm:$0xff]
    %v1947 = vld [vmem:[#allocation7 + $0x70] sm:$0xff]
    %v1948 = vld [vmem:[#allocation7 + $0x78] sm:$0xff]
    %v1949 = vld [vmem:[#allocation7 + $0x80] sm:$0xff]
    %v1950 = vld [vmem:[#allocation7 + $0x88] sm:$0xff]
    %v1951 = vld [vmem:[#allocation7 + $0x90] sm:$0xff]
    %v1952 = vld [vmem:[#allocation7 + $0x98] sm:$0xff]
    %v1953 = vld [vmem:[#allocation7 + $0xa0] sm:$0xff]
    %v1954 = vld [vmem:[#allocation7 + $0xa8] sm:$0xff]
    %v1955 = vld [vmem:[#allocation7 + $0xb0] sm:$0xff]
    %v1956 = vld [vmem:[#allocation7 + $0xb8] sm:$0xff]
    %v1957 = vld [vmem:[#allocation7 + $0xc0] sm:$0xff]
    %v1958 = vld [vmem:[#allocation7 + $0xc8] sm:$0xff]
    %v1959 = vld [vmem:[#allocation7 + $0xd0] sm:$0xff]
    %v1960 = vld [vmem:[#allocation7 + $0xd8] sm:$0xff]
    %v1961 = vld [vmem:[#allocation7 + $0xe0] sm:$0xff]
    %v1962 = vld [vmem:[#allocation7 + $0xe8] sm:$0xff]
    %v1963 = vld [vmem:[#allocation7 + $0xf0] sm:$0xff]
    %v1964 = vld [vmem:[#allocation7 + $0xf8] sm:$0xff]
    %v1965 = vld [vmem:[#allocation7 + $0x100] sm:$0xff]
    %v1966 = vld [vmem:[#allocation7 + $0x108] sm:$0xff]
    %v1967 = vld [vmem:[#allocation7 + $0x110] sm:$0xff]
    %v1968 = vld [vmem:[#allocation7 + $0x118] sm:$0xff]
    %v1969 = vld [vmem:[#allocation7 + $0x120] sm:$0xff]
    %v1970 = vld [vmem:[#allocation7 + $0x128] sm:$0xff]
    %v1971 = vld [vmem:[#allocation7 + $0x130] sm:$0xff]
    %v1972 = vld [vmem:[#allocation7 + $0x138] sm:$0xff]
    %v1973 = vld [vmem:[#allocation7 + $0x140] sm:$0xff]
    %v1974 = vld [vmem:[#allocation7 + $0x148] sm:$0xff]
    %v1975 = vld [vmem:[#allocation7 + $0x150] sm:$0xff]
    %v1976 = vld [vmem:[#allocation7 + $0x158] sm:$0xff]
    %v1977 = vld [vmem:[#allocation7 + $0x160] sm:$0xff]
    %v1978 = vld [vmem:[#allocation7 + $0x168] sm:$0xff]
    %v1979 = vld [vmem:[#allocation7 + $0x170] sm:$0xff]
    %v1980 = vld [vmem:[#allocation7 + $0x178] sm:$0xff]
    %v1981 = vld [vmem:[#allocation7 + $0x180] sm:$0xff]
    %v1982 = vld [vmem:[#allocation7 + $0x188] sm:$0xff]
    %v1983 = vld [vmem:[#allocation7 + $0x190] sm:$0xff]
    %v1984 = vld [vmem:[#allocation7 + $0x198] sm:$0xff]
    %v1985 = vld [vmem:[#allocation7 + $0x1a0] sm:$0xff]
    %v1986 = vld [vmem:[#allocation7 + $0x1a8] sm:$0xff]
    %v1987 = vld [vmem:[#allocation7 + $0x1b0] sm:$0xff]
    %v1988 = vld [vmem:[#allocation7 + $0x1b8] sm:$0xff]
    %v1989 = vld [vmem:[#allocation7 + $0x1c0] sm:$0xff]
    %v1990 = vld [vmem:[#allocation7 + $0x1c8] sm:$0xff]
    %v1991 = vld [vmem:[#allocation7 + $0x1d0] sm:$0xff]
    %v1992 = vld [vmem:[#allocation7 + $0x1d8] sm:$0xff]
    %v1993 = vld [vmem:[#allocation7 + $0x1e0] sm:$0xff]
    %v1994 = vld [vmem:[#allocation7 + $0x1e8] sm:$0xff]
    %v1995 = vld [vmem:[#allocation7 + $0x1f0] sm:$0xff]
    %v1996 = vld [vmem:[#allocation7 + $0x1f8] sm:$0xff]
    %v1997 = vld [vmem:[#allocation9] sm:$0xf]
    %v1999 = vlaneseq
    %v2000 = vshrl.u32 %v1999, 7
    %v2001 = vsub.s32 0, %v2000
    %v2002 = vrot.slane %v1997, %v2001
    %v2003 = vlaneseq
    %v2004 = vshrl.u32 %v2003, 7
    %v2005 = vsub.s32 1, %v2004
    %v2006 = vrot.slane %v1997, %v2005
    %v2007 = vlaneseq
    %v2008 = vshrl.u32 %v2007, 7
    %v2009 = vsub.s32 2, %v2008
    %v2010 = vrot.slane %v1997, %v2009
    %v2011 = vlaneseq
    %v2012 = vshrl.u32 %v2011, 7
    %v2013 = vsub.s32 3, %v2012
    %v2014 = vrot.slane %v1997, %v2013
    %v2083 = vunpack.c.l.b16 %v1933
    %v2084 = vunpack.c.h.b16 %v1933
    %v2085 = vunpack.c.l.b16 %v1934
    %v2086 = vunpack.c.h.b16 %v1934
    %v2087 = vunpack.c.l.b16 %v1935
    %v2088 = vunpack.c.h.b16 %v1935
    %v2089 = vunpack.c.l.b16 %v1936
    %v2090 = vunpack.c.h.b16 %v1936
    %v2091 = vunpack.c.l.b16 %v1937
    %v2092 = vunpack.c.h.b16 %v1937
    %v2093 = vunpack.c.l.b16 %v1938
    %v2094 = vunpack.c.h.b16 %v1938
    %v2095 = vunpack.c.l.b16 %v1939
    %v2096 = vunpack.c.h.b16 %v1939
    %v2097 = vunpack.c.l.b16 %v1940
    %v2098 = vunpack.c.h.b16 %v1940
    %v2099 = vunpack.c.l.b16 %v1941
    %v2100 = vunpack.c.h.b16 %v1941
    %v2101 = vunpack.c.l.b16 %v1942
    %v2102 = vunpack.c.h.b16 %v1942
    %v2103 = vunpack.c.l.b16 %v1943
    %v2104 = vunpack.c.h.b16 %v1943
    %v2105 = vunpack.c.l.b16 %v1944
    %v2106 = vunpack.c.h.b16 %v1944
    %v2107 = vunpack.c.l.b16 %v1945
    %v2108 = vunpack.c.h.b16 %v1945
    %v2109 = vunpack.c.l.b16 %v1946
    %v2110 = vunpack.c.h.b16 %v1946
    %v2111 = vunpack.c.l.b16 %v1947
    %v2112 = vunpack.c.h.b16 %v1947
    %v2113 = vunpack.c.l.b16 %v1948
    %v2114 = vunpack.c.h.b16 %v1948
    %v2115 = vunpack.c.l.b16 %v1949
    %v2116 = vunpack.c.h.b16 %v1949
    %v2117 = vunpack.c.l.b16 %v1950
    %v2118 = vunpack.c.h.b16 %v1950
    %v2119 = vunpack.c.l.b16 %v1951
    %v2120 = vunpack.c.h.b16 %v1951
    %v2121 = vunpack.c.l.b16 %v1952
    %v2122 = vunpack.c.h.b16 %v1952
    %v2123 = vunpack.c.l.b16 %v1953
    %v2124 = vunpack.c.h.b16 %v1953
    %v2125 = vunpack.c.l.b16 %v1954
    %v2126 = vunpack.c.h.b16 %v1954
    %v2127 = vunpack.c.l.b16 %v1955
    %v2128 = vunpack.c.h.b16 %v1955
    %v2129 = vunpack.c.l.b16 %v1956
    %v2130 = vunpack.c.h.b16 %v1956
    %v2131 = vunpack.c.l.b16 %v1957
    %v2132 = vunpack.c.h.b16 %v1957
    %v2133 = vunpack.c.l.b16 %v1958
    %v2134 = vunpack.c.h.b16 %v1958
    %v2135 = vunpack.c.l.b16 %v1959
    %v2136 = vunpack.c.h.b16 %v1959
    %v2137 = vunpack.c.l.b16 %v1960
    %v2138 = vunpack.c.h.b16 %v1960
    %v2139 = vunpack.c.l.b16 %v1961
    %v2140 = vunpack.c.h.b16 %v1961
    %v2141 = vunpack.c.l.b16 %v1962
    %v2142 = vunpack.c.h.b16 %v1962
    %v2143 = vunpack.c.l.b16 %v1963
    %v2144 = vunpack.c.h.b16 %v1963
    %v2145 = vunpack.c.l.b16 %v1964
    %v2146 = vunpack.c.h.b16 %v1964
    %v2147 = vunpack.c.l.b16 %v1965
    %v2148 = vunpack.c.h.b16 %v1965
    %v2149 = vunpack.c.l.b16 %v1966
    %v2150 = vunpack.c.h.b16 %v1966
    %v2151 = vunpack.c.l.b16 %v1967
    %v2152 = vunpack.c.h.b16 %v1967
    %v2153 = vunpack.c.l.b16 %v1968
    %v2154 = vunpack.c.h.b16 %v1968
    %v2155 = vunpack.c.l.b16 %v1969
    %v2156 = vunpack.c.h.b16 %v1969
    %v2157 = vunpack.c.l.b16 %v1970
    %v2158 = vunpack.c.h.b16 %v1970
    %v2159 = vunpack.c.l.b16 %v1971
    %v2160 = vunpack.c.h.b16 %v1971
    %v2161 = vunpack.c.l.b16 %v1972
    %v2162 = vunpack.c.h.b16 %v1972
    %v2163 = vunpack.c.l.b16 %v1973
    %v2164 = vunpack.c.h.b16 %v1973
    %v2165 = vunpack.c.l.b16 %v1974
    %v2166 = vunpack.c.h.b16 %v1974
    %v2167 = vunpack.c.l.b16 %v1975
    %v2168 = vunpack.c.h.b16 %v1975
    %v2169 = vunpack.c.l.b16 %v1976
    %v2170 = vunpack.c.h.b16 %v1976
    %v2171 = vunpack.c.l.b16 %v1977
    %v2172 = vunpack.c.h.b16 %v1977
    %v2173 = vunpack.c.l.b16 %v1978
    %v2174 = vunpack.c.h.b16 %v1978
    %v2175 = vunpack.c.l.b16 %v1979
    %v2176 = vunpack.c.h.b16 %v1979
    %v2177 = vunpack.c.l.b16 %v1980
    %v2178 = vunpack.c.h.b16 %v1980
    %v2179 = vunpack.c.l.b16 %v1981
    %v2180 = vunpack.c.h.b16 %v1981
    %v2181 = vunpack.c.l.b16 %v1982
    %v2182 = vunpack.c.h.b16 %v1982
    %v2183 = vunpack.c.l.b16 %v1983
    %v2184 = vunpack.c.h.b16 %v1983
    %v2185 = vunpack.c.l.b16 %v1984
    %v2186 = vunpack.c.h.b16 %v1984
    %v2187 = vunpack.c.l.b16 %v1985
    %v2188 = vunpack.c.h.b16 %v1985
    %v2189 = vunpack.c.l.b16 %v1986
    %v2190 = vunpack.c.h.b16 %v1986
    %v2191 = vunpack.c.l.b16 %v1987
    %v2192 = vunpack.c.h.b16 %v1987
    %v2193 = vunpack.c.l.b16 %v1988
    %v2194 = vunpack.c.h.b16 %v1988
    %v2195 = vunpack.c.l.b16 %v1989
    %v2196 = vunpack.c.h.b16 %v1989
    %v2197 = vunpack.c.l.b16 %v1990
    %v2198 = vunpack.c.h.b16 %v1990
    %v2199 = vunpack.c.l.b16 %v1991
    %v2200 = vunpack.c.h.b16 %v1991
    %v2201 = vunpack.c.l.b16 %v1992
    %v2202 = vunpack.c.h.b16 %v1992
    %v2203 = vunpack.c.l.b16 %v1993
    %v2204 = vunpack.c.h.b16 %v1993
    %v2205 = vunpack.c.l.b16 %v1994
    %v2206 = vunpack.c.h.b16 %v1994
    %v2207 = vunpack.c.l.b16 %v1995
    %v2208 = vunpack.c.h.b16 %v1995
    %v2209 = vunpack.c.l.b16 %v1996
    %v2210 = vunpack.c.h.b16 %v1996
    %v2211 = vpack.c.b16 %v2087, %v2083
    %v2212 = vpack.c.b16 %v2088, %v2084
    %v2213 = vpack.c.b16 %v2089, %v2085
    %v2214 = vpack.c.b16 %v2090, %v2086
    %v2215 = vpack.c.b16 %v2095, %v2091
    %v2216 = vpack.c.b16 %v2096, %v2092
    %v2217 = vpack.c.b16 %v2097, %v2093
    %v2218 = vpack.c.b16 %v2098, %v2094
    %v2219 = vpack.c.b16 %v2103, %v2099
    %v2220 = vpack.c.b16 %v2104, %v2100
    %v2221 = vpack.c.b16 %v2105, %v2101
    %v2222 = vpack.c.b16 %v2106, %v2102
    %v2223 = vpack.c.b16 %v2111, %v2107
    %v2224 = vpack.c.b16 %v2112, %v2108
    %v2225 = vpack.c.b16 %v2113, %v2109
    %v2226 = vpack.c.b16 %v2114, %v2110
    %v2227 = vpack.c.b16 %v2119, %v2115
    %v2228 = vpack.c.b16 %v2120, %v2116
    %v2229 = vpack.c.b16 %v2121, %v2117
    %v2230 = vpack.c.b16 %v2122, %v2118
    %v2231 = vpack.c.b16 %v2127, %v2123
    %v2232 = vpack.c.b16 %v2128, %v2124
    %v2233 = vpack.c.b16 %v2129, %v2125
    %v2234 = vpack.c.b16 %v2130, %v2126
    %v2235 = vpack.c.b16 %v2135, %v2131
    %v2236 = vpack.c.b16 %v2136, %v2132
    %v2237 = vpack.c.b16 %v2137, %v2133
    %v2238 = vpack.c.b16 %v2138, %v2134
    %v2239 = vpack.c.b16 %v2143, %v2139
    %v2240 = vpack.c.b16 %v2144, %v2140
    %v2241 = vpack.c.b16 %v2145, %v2141
    %v2242 = vpack.c.b16 %v2146, %v2142
    %v2243 = vpack.c.b16 %v2151, %v2147
    %v2244 = vpack.c.b16 %v2152, %v2148
    %v2245 = vpack.c.b16 %v2153, %v2149
    %v2246 = vpack.c.b16 %v2154, %v2150
    %v2247 = vpack.c.b16 %v2159, %v2155
    %v2248 = vpack.c.b16 %v2160, %v2156
    %v2249 = vpack.c.b16 %v2161, %v2157
    %v2250 = vpack.c.b16 %v2162, %v2158
    %v2251 = vpack.c.b16 %v2167, %v2163
    %v2252 = vpack.c.b16 %v2168, %v2164
    %v2253 = vpack.c.b16 %v2169, %v2165
    %v2254 = vpack.c.b16 %v2170, %v2166
    %v2255 = vpack.c.b16 %v2175, %v2171
    %v2256 = vpack.c.b16 %v2176, %v2172
    %v2257 = vpack.c.b16 %v2177, %v2173
    %v2258 = vpack.c.b16 %v2178, %v2174
    %v2259 = vpack.c.b16 %v2183, %v2179
    %v2260 = vpack.c.b16 %v2184, %v2180
    %v2261 = vpack.c.b16 %v2185, %v2181
    %v2262 = vpack.c.b16 %v2186, %v2182
    %v2263 = vpack.c.b16 %v2191, %v2187
    %v2264 = vpack.c.b16 %v2192, %v2188
    %v2265 = vpack.c.b16 %v2193, %v2189
    %v2266 = vpack.c.b16 %v2194, %v2190
    %v2267 = vpack.c.b16 %v2199, %v2195
    %v2268 = vpack.c.b16 %v2200, %v2196
    %v2269 = vpack.c.b16 %v2201, %v2197
    %v2270 = vpack.c.b16 %v2202, %v2198
    %v2271 = vpack.c.b16 %v2207, %v2203
    %v2272 = vpack.c.b16 %v2208, %v2204
    %v2273 = vpack.c.b16 %v2209, %v2205
    %v2274 = vpack.c.b16 %v2210, %v2206
    %2339 = vmatprep.subr.bf16.mxu0 %v2212
    %2340 = vmatpush1.bf16.msra.mxu0 %v2211
    %2341 = vmatprep.subr.bf16.mxu0 %v2216
    %2342 = vmatpush1.bf16.msra.mxu0 %v2215
    %2343 = vmatprep.subr.bf16.mxu0 %v2220
    %2344 = vmatpush1.bf16.msra.mxu0 %v2219
    %2345 = vmatprep.subr.bf16.mxu0 %v2224
    %2346 = vmatpush1.bf16.msra.mxu0 %v2223
    %2347 = vmatprep.subr.bf16.mxu0 %v2228
    %2348 = vmatpush1.bf16.msra.mxu0 %v2227
    %2349 = vmatprep.subr.bf16.mxu0 %v2232
    %2350 = vmatpush1.bf16.msra.mxu0 %v2231
    %2351 = vmatprep.subr.bf16.mxu0 %v2236
    %2352 = vmatpush1.bf16.msra.mxu0 %v2235
    %2353 = vmatprep.subr.bf16.mxu0 %v2240
    %2354 = vmatpush1.bf16.msra.mxu0 %v2239
    %2355 = vmatprep.subr.bf16.mxu0 %v2244
    %2356 = vmatpush1.bf16.msra.mxu0 %v2243
    %2357 = vmatprep.subr.bf16.mxu0 %v2248
    %2358 = vmatpush1.bf16.msra.mxu0 %v2247
    %2359 = vmatprep.subr.bf16.mxu0 %v2252
    %2360 = vmatpush1.bf16.msra.mxu0 %v2251
    %2361 = vmatprep.subr.bf16.mxu0 %v2256
    %2362 = vmatpush1.bf16.msra.mxu0 %v2255
    %2363 = vmatprep.subr.bf16.mxu0 %v2260
    %2364 = vmatpush1.bf16.msra.mxu0 %v2259
    %2365 = vmatprep.subr.bf16.mxu0 %v2264
    %2366 = vmatpush1.bf16.msra.mxu0 %v2263
    %2367 = vmatprep.subr.bf16.mxu0 %v2268
    %2368 = vmatpush1.bf16.msra.mxu0 %v2267
    %2369 = vmatprep.subr.bf16.mxu0 %v2272
    %2370 = vmatpush1.bf16.msra.mxu0 %v2271
    %2371 = vmatprep.mubr.bf16.mxu0 %v1588
    %2372 = vmatmul.mubr.bf16.gmra.mrb[0].mxu0 %v1047
    %v2373 = vpop.f32.mrb[0].mxu0
    %v2374 = vadd.f32 %v2002, %v2373
    %v2375 = vpop.f32.mrb[0].mxu0
    %v2376 = vadd.f32 %v2006, %v2375
    %v2377 = vpop.f32.mrb[0].mxu0
    %v2378 = vadd.f32 %v2002, %v2377
    %v2379 = vpop.f32.mrb[0].mxu0
    %v2380 = vadd.f32 %v2006, %v2379
    %2381 = vdwg.mxu0
    %2382 = vmatprep.subr.bf16.mxu0 %v2214
    %2383 = vmatpush1.bf16.msra.mxu0 %v2213
    %2384 = vmatprep.subr.bf16.mxu0 %v2218
    %2385 = vmatpush1.bf16.msra.mxu0 %v2217
    %2386 = vmatprep.subr.bf16.mxu0 %v2222
    %2387 = vmatpush1.bf16.msra.mxu0 %v2221
    %2388 = vmatprep.subr.bf16.mxu0 %v2226
    %2389 = vmatpush1.bf16.msra.mxu0 %v2225
    %2390 = vmatprep.subr.bf16.mxu0 %v2230
    %2391 = vmatpush1.bf16.msra.mxu0 %v2229
    %2392 = vmatprep.subr.bf16.mxu0 %v2234
    %2393 = vmatpush1.bf16.msra.mxu0 %v2233
    %2394 = vmatprep.subr.bf16.mxu0 %v2238
    %2395 = vmatpush1.bf16.msra.mxu0 %v2237
    %2396 = vmatprep.subr.bf16.mxu0 %v2242
    %2397 = vmatpush1.bf16.msra.mxu0 %v2241
    %2398 = vmatprep.subr.bf16.mxu0 %v2246
    %2399 = vmatpush1.bf16.msra.mxu0 %v2245
    %2400 = vmatprep.subr.bf16.mxu0 %v2250
    %2401 = vmatpush1.bf16.msra.mxu0 %v2249
    %2402 = vmatprep.subr.bf16.mxu0 %v2254
    %2403 = vmatpush1.bf16.msra.mxu0 %v2253
    %2404 = vmatprep.subr.bf16.mxu0 %v2258
    %2405 = vmatpush1.bf16.msra.mxu0 %v2257
    %2406 = vmatprep.subr.bf16.mxu0 %v2262
    %2407 = vmatpush1.bf16.msra.mxu0 %v2261
    %2408 = vmatprep.subr.bf16.mxu0 %v2266
    %2409 = vmatpush1.bf16.msra.mxu0 %v2265
    %2410 = vmatprep.subr.bf16.mxu0 %v2270
    %2411 = vmatpush1.bf16.msra.mxu0 %v2269
    %2412 = vmatprep.subr.bf16.mxu0 %v2274
    %2413 = vmatpush1.bf16.msra.mxu0 %v2273
    %2414 = vmatprep.mubr.bf16.mxu0 %v1588
    %2415 = vmatmul.mubr.bf16.gmra.mrb[0].mxu0 %v1047
    %v2416 = vpop.f32.mrb[0].mxu0
    %v2417 = vadd.f32 %v2010, %v2416
    %v2418 = vpop.f32.mrb[0].mxu0
    %v2419 = vadd.f32 %v2014, %v2418
    %v2420 = vpop.f32.mrb[0].mxu0
    %v2421 = vadd.f32 %v2010, %v2420
    %v2422 = vpop.f32.mrb[0].mxu0
    %v2423 = vadd.f32 %v2014, %v2422
    %2424 = vdwg.mxu0
    %v2425 = vxor.u32 %v2374, 2147483648
    %v2426 = vxor.u32 %v2378, 2147483648
    %v2427 = vmul.f32 %v2425, 1.442695
    %v2428 = vpow.pop %v2427
    %v2429 = vmul.f32 %v2426, 1.442695
    %v2430 = vpow.pop %v2429
    %v2431 = vadd.f32 %v2428, 1.0
    %v2432 = vadd.f32 %v2430, 1.0
    %v2433 = vrcp.pop %v2431
    %v2434 = vmul.f32 1.0, %v2433
    %v2435 = vrcp.pop %v2432
    %v2436 = vmul.f32 1.0, %v2435
    %v2437 = vxor.u32 %v2376, 2147483648
    %v2438 = vxor.u32 %v2380, 2147483648
    %v2439 = vmul.f32 %v2437, 1.442695
    %v2440 = vpow.pop %v2439
    %v2441 = vmul.f32 %v2438, 1.442695
    %v2442 = vpow.pop %v2441
    %v2443 = vadd.f32 %v2440, 1.0
    %v2444 = vadd.f32 %v2442, 1.0
    %v2445 = vrcp.pop %v2443
    %v2446 = vmul.f32 1.0, %v2445
    %v2447 = vrcp.pop %v2444
    %v2448 = vmul.f32 1.0, %v2447
    %v2449 = vtanh.pop %v2417
    %v2450 = vtanh.pop %v2421
    %v2451 = vxor.u32 %v2419, 2147483648
    %v2452 = vxor.u32 %v2423, 2147483648
    %v2453 = vmul.f32 %v2451, 1.442695
    %v2454 = vpow.pop %v2453
    %v2455 = vmul.f32 %v2452, 1.442695
    %v2456 = vpow.pop %v2455
    %v2457 = vadd.f32 %v2454, 1.0
    %v2458 = vadd.f32 %v2456, 1.0
    %v2459 = vrcp.pop %v2457
    %v2460 = vmul.f32 1.0, %v2459
    %v2461 = vrcp.pop %v2458
    %v2462 = vmul.f32 1.0, %v2461
    %v2463 = vmul.f32 %v2446, %v1582
    %v2464 = vmul.f32 %v2448, %v1583
    %v2465 = vmul.f32 %v2434, %v2449
    %v2466 = vmul.f32 %v2436, %v2450
    %v2467 = vadd.f32 %v2463, %v2465
    %v2468 = vadd.f32 %v2464, %v2466
    %v2469 = vtanh.pop %v2467
    %v2470 = vtanh.pop %v2468
    %v2471 = vmul.f32 %v2460, %v2469
    %v2472 = vmul.f32 %v2462, %v2470
    %v2473 = vpack.c.bf16 %v2472, %v2471
    %2474 = vst [vmem:[#allocation3 + $0x8] sm:$0xff] %v2473
    %v2475 = vld [vmem:[#allocation2 + $0xc0] sm:$0xff]
    %v2476 = vld [vmem:[#allocation2 + $0xc8] sm:$0xff]
    %v2477 = vld [vmem:[#allocation2 + $0xd0] sm:$0xff]
    %v2478 = vld [vmem:[#allocation2 + $0xd8] sm:$0xff]
    %v2479 = vld [vmem:[#allocation2 + $0xe0] sm:$0xff]
    %v2480 = vld [vmem:[#allocation2 + $0xe8] sm:$0xff]
    %v2481 = vld [vmem:[#allocation2 + $0xf0] sm:$0xff]
    %v2482 = vld [vmem:[#allocation2 + $0xf8] sm:$0xff]
    %v2483 = vld [vmem:[%s3] sm:$0xff]
    %v2484 = vld [vmem:[%s3 + $0x8] sm:$0xff]
    %v2485 = vld [vmem:[%s3 + $0x10] sm:$0xff]
    %v2486 = vld [vmem:[%s3 + $0x18] sm:$0xff]
    %v2487 = vld [vmem:[%s3 + $0x20] sm:$0xff]
    %v2488 = vld [vmem:[%s3 + $0x28] sm:$0xff]
    %v2489 = vld [vmem:[%s3 + $0x30] sm:$0xff]
    %v2490 = vld [vmem:[%s3 + $0x38] sm:$0xff]
    %v2491 = vld [vmem:[%s3 + $0x40] sm:$0xff]
    %v2492 = vld [vmem:[%s3 + $0x48] sm:$0xff]
    %v2493 = vld [vmem:[%s3 + $0x50] sm:$0xff]
    %v2494 = vld [vmem:[%s3 + $0x58] sm:$0xff]
    %v2495 = vld [vmem:[%s3 + $0x60] sm:$0xff]
    %v2496 = vld [vmem:[%s3 + $0x68] sm:$0xff]
    %v2497 = vld [vmem:[%s3 + $0x70] sm:$0xff]
    %v2498 = vld [vmem:[%s3 + $0x78] sm:$0xff]
    %v2499 = vld [vmem:[%s3 + $0x80] sm:$0xff]
    %v2500 = vld [vmem:[%s3 + $0x88] sm:$0xff]
    %v2501 = vld [vmem:[%s3 + $0x90] sm:$0xff]
    %v2502 = vld [vmem:[%s3 + $0x98] sm:$0xff]
    %v2503 = vld [vmem:[%s3 + $0xa0] sm:$0xff]
    %v2504 = vld [vmem:[%s3 + $0xa8] sm:$0xff]
    %v2505 = vld [vmem:[%s3 + $0xb0] sm:$0xff]
    %v2506 = vld [vmem:[%s3 + $0xb8] sm:$0xff]
    %v2507 = vld [vmem:[%s3 + $0xc0] sm:$0xff]
    %v2508 = vld [vmem:[%s3 + $0xc8] sm:$0xff]
    %v2509 = vld [vmem:[%s3 + $0xd0] sm:$0xff]
    %v2510 = vld [vmem:[%s3 + $0xd8] sm:$0xff]
    %v2511 = vld [vmem:[%s3 + $0xe0] sm:$0xff]
    %v2512 = vld [vmem:[%s3 + $0xe8] sm:$0xff]
    %v2513 = vld [vmem:[%s3 + $0xf0] sm:$0xff]
    %v2514 = vld [vmem:[%s3 + $0xf8] sm:$0xff]
    %v2547 = vunpack.c.l.b16 %v2483
    %v2548 = vunpack.c.h.b16 %v2483
    %v2549 = vunpack.c.l.b16 %v2484
    %v2550 = vunpack.c.h.b16 %v2484
    %v2551 = vunpack.c.l.b16 %v2485
    %v2552 = vunpack.c.h.b16 %v2485
    %v2553 = vunpack.c.l.b16 %v2486
    %v2554 = vunpack.c.h.b16 %v2486
    %v2555 = vunpack.c.l.b16 %v2487
    %v2556 = vunpack.c.h.b16 %v2487
    %v2557 = vunpack.c.l.b16 %v2488
    %v2558 = vunpack.c.h.b16 %v2488
    %v2559 = vunpack.c.l.b16 %v2489
    %v2560 = vunpack.c.h.b16 %v2489
    %v2561 = vunpack.c.l.b16 %v2490
    %v2562 = vunpack.c.h.b16 %v2490
    %v2563 = vunpack.c.l.b16 %v2491
    %v2564 = vunpack.c.h.b16 %v2491
    %v2565 = vunpack.c.l.b16 %v2492
    %v2566 = vunpack.c.h.b16 %v2492
    %v2567 = vunpack.c.l.b16 %v2493
    %v2568 = vunpack.c.h.b16 %v2493
    %v2569 = vunpack.c.l.b16 %v2494
    %v2570 = vunpack.c.h.b16 %v2494
    %v2571 = vunpack.c.l.b16 %v2495
    %v2572 = vunpack.c.h.b16 %v2495
    %v2573 = vunpack.c.l.b16 %v2496
    %v2574 = vunpack.c.h.b16 %v2496
    %v2575 = vunpack.c.l.b16 %v2497
    %v2576 = vunpack.c.h.b16 %v2497
    %v2577 = vunpack.c.l.b16 %v2498
    %v2578 = vunpack.c.h.b16 %v2498
    %v2579 = vunpack.c.l.b16 %v2499
    %v2580 = vunpack.c.h.b16 %v2499
    %v2581 = vunpack.c.l.b16 %v2500
    %v2582 = vunpack.c.h.b16 %v2500
    %v2583 = vunpack.c.l.b16 %v2501
    %v2584 = vunpack.c.h.b16 %v2501
    %v2585 = vunpack.c.l.b16 %v2502
    %v2586 = vunpack.c.h.b16 %v2502
    %v2587 = vunpack.c.l.b16 %v2503
    %v2588 = vunpack.c.h.b16 %v2503
    %v2589 = vunpack.c.l.b16 %v2504
    %v2590 = vunpack.c.h.b16 %v2504
    %v2591 = vunpack.c.l.b16 %v2505
    %v2592 = vunpack.c.h.b16 %v2505
    %v2593 = vunpack.c.l.b16 %v2506
    %v2594 = vunpack.c.h.b16 %v2506
    %v2595 = vunpack.c.l.b16 %v2507
    %v2596 = vunpack.c.h.b16 %v2507
    %v2597 = vunpack.c.l.b16 %v2508
    %v2598 = vunpack.c.h.b16 %v2508
    %v2599 = vunpack.c.l.b16 %v2509
    %v2600 = vunpack.c.h.b16 %v2509
    %v2601 = vunpack.c.l.b16 %v2510
    %v2602 = vunpack.c.h.b16 %v2510
    %v2603 = vunpack.c.l.b16 %v2511
    %v2604 = vunpack.c.h.b16 %v2511
    %v2605 = vunpack.c.l.b16 %v2512
    %v2606 = vunpack.c.h.b16 %v2512
    %v2607 = vunpack.c.l.b16 %v2513
    %v2608 = vunpack.c.h.b16 %v2513
    %v2609 = vunpack.c.l.b16 %v2514
    %v2610 = vunpack.c.h.b16 %v2514
    %v2611 = vpack.c.b16 %v2551, %v2547
    %v2612 = vpack.c.b16 %v2552, %v2548
    %v2613 = vpack.c.b16 %v2553, %v2549
    %v2614 = vpack.c.b16 %v2554, %v2550
    %v2615 = vpack.c.b16 %v2559, %v2555
    %v2616 = vpack.c.b16 %v2560, %v2556
    %v2617 = vpack.c.b16 %v2561, %v2557
    %v2618 = vpack.c.b16 %v2562, %v2558
    %v2619 = vpack.c.b16 %v2567, %v2563
    %v2620 = vpack.c.b16 %v2568, %v2564
    %v2621 = vpack.c.b16 %v2569, %v2565
    %v2622 = vpack.c.b16 %v2570, %v2566
    %v2623 = vpack.c.b16 %v2575, %v2571
    %v2624 = vpack.c.b16 %v2576, %v2572
    %v2625 = vpack.c.b16 %v2577, %v2573
    %v2626 = vpack.c.b16 %v2578, %v2574
    %v2627 = vpack.c.b16 %v2583, %v2579
    %v2628 = vpack.c.b16 %v2584, %v2580
    %v2629 = vpack.c.b16 %v2585, %v2581
    %v2630 = vpack.c.b16 %v2586, %v2582
    %v2631 = vpack.c.b16 %v2591, %v2587
    %v2632 = vpack.c.b16 %v2592, %v2588
    %v2633 = vpack.c.b16 %v2593, %v2589
    %v2634 = vpack.c.b16 %v2594, %v2590
    %v2635 = vpack.c.b16 %v2599, %v2595
    %v2636 = vpack.c.b16 %v2600, %v2596
    %v2637 = vpack.c.b16 %v2601, %v2597
    %v2638 = vpack.c.b16 %v2602, %v2598
    %v2639 = vpack.c.b16 %v2607, %v2603
    %v2640 = vpack.c.b16 %v2608, %v2604
    %v2641 = vpack.c.b16 %v2609, %v2605
    %v2642 = vpack.c.b16 %v2610, %v2606
    %2675 = vmatprep.subr.bf16.mxu0 %v2612
    %2676 = vmatpush1.bf16.msra.mxu0 %v2611
    %2677 = vmatprep.subr.bf16.mxu0 %v2616
    %2678 = vmatpush1.bf16.msra.mxu0 %v2615
    %2679 = vmatprep.subr.bf16.mxu0 %v2620
    %2680 = vmatpush1.bf16.msra.mxu0 %v2619
    %2681 = vmatprep.subr.bf16.mxu0 %v2624
    %2682 = vmatpush1.bf16.msra.mxu0 %v2623
    %2683 = vmatprep.subr.bf16.mxu0 %v2628
    %2684 = vmatpush1.bf16.msra.mxu0 %v2627
    %2685 = vmatprep.subr.bf16.mxu0 %v2632
    %2686 = vmatpush1.bf16.msra.mxu0 %v2631
    %2687 = vmatprep.subr.bf16.mxu0 %v2636
    %2688 = vmatpush1.bf16.msra.mxu0 %v2635
    %2689 = vmatprep.subr.bf16.mxu0 %v2640
    %2690 = vmatpush1.bf16.msra.mxu0 %v2639
    %2691 = vmatprep.subr.bf16.mxu0 0
    %2692 = vmatpush1.bf16.msra.mxu0 0
    %2693 = vmatprep.subr.bf16.mxu0 0
    %2694 = vmatpush1.bf16.msra.mxu0 0
    %2695 = vmatprep.subr.bf16.mxu0 0
    %2696 = vmatpush1.bf16.msra.mxu0 0
    %2697 = vmatprep.subr.bf16.mxu0 0
    %2698 = vmatpush1.bf16.msra.mxu0 0
    %2699 = vmatprep.subr.bf16.mxu0 0
    %2700 = vmatpush1.bf16.msra.mxu0 0
    %2701 = vmatprep.subr.bf16.mxu0 0
    %2702 = vmatpush1.bf16.msra.mxu0 0
    %2703 = vmatprep.subr.bf16.mxu0 0
    %2704 = vmatpush1.bf16.msra.mxu0 0
    %2705 = vmatprep.subr.bf16.mxu0 0
    %2706 = vmatpush1.bf16.msra.mxu0 0
    %2707 = vmatprep.mubr.bf16.mxu0 0
    %2708 = vmatmul.mubr.bf16.gmra.mrb[0].mxu0 %v1932
    %v2709 = vpop.f32.mrb[0].mxu0
    %v2710 = vadd.f32 0.0, %v2709
    %v2711 = vpop.f32.mrb[0].mxu0
    %v2712 = vadd.f32 0.0, %v2711
    %v2713 = vpop.f32.mrb[0].mxu0
    %v2714 = vadd.f32 0.0, %v2713
    %v2715 = vpop.f32.mrb[0].mxu0
    %v2716 = vadd.f32 0.0, %v2715
    %2717 = vdwg.mxu0
    %2718 = vmatprep.subr.bf16.mxu0 %v2614
    %2719 = vmatpush1.bf16.msra.mxu0 %v2613
    %2720 = vmatprep.subr.bf16.mxu0 %v2618
    %2721 = vmatpush1.bf16.msra.mxu0 %v2617
    %2722 = vmatprep.subr.bf16.mxu0 %v2622
    %2723 = vmatpush1.bf16.msra.mxu0 %v2621
    %2724 = vmatprep.subr.bf16.mxu0 %v2626
    %2725 = vmatpush1.bf16.msra.mxu0 %v2625
    %2726 = vmatprep.subr.bf16.mxu0 %v2630
    %2727 = vmatpush1.bf16.msra.mxu0 %v2629
    %2728 = vmatprep.subr.bf16.mxu0 %v2634
    %2729 = vmatpush1.bf16.msra.mxu0 %v2633
    %2730 = vmatprep.subr.bf16.mxu0 %v2638
    %2731 = vmatpush1.bf16.msra.mxu0 %v2637
    %2732 = vmatprep.subr.bf16.mxu0 %v2642
    %2733 = vmatpush1.bf16.msra.mxu0 %v2641
    %2734 = vmatprep.subr.bf16.mxu0 0
    %2735 = vmatpush1.bf16.msra.mxu0 0
    %2736 = vmatprep.subr.bf16.mxu0 0
    %2737 = vmatpush1.bf16.msra.mxu0 0
    %2738 = vmatprep.subr.bf16.mxu0 0
    %2739 = vmatpush1.bf16.msra.mxu0 0
    %2740 = vmatprep.subr.bf16.mxu0 0
    %2741 = vmatpush1.bf16.msra.mxu0 0
    %2742 = vmatprep.subr.bf16.mxu0 0
    %2743 = vmatpush1.bf16.msra.mxu0 0
    %2744 = vmatprep.subr.bf16.mxu0 0
    %2745 = vmatpush1.bf16.msra.mxu0 0
    %2746 = vmatprep.subr.bf16.mxu0 0
    %2747 = vmatpush1.bf16.msra.mxu0 0
    %2748 = vmatprep.subr.bf16.mxu0 0
    %2749 = vmatpush1.bf16.msra.mxu0 0
    %2750 = vmatprep.mubr.bf16.mxu0 0
    %2751 = vmatmul.mubr.bf16.gmra.mrb[0].mxu0 %v1932
    %v2752 = vpop.f32.mrb[0].mxu0
    %v2753 = vadd.f32 0.0, %v2752
    %v2754 = vpop.f32.mrb[0].mxu0
    %v2755 = vadd.f32 0.0, %v2754
    %v2756 = vpop.f32.mrb[0].mxu0
    %v2757 = vadd.f32 0.0, %v2756
    %v2758 = vpop.f32.mrb[0].mxu0
    %v2759 = vadd.f32 0.0, %v2758
    %2760 = vdwg.mxu0
    %v2761 = vadd.f32 %v2475, %v2710
    %v2762 = vadd.f32 %v2476, %v2712
    %v2763 = vadd.f32 %v2477, %v2753
    %v2764 = vadd.f32 %v2478, %v2755
    %v2765 = vadd.f32 %v2479, %v2714
    %v2766 = vadd.f32 %v2480, %v2716
    %v2767 = vadd.f32 %v2481, %v2757
    %v2768 = vadd.f32 %v2482, %v2759
    %v2769 = vxor.u32 %v2761, 2147483648
    %v2770 = vxor.u32 %v2765, 2147483648
    %v2771 = vmul.f32 %v2769, 1.442695
    %v2772 = vpow.pop %v2771
    %v2773 = vmul.f32 %v2770, 1.442695
    %v2774 = vpow.pop %v2773
    %v2775 = vadd.f32 %v2772, 1.0
    %v2776 = vadd.f32 %v2774, 1.0
    %v2777 = vrcp.pop %v2775
    %v2778 = vmul.f32 1.0, %v2777
    %v2779 = vrcp.pop %v2776
    %v2780 = vmul.f32 1.0, %v2779
    %v2781 = vxor.u32 %v2762, 2147483648
    %v2782 = vxor.u32 %v2766, 2147483648
    %v2783 = vmul.f32 %v2781, 1.442695
    %v2784 = vpow.pop %v2783
    %v2785 = vmul.f32 %v2782, 1.442695
    %v2786 = vpow.pop %v2785
    %v2787 = vadd.f32 %v2784, 1.0
    %v2788 = vadd.f32 %v2786, 1.0
    %v2789 = vrcp.pop %v2787
    %v2790 = vmul.f32 1.0, %v2789
    %v2791 = vrcp.pop %v2788
    %v2792 = vmul.f32 1.0, %v2791
    %v2793 = vtanh.pop %v2763
    %v2794 = vtanh.pop %v2767
    %v2795 = vxor.u32 %v2764, 2147483648
    %v2796 = vxor.u32 %v2768, 2147483648
    %v2797 = vmul.f32 %v2795, 1.442695
    %v2798 = vpow.pop %v2797
    %v2799 = vmul.f32 %v2796, 1.442695
    %v2800 = vpow.pop %v2799
    %v2801 = vadd.f32 %v2798, 1.0
    %v2802 = vadd.f32 %v2800, 1.0
    %v2803 = vrcp.pop %v2801
    %v2804 = vmul.f32 1.0, %v2803
    %v2805 = vrcp.pop %v2802
    %v2806 = vmul.f32 1.0, %v2805
    %v2807 = vmul.f32 %v2790, %v1926
    %v2808 = vmul.f32 %v2792, %v1927
    %v2809 = vmul.f32 %v2778, %v2793
    %v2810 = vmul.f32 %v2780, %v2794
    %v2811 = vadd.f32 %v2807, %v2809
    %v2812 = vadd.f32 %v2808, %v2810
    %v2813 = vtanh.pop %v2811
    %v2814 = vtanh.pop %v2812
    %v2815 = vmul.f32 %v2804, %v2813
    %v2816 = vmul.f32 %v2806, %v2814
    %v2817 = vpack.c.bf16 %v2816, %v2815
    %v2818 = vld [vmem:[#allocation7] sm:$0xff]
    %v2819 = vld [vmem:[#allocation7 + $0x8] sm:$0xff]
    %v2820 = vld [vmem:[#allocation7 + $0x10] sm:$0xff]
    %v2821 = vld [vmem:[#allocation7 + $0x18] sm:$0xff]
    %v2822 = vld [vmem:[#allocation7 + $0x20] sm:$0xff]
    %v2823 = vld [vmem:[#allocation7 + $0x28] sm:$0xff]
    %v2824 = vld [vmem:[#allocation7 + $0x30] sm:$0xff]
    %v2825 = vld [vmem:[#allocation7 + $0x38] sm:$0xff]
    %v2826 = vld [vmem:[#allocation7 + $0x40] sm:$0xff]
    %v2827 = vld [vmem:[#allocation7 + $0x48] sm:$0xff]
    %v2828 = vld [vmem:[#allocation7 + $0x50] sm:$0xff]
    %v2829 = vld [vmem:[#allocation7 + $0x58] sm:$0xff]
    %v2830 = vld [vmem:[#allocation7 + $0x60] sm:$0xff]
    %v2831 = vld [vmem:[#allocation7 + $0x68] sm:$0xff]
    %v2832 = vld [vmem:[#allocation7 + $0x70] sm:$0xff]
    %v2833 = vld [vmem:[#allocation7 + $0x78] sm:$0xff]
    %v2834 = vld [vmem:[#allocation7 + $0x80] sm:$0xff]
    %v2835 = vld [vmem:[#allocation7 + $0x88] sm:$0xff]
    %v2836 = vld [vmem:[#allocation7 + $0x90] sm:$0xff]
    %v2837 = vld [vmem:[#allocation7 + $0x98] sm:$0xff]
    %v2838 = vld [vmem:[#allocation7 + $0xa0] sm:$0xff]
    %v2839 = vld [vmem:[#allocation7 + $0xa8] sm:$0xff]
    %v2840 = vld [vmem:[#allocation7 + $0xb0] sm:$0xff]
    %v2841 = vld [vmem:[#allocation7 + $0xb8] sm:$0xff]
    %v2842 = vld [vmem:[#allocation7 + $0xc0] sm:$0xff]
    %v2843 = vld [vmem:[#allocation7 + $0xc8] sm:$0xff]
    %v2844 = vld [vmem:[#allocation7 + $0xd0] sm:$0xff]
    %v2845 = vld [vmem:[#allocation7 + $0xd8] sm:$0xff]
    %v2846 = vld [vmem:[#allocation7 + $0xe0] sm:$0xff]
    %v2847 = vld [vmem:[#allocation7 + $0xe8] sm:$0xff]
    %v2848 = vld [vmem:[#allocation7 + $0xf0] sm:$0xff]
    %v2849 = vld [vmem:[#allocation7 + $0xf8] sm:$0xff]
    %v2850 = vld [vmem:[#allocation7 + $0x100] sm:$0xff]
    %v2851 = vld [vmem:[#allocation7 + $0x108] sm:$0xff]
    %v2852 = vld [vmem:[#allocation7 + $0x110] sm:$0xff]
    %v2853 = vld [vmem:[#allocation7 + $0x118] sm:$0xff]
    %v2854 = vld [vmem:[#allocation7 + $0x120] sm:$0xff]
    %v2855 = vld [vmem:[#allocation7 + $0x128] sm:$0xff]
    %v2856 = vld [vmem:[#allocation7 + $0x130] sm:$0xff]
    %v2857 = vld [vmem:[#allocation7 + $0x138] sm:$0xff]
    %v2858 = vld [vmem:[#allocation7 + $0x140] sm:$0xff]
    %v2859 = vld [vmem:[#allocation7 + $0x148] sm:$0xff]
    %v2860 = vld [vmem:[#allocation7 + $0x150] sm:$0xff]
    %v2861 = vld [vmem:[#allocation7 + $0x158] sm:$0xff]
    %v2862 = vld [vmem:[#allocation7 + $0x160] sm:$0xff]
    %v2863 = vld [vmem:[#allocation7 + $0x168] sm:$0xff]
    %v2864 = vld [vmem:[#allocation7 + $0x170] sm:$0xff]
    %v2865 = vld [vmem:[#allocation7 + $0x178] sm:$0xff]
    %v2866 = vld [vmem:[#allocation7 + $0x180] sm:$0xff]
    %v2867 = vld [vmem:[#allocation7 + $0x188] sm:$0xff]
    %v2868 = vld [vmem:[#allocation7 + $0x190] sm:$0xff]
    %v2869 = vld [vmem:[#allocation7 + $0x198] sm:$0xff]
    %v2870 = vld [vmem:[#allocation7 + $0x1a0] sm:$0xff]
    %v2871 = vld [vmem:[#allocation7 + $0x1a8] sm:$0xff]
    %v2872 = vld [vmem:[#allocation7 + $0x1b0] sm:$0xff]
    %v2873 = vld [vmem:[#allocation7 + $0x1b8] sm:$0xff]
    %v2874 = vld [vmem:[#allocation7 + $0x1c0] sm:$0xff]
    %v2875 = vld [vmem:[#allocation7 + $0x1c8] sm:$0xff]
    %v2876 = vld [vmem:[#allocation7 + $0x1d0] sm:$0xff]
    %v2877 = vld [vmem:[#allocation7 + $0x1d8] sm:$0xff]
    %v2878 = vld [vmem:[#allocation7 + $0x1e0] sm:$0xff]
    %v2879 = vld [vmem:[#allocation7 + $0x1e8] sm:$0xff]
    %v2880 = vld [vmem:[#allocation7 + $0x1f0] sm:$0xff]
    %v2881 = vld [vmem:[#allocation7 + $0x1f8] sm:$0xff]
    %v2882 = vld [vmem:[#allocation9] sm:$0xf]
    %v2884 = vlaneseq
    %v2885 = vshrl.u32 %v2884, 7
    %v2886 = vsub.s32 0, %v2885
    %v2887 = vrot.slane %v2882, %v2886
    %v2888 = vlaneseq
    %v2889 = vshrl.u32 %v2888, 7
    %v2890 = vsub.s32 1, %v2889
    %v2891 = vrot.slane %v2882, %v2890
    %v2892 = vlaneseq
    %v2893 = vshrl.u32 %v2892, 7
    %v2894 = vsub.s32 2, %v2893
    %v2895 = vrot.slane %v2882, %v2894
    %v2896 = vlaneseq
    %v2897 = vshrl.u32 %v2896, 7
    %v2898 = vsub.s32 3, %v2897
    %v2899 = vrot.slane %v2882, %v2898
    %v2968 = vunpack.c.l.b16 %v2818
    %v2969 = vunpack.c.h.b16 %v2818
    %v2970 = vunpack.c.l.b16 %v2819
    %v2971 = vunpack.c.h.b16 %v2819
    %v2972 = vunpack.c.l.b16 %v2820
    %v2973 = vunpack.c.h.b16 %v2820
    %v2974 = vunpack.c.l.b16 %v2821
    %v2975 = vunpack.c.h.b16 %v2821
    %v2976 = vunpack.c.l.b16 %v2822
    %v2977 = vunpack.c.h.b16 %v2822
    %v2978 = vunpack.c.l.b16 %v2823
    %v2979 = vunpack.c.h.b16 %v2823
    %v2980 = vunpack.c.l.b16 %v2824
    %v2981 = vunpack.c.h.b16 %v2824
    %v2982 = vunpack.c.l.b16 %v2825
    %v2983 = vunpack.c.h.b16 %v2825
    %v2984 = vunpack.c.l.b16 %v2826
    %v2985 = vunpack.c.h.b16 %v2826
    %v2986 = vunpack.c.l.b16 %v2827
    %v2987 = vunpack.c.h.b16 %v2827
    %v2988 = vunpack.c.l.b16 %v2828
    %v2989 = vunpack.c.h.b16 %v2828
    %v2990 = vunpack.c.l.b16 %v2829
    %v2991 = vunpack.c.h.b16 %v2829
    %v2992 = vunpack.c.l.b16 %v2830
    %v2993 = vunpack.c.h.b16 %v2830
    %v2994 = vunpack.c.l.b16 %v2831
    %v2995 = vunpack.c.h.b16 %v2831
    %v2996 = vunpack.c.l.b16 %v2832
    %v2997 = vunpack.c.h.b16 %v2832
    %v2998 = vunpack.c.l.b16 %v2833
    %v2999 = vunpack.c.h.b16 %v2833
    %v3000 = vunpack.c.l.b16 %v2834
    %v3001 = vunpack.c.h.b16 %v2834
    %v3002 = vunpack.c.l.b16 %v2835
    %v3003 = vunpack.c.h.b16 %v2835
    %v3004 = vunpack.c.l.b16 %v2836
    %v3005 = vunpack.c.h.b16 %v2836
    %v3006 = vunpack.c.l.b16 %v2837
    %v3007 = vunpack.c.h.b16 %v2837
    %v3008 = vunpack.c.l.b16 %v2838
    %v3009 = vunpack.c.h.b16 %v2838
    %v3010 = vunpack.c.l.b16 %v2839
    %v3011 = vunpack.c.h.b16 %v2839
    %v3012 = vunpack.c.l.b16 %v2840
    %v3013 = vunpack.c.h.b16 %v2840
    %v3014 = vunpack.c.l.b16 %v2841
    %v3015 = vunpack.c.h.b16 %v2841
    %v3016 = vunpack.c.l.b16 %v2842
    %v3017 = vunpack.c.h.b16 %v2842
    %v3018 = vunpack.c.l.b16 %v2843
    %v3019 = vunpack.c.h.b16 %v2843
    %v3020 = vunpack.c.l.b16 %v2844
    %v3021 = vunpack.c.h.b16 %v2844
    %v3022 = vunpack.c.l.b16 %v2845
    %v3023 = vunpack.c.h.b16 %v2845
    %v3024 = vunpack.c.l.b16 %v2846
    %v3025 = vunpack.c.h.b16 %v2846
    %v3026 = vunpack.c.l.b16 %v2847
    %v3027 = vunpack.c.h.b16 %v2847
    %v3028 = vunpack.c.l.b16 %v2848
    %v3029 = vunpack.c.h.b16 %v2848
    %v3030 = vunpack.c.l.b16 %v2849
    %v3031 = vunpack.c.h.b16 %v2849
    %v3032 = vunpack.c.l.b16 %v2850
    %v3033 = vunpack.c.h.b16 %v2850
    %v3034 = vunpack.c.l.b16 %v2851
    %v3035 = vunpack.c.h.b16 %v2851
    %v3036 = vunpack.c.l.b16 %v2852
    %v3037 = vunpack.c.h.b16 %v2852
    %v3038 = vunpack.c.l.b16 %v2853
    %v3039 = vunpack.c.h.b16 %v2853
    %v3040 = vunpack.c.l.b16 %v2854
    %v3041 = vunpack.c.h.b16 %v2854
    %v3042 = vunpack.c.l.b16 %v2855
    %v3043 = vunpack.c.h.b16 %v2855
    %v3044 = vunpack.c.l.b16 %v2856
    %v3045 = vunpack.c.h.b16 %v2856
    %v3046 = vunpack.c.l.b16 %v2857
    %v3047 = vunpack.c.h.b16 %v2857
    %v3048 = vunpack.c.l.b16 %v2858
    %v3049 = vunpack.c.h.b16 %v2858
    %v3050 = vunpack.c.l.b16 %v2859
    %v3051 = vunpack.c.h.b16 %v2859
    %v3052 = vunpack.c.l.b16 %v2860
    %v3053 = vunpack.c.h.b16 %v2860
    %v3054 = vunpack.c.l.b16 %v2861
    %v3055 = vunpack.c.h.b16 %v2861
    %v3056 = vunpack.c.l.b16 %v2862
    %v3057 = vunpack.c.h.b16 %v2862
    %v3058 = vunpack.c.l.b16 %v2863
    %v3059 = vunpack.c.h.b16 %v2863
    %v3060 = vunpack.c.l.b16 %v2864
    %v3061 = vunpack.c.h.b16 %v2864
    %v3062 = vunpack.c.l.b16 %v2865
    %v3063 = vunpack.c.h.b16 %v2865
    %v3064 = vunpack.c.l.b16 %v2866
    %v3065 = vunpack.c.h.b16 %v2866
    %v3066 = vunpack.c.l.b16 %v2867
    %v3067 = vunpack.c.h.b16 %v2867
    %v3068 = vunpack.c.l.b16 %v2868
    %v3069 = vunpack.c.h.b16 %v2868
    %v3070 = vunpack.c.l.b16 %v2869
    %v3071 = vunpack.c.h.b16 %v2869
    %v3072 = vunpack.c.l.b16 %v2870
    %v3073 = vunpack.c.h.b16 %v2870
    %v3074 = vunpack.c.l.b16 %v2871
    %v3075 = vunpack.c.h.b16 %v2871
    %v3076 = vunpack.c.l.b16 %v2872
    %v3077 = vunpack.c.h.b16 %v2872
    %v3078 = vunpack.c.l.b16 %v2873
    %v3079 = vunpack.c.h.b16 %v2873
    %v3080 = vunpack.c.l.b16 %v2874
    %v3081 = vunpack.c.h.b16 %v2874
    %v3082 = vunpack.c.l.b16 %v2875
    %v3083 = vunpack.c.h.b16 %v2875
    %v3084 = vunpack.c.l.b16 %v2876
    %v3085 = vunpack.c.h.b16 %v2876
    %v3086 = vunpack.c.l.b16 %v2877
    %v3087 = vunpack.c.h.b16 %v2877
    %v3088 = vunpack.c.l.b16 %v2878
    %v3089 = vunpack.c.h.b16 %v2878
    %v3090 = vunpack.c.l.b16 %v2879
    %v3091 = vunpack.c.h.b16 %v2879
    %v3092 = vunpack.c.l.b16 %v2880
    %v3093 = vunpack.c.h.b16 %v2880
    %v3094 = vunpack.c.l.b16 %v2881
    %v3095 = vunpack.c.h.b16 %v2881
    %v3096 = vpack.c.b16 %v2972, %v2968
    %v3097 = vpack.c.b16 %v2973, %v2969
    %v3098 = vpack.c.b16 %v2974, %v2970
    %v3099 = vpack.c.b16 %v2975, %v2971
    %v3100 = vpack.c.b16 %v2980, %v2976
    %v3101 = vpack.c.b16 %v2981, %v2977
    %v3102 = vpack.c.b16 %v2982, %v2978
    %v3103 = vpack.c.b16 %v2983, %v2979
    %v3104 = vpack.c.b16 %v2988, %v2984
    %v3105 = vpack.c.b16 %v2989, %v2985
    %v3106 = vpack.c.b16 %v2990, %v2986
    %v3107 = vpack.c.b16 %v2991, %v2987
    %v3108 = vpack.c.b16 %v2996, %v2992
    %v3109 = vpack.c.b16 %v2997, %v2993
    %v3110 = vpack.c.b16 %v2998, %v2994
    %v3111 = vpack.c.b16 %v2999, %v2995
    %v3112 = vpack.c.b16 %v3004, %v3000
    %v3113 = vpack.c.b16 %v3005, %v3001
    %v3114 = vpack.c.b16 %v3006, %v3002
    %v3115 = vpack.c.b16 %v3007, %v3003
    %v3116 = vpack.c.b16 %v3012, %v3008
    %v3117 = vpack.c.b16 %v3013, %v3009
    %v3118 = vpack.c.b16 %v3014, %v3010
    %v3119 = vpack.c.b16 %v3015, %v3011
    %v3120 = vpack.c.b16 %v3020, %v3016
    %v3121 = vpack.c.b16 %v3021, %v3017
    %v3122 = vpack.c.b16 %v3022, %v3018
    %v3123 = vpack.c.b16 %v3023, %v3019
    %v3124 = vpack.c.b16 %v3028, %v3024
    %v3125 = vpack.c.b16 %v3029, %v3025
    %v3126 = vpack.c.b16 %v3030, %v3026
    %v3127 = vpack.c.b16 %v3031, %v3027
    %v3128 = vpack.c.b16 %v3036, %v3032
    %v3129 = vpack.c.b16 %v3037, %v3033
    %v3130 = vpack.c.b16 %v3038, %v3034
    %v3131 = vpack.c.b16 %v3039, %v3035
    %v3132 = vpack.c.b16 %v3044, %v3040
    %v3133 = vpack.c.b16 %v3045, %v3041
    %v3134 = vpack.c.b16 %v3046, %v3042
    %v3135 = vpack.c.b16 %v3047, %v3043
    %v3136 = vpack.c.b16 %v3052, %v3048
    %v3137 = vpack.c.b16 %v3053, %v3049
    %v3138 = vpack.c.b16 %v3054, %v3050
    %v3139 = vpack.c.b16 %v3055, %v3051
    %v3140 = vpack.c.b16 %v3060, %v3056
    %v3141 = vpack.c.b16 %v3061, %v3057
    %v3142 = vpack.c.b16 %v3062, %v3058
    %v3143 = vpack.c.b16 %v3063, %v3059
    %v3144 = vpack.c.b16 %v3068, %v3064
    %v3145 = vpack.c.b16 %v3069, %v3065
    %v3146 = vpack.c.b16 %v3070, %v3066
    %v3147 = vpack.c.b16 %v3071, %v3067
    %v3148 = vpack.c.b16 %v3076, %v3072
    %v3149 = vpack.c.b16 %v3077, %v3073
    %v3150 = vpack.c.b16 %v3078, %v3074
    %v3151 = vpack.c.b16 %v3079, %v3075
    %v3152 = vpack.c.b16 %v3084, %v3080
    %v3153 = vpack.c.b16 %v3085, %v3081
    %v3154 = vpack.c.b16 %v3086, %v3082
    %v3155 = vpack.c.b16 %v3087, %v3083
    %v3156 = vpack.c.b16 %v3092, %v3088
    %v3157 = vpack.c.b16 %v3093, %v3089
    %v3158 = vpack.c.b16 %v3094, %v3090
    %v3159 = vpack.c.b16 %v3095, %v3091
    %3224 = vmatprep.subr.bf16.mxu0 %v3097
    %3225 = vmatpush1.bf16.msra.mxu0 %v3096
    %3226 = vmatprep.subr.bf16.mxu0 %v3101
    %3227 = vmatpush1.bf16.msra.mxu0 %v3100
    %3228 = vmatprep.subr.bf16.mxu0 %v3105
    %3229 = vmatpush1.bf16.msra.mxu0 %v3104
    %3230 = vmatprep.subr.bf16.mxu0 %v3109
    %3231 = vmatpush1.bf16.msra.mxu0 %v3108
    %3232 = vmatprep.subr.bf16.mxu0 %v3113
    %3233 = vmatpush1.bf16.msra.mxu0 %v3112
    %3234 = vmatprep.subr.bf16.mxu0 %v3117
    %3235 = vmatpush1.bf16.msra.mxu0 %v3116
    %3236 = vmatprep.subr.bf16.mxu0 %v3121
    %3237 = vmatpush1.bf16.msra.mxu0 %v3120
    %3238 = vmatprep.subr.bf16.mxu0 %v3125
    %3239 = vmatpush1.bf16.msra.mxu0 %v3124
    %3240 = vmatprep.subr.bf16.mxu0 %v3129
    %3241 = vmatpush1.bf16.msra.mxu0 %v3128
    %3242 = vmatprep.subr.bf16.mxu0 %v3133
    %3243 = vmatpush1.bf16.msra.mxu0 %v3132
    %3244 = vmatprep.subr.bf16.mxu0 %v3137
    %3245 = vmatpush1.bf16.msra.mxu0 %v3136
    %3246 = vmatprep.subr.bf16.mxu0 %v3141
    %3247 = vmatpush1.bf16.msra.mxu0 %v3140
    %3248 = vmatprep.subr.bf16.mxu0 %v3145
    %3249 = vmatpush1.bf16.msra.mxu0 %v3144
    %3250 = vmatprep.subr.bf16.mxu0 %v3149
    %3251 = vmatpush1.bf16.msra.mxu0 %v3148
    %3252 = vmatprep.subr.bf16.mxu0 %v3153
    %3253 = vmatpush1.bf16.msra.mxu0 %v3152
    %3254 = vmatprep.subr.bf16.mxu0 %v3157
    %3255 = vmatpush1.bf16.msra.mxu0 %v3156
    %3256 = vmatprep.mubr.bf16.mxu0 %v2473
    %3257 = vmatmul.mubr.bf16.gmra.mrb[0].mxu0 %v1932
    %v3258 = vpop.f32.mrb[0].mxu0
    %v3259 = vadd.f32 %v2887, %v3258
    %v3260 = vpop.f32.mrb[0].mxu0
    %v3261 = vadd.f32 %v2891, %v3260
    %v3262 = vpop.f32.mrb[0].mxu0
    %v3263 = vadd.f32 %v2887, %v3262
    %v3264 = vpop.f32.mrb[0].mxu0
    %v3265 = vadd.f32 %v2891, %v3264
    %3266 = vdwg.mxu0
    %3267 = vmatprep.subr.bf16.mxu0 %v3099
    %3268 = vmatpush1.bf16.msra.mxu0 %v3098
    %3269 = vmatprep.subr.bf16.mxu0 %v3103
    %3270 = vmatpush1.bf16.msra.mxu0 %v3102
    %3271 = vmatprep.subr.bf16.mxu0 %v3107
    %3272 = vmatpush1.bf16.msra.mxu0 %v3106
    %3273 = vmatprep.subr.bf16.mxu0 %v3111
    %3274 = vmatpush1.bf16.msra.mxu0 %v3110
    %3275 = vmatprep.subr.bf16.mxu0 %v3115
    %3276 = vmatpush1.bf16.msra.mxu0 %v3114
    %3277 = vmatprep.subr.bf16.mxu0 %v3119
    %3278 = vmatpush1.bf16.msra.mxu0 %v3118
    %3279 = vmatprep.subr.bf16.mxu0 %v3123
    %3280 = vmatpush1.bf16.msra.mxu0 %v3122
    %3281 = vmatprep.subr.bf16.mxu0 %v3127
    %3282 = vmatpush1.bf16.msra.mxu0 %v3126
    %3283 = vmatprep.subr.bf16.mxu0 %v3131
    %3284 = vmatpush1.bf16.msra.mxu0 %v3130
    %3285 = vmatprep.subr.bf16.mxu0 %v3135
    %3286 = vmatpush1.bf16.msra.mxu0 %v3134
    %3287 = vmatprep.subr.bf16.mxu0 %v3139
    %3288 = vmatpush1.bf16.msra.mxu0 %v3138
    %3289 = vmatprep.subr.bf16.mxu0 %v3143
    %3290 = vmatpush1.bf16.msra.mxu0 %v3142
    %3291 = vmatprep.subr.bf16.mxu0 %v3147
    %3292 = vmatpush1.bf16.msra.mxu0 %v3146
    %3293 = vmatprep.subr.bf16.mxu0 %v3151
    %3294 = vmatpush1.bf16.msra.mxu0 %v3150
    %3295 = vmatprep.subr.bf16.mxu0 %v3155
    %3296 = vmatpush1.bf16.msra.mxu0 %v3154
    %3297 = vmatprep.subr.bf16.mxu0 %v3159
    %3298 = vmatpush1.bf16.msra.mxu0 %v3158
    %3299 = vmatprep.mubr.bf16.mxu0 %v2473
    %3300 = vmatmul.mubr.bf16.gmra.mrb[0].mxu0 %v1932
    %v3301 = vpop.f32.mrb[0].mxu0
    %v3302 = vadd.f32 %v2895, %v3301
    %v3303 = vpop.f32.mrb[0].mxu0
    %v3304 = vadd.f32 %v2899, %v3303
    %v3305 = vpop.f32.mrb[0].mxu0
    %v3306 = vadd.f32 %v2895, %v3305
    %v3307 = vpop.f32.mrb[0].mxu0
    %v3308 = vadd.f32 %v2899, %v3307
    %3309 = vdwg.mxu0
    %v3310 = vxor.u32 %v3259, 2147483648
    %v3311 = vxor.u32 %v3263, 2147483648
    %v3312 = vmul.f32 %v3310, 1.442695
    %v3313 = vpow.pop %v3312
    %v3314 = vmul.f32 %v3311, 1.442695
    %v3315 = vpow.pop %v3314
    %v3316 = vadd.f32 %v3313, 1.0
    %v3317 = vadd.f32 %v3315, 1.0
    %v3318 = vrcp.pop %v3316
    %v3319 = vmul.f32 1.0, %v3318
    %v3320 = vrcp.pop %v3317
    %v3321 = vmul.f32 1.0, %v3320
    %v3322 = vxor.u32 %v3261, 2147483648
    %v3323 = vxor.u32 %v3265, 2147483648
    %v3324 = vmul.f32 %v3322, 1.442695
    %v3325 = vpow.pop %v3324
    %v3326 = vmul.f32 %v3323, 1.442695
    %v3327 = vpow.pop %v3326
    %v3328 = vadd.f32 %v3325, 1.0
    %v3329 = vadd.f32 %v3327, 1.0
    %v3330 = vrcp.pop %v3328
    %v3331 = vmul.f32 1.0, %v3330
    %v3332 = vrcp.pop %v3329
    %v3333 = vmul.f32 1.0, %v3332
    %v3334 = vtanh.pop %v3302
    %v3335 = vtanh.pop %v3306
    %v3336 = vxor.u32 %v3304, 2147483648
    %v3337 = vxor.u32 %v3308, 2147483648
    %v3338 = vmul.f32 %v3336, 1.442695
    %v3339 = vpow.pop %v3338
    %v3340 = vmul.f32 %v3337, 1.442695
    %v3341 = vpow.pop %v3340
    %v3342 = vadd.f32 %v3339, 1.0
    %v3343 = vadd.f32 %v3341, 1.0
    %v3344 = vrcp.pop %v3342
    %v3345 = vmul.f32 1.0, %v3344
    %v3346 = vrcp.pop %v3343
    %v3347 = vmul.f32 1.0, %v3346
    %v3348 = vmul.f32 %v3331, %v2467
    %v3349 = vmul.f32 %v3333, %v2468
    %v3350 = vmul.f32 %v3319, %v3334
    %v3351 = vmul.f32 %v3321, %v3335
    %v3352 = vadd.f32 %v3348, %v3350
    %v3353 = vadd.f32 %v3349, %v3351
    %v3354 = vtanh.pop %v3352
    %v3355 = vtanh.pop %v3353
    %v3356 = vmul.f32 %v3345, %v3354
    %v3357 = vmul.f32 %v3347, %v3355
    %v3358 = vpack.c.bf16 %v3357, %v3356
    %3359 = vst [vmem:[#allocation3 + $0x10] sm:$0xff] %v3358
    %v3360 = vld [vmem:[#allocation2 + $0x100] sm:$0xff]
    %v3361 = vld [vmem:[#allocation2 + $0x108] sm:$0xff]
    %v3362 = vld [vmem:[#allocation2 + $0x110] sm:$0xff]
    %v3363 = vld [vmem:[#allocation2 + $0x118] sm:$0xff]
    %v3364 = vld [vmem:[#allocation2 + $0x120] sm:$0xff]
    %v3365 = vld [vmem:[#allocation2 + $0x128] sm:$0xff]
    %v3366 = vld [vmem:[#allocation2 + $0x130] sm:$0xff]
    %v3367 = vld [vmem:[#allocation2 + $0x138] sm:$0xff]
    %v3368 = vld [vmem:[%s3] sm:$0xff]
    %v3369 = vld [vmem:[%s3 + $0x8] sm:$0xff]
    %v3370 = vld [vmem:[%s3 + $0x10] sm:$0xff]
    %v3371 = vld [vmem:[%s3 + $0x18] sm:$0xff]
    %v3372 = vld [vmem:[%s3 + $0x20] sm:$0xff]
    %v3373 = vld [vmem:[%s3 + $0x28] sm:$0xff]
    %v3374 = vld [vmem:[%s3 + $0x30] sm:$0xff]
    %v3375 = vld [vmem:[%s3 + $0x38] sm:$0xff]
    %v3376 = vld [vmem:[%s3 + $0x40] sm:$0xff]
    %v3377 = vld [vmem:[%s3 + $0x48] sm:$0xff]
    %v3378 = vld [vmem:[%s3 + $0x50] sm:$0xff]
    %v3379 = vld [vmem:[%s3 + $0x58] sm:$0xff]
    %v3380 = vld [vmem:[%s3 + $0x60] sm:$0xff]
    %v3381 = vld [vmem:[%s3 + $0x68] sm:$0xff]
    %v3382 = vld [vmem:[%s3 + $0x70] sm:$0xff]
    %v3383 = vld [vmem:[%s3 + $0x78] sm:$0xff]
    %v3384 = vld [vmem:[%s3 + $0x80] sm:$0xff]
    %v3385 = vld [vmem:[%s3 + $0x88] sm:$0xff]
    %v3386 = vld [vmem:[%s3 + $0x90] sm:$0xff]
    %v3387 = vld [vmem:[%s3 + $0x98] sm:$0xff]
    %v3388 = vld [vmem:[%s3 + $0xa0] sm:$0xff]
    %v3389 = vld [vmem:[%s3 + $0xa8] sm:$0xff]
    %v3390 = vld [vmem:[%s3 + $0xb0] sm:$0xff]
    %v3391 = vld [vmem:[%s3 + $0xb8] sm:$0xff]
    %v3392 = vld [vmem:[%s3 + $0xc0] sm:$0xff]
    %v3393 = vld [vmem:[%s3 + $0xc8] sm:$0xff]
    %v3394 = vld [vmem:[%s3 + $0xd0] sm:$0xff]
    %v3395 = vld [vmem:[%s3 + $0xd8] sm:$0xff]
    %v3396 = vld [vmem:[%s3 + $0xe0] sm:$0xff]
    %v3397 = vld [vmem:[%s3 + $0xe8] sm:$0xff]
    %v3398 = vld [vmem:[%s3 + $0xf0] sm:$0xff]
    %v3399 = vld [vmem:[%s3 + $0xf8] sm:$0xff]
    %v3432 = vunpack.c.l.b16 %v3368
    %v3433 = vunpack.c.h.b16 %v3368
    %v3434 = vunpack.c.l.b16 %v3369
    %v3435 = vunpack.c.h.b16 %v3369
    %v3436 = vunpack.c.l.b16 %v3370
    %v3437 = vunpack.c.h.b16 %v3370
    %v3438 = vunpack.c.l.b16 %v3371
    %v3439 = vunpack.c.h.b16 %v3371
    %v3440 = vunpack.c.l.b16 %v3372
    %v3441 = vunpack.c.h.b16 %v3372
    %v3442 = vunpack.c.l.b16 %v3373
    %v3443 = vunpack.c.h.b16 %v3373
    %v3444 = vunpack.c.l.b16 %v3374
    %v3445 = vunpack.c.h.b16 %v3374
    %v3446 = vunpack.c.l.b16 %v3375
    %v3447 = vunpack.c.h.b16 %v3375
    %v3448 = vunpack.c.l.b16 %v3376
    %v3449 = vunpack.c.h.b16 %v3376
    %v3450 = vunpack.c.l.b16 %v3377
    %v3451 = vunpack.c.h.b16 %v3377
    %v3452 = vunpack.c.l.b16 %v3378
    %v3453 = vunpack.c.h.b16 %v3378
    %v3454 = vunpack.c.l.b16 %v3379
    %v3455 = vunpack.c.h.b16 %v3379
    %v3456 = vunpack.c.l.b16 %v3380
    %v3457 = vunpack.c.h.b16 %v3380
    %v3458 = vunpack.c.l.b16 %v3381
    %v3459 = vunpack.c.h.b16 %v3381
    %v3460 = vunpack.c.l.b16 %v3382
    %v3461 = vunpack.c.h.b16 %v3382
    %v3462 = vunpack.c.l.b16 %v3383
    %v3463 = vunpack.c.h.b16 %v3383
    %v3464 = vunpack.c.l.b16 %v3384
    %v3465 = vunpack.c.h.b16 %v3384
    %v3466 = vunpack.c.l.b16 %v3385
    %v3467 = vunpack.c.h.b16 %v3385
    %v3468 = vunpack.c.l.b16 %v3386
    %v3469 = vunpack.c.h.b16 %v3386
    %v3470 = vunpack.c.l.b16 %v3387
    %v3471 = vunpack.c.h.b16 %v3387
    %v3472 = vunpack.c.l.b16 %v3388
    %v3473 = vunpack.c.h.b16 %v3388
    %v3474 = vunpack.c.l.b16 %v3389
    %v3475 = vunpack.c.h.b16 %v3389
    %v3476 = vunpack.c.l.b16 %v3390
    %v3477 = vunpack.c.h.b16 %v3390
    %v3478 = vunpack.c.l.b16 %v3391
    %v3479 = vunpack.c.h.b16 %v3391
    %v3480 = vunpack.c.l.b16 %v3392
    %v3481 = vunpack.c.h.b16 %v3392
    %v3482 = vunpack.c.l.b16 %v3393
    %v3483 = vunpack.c.h.b16 %v3393
    %v3484 = vunpack.c.l.b16 %v3394
    %v3485 = vunpack.c.h.b16 %v3394
    %v3486 = vunpack.c.l.b16 %v3395
    %v3487 = vunpack.c.h.b16 %v3395
    %v3488 = vunpack.c.l.b16 %v3396
    %v3489 = vunpack.c.h.b16 %v3396
    %v3490 = vunpack.c.l.b16 %v3397
    %v3491 = vunpack.c.h.b16 %v3397
    %v3492 = vunpack.c.l.b16 %v3398
    %v3493 = vunpack.c.h.b16 %v3398
    %v3494 = vunpack.c.l.b16 %v3399
    %v3495 = vunpack.c.h.b16 %v3399
    %v3496 = vpack.c.b16 %v3436, %v3432
    %v3497 = vpack.c.b16 %v3437, %v3433
    %v3498 = vpack.c.b16 %v3438, %v3434
    %v3499 = vpack.c.b16 %v3439, %v3435
    %v3500 = vpack.c.b16 %v3444, %v3440
    %v3501 = vpack.c.b16 %v3445, %v3441
    %v3502 = vpack.c.b16 %v3446, %v3442
    %v3503 = vpack.c.b16 %v3447, %v3443
    %v3504 = vpack.c.b16 %v3452, %v3448
    %v3505 = vpack.c.b16 %v3453, %v3449
    %v3506 = vpack.c.b16 %v3454, %v3450
    %v3507 = vpack.c.b16 %v3455, %v3451
    %v3508 = vpack.c.b16 %v3460, %v3456
    %v3509 = vpack.c.b16 %v3461, %v3457
    %v3510 = vpack.c.b16 %v3462, %v3458
    %v3511 = vpack.c.b16 %v3463, %v3459
    %v3512 = vpack.c.b16 %v3468, %v3464
    %v3513 = vpack.c.b16 %v3469, %v3465
    %v3514 = vpack.c.b16 %v3470, %v3466
    %v3515 = vpack.c.b16 %v3471, %v3467
    %v3516 = vpack.c.b16 %v3476, %v3472
    %v3517 = vpack.c.b16 %v3477, %v3473
    %v3518 = vpack.c.b16 %v3478, %v3474
    %v3519 = vpack.c.b16 %v3479, %v3475
    %v3520 = vpack.c.b16 %v3484, %v3480
    %v3521 = vpack.c.b16 %v3485, %v3481
    %v3522 = vpack.c.b16 %v3486, %v3482
    %v3523 = vpack.c.b16 %v3487, %v3483
    %v3524 = vpack.c.b16 %v3492, %v3488
    %v3525 = vpack.c.b16 %v3493, %v3489
    %v3526 = vpack.c.b16 %v3494, %v3490
    %v3527 = vpack.c.b16 %v3495, %v3491
    %3560 = vmatprep.subr.bf16.mxu0 %v3497
    %3561 = vmatpush1.bf16.msra.mxu0 %v3496
    %3562 = vmatprep.subr.bf16.mxu0 %v3501
    %3563 = vmatpush1.bf16.msra.mxu0 %v3500
    %3564 = vmatprep.subr.bf16.mxu0 %v3505
    %3565 = vmatpush1.bf16.msra.mxu0 %v3504
    %3566 = vmatprep.subr.bf16.mxu0 %v3509
    %3567 = vmatpush1.bf16.msra.mxu0 %v3508
    %3568 = vmatprep.subr.bf16.mxu0 %v3513
    %3569 = vmatpush1.bf16.msra.mxu0 %v3512
    %3570 = vmatprep.subr.bf16.mxu0 %v3517
    %3571 = vmatpush1.bf16.msra.mxu0 %v3516
    %3572 = vmatprep.subr.bf16.mxu0 %v3521
    %3573 = vmatpush1.bf16.msra.mxu0 %v3520
    %3574 = vmatprep.subr.bf16.mxu0 %v3525
    %3575 = vmatpush1.bf16.msra.mxu0 %v3524
    %3576 = vmatprep.subr.bf16.mxu0 0
    %3577 = vmatpush1.bf16.msra.mxu0 0
    %3578 = vmatprep.subr.bf16.mxu0 0
    %3579 = vmatpush1.bf16.msra.mxu0 0
    %3580 = vmatprep.subr.bf16.mxu0 0
    %3581 = vmatpush1.bf16.msra.mxu0 0
    %3582 = vmatprep.subr.bf16.mxu0 0
    %3583 = vmatpush1.bf16.msra.mxu0 0
    %3584 = vmatprep.subr.bf16.mxu0 0
    %3585 = vmatpush1.bf16.msra.mxu0 0
    %3586 = vmatprep.subr.bf16.mxu0 0
    %3587 = vmatpush1.bf16.msra.mxu0 0
    %3588 = vmatprep.subr.bf16.mxu0 0
    %3589 = vmatpush1.bf16.msra.mxu0 0
    %3590 = vmatprep.subr.bf16.mxu0 0
    %3591 = vmatpush1.bf16.msra.mxu0 0
    %3592 = vmatprep.mubr.bf16.mxu0 0
    %3593 = vmatmul.mubr.bf16.gmra.mrb[0].mxu0 %v2817
    %v3594 = vpop.f32.mrb[0].mxu0
    %v3595 = vadd.f32 0.0, %v3594
    %v3596 = vpop.f32.mrb[0].mxu0
    %v3597 = vadd.f32 0.0, %v3596
    %v3598 = vpop.f32.mrb[0].mxu0
    %v3599 = vadd.f32 0.0, %v3598
    %v3600 = vpop.f32.mrb[0].mxu0
    %v3601 = vadd.f32 0.0, %v3600
    %3602 = vdwg.mxu0
    %3603 = vmatprep.subr.bf16.mxu0 %v3499
    %3604 = vmatpush1.bf16.msra.mxu0 %v3498
    %3605 = vmatprep.subr.bf16.mxu0 %v3503
    %3606 = vmatpush1.bf16.msra.mxu0 %v3502
    %3607 = vmatprep.subr.bf16.mxu0 %v3507
    %3608 = vmatpush1.bf16.msra.mxu0 %v3506
    %3609 = vmatprep.subr.bf16.mxu0 %v3511
    %3610 = vmatpush1.bf16.msra.mxu0 %v3510
    %3611 = vmatprep.subr.bf16.mxu0 %v3515
    %3612 = vmatpush1.bf16.msra.mxu0 %v3514
    %3613 = vmatprep.subr.bf16.mxu0 %v3519
    %3614 = vmatpush1.bf16.msra.mxu0 %v3518
    %3615 = vmatprep.subr.bf16.mxu0 %v3523
    %3616 = vmatpush1.bf16.msra.mxu0 %v3522
    %3617 = vmatprep.subr.bf16.mxu0 %v3527
    %3618 = vmatpush1.bf16.msra.mxu0 %v3526
    %3619 = vmatprep.subr.bf16.mxu0 0
    %3620 = vmatpush1.bf16.msra.mxu0 0
    %3621 = vmatprep.subr.bf16.mxu0 0
    %3622 = vmatpush1.bf16.msra.mxu0 0
    %3623 = vmatprep.subr.bf16.mxu0 0
    %3624 = vmatpush1.bf16.msra.mxu0 0
    %3625 = vmatprep.subr.bf16.mxu0 0
    %3626 = vmatpush1.bf16.msra.mxu0 0
    %3627 = vmatprep.subr.bf16.mxu0 0
    %3628 = vmatpush1.bf16.msra.mxu0 0
    %3629 = vmatprep.subr.bf16.mxu0 0
    %3630 = vmatpush1.bf16.msra.mxu0 0
    %3631 = vmatprep.subr.bf16.mxu0 0
    %3632 = vmatpush1.bf16.msra.mxu0 0
    %3633 = vmatprep.subr.bf16.mxu0 0
    %3634 = vmatpush1.bf16.msra.mxu0 0
    %3635 = vmatprep.mubr.bf16.mxu0 0
    %3636 = vmatmul.mubr.bf16.gmra.mrb[0].mxu0 %v2817
    %v3637 = vpop.f32.mrb[0].mxu0
    %v3638 = vadd.f32 0.0, %v3637
    %v3639 = vpop.f32.mrb[0].mxu0
    %v3640 = vadd.f32 0.0, %v3639
    %v3641 = vpop.f32.mrb[0].mxu0
    %v3642 = vadd.f32 0.0, %v3641
    %v3643 = vpop.f32.mrb[0].mxu0
    %v3644 = vadd.f32 0.0, %v3643
    %3645 = vdwg.mxu0
    %v3646 = vadd.f32 %v3360, %v3595
    %v3647 = vadd.f32 %v3361, %v3597
    %v3648 = vadd.f32 %v3362, %v3638
    %v3649 = vadd.f32 %v3363, %v3640
    %v3650 = vadd.f32 %v3364, %v3599
    %v3651 = vadd.f32 %v3365, %v3601
    %v3652 = vadd.f32 %v3366, %v3642
    %v3653 = vadd.f32 %v3367, %v3644
    %v3654 = vxor.u32 %v3646, 2147483648
    %v3655 = vxor.u32 %v3650, 2147483648
    %v3656 = vmul.f32 %v3654, 1.442695
    %v3657 = vpow.pop %v3656
    %v3658 = vmul.f32 %v3655, 1.442695
    %v3659 = vpow.pop %v3658
    %v3660 = vadd.f32 %v3657, 1.0
    %v3661 = vadd.f32 %v3659, 1.0
    %v3662 = vrcp.pop %v3660
    %v3663 = vmul.f32 1.0, %v3662
    %v3664 = vrcp.pop %v3661
    %v3665 = vmul.f32 1.0, %v3664
    %v3666 = vxor.u32 %v3647, 2147483648
    %v3667 = vxor.u32 %v3651, 2147483648
    %v3668 = vmul.f32 %v3666, 1.442695
    %v3669 = vpow.pop %v3668
    %v3670 = vmul.f32 %v3667, 1.442695
    %v3671 = vpow.pop %v3670
    %v3672 = vadd.f32 %v3669, 1.0
    %v3673 = vadd.f32 %v3671, 1.0
    %v3674 = vrcp.pop %v3672
    %v3675 = vmul.f32 1.0, %v3674
    %v3676 = vrcp.pop %v3673
    %v3677 = vmul.f32 1.0, %v3676
    %v3678 = vtanh.pop %v3648
    %v3679 = vtanh.pop %v3652
    %v3680 = vxor.u32 %v3649, 2147483648
    %v3681 = vxor.u32 %v3653, 2147483648
    %v3682 = vmul.f32 %v3680, 1.442695
    %v3683 = vpow.pop %v3682
    %v3684 = vmul.f32 %v3681, 1.442695
    %v3685 = vpow.pop %v3684
    %v3686 = vadd.f32 %v3683, 1.0
    %v3687 = vadd.f32 %v3685, 1.0
    %v3688 = vrcp.pop %v3686
    %v3689 = vmul.f32 1.0, %v3688
    %v3690 = vrcp.pop %v3687
    %v3691 = vmul.f32 1.0, %v3690
    %v3692 = vmul.f32 %v3675, %v2811
    %v3693 = vmul.f32 %v3677, %v2812
    %v3694 = vmul.f32 %v3663, %v3678
    %v3695 = vmul.f32 %v3665, %v3679
    %v3696 = vadd.f32 %v3692, %v3694
    %v3697 = vadd.f32 %v3693, %v3695
    %v3698 = vtanh.pop %v3696
    %v3699 = vtanh.pop %v3697
    %v3700 = vmul.f32 %v3689, %v3698
    %v3701 = vmul.f32 %v3691, %v3699
    %v3702 = vpack.c.bf16 %v3701, %v3700
    %v3703 = vld [vmem:[#allocation7] sm:$0xff]
    %v3704 = vld [vmem:[#allocation7 + $0x8] sm:$0xff]
    %v3705 = vld [vmem:[#allocation7 + $0x10] sm:$0xff]
    %v3706 = vld [vmem:[#allocation7 + $0x18] sm:$0xff]
    %v3707 = vld [vmem:[#allocation7 + $0x20] sm:$0xff]
    %v3708 = vld [vmem:[#allocation7 + $0x28] sm:$0xff]
    %v3709 = vld [vmem:[#allocation7 + $0x30] sm:$0xff]
    %v3710 = vld [vmem:[#allocation7 + $0x38] sm:$0xff]
    %v3711 = vld [vmem:[#allocation7 + $0x40] sm:$0xff]
    %v3712 = vld [vmem:[#allocation7 + $0x48] sm:$0xff]
    %v3713 = vld [vmem:[#allocation7 + $0x50] sm:$0xff]
    %v3714 = vld [vmem:[#allocation7 + $0x58] sm:$0xff]
    %v3715 = vld [vmem:[#allocation7 + $0x60] sm:$0xff]
    %v3716 = vld [vmem:[#allocation7 + $0x68] sm:$0xff]
    %v3717 = vld [vmem:[#allocation7 + $0x70] sm:$0xff]
    %v3718 = vld [vmem:[#allocation7 + $0x78] sm:$0xff]
    %v3719 = vld [vmem:[#allocation7 + $0x80] sm:$0xff]
    %v3720 = vld [vmem:[#allocation7 + $0x88] sm:$0xff]
    %v3721 = vld [vmem:[#allocation7 + $0x90] sm:$0xff]
    %v3722 = vld [vmem:[#allocation7 + $0x98] sm:$0xff]
    %v3723 = vld [vmem:[#allocation7 + $0xa0] sm:$0xff]
    %v3724 = vld [vmem:[#allocation7 + $0xa8] sm:$0xff]
    %v3725 = vld [vmem:[#allocation7 + $0xb0] sm:$0xff]
    %v3726 = vld [vmem:[#allocation7 + $0xb8] sm:$0xff]
    %v3727 = vld [vmem:[#allocation7 + $0xc0] sm:$0xff]
    %v3728 = vld [vmem:[#allocation7 + $0xc8] sm:$0xff]
    %v3729 = vld [vmem:[#allocation7 + $0xd0] sm:$0xff]
    %v3730 = vld [vmem:[#allocation7 + $0xd8] sm:$0xff]
    %v3731 = vld [vmem:[#allocation7 + $0xe0] sm:$0xff]
    %v3732 = vld [vmem:[#allocation7 + $0xe8] sm:$0xff]
    %v3733 = vld [vmem:[#allocation7 + $0xf0] sm:$0xff]
    %v3734 = vld [vmem:[#allocation7 + $0xf8] sm:$0xff]
    %v3735 = vld [vmem:[#allocation7 + $0x100] sm:$0xff]
    %v3736 = vld [vmem:[#allocation7 + $0x108] sm:$0xff]
    %v3737 = vld [vmem:[#allocation7 + $0x110] sm:$0xff]
    %v3738 = vld [vmem:[#allocation7 + $0x118] sm:$0xff]
    %v3739 = vld [vmem:[#allocation7 + $0x120] sm:$0xff]
    %v3740 = vld [vmem:[#allocation7 + $0x128] sm:$0xff]
    %v3741 = vld [vmem:[#allocation7 + $0x130] sm:$0xff]
    %v3742 = vld [vmem:[#allocation7 + $0x138] sm:$0xff]
    %v3743 = vld [vmem:[#allocation7 + $0x140] sm:$0xff]
    %v3744 = vld [vmem:[#allocation7 + $0x148] sm:$0xff]
    %v3745 = vld [vmem:[#allocation7 + $0x150] sm:$0xff]
    %v3746 = vld [vmem:[#allocation7 + $0x158] sm:$0xff]
    %v3747 = vld [vmem:[#allocation7 + $0x160] sm:$0xff]
    %v3748 = vld [vmem:[#allocation7 + $0x168] sm:$0xff]
    %v3749 = vld [vmem:[#allocation7 + $0x170] sm:$0xff]
    %v3750 = vld [vmem:[#allocation7 + $0x178] sm:$0xff]
    %v3751 = vld [vmem:[#allocation7 + $0x180] sm:$0xff]
    %v3752 = vld [vmem:[#allocation7 + $0x188] sm:$0xff]
    %v3753 = vld [vmem:[#allocation7 + $0x190] sm:$0xff]
    %v3754 = vld [vmem:[#allocation7 + $0x198] sm:$0xff]
    %v3755 = vld [vmem:[#allocation7 + $0x1a0] sm:$0xff]
    %v3756 = vld [vmem:[#allocation7 + $0x1a8] sm:$0xff]
    %v3757 = vld [vmem:[#allocation7 + $0x1b0] sm:$0xff]
    %v3758 = vld [vmem:[#allocation7 + $0x1b8] sm:$0xff]
    %v3759 = vld [vmem:[#allocation7 + $0x1c0] sm:$0xff]
    %v3760 = vld [vmem:[#allocation7 + $0x1c8] sm:$0xff]
    %v3761 = vld [vmem:[#allocation7 + $0x1d0] sm:$0xff]
    %v3762 = vld [vmem:[#allocation7 + $0x1d8] sm:$0xff]
    %v3763 = vld [vmem:[#allocation7 + $0x1e0] sm:$0xff]
    %v3764 = vld [vmem:[#allocation7 + $0x1e8] sm:$0xff]
    %v3765 = vld [vmem:[#allocation7 + $0x1f0] sm:$0xff]
    %v3766 = vld [vmem:[#allocation7 + $0x1f8] sm:$0xff]
    %v3767 = vld [vmem:[#allocation9] sm:$0xf]
    %v3769 = vlaneseq
    %v3770 = vshrl.u32 %v3769, 7
    %v3771 = vsub.s32 0, %v3770
    %v3772 = vrot.slane %v3767, %v3771
    %v3773 = vlaneseq
    %v3774 = vshrl.u32 %v3773, 7
    %v3775 = vsub.s32 1, %v3774
    %v3776 = vrot.slane %v3767, %v3775
    %v3777 = vlaneseq
    %v3778 = vshrl.u32 %v3777, 7
    %v3779 = vsub.s32 2, %v3778
    %v3780 = vrot.slane %v3767, %v3779
    %v3781 = vlaneseq
    %v3782 = vshrl.u32 %v3781, 7
    %v3783 = vsub.s32 3, %v3782
    %v3784 = vrot.slane %v3767, %v3783
    %v3853 = vunpack.c.l.b16 %v3703
    %v3854 = vunpack.c.h.b16 %v3703
    %v3855 = vunpack.c.l.b16 %v3704
    %v3856 = vunpack.c.h.b16 %v3704
    %v3857 = vunpack.c.l.b16 %v3705
    %v3858 = vunpack.c.h.b16 %v3705
    %v3859 = vunpack.c.l.b16 %v3706
    %v3860 = vunpack.c.h.b16 %v3706
    %v3861 = vunpack.c.l.b16 %v3707
    %v3862 = vunpack.c.h.b16 %v3707
    %v3863 = vunpack.c.l.b16 %v3708
    %v3864 = vunpack.c.h.b16 %v3708
    %v3865 = vunpack.c.l.b16 %v3709
    %v3866 = vunpack.c.h.b16 %v3709
    %v3867 = vunpack.c.l.b16 %v3710
    %v3868 = vunpack.c.h.b16 %v3710
    %v3869 = vunpack.c.l.b16 %v3711
    %v3870 = vunpack.c.h.b16 %v3711
    %v3871 = vunpack.c.l.b16 %v3712
    %v3872 = vunpack.c.h.b16 %v3712
    %v3873 = vunpack.c.l.b16 %v3713
    %v3874 = vunpack.c.h.b16 %v3713
    %v3875 = vunpack.c.l.b16 %v3714
    %v3876 = vunpack.c.h.b16 %v3714
    %v3877 = vunpack.c.l.b16 %v3715
    %v3878 = vunpack.c.h.b16 %v3715
    %v3879 = vunpack.c.l.b16 %v3716
    %v3880 = vunpack.c.h.b16 %v3716
    %v3881 = vunpack.c.l.b16 %v3717
    %v3882 = vunpack.c.h.b16 %v3717
    %v3883 = vunpack.c.l.b16 %v3718
    %v3884 = vunpack.c.h.b16 %v3718
    %v3885 = vunpack.c.l.b16 %v3719
    %v3886 = vunpack.c.h.b16 %v3719
    %v3887 = vunpack.c.l.b16 %v3720
    %v3888 = vunpack.c.h.b16 %v3720
    %v3889 = vunpack.c.l.b16 %v3721
    %v3890 = vunpack.c.h.b16 %v3721
    %v3891 = vunpack.c.l.b16 %v3722
    %v3892 = vunpack.c.h.b16 %v3722
    %v3893 = vunpack.c.l.b16 %v3723
    %v3894 = vunpack.c.h.b16 %v3723
    %v3895 = vunpack.c.l.b16 %v3724
    %v3896 = vunpack.c.h.b16 %v3724
    %v3897 = vunpack.c.l.b16 %v3725
    %v3898 = vunpack.c.h.b16 %v3725
    %v3899 = vunpack.c.l.b16 %v3726
    %v3900 = vunpack.c.h.b16 %v3726
    %v3901 = vunpack.c.l.b16 %v3727
    %v3902 = vunpack.c.h.b16 %v3727
    %v3903 = vunpack.c.l.b16 %v3728
    %v3904 = vunpack.c.h.b16 %v3728
    %v3905 = vunpack.c.l.b16 %v3729
    %v3906 = vunpack.c.h.b16 %v3729
    %v3907 = vunpack.c.l.b16 %v3730
    %v3908 = vunpack.c.h.b16 %v3730
    %v3909 = vunpack.c.l.b16 %v3731
    %v3910 = vunpack.c.h.b16 %v3731
    %v3911 = vunpack.c.l.b16 %v3732
    %v3912 = vunpack.c.h.b16 %v3732
    %v3913 = vunpack.c.l.b16 %v3733
    %v3914 = vunpack.c.h.b16 %v3733
    %v3915 = vunpack.c.l.b16 %v3734
    %v3916 = vunpack.c.h.b16 %v3734
    %v3917 = vunpack.c.l.b16 %v3735
    %v3918 = vunpack.c.h.b16 %v3735
    %v3919 = vunpack.c.l.b16 %v3736
    %v3920 = vunpack.c.h.b16 %v3736
    %v3921 = vunpack.c.l.b16 %v3737
    %v3922 = vunpack.c.h.b16 %v3737
    %v3923 = vunpack.c.l.b16 %v3738
    %v3924 = vunpack.c.h.b16 %v3738
    %v3925 = vunpack.c.l.b16 %v3739
    %v3926 = vunpack.c.h.b16 %v3739
    %v3927 = vunpack.c.l.b16 %v3740
    %v3928 = vunpack.c.h.b16 %v3740
    %v3929 = vunpack.c.l.b16 %v3741
    %v3930 = vunpack.c.h.b16 %v3741
    %v3931 = vunpack.c.l.b16 %v3742
    %v3932 = vunpack.c.h.b16 %v3742
    %v3933 = vunpack.c.l.b16 %v3743
    %v3934 = vunpack.c.h.b16 %v3743
    %v3935 = vunpack.c.l.b16 %v3744
    %v3936 = vunpack.c.h.b16 %v3744
    %v3937 = vunpack.c.l.b16 %v3745
    %v3938 = vunpack.c.h.b16 %v3745
    %v3939 = vunpack.c.l.b16 %v3746
    %v3940 = vunpack.c.h.b16 %v3746
    %v3941 = vunpack.c.l.b16 %v3747
    %v3942 = vunpack.c.h.b16 %v3747
    %v3943 = vunpack.c.l.b16 %v3748
    %v3944 = vunpack.c.h.b16 %v3748
    %v3945 = vunpack.c.l.b16 %v3749
    %v3946 = vunpack.c.h.b16 %v3749
    %v3947 = vunpack.c.l.b16 %v3750
    %v3948 = vunpack.c.h.b16 %v3750
    %v3949 = vunpack.c.l.b16 %v3751
    %v3950 = vunpack.c.h.b16 %v3751
    %v3951 = vunpack.c.l.b16 %v3752
    %v3952 = vunpack.c.h.b16 %v3752
    %v3953 = vunpack.c.l.b16 %v3753
    %v3954 = vunpack.c.h.b16 %v3753
    %v3955 = vunpack.c.l.b16 %v3754
    %v3956 = vunpack.c.h.b16 %v3754
    %v3957 = vunpack.c.l.b16 %v3755
    %v3958 = vunpack.c.h.b16 %v3755
    %v3959 = vunpack.c.l.b16 %v3756
    %v3960 = vunpack.c.h.b16 %v3756
    %v3961 = vunpack.c.l.b16 %v3757
    %v3962 = vunpack.c.h.b16 %v3757
    %v3963 = vunpack.c.l.b16 %v3758
    %v3964 = vunpack.c.h.b16 %v3758
    %v3965 = vunpack.c.l.b16 %v3759
    %v3966 = vunpack.c.h.b16 %v3759
    %v3967 = vunpack.c.l.b16 %v3760
    %v3968 = vunpack.c.h.b16 %v3760
    %v3969 = vunpack.c.l.b16 %v3761
    %v3970 = vunpack.c.h.b16 %v3761
    %v3971 = vunpack.c.l.b16 %v3762
    %v3972 = vunpack.c.h.b16 %v3762
    %v3973 = vunpack.c.l.b16 %v3763
    %v3974 = vunpack.c.h.b16 %v3763
    %v3975 = vunpack.c.l.b16 %v3764
    %v3976 = vunpack.c.h.b16 %v3764
    %v3977 = vunpack.c.l.b16 %v3765
    %v3978 = vunpack.c.h.b16 %v3765
    %v3979 = vunpack.c.l.b16 %v3766
    %v3980 = vunpack.c.h.b16 %v3766
    %v3981 = vpack.c.b16 %v3857, %v3853
    %v3982 = vpack.c.b16 %v3858, %v3854
    %v3983 = vpack.c.b16 %v3859, %v3855
    %v3984 = vpack.c.b16 %v3860, %v3856
    %v3985 = vpack.c.b16 %v3865, %v3861
    %v3986 = vpack.c.b16 %v3866, %v3862
    %v3987 = vpack.c.b16 %v3867, %v3863
    %v3988 = vpack.c.b16 %v3868, %v3864
    %v3989 = vpack.c.b16 %v3873, %v3869
    %v3990 = vpack.c.b16 %v3874, %v3870
    %v3991 = vpack.c.b16 %v3875, %v3871
    %v3992 = vpack.c.b16 %v3876, %v3872
    %v3993 = vpack.c.b16 %v3881, %v3877
    %v3994 = vpack.c.b16 %v3882, %v3878
    %v3995 = vpack.c.b16 %v3883, %v3879
    %v3996 = vpack.c.b16 %v3884, %v3880
    %v3997 = vpack.c.b16 %v3889, %v3885
    %v3998 = vpack.c.b16 %v3890, %v3886
    %v3999 = vpack.c.b16 %v3891, %v3887
    %v4000 = vpack.c.b16 %v3892, %v3888
    %v4001 = vpack.c.b16 %v3897, %v3893
    %v4002 = vpack.c.b16 %v3898, %v3894
    %v4003 = vpack.c.b16 %v3899, %v3895
    %v4004 = vpack.c.b16 %v3900, %v3896
    %v4005 = vpack.c.b16 %v3905, %v3901
    %v4006 = vpack.c.b16 %v3906, %v3902
    %v4007 = vpack.c.b16 %v3907, %v3903
    %v4008 = vpack.c.b16 %v3908, %v3904
    %v4009 = vpack.c.b16 %v3913, %v3909
    %v4010 = vpack.c.b16 %v3914, %v3910
    %v4011 = vpack.c.b16 %v3915, %v3911
    %v4012 = vpack.c.b16 %v3916, %v3912
    %v4013 = vpack.c.b16 %v3921, %v3917
    %v4014 = vpack.c.b16 %v3922, %v3918
    %v4015 = vpack.c.b16 %v3923, %v3919
    %v4016 = vpack.c.b16 %v3924, %v3920
    %v4017 = vpack.c.b16 %v3929, %v3925
    %v4018 = vpack.c.b16 %v3930, %v3926
    %v4019 = vpack.c.b16 %v3931, %v3927
    %v4020 = vpack.c.b16 %v3932, %v3928
    %v4021 = vpack.c.b16 %v3937, %v3933
    %v4022 = vpack.c.b16 %v3938, %v3934
    %v4023 = vpack.c.b16 %v3939, %v3935
    %v4024 = vpack.c.b16 %v3940, %v3936
    %v4025 = vpack.c.b16 %v3945, %v3941
    %v4026 = vpack.c.b16 %v3946, %v3942
    %v4027 = vpack.c.b16 %v3947, %v3943
    %v4028 = vpack.c.b16 %v3948, %v3944
    %v4029 = vpack.c.b16 %v3953, %v3949
    %v4030 = vpack.c.b16 %v3954, %v3950
    %v4031 = vpack.c.b16 %v3955, %v3951
    %v4032 = vpack.c.b16 %v3956, %v3952
    %v4033 = vpack.c.b16 %v3961, %v3957
    %v4034 = vpack.c.b16 %v3962, %v3958
    %v4035 = vpack.c.b16 %v3963, %v3959
    %v4036 = vpack.c.b16 %v3964, %v3960
    %v4037 = vpack.c.b16 %v3969, %v3965
    %v4038 = vpack.c.b16 %v3970, %v3966
    %v4039 = vpack.c.b16 %v3971, %v3967
    %v4040 = vpack.c.b16 %v3972, %v3968
    %v4041 = vpack.c.b16 %v3977, %v3973
    %v4042 = vpack.c.b16 %v3978, %v3974
    %v4043 = vpack.c.b16 %v3979, %v3975
    %v4044 = vpack.c.b16 %v3980, %v3976
    %4109 = vmatprep.subr.bf16.mxu0 %v3982
    %4110 = vmatpush1.bf16.msra.mxu0 %v3981
    %4111 = vmatprep.subr.bf16.mxu0 %v3986
    %4112 = vmatpush1.bf16.msra.mxu0 %v3985
    %4113 = vmatprep.subr.bf16.mxu0 %v3990
    %4114 = vmatpush1.bf16.msra.mxu0 %v3989
    %4115 = vmatprep.subr.bf16.mxu0 %v3994
    %4116 = vmatpush1.bf16.msra.mxu0 %v3993
    %4117 = vmatprep.subr.bf16.mxu0 %v3998
    %4118 = vmatpush1.bf16.msra.mxu0 %v3997
    %4119 = vmatprep.subr.bf16.mxu0 %v4002
    %4120 = vmatpush1.bf16.msra.mxu0 %v4001
    %4121 = vmatprep.subr.bf16.mxu0 %v4006
    %4122 = vmatpush1.bf16.msra.mxu0 %v4005
    %4123 = vmatprep.subr.bf16.mxu0 %v4010
    %4124 = vmatpush1.bf16.msra.mxu0 %v4009
    %4125 = vmatprep.subr.bf16.mxu0 %v4014
    %4126 = vmatpush1.bf16.msra.mxu0 %v4013
    %4127 = vmatprep.subr.bf16.mxu0 %v4018
    %4128 = vmatpush1.bf16.msra.mxu0 %v4017
    %4129 = vmatprep.subr.bf16.mxu0 %v4022
    %4130 = vmatpush1.bf16.msra.mxu0 %v4021
    %4131 = vmatprep.subr.bf16.mxu0 %v4026
    %4132 = vmatpush1.bf16.msra.mxu0 %v4025
    %4133 = vmatprep.subr.bf16.mxu0 %v4030
    %4134 = vmatpush1.bf16.msra.mxu0 %v4029
    %4135 = vmatprep.subr.bf16.mxu0 %v4034
    %4136 = vmatpush1.bf16.msra.mxu0 %v4033
    %4137 = vmatprep.subr.bf16.mxu0 %v4038
    %4138 = vmatpush1.bf16.msra.mxu0 %v4037
    %4139 = vmatprep.subr.bf16.mxu0 %v4042
    %4140 = vmatpush1.bf16.msra.mxu0 %v4041
    %4141 = vmatprep.mubr.bf16.mxu0 %v3358
    %4142 = vmatmul.mubr.bf16.gmra.mrb[0].mxu0 %v2817
    %v4143 = vpop.f32.mrb[0].mxu0
    %v4144 = vadd.f32 %v3772, %v4143
    %v4145 = vpop.f32.mrb[0].mxu0
    %v4146 = vadd.f32 %v3776, %v4145
    %v4147 = vpop.f32.mrb[0].mxu0
    %v4148 = vadd.f32 %v3772, %v4147
    %v4149 = vpop.f32.mrb[0].mxu0
    %v4150 = vadd.f32 %v3776, %v4149
    %4151 = vdwg.mxu0
    %4152 = vmatprep.subr.bf16.mxu0 %v3984
    %4153 = vmatpush1.bf16.msra.mxu0 %v3983
    %4154 = vmatprep.subr.bf16.mxu0 %v3988
    %4155 = vmatpush1.bf16.msra.mxu0 %v3987
    %4156 = vmatprep.subr.bf16.mxu0 %v3992
    %4157 = vmatpush1.bf16.msra.mxu0 %v3991
    %4158 = vmatprep.subr.bf16.mxu0 %v3996
    %4159 = vmatpush1.bf16.msra.mxu0 %v3995
    %4160 = vmatprep.subr.bf16.mxu0 %v4000
    %4161 = vmatpush1.bf16.msra.mxu0 %v3999
    %4162 = vmatprep.subr.bf16.mxu0 %v4004
    %4163 = vmatpush1.bf16.msra.mxu0 %v4003
    %4164 = vmatprep.subr.bf16.mxu0 %v4008
    %4165 = vmatpush1.bf16.msra.mxu0 %v4007
    %4166 = vmatprep.subr.bf16.mxu0 %v4012
    %4167 = vmatpush1.bf16.msra.mxu0 %v4011
    %4168 = vmatprep.subr.bf16.mxu0 %v4016
    %4169 = vmatpush1.bf16.msra.mxu0 %v4015
    %4170 = vmatprep.subr.bf16.mxu0 %v4020
    %4171 = vmatpush1.bf16.msra.mxu0 %v4019
    %4172 = vmatprep.subr.bf16.mxu0 %v4024
    %4173 = vmatpush1.bf16.msra.mxu0 %v4023
    %4174 = vmatprep.subr.bf16.mxu0 %v4028
    %4175 = vmatpush1.bf16.msra.mxu0 %v4027
    %4176 = vmatprep.subr.bf16.mxu0 %v4032
    %4177 = vmatpush1.bf16.msra.mxu0 %v4031
    %4178 = vmatprep.subr.bf16.mxu0 %v4036
    %4179 = vmatpush1.bf16.msra.mxu0 %v4035
    %4180 = vmatprep.subr.bf16.mxu0 %v4040
    %4181 = vmatpush1.bf16.msra.mxu0 %v4039
    %4182 = vmatprep.subr.bf16.mxu0 %v4044
    %4183 = vmatpush1.bf16.msra.mxu0 %v4043
    %4184 = vmatprep.mubr.bf16.mxu0 %v3358
    %4185 = vmatmul.mubr.bf16.gmra.mrb[0].mxu0 %v2817
    %v4186 = vpop.f32.mrb[0].mxu0
    %v4187 = vadd.f32 %v3780, %v4186
    %v4188 = vpop.f32.mrb[0].mxu0
    %v4189 = vadd.f32 %v3784, %v4188
    %v4190 = vpop.f32.mrb[0].mxu0
    %v4191 = vadd.f32 %v3780, %v4190
    %v4192 = vpop.f32.mrb[0].mxu0
    %v4193 = vadd.f32 %v3784, %v4192
    %4194 = vdwg.mxu0
    %v4195 = vxor.u32 %v4144, 2147483648
    %v4196 = vxor.u32 %v4148, 2147483648
    %v4197 = vmul.f32 %v4195, 1.442695
    %v4198 = vpow.pop %v4197
    %v4199 = vmul.f32 %v4196, 1.442695
    %v4200 = vpow.pop %v4199
    %v4201 = vadd.f32 %v4198, 1.0
    %v4202 = vadd.f32 %v4200, 1.0
    %v4203 = vrcp.pop %v4201
    %v4204 = vmul.f32 1.0, %v4203
    %v4205 = vrcp.pop %v4202
    %v4206 = vmul.f32 1.0, %v4205
    %v4207 = vxor.u32 %v4146, 2147483648
    %v4208 = vxor.u32 %v4150, 2147483648
    %v4209 = vmul.f32 %v4207, 1.442695
    %v4210 = vpow.pop %v4209
    %v4211 = vmul.f32 %v4208, 1.442695
    %v4212 = vpow.pop %v4211
    %v4213 = vadd.f32 %v4210, 1.0
    %v4214 = vadd.f32 %v4212, 1.0
    %v4215 = vrcp.pop %v4213
    %v4216 = vmul.f32 1.0, %v4215
    %v4217 = vrcp.pop %v4214
    %v4218 = vmul.f32 1.0, %v4217
    %v4219 = vtanh.pop %v4187
    %v4220 = vtanh.pop %v4191
    %v4221 = vxor.u32 %v4189, 2147483648
    %v4222 = vxor.u32 %v4193, 2147483648
    %v4223 = vmul.f32 %v4221, 1.442695
    %v4224 = vpow.pop %v4223
    %v4225 = vmul.f32 %v4222, 1.442695
    %v4226 = vpow.pop %v4225
    %v4227 = vadd.f32 %v4224, 1.0
    %v4228 = vadd.f32 %v4226, 1.0
    %v4229 = vrcp.pop %v4227
    %v4230 = vmul.f32 1.0, %v4229
    %v4231 = vrcp.pop %v4228
    %v4232 = vmul.f32 1.0, %v4231
    %v4233 = vmul.f32 %v4216, %v3352
    %v4234 = vmul.f32 %v4218, %v3353
    %v4235 = vmul.f32 %v4204, %v4219
    %v4236 = vmul.f32 %v4206, %v4220
    %v4237 = vadd.f32 %v4233, %v4235
    %v4238 = vadd.f32 %v4234, %v4236
    %v4239 = vtanh.pop %v4237
    %v4240 = vtanh.pop %v4238
    %v4241 = vmul.f32 %v4230, %v4239
    %v4242 = vmul.f32 %v4232, %v4240
    %v4243 = vpack.c.bf16 %v4242, %v4241
    %4244 = vst [vmem:[#allocation3 + $0x18] sm:$0xff] %v4243
    %v4245 = vld [vmem:[#allocation2 + $0x140] sm:$0xff]
    %v4246 = vld [vmem:[#allocation2 + $0x148] sm:$0xff]
    %v4247 = vld [vmem:[#allocation2 + $0x150] sm:$0xff]
    %v4248 = vld [vmem:[#allocation2 + $0x158] sm:$0xff]
    %v4249 = vld [vmem:[#allocation2 + $0x160] sm:$0xff]
    %v4250 = vld [vmem:[#allocation2 + $0x168] sm:$0xff]
    %v4251 = vld [vmem:[#allocation2 + $0x170] sm:$0xff]
    %v4252 = vld [vmem:[#allocation2 + $0x178] sm:$0xff]
    %v4253 = vld [vmem:[%s3] sm:$0xff]
    %v4254 = vld [vmem:[%s3 + $0x8] sm:$0xff]
    %v4255 = vld [vmem:[%s3 + $0x10] sm:$0xff]
    %v4256 = vld [vmem:[%s3 + $0x18] sm:$0xff]
    %v4257 = vld [vmem:[%s3 + $0x20] sm:$0xff]
    %v4258 = vld [vmem:[%s3 + $0x28] sm:$0xff]
    %v4259 = vld [vmem:[%s3 + $0x30] sm:$0xff]
    %v4260 = vld [vmem:[%s3 + $0x38] sm:$0xff]
    %v4261 = vld [vmem:[%s3 + $0x40] sm:$0xff]
    %v4262 = vld [vmem:[%s3 + $0x48] sm:$0xff]
    %v4263 = vld [vmem:[%s3 + $0x50] sm:$0xff]
    %v4264 = vld [vmem:[%s3 + $0x58] sm:$0xff]
    %v4265 = vld [vmem:[%s3 + $0x60] sm:$0xff]
    %v4266 = vld [vmem:[%s3 + $0x68] sm:$0xff]
    %v4267 = vld [vmem:[%s3 + $0x70] sm:$0xff]
    %v4268 = vld [vmem:[%s3 + $0x78] sm:$0xff]
    %v4269 = vld [vmem:[%s3 + $0x80] sm:$0xff]
    %v4270 = vld [vmem:[%s3 + $0x88] sm:$0xff]
    %v4271 = vld [vmem:[%s3 + $0x90] sm:$0xff]
    %v4272 = vld [vmem:[%s3 + $0x98] sm:$0xff]
    %v4273 = vld [vmem:[%s3 + $0xa0] sm:$0xff]
    %v4274 = vld [vmem:[%s3 + $0xa8] sm:$0xff]
    %v4275 = vld [vmem:[%s3 + $0xb0] sm:$0xff]
    %v4276 = vld [vmem:[%s3 + $0xb8] sm:$0xff]
    %v4277 = vld [vmem:[%s3 + $0xc0] sm:$0xff]
    %v4278 = vld [vmem:[%s3 + $0xc8] sm:$0xff]
    %v4279 = vld [vmem:[%s3 + $0xd0] sm:$0xff]
    %v4280 = vld [vmem:[%s3 + $0xd8] sm:$0xff]
    %v4281 = vld [vmem:[%s3 + $0xe0] sm:$0xff]
    %v4282 = vld [vmem:[%s3 + $0xe8] sm:$0xff]
    %v4283 = vld [vmem:[%s3 + $0xf0] sm:$0xff]
    %v4284 = vld [vmem:[%s3 + $0xf8] sm:$0xff]
    %v4317 = vunpack.c.l.b16 %v4253
    %v4318 = vunpack.c.h.b16 %v4253
    %v4319 = vunpack.c.l.b16 %v4254
    %v4320 = vunpack.c.h.b16 %v4254
    %v4321 = vunpack.c.l.b16 %v4255
    %v4322 = vunpack.c.h.b16 %v4255
    %v4323 = vunpack.c.l.b16 %v4256
    %v4324 = vunpack.c.h.b16 %v4256
    %v4325 = vunpack.c.l.b16 %v4257
    %v4326 = vunpack.c.h.b16 %v4257
    %v4327 = vunpack.c.l.b16 %v4258
    %v4328 = vunpack.c.h.b16 %v4258
    %v4329 = vunpack.c.l.b16 %v4259
    %v4330 = vunpack.c.h.b16 %v4259
    %v4331 = vunpack.c.l.b16 %v4260
    %v4332 = vunpack.c.h.b16 %v4260
    %v4333 = vunpack.c.l.b16 %v4261
    %v4334 = vunpack.c.h.b16 %v4261
    %v4335 = vunpack.c.l.b16 %v4262
    %v4336 = vunpack.c.h.b16 %v4262
    %v4337 = vunpack.c.l.b16 %v4263
    %v4338 = vunpack.c.h.b16 %v4263
    %v4339 = vunpack.c.l.b16 %v4264
    %v4340 = vunpack.c.h.b16 %v4264
    %v4341 = vunpack.c.l.b16 %v4265
    %v4342 = vunpack.c.h.b16 %v4265
    %v4343 = vunpack.c.l.b16 %v4266
    %v4344 = vunpack.c.h.b16 %v4266
    %v4345 = vunpack.c.l.b16 %v4267
    %v4346 = vunpack.c.h.b16 %v4267
    %v4347 = vunpack.c.l.b16 %v4268
    %v4348 = vunpack.c.h.b16 %v4268
    %v4349 = vunpack.c.l.b16 %v4269
    %v4350 = vunpack.c.h.b16 %v4269
    %v4351 = vunpack.c.l.b16 %v4270
    %v4352 = vunpack.c.h.b16 %v4270
    %v4353 = vunpack.c.l.b16 %v4271
    %v4354 = vunpack.c.h.b16 %v4271
    %v4355 = vunpack.c.l.b16 %v4272
    %v4356 = vunpack.c.h.b16 %v4272
    %v4357 = vunpack.c.l.b16 %v4273
    %v4358 = vunpack.c.h.b16 %v4273
    %v4359 = vunpack.c.l.b16 %v4274
    %v4360 = vunpack.c.h.b16 %v4274
    %v4361 = vunpack.c.l.b16 %v4275
    %v4362 = vunpack.c.h.b16 %v4275
    %v4363 = vunpack.c.l.b16 %v4276
    %v4364 = vunpack.c.h.b16 %v4276
    %v4365 = vunpack.c.l.b16 %v4277
    %v4366 = vunpack.c.h.b16 %v4277
    %v4367 = vunpack.c.l.b16 %v4278
    %v4368 = vunpack.c.h.b16 %v4278
    %v4369 = vunpack.c.l.b16 %v4279
    %v4370 = vunpack.c.h.b16 %v4279
    %v4371 = vunpack.c.l.b16 %v4280
    %v4372 = vunpack.c.h.b16 %v4280
    %v4373 = vunpack.c.l.b16 %v4281
    %v4374 = vunpack.c.h.b16 %v4281
    %v4375 = vunpack.c.l.b16 %v4282
    %v4376 = vunpack.c.h.b16 %v4282
    %v4377 = vunpack.c.l.b16 %v4283
    %v4378 = vunpack.c.h.b16 %v4283
    %v4379 = vunpack.c.l.b16 %v4284
    %v4380 = vunpack.c.h.b16 %v4284
    %v4381 = vpack.c.b16 %v4321, %v4317
    %v4382 = vpack.c.b16 %v4322, %v4318
    %v4383 = vpack.c.b16 %v4323, %v4319
    %v4384 = vpack.c.b16 %v4324, %v4320
    %v4385 = vpack.c.b16 %v4329, %v4325
    %v4386 = vpack.c.b16 %v4330, %v4326
    %v4387 = vpack.c.b16 %v4331, %v4327
    %v4388 = vpack.c.b16 %v4332, %v4328
    %v4389 = vpack.c.b16 %v4337, %v4333
    %v4390 = vpack.c.b16 %v4338, %v4334
    %v4391 = vpack.c.b16 %v4339, %v4335
    %v4392 = vpack.c.b16 %v4340, %v4336
    %v4393 = vpack.c.b16 %v4345, %v4341
    %v4394 = vpack.c.b16 %v4346, %v4342
    %v4395 = vpack.c.b16 %v4347, %v4343
    %v4396 = vpack.c.b16 %v4348, %v4344
    %v4397 = vpack.c.b16 %v4353, %v4349
    %v4398 = vpack.c.b16 %v4354, %v4350
    %v4399 = vpack.c.b16 %v4355, %v4351
    %v4400 = vpack.c.b16 %v4356, %v4352
    %v4401 = vpack.c.b16 %v4361, %v4357
    %v4402 = vpack.c.b16 %v4362, %v4358
    %v4403 = vpack.c.b16 %v4363, %v4359
    %v4404 = vpack.c.b16 %v4364, %v4360
    %v4405 = vpack.c.b16 %v4369, %v4365
    %v4406 = vpack.c.b16 %v4370, %v4366
    %v4407 = vpack.c.b16 %v4371, %v4367
    %v4408 = vpack.c.b16 %v4372, %v4368
    %v4409 = vpack.c.b16 %v4377, %v4373
    %v4410 = vpack.c.b16 %v4378, %v4374
    %v4411 = vpack.c.b16 %v4379, %v4375
    %v4412 = vpack.c.b16 %v4380, %v4376
    %4445 = vmatprep.subr.bf16.mxu0 %v4382
    %4446 = vmatpush1.bf16.msra.mxu0 %v4381
    %4447 = vmatprep.subr.bf16.mxu0 %v4386
    %4448 = vmatpush1.bf16.msra.mxu0 %v4385
    %4449 = vmatprep.subr.bf16.mxu0 %v4390
    %4450 = vmatpush1.bf16.msra.mxu0 %v4389
    %4451 = vmatprep.subr.bf16.mxu0 %v4394
    %4452 = vmatpush1.bf16.msra.mxu0 %v4393
    %4453 = vmatprep.subr.bf16.mxu0 %v4398
    %4454 = vmatpush1.bf16.msra.mxu0 %v4397
    %4455 = vmatprep.subr.bf16.mxu0 %v4402
    %4456 = vmatpush1.bf16.msra.mxu0 %v4401
    %4457 = vmatprep.subr.bf16.mxu0 %v4406
    %4458 = vmatpush1.bf16.msra.mxu0 %v4405
    %4459 = vmatprep.subr.bf16.mxu0 %v4410
    %4460 = vmatpush1.bf16.msra.mxu0 %v4409
    %4461 = vmatprep.subr.bf16.mxu0 0
    %4462 = vmatpush1.bf16.msra.mxu0 0
    %4463 = vmatprep.subr.bf16.mxu0 0
    %4464 = vmatpush1.bf16.msra.mxu0 0
    %4465 = vmatprep.subr.bf16.mxu0 0
    %4466 = vmatpush1.bf16.msra.mxu0 0
    %4467 = vmatprep.subr.bf16.mxu0 0
    %4468 = vmatpush1.bf16.msra.mxu0 0
    %4469 = vmatprep.subr.bf16.mxu0 0
    %4470 = vmatpush1.bf16.msra.mxu0 0
    %4471 = vmatprep.subr.bf16.mxu0 0
    %4472 = vmatpush1.bf16.msra.mxu0 0
    %4473 = vmatprep.subr.bf16.mxu0 0
    %4474 = vmatpush1.bf16.msra.mxu0 0
    %4475 = vmatprep.subr.bf16.mxu0 0
    %4476 = vmatpush1.bf16.msra.mxu0 0
    %4477 = vmatprep.mubr.bf16.mxu0 0
    %4478 = vmatmul.mubr.bf16.gmra.mrb[0].mxu0 %v3702
    %v4479 = vpop.f32.mrb[0].mxu0
    %v4480 = vadd.f32 0.0, %v4479
    %v4481 = vpop.f32.mrb[0].mxu0
    %v4482 = vadd.f32 0.0, %v4481
    %v4483 = vpop.f32.mrb[0].mxu0
    %v4484 = vadd.f32 0.0, %v4483
    %v4485 = vpop.f32.mrb[0].mxu0
    %v4486 = vadd.f32 0.0, %v4485
    %4487 = vdwg.mxu0
    %4488 = vmatprep.subr.bf16.mxu0 %v4384
    %4489 = vmatpush1.bf16.msra.mxu0 %v4383
    %4490 = vmatprep.subr.bf16.mxu0 %v4388
    %4491 = vmatpush1.bf16.msra.mxu0 %v4387
    %4492 = vmatprep.subr.bf16.mxu0 %v4392
    %4493 = vmatpush1.bf16.msra.mxu0 %v4391
    %4494 = vmatprep.subr.bf16.mxu0 %v4396
    %4495 = vmatpush1.bf16.msra.mxu0 %v4395
    %4496 = vmatprep.subr.bf16.mxu0 %v4400
    %4497 = vmatpush1.bf16.msra.mxu0 %v4399
    %4498 = vmatprep.subr.bf16.mxu0 %v4404
    %4499 = vmatpush1.bf16.msra.mxu0 %v4403
    %4500 = vmatprep.subr.bf16.mxu0 %v4408
    %4501 = vmatpush1.bf16.msra.mxu0 %v4407
    %4502 = vmatprep.subr.bf16.mxu0 %v4412
    %4503 = vmatpush1.bf16.msra.mxu0 %v4411
    %4504 = vmatprep.subr.bf16.mxu0 0
    %4505 = vmatpush1.bf16.msra.mxu0 0
    %4506 = vmatprep.subr.bf16.mxu0 0
    %4507 = vmatpush1.bf16.msra.mxu0 0
    %4508 = vmatprep.subr.bf16.mxu0 0
    %4509 = vmatpush1.bf16.msra.mxu0 0
    %4510 = vmatprep.subr.bf16.mxu0 0
    %4511 = vmatpush1.bf16.msra.mxu0 0
    %4512 = vmatprep.subr.bf16.mxu0 0
    %4513 = vmatpush1.bf16.msra.mxu0 0
    %4514 = vmatprep.subr.bf16.mxu0 0
    %4515 = vmatpush1.bf16.msra.mxu0 0
    %4516 = vmatprep.subr.bf16.mxu0 0
    %4517 = vmatpush1.bf16.msra.mxu0 0
    %4518 = vmatprep.subr.bf16.mxu0 0
    %4519 = vmatpush1.bf16.msra.mxu0 0
    %4520 = vmatprep.mubr.bf16.mxu0 0
    %4521 = vmatmul.mubr.bf16.gmra.mrb[0].mxu0 %v3702
    %v4522 = vpop.f32.mrb[0].mxu0
    %v4523 = vadd.f32 0.0, %v4522
    %v4524 = vpop.f32.mrb[0].mxu0
    %v4525 = vadd.f32 0.0, %v4524
    %v4526 = vpop.f32.mrb[0].mxu0
    %v4527 = vadd.f32 0.0, %v4526
    %v4528 = vpop.f32.mrb[0].mxu0
    %v4529 = vadd.f32 0.0, %v4528
    %4530 = vdwg.mxu0
    %v4531 = vadd.f32 %v4245, %v4480
    %v4532 = vadd.f32 %v4246, %v4482
    %v4533 = vadd.f32 %v4247, %v4523
    %v4534 = vadd.f32 %v4248, %v4525
    %v4535 = vadd.f32 %v4249, %v4484
    %v4536 = vadd.f32 %v4250, %v4486
    %v4537 = vadd.f32 %v4251, %v4527
    %v4538 = vadd.f32 %v4252, %v4529
    %v4539 = vxor.u32 %v4531, 2147483648
    %v4540 = vxor.u32 %v4535, 2147483648
    %v4541 = vmul.f32 %v4539, 1.442695
    %v4542 = vpow.pop %v4541
    %v4543 = vmul.f32 %v4540, 1.442695
    %v4544 = vpow.pop %v4543
    %v4545 = vadd.f32 %v4542, 1.0
    %v4546 = vadd.f32 %v4544, 1.0
    %v4547 = vrcp.pop %v4545
    %v4548 = vmul.f32 1.0, %v4547
    %v4549 = vrcp.pop %v4546
    %v4550 = vmul.f32 1.0, %v4549
    %v4551 = vxor.u32 %v4532, 2147483648
    %v4552 = vxor.u32 %v4536, 2147483648
    %v4553 = vmul.f32 %v4551, 1.442695
    %v4554 = vpow.pop %v4553
    %v4555 = vmul.f32 %v4552, 1.442695
    %v4556 = vpow.pop %v4555
    %v4557 = vadd.f32 %v4554, 1.0
    %v4558 = vadd.f32 %v4556, 1.0
    %v4559 = vrcp.pop %v4557
    %v4560 = vmul.f32 1.0, %v4559
    %v4561 = vrcp.pop %v4558
    %v4562 = vmul.f32 1.0, %v4561
    %v4563 = vtanh.pop %v4533
    %v4564 = vtanh.pop %v4537
    %v4565 = vxor.u32 %v4534, 2147483648
    %v4566 = vxor.u32 %v4538, 2147483648
    %v4567 = vmul.f32 %v4565, 1.442695
    %v4568 = vpow.pop %v4567
    %v4569 = vmul.f32 %v4566, 1.442695
    %v4570 = vpow.pop %v4569
    %v4571 = vadd.f32 %v4568, 1.0
    %v4572 = vadd.f32 %v4570, 1.0
    %v4573 = vrcp.pop %v4571
    %v4574 = vmul.f32 1.0, %v4573
    %v4575 = vrcp.pop %v4572
    %v4576 = vmul.f32 1.0, %v4575
    %v4577 = vmul.f32 %v4560, %v3696
    %v4578 = vmul.f32 %v4562, %v3697
    %v4579 = vmul.f32 %v4548, %v4563
    %v4580 = vmul.f32 %v4550, %v4564
    %v4581 = vadd.f32 %v4577, %v4579
    %v4582 = vadd.f32 %v4578, %v4580
    %v4583 = vtanh.pop %v4581
    %v4584 = vtanh.pop %v4582
    %v4585 = vmul.f32 %v4574, %v4583
    %v4586 = vmul.f32 %v4576, %v4584
    %v4587 = vpack.c.bf16 %v4586, %v4585
    %v4588 = vld [vmem:[#allocation7] sm:$0xff]
    %v4589 = vld [vmem:[#allocation7 + $0x8] sm:$0xff]
    %v4590 = vld [vmem:[#allocation7 + $0x10] sm:$0xff]
    %v4591 = vld [vmem:[#allocation7 + $0x18] sm:$0xff]
    %v4592 = vld [vmem:[#allocation7 + $0x20] sm:$0xff]
    %v4593 = vld [vmem:[#allocation7 + $0x28] sm:$0xff]
    %v4594 = vld [vmem:[#allocation7 + $0x30] sm:$0xff]
    %v4595 = vld [vmem:[#allocation7 + $0x38] sm:$0xff]
    %v4596 = vld [vmem:[#allocation7 + $0x40] sm:$0xff]
    %v4597 = vld [vmem:[#allocation7 + $0x48] sm:$0xff]
    %v4598 = vld [vmem:[#allocation7 + $0x50] sm:$0xff]
    %v4599 = vld [vmem:[#allocation7 + $0x58] sm:$0xff]
    %v4600 = vld [vmem:[#allocation7 + $0x60] sm:$0xff]
    %v4601 = vld [vmem:[#allocation7 + $0x68] sm:$0xff]
    %v4602 = vld [vmem:[#allocation7 + $0x70] sm:$0xff]
    %v4603 = vld [vmem:[#allocation7 + $0x78] sm:$0xff]
    %v4604 = vld [vmem:[#allocation7 + $0x80] sm:$0xff]
    %v4605 = vld [vmem:[#allocation7 + $0x88] sm:$0xff]
    %v4606 = vld [vmem:[#allocation7 + $0x90] sm:$0xff]
    %v4607 = vld [vmem:[#allocation7 + $0x98] sm:$0xff]
    %v4608 = vld [vmem:[#allocation7 + $0xa0] sm:$0xff]
    %v4609 = vld [vmem:[#allocation7 + $0xa8] sm:$0xff]
    %v4610 = vld [vmem:[#allocation7 + $0xb0] sm:$0xff]
    %v4611 = vld [vmem:[#allocation7 + $0xb8] sm:$0xff]
    %v4612 = vld [vmem:[#allocation7 + $0xc0] sm:$0xff]
    %v4613 = vld [vmem:[#allocation7 + $0xc8] sm:$0xff]
    %v4614 = vld [vmem:[#allocation7 + $0xd0] sm:$0xff]
    %v4615 = vld [vmem:[#allocation7 + $0xd8] sm:$0xff]
    %v4616 = vld [vmem:[#allocation7 + $0xe0] sm:$0xff]
    %v4617 = vld [vmem:[#allocation7 + $0xe8] sm:$0xff]
    %v4618 = vld [vmem:[#allocation7 + $0xf0] sm:$0xff]
    %v4619 = vld [vmem:[#allocation7 + $0xf8] sm:$0xff]
    %v4620 = vld [vmem:[#allocation7 + $0x100] sm:$0xff]
    %v4621 = vld [vmem:[#allocation7 + $0x108] sm:$0xff]
    %v4622 = vld [vmem:[#allocation7 + $0x110] sm:$0xff]
    %v4623 = vld [vmem:[#allocation7 + $0x118] sm:$0xff]
    %v4624 = vld [vmem:[#allocation7 + $0x120] sm:$0xff]
    %v4625 = vld [vmem:[#allocation7 + $0x128] sm:$0xff]
    %v4626 = vld [vmem:[#allocation7 + $0x130] sm:$0xff]
    %v4627 = vld [vmem:[#allocation7 + $0x138] sm:$0xff]
    %v4628 = vld [vmem:[#allocation7 + $0x140] sm:$0xff]
    %v4629 = vld [vmem:[#allocation7 + $0x148] sm:$0xff]
    %v4630 = vld [vmem:[#allocation7 + $0x150] sm:$0xff]
    %v4631 = vld [vmem:[#allocation7 + $0x158] sm:$0xff]
    %v4632 = vld [vmem:[#allocation7 + $0x160] sm:$0xff]
    %v4633 = vld [vmem:[#allocation7 + $0x168] sm:$0xff]
    %v4634 = vld [vmem:[#allocation7 + $0x170] sm:$0xff]
    %v4635 = vld [vmem:[#allocation7 + $0x178] sm:$0xff]
    %v4636 = vld [vmem:[#allocation7 + $0x180] sm:$0xff]
    %v4637 = vld [vmem:[#allocation7 + $0x188] sm:$0xff]
    %v4638 = vld [vmem:[#allocation7 + $0x190] sm:$0xff]
    %v4639 = vld [vmem:[#allocation7 + $0x198] sm:$0xff]
    %v4640 = vld [vmem:[#allocation7 + $0x1a0] sm:$0xff]
    %v4641 = vld [vmem:[#allocation7 + $0x1a8] sm:$0xff]
    %v4642 = vld [vmem:[#allocation7 + $0x1b0] sm:$0xff]
    %v4643 = vld [vmem:[#allocation7 + $0x1b8] sm:$0xff]
    %v4644 = vld [vmem:[#allocation7 + $0x1c0] sm:$0xff]
    %v4645 = vld [vmem:[#allocation7 + $0x1c8] sm:$0xff]
    %v4646 = vld [vmem:[#allocation7 + $0x1d0] sm:$0xff]
    %v4647 = vld [vmem:[#allocation7 + $0x1d8] sm:$0xff]
    %v4648 = vld [vmem:[#allocation7 + $0x1e0] sm:$0xff]
    %v4649 = vld [vmem:[#allocation7 + $0x1e8] sm:$0xff]
    %v4650 = vld [vmem:[#allocation7 + $0x1f0] sm:$0xff]
    %v4651 = vld [vmem:[#allocation7 + $0x1f8] sm:$0xff]
    %v4652 = vld [vmem:[#allocation9] sm:$0xf]
    %v4654 = vlaneseq
    %v4655 = vshrl.u32 %v4654, 7
    %v4656 = vsub.s32 0, %v4655
    %v4657 = vrot.slane %v4652, %v4656
    %v4658 = vlaneseq
    %v4659 = vshrl.u32 %v4658, 7
    %v4660 = vsub.s32 1, %v4659
    %v4661 = vrot.slane %v4652, %v4660
    %v4662 = vlaneseq
    %v4663 = vshrl.u32 %v4662, 7
    %v4664 = vsub.s32 2, %v4663
    %v4665 = vrot.slane %v4652, %v4664
    %v4666 = vlaneseq
    %v4667 = vshrl.u32 %v4666, 7
    %v4668 = vsub.s32 3, %v4667
    %v4669 = vrot.slane %v4652, %v4668
    %v4738 = vunpack.c.l.b16 %v4588
    %v4739 = vunpack.c.h.b16 %v4588
    %v4740 = vunpack.c.l.b16 %v4589
    %v4741 = vunpack.c.h.b16 %v4589
    %v4742 = vunpack.c.l.b16 %v4590
    %v4743 = vunpack.c.h.b16 %v4590
    %v4744 = vunpack.c.l.b16 %v4591
    %v4745 = vunpack.c.h.b16 %v4591
    %v4746 = vunpack.c.l.b16 %v4592
    %v4747 = vunpack.c.h.b16 %v4592
    %v4748 = vunpack.c.l.b16 %v4593
    %v4749 = vunpack.c.h.b16 %v4593
    %v4750 = vunpack.c.l.b16 %v4594
    %v4751 = vunpack.c.h.b16 %v4594
    %v4752 = vunpack.c.l.b16 %v4595
    %v4753 = vunpack.c.h.b16 %v4595
    %v4754 = vunpack.c.l.b16 %v4596
    %v4755 = vunpack.c.h.b16 %v4596
    %v4756 = vunpack.c.l.b16 %v4597
    %v4757 = vunpack.c.h.b16 %v4597
    %v4758 = vunpack.c.l.b16 %v4598
    %v4759 = vunpack.c.h.b16 %v4598
    %v4760 = vunpack.c.l.b16 %v4599
    %v4761 = vunpack.c.h.b16 %v4599
    %v4762 = vunpack.c.l.b16 %v4600
    %v4763 = vunpack.c.h.b16 %v4600
    %v4764 = vunpack.c.l.b16 %v4601
    %v4765 = vunpack.c.h.b16 %v4601
    %v4766 = vunpack.c.l.b16 %v4602
    %v4767 = vunpack.c.h.b16 %v4602
    %v4768 = vunpack.c.l.b16 %v4603
    %v4769 = vunpack.c.h.b16 %v4603
    %v4770 = vunpack.c.l.b16 %v4604
    %v4771 = vunpack.c.h.b16 %v4604
    %v4772 = vunpack.c.l.b16 %v4605
    %v4773 = vunpack.c.h.b16 %v4605
    %v4774 = vunpack.c.l.b16 %v4606
    %v4775 = vunpack.c.h.b16 %v4606
    %v4776 = vunpack.c.l.b16 %v4607
    %v4777 = vunpack.c.h.b16 %v4607
    %v4778 = vunpack.c.l.b16 %v4608
    %v4779 = vunpack.c.h.b16 %v4608
    %v4780 = vunpack.c.l.b16 %v4609
    %v4781 = vunpack.c.h.b16 %v4609
    %v4782 = vunpack.c.l.b16 %v4610
    %v4783 = vunpack.c.h.b16 %v4610
    %v4784 = vunpack.c.l.b16 %v4611
    %v4785 = vunpack.c.h.b16 %v4611
    %v4786 = vunpack.c.l.b16 %v4612
    %v4787 = vunpack.c.h.b16 %v4612
    %v4788 = vunpack.c.l.b16 %v4613
    %v4789 = vunpack.c.h.b16 %v4613
    %v4790 = vunpack.c.l.b16 %v4614
    %v4791 = vunpack.c.h.b16 %v4614
    %v4792 = vunpack.c.l.b16 %v4615
    %v4793 = vunpack.c.h.b16 %v4615
    %v4794 = vunpack.c.l.b16 %v4616
    %v4795 = vunpack.c.h.b16 %v4616
    %v4796 = vunpack.c.l.b16 %v4617
    %v4797 = vunpack.c.h.b16 %v4617
    %v4798 = vunpack.c.l.b16 %v4618
    %v4799 = vunpack.c.h.b16 %v4618
    %v4800 = vunpack.c.l.b16 %v4619
    %v4801 = vunpack.c.h.b16 %v4619
    %v4802 = vunpack.c.l.b16 %v4620
    %v4803 = vunpack.c.h.b16 %v4620
    %v4804 = vunpack.c.l.b16 %v4621
    %v4805 = vunpack.c.h.b16 %v4621
    %v4806 = vunpack.c.l.b16 %v4622
    %v4807 = vunpack.c.h.b16 %v4622
    %v4808 = vunpack.c.l.b16 %v4623
    %v4809 = vunpack.c.h.b16 %v4623
    %v4810 = vunpack.c.l.b16 %v4624
    %v4811 = vunpack.c.h.b16 %v4624
    %v4812 = vunpack.c.l.b16 %v4625
    %v4813 = vunpack.c.h.b16 %v4625
    %v4814 = vunpack.c.l.b16 %v4626
    %v4815 = vunpack.c.h.b16 %v4626
    %v4816 = vunpack.c.l.b16 %v4627
    %v4817 = vunpack.c.h.b16 %v4627
    %v4818 = vunpack.c.l.b16 %v4628
    %v4819 = vunpack.c.h.b16 %v4628
    %v4820 = vunpack.c.l.b16 %v4629
    %v4821 = vunpack.c.h.b16 %v4629
    %v4822 = vunpack.c.l.b16 %v4630
    %v4823 = vunpack.c.h.b16 %v4630
    %v4824 = vunpack.c.l.b16 %v4631
    %v4825 = vunpack.c.h.b16 %v4631
    %v4826 = vunpack.c.l.b16 %v4632
    %v4827 = vunpack.c.h.b16 %v4632
    %v4828 = vunpack.c.l.b16 %v4633
    %v4829 = vunpack.c.h.b16 %v4633
    %v4830 = vunpack.c.l.b16 %v4634
    %v4831 = vunpack.c.h.b16 %v4634
    %v4832 = vunpack.c.l.b16 %v4635
    %v4833 = vunpack.c.h.b16 %v4635
    %v4834 = vunpack.c.l.b16 %v4636
    %v4835 = vunpack.c.h.b16 %v4636
    %v4836 = vunpack.c.l.b16 %v4637
    %v4837 = vunpack.c.h.b16 %v4637
    %v4838 = vunpack.c.l.b16 %v4638
    %v4839 = vunpack.c.h.b16 %v4638
    %v4840 = vunpack.c.l.b16 %v4639
    %v4841 = vunpack.c.h.b16 %v4639
    %v4842 = vunpack.c.l.b16 %v4640
    %v4843 = vunpack.c.h.b16 %v4640
    %v4844 = vunpack.c.l.b16 %v4641
    %v4845 = vunpack.c.h.b16 %v4641
    %v4846 = vunpack.c.l.b16 %v4642
    %v4847 = vunpack.c.h.b16 %v4642
    %v4848 = vunpack.c.l.b16 %v4643
    %v4849 = vunpack.c.h.b16 %v4643
    %v4850 = vunpack.c.l.b16 %v4644
    %v4851 = vunpack.c.h.b16 %v4644
    %v4852 = vunpack.c.l.b16 %v4645
    %v4853 = vunpack.c.h.b16 %v4645
    %v4854 = vunpack.c.l.b16 %v4646
    %v4855 = vunpack.c.h.b16 %v4646
    %v4856 = vunpack.c.l.b16 %v4647
    %v4857 = vunpack.c.h.b16 %v4647
    %v4858 = vunpack.c.l.b16 %v4648
    %v4859 = vunpack.c.h.b16 %v4648
    %v4860 = vunpack.c.l.b16 %v4649
    %v4861 = vunpack.c.h.b16 %v4649
    %v4862 = vunpack.c.l.b16 %v4650
    %v4863 = vunpack.c.h.b16 %v4650
    %v4864 = vunpack.c.l.b16 %v4651
    %v4865 = vunpack.c.h.b16 %v4651
    %v4866 = vpack.c.b16 %v4742, %v4738
    %v4867 = vpack.c.b16 %v4743, %v4739
    %v4868 = vpack.c.b16 %v4744, %v4740
    %v4869 = vpack.c.b16 %v4745, %v4741
    %v4870 = vpack.c.b16 %v4750, %v4746
    %v4871 = vpack.c.b16 %v4751, %v4747
    %v4872 = vpack.c.b16 %v4752, %v4748
    %v4873 = vpack.c.b16 %v4753, %v4749
    %v4874 = vpack.c.b16 %v4758, %v4754
    %v4875 = vpack.c.b16 %v4759, %v4755
    %v4876 = vpack.c.b16 %v4760, %v4756
    %v4877 = vpack.c.b16 %v4761, %v4757
    %v4878 = vpack.c.b16 %v4766, %v4762
    %v4879 = vpack.c.b16 %v4767, %v4763
    %v4880 = vpack.c.b16 %v4768, %v4764
    %v4881 = vpack.c.b16 %v4769, %v4765
    %v4882 = vpack.c.b16 %v4774, %v4770
    %v4883 = vpack.c.b16 %v4775, %v4771
    %v4884 = vpack.c.b16 %v4776, %v4772
    %v4885 = vpack.c.b16 %v4777, %v4773
    %v4886 = vpack.c.b16 %v4782, %v4778
    %v4887 = vpack.c.b16 %v4783, %v4779
    %v4888 = vpack.c.b16 %v4784, %v4780
    %v4889 = vpack.c.b16 %v4785, %v4781
    %v4890 = vpack.c.b16 %v4790, %v4786
    %v4891 = vpack.c.b16 %v4791, %v4787
    %v4892 = vpack.c.b16 %v4792, %v4788
    %v4893 = vpack.c.b16 %v4793, %v4789
    %v4894 = vpack.c.b16 %v4798, %v4794
    %v4895 = vpack.c.b16 %v4799, %v4795
    %v4896 = vpack.c.b16 %v4800, %v4796
    %v4897 = vpack.c.b16 %v4801, %v4797
    %v4898 = vpack.c.b16 %v4806, %v4802
    %v4899 = vpack.c.b16 %v4807, %v4803
    %v4900 = vpack.c.b16 %v4808, %v4804
    %v4901 = vpack.c.b16 %v4809, %v4805
    %v4902 = vpack.c.b16 %v4814, %v4810
    %v4903 = vpack.c.b16 %v4815, %v4811
    %v4904 = vpack.c.b16 %v4816, %v4812
    %v4905 = vpack.c.b16 %v4817, %v4813
    %v4906 = vpack.c.b16 %v4822, %v4818
    %v4907 = vpack.c.b16 %v4823, %v4819
    %v4908 = vpack.c.b16 %v4824, %v4820
    %v4909 = vpack.c.b16 %v4825, %v4821
    %v4910 = vpack.c.b16 %v4830, %v4826
    %v4911 = vpack.c.b16 %v4831, %v4827
    %v4912 = vpack.c.b16 %v4832, %v4828
    %v4913 = vpack.c.b16 %v4833, %v4829
    %v4914 = vpack.c.b16 %v4838, %v4834
    %v4915 = vpack.c.b16 %v4839, %v4835
    %v4916 = vpack.c.b16 %v4840, %v4836
    %v4917 = vpack.c.b16 %v4841, %v4837
    %v4918 = vpack.c.b16 %v4846, %v4842
    %v4919 = vpack.c.b16 %v4847, %v4843
    %v4920 = vpack.c.b16 %v4848, %v4844
    %v4921 = vpack.c.b16 %v4849, %v4845
    %v4922 = vpack.c.b16 %v4854, %v4850
    %v4923 = vpack.c.b16 %v4855, %v4851
    %v4924 = vpack.c.b16 %v4856, %v4852
    %v4925 = vpack.c.b16 %v4857, %v4853
    %v4926 = vpack.c.b16 %v4862, %v4858
    %v4927 = vpack.c.b16 %v4863, %v4859
    %v4928 = vpack.c.b16 %v4864, %v4860
    %v4929 = vpack.c.b16 %v4865, %v4861
    %4994 = vmatprep.subr.bf16.mxu0 %v4867
    %4995 = vmatpush1.bf16.msra.mxu0 %v4866
    %4996 = vmatprep.subr.bf16.mxu0 %v4871
    %4997 = vmatpush1.bf16.msra.mxu0 %v4870
    %4998 = vmatprep.subr.bf16.mxu0 %v4875
    %4999 = vmatpush1.bf16.msra.mxu0 %v4874
    %5000 = vmatprep.subr.bf16.mxu0 %v4879
    %5001 = vmatpush1.bf16.msra.mxu0 %v4878
    %5002 = vmatprep.subr.bf16.mxu0 %v4883
    %5003 = vmatpush1.bf16.msra.mxu0 %v4882
    %5004 = vmatprep.subr.bf16.mxu0 %v4887
    %5005 = vmatpush1.bf16.msra.mxu0 %v4886
    %5006 = vmatprep.subr.bf16.mxu0 %v4891
    %5007 = vmatpush1.bf16.msra.mxu0 %v4890
    %5008 = vmatprep.subr.bf16.mxu0 %v4895
    %5009 = vmatpush1.bf16.msra.mxu0 %v4894
    %5010 = vmatprep.subr.bf16.mxu0 %v4899
    %5011 = vmatpush1.bf16.msra.mxu0 %v4898
    %5012 = vmatprep.subr.bf16.mxu0 %v4903
    %5013 = vmatpush1.bf16.msra.mxu0 %v4902
    %5014 = vmatprep.subr.bf16.mxu0 %v4907
    %5015 = vmatpush1.bf16.msra.mxu0 %v4906
    %5016 = vmatprep.subr.bf16.mxu0 %v4911
    %5017 = vmatpush1.bf16.msra.mxu0 %v4910
    %5018 = vmatprep.subr.bf16.mxu0 %v4915
    %5019 = vmatpush1.bf16.msra.mxu0 %v4914
    %5020 = vmatprep.subr.bf16.mxu0 %v4919
    %5021 = vmatpush1.bf16.msra.mxu0 %v4918
    %5022 = vmatprep.subr.bf16.mxu0 %v4923
    %5023 = vmatpush1.bf16.msra.mxu0 %v4922
    %5024 = vmatprep.subr.bf16.mxu0 %v4927
    %5025 = vmatpush1.bf16.msra.mxu0 %v4926
    %5026 = vmatprep.mubr.bf16.mxu0 %v4243
    %5027 = vmatmul.mubr.bf16.gmra.mrb[0].mxu0 %v3702
    %v5028 = vpop.f32.mrb[0].mxu0
    %v5029 = vadd.f32 %v4657, %v5028
    %v5030 = vpop.f32.mrb[0].mxu0
    %v5031 = vadd.f32 %v4661, %v5030
    %v5032 = vpop.f32.mrb[0].mxu0
    %v5033 = vadd.f32 %v4657, %v5032
    %v5034 = vpop.f32.mrb[0].mxu0
    %v5035 = vadd.f32 %v4661, %v5034
    %5036 = vdwg.mxu0
    %5037 = vmatprep.subr.bf16.mxu0 %v4869
    %5038 = vmatpush1.bf16.msra.mxu0 %v4868
    %5039 = vmatprep.subr.bf16.mxu0 %v4873
    %5040 = vmatpush1.bf16.msra.mxu0 %v4872
    %5041 = vmatprep.subr.bf16.mxu0 %v4877
    %5042 = vmatpush1.bf16.msra.mxu0 %v4876
    %5043 = vmatprep.subr.bf16.mxu0 %v4881
    %5044 = vmatpush1.bf16.msra.mxu0 %v4880
    %5045 = vmatprep.subr.bf16.mxu0 %v4885
    %5046 = vmatpush1.bf16.msra.mxu0 %v4884
    %5047 = vmatprep.subr.bf16.mxu0 %v4889
    %5048 = vmatpush1.bf16.msra.mxu0 %v4888
    %5049 = vmatprep.subr.bf16.mxu0 %v4893
    %5050 = vmatpush1.bf16.msra.mxu0 %v4892
    %5051 = vmatprep.subr.bf16.mxu0 %v4897
    %5052 = vmatpush1.bf16.msra.mxu0 %v4896
    %5053 = vmatprep.subr.bf16.mxu0 %v4901
    %5054 = vmatpush1.bf16.msra.mxu0 %v4900
    %5055 = vmatprep.subr.bf16.mxu0 %v4905
    %5056 = vmatpush1.bf16.msra.mxu0 %v4904
    %5057 = vmatprep.subr.bf16.mxu0 %v4909
    %5058 = vmatpush1.bf16.msra.mxu0 %v4908
    %5059 = vmatprep.subr.bf16.mxu0 %v4913
    %5060 = vmatpush1.bf16.msra.mxu0 %v4912
    %5061 = vmatprep.subr.bf16.mxu0 %v4917
    %5062 = vmatpush1.bf16.msra.mxu0 %v4916
    %5063 = vmatprep.subr.bf16.mxu0 %v4921
    %5064 = vmatpush1.bf16.msra.mxu0 %v4920
    %5065 = vmatprep.subr.bf16.mxu0 %v4925
    %5066 = vmatpush1.bf16.msra.mxu0 %v4924
    %5067 = vmatprep.subr.bf16.mxu0 %v4929
    %5068 = vmatpush1.bf16.msra.mxu0 %v4928
    %5069 = vmatprep.mubr.bf16.mxu0 %v4243
    %5070 = vmatmul.mubr.bf16.gmra.mrb[0].mxu0 %v3702
    %v5071 = vpop.f32.mrb[0].mxu0
    %v5072 = vadd.f32 %v4665, %v5071
    %v5073 = vpop.f32.mrb[0].mxu0
    %v5074 = vadd.f32 %v4669, %v5073
    %v5075 = vpop.f32.mrb[0].mxu0
    %v5076 = vadd.f32 %v4665, %v5075
    %v5077 = vpop.f32.mrb[0].mxu0
    %v5078 = vadd.f32 %v4669, %v5077
    %5079 = vdwg.mxu0
    %v5080 = vxor.u32 %v5029, 2147483648
    %v5081 = vxor.u32 %v5033, 2147483648
    %v5082 = vmul.f32 %v5080, 1.442695
    %v5083 = vpow.pop %v5082
    %v5084 = vmul.f32 %v5081, 1.442695
    %v5085 = vpow.pop %v5084
    %v5086 = vadd.f32 %v5083, 1.0
    %v5087 = vadd.f32 %v5085, 1.0
    %v5088 = vrcp.pop %v5086
    %v5089 = vmul.f32 1.0, %v5088
    %v5090 = vrcp.pop %v5087
    %v5091 = vmul.f32 1.0, %v5090
    %v5092 = vxor.u32 %v5031, 2147483648
    %v5093 = vxor.u32 %v5035, 2147483648
    %v5094 = vmul.f32 %v5092, 1.442695
    %v5095 = vpow.pop %v5094
    %v5096 = vmul.f32 %v5093, 1.442695
    %v5097 = vpow.pop %v5096
    %v5098 = vadd.f32 %v5095, 1.0
    %v5099 = vadd.f32 %v5097, 1.0
    %v5100 = vrcp.pop %v5098
    %v5101 = vmul.f32 1.0, %v5100
    %v5102 = vrcp.pop %v5099
    %v5103 = vmul.f32 1.0, %v5102
    %v5104 = vtanh.pop %v5072
    %v5105 = vtanh.pop %v5076
    %v5106 = vxor.u32 %v5074, 2147483648
    %v5107 = vxor.u32 %v5078, 2147483648
    %v5108 = vmul.f32 %v5106, 1.442695
    %v5109 = vpow.pop %v5108
    %v5110 = vmul.f32 %v5107, 1.442695
    %v5111 = vpow.pop %v5110
    %v5112 = vadd.f32 %v5109, 1.0
    %v5113 = vadd.f32 %v5111, 1.0
    %v5114 = vrcp.pop %v5112
    %v5115 = vmul.f32 1.0, %v5114
    %v5116 = vrcp.pop %v5113
    %v5117 = vmul.f32 1.0, %v5116
    %v5118 = vmul.f32 %v5101, %v4237
    %v5119 = vmul.f32 %v5103, %v4238
    %v5120 = vmul.f32 %v5089, %v5104
    %v5121 = vmul.f32 %v5091, %v5105
    %v5122 = vadd.f32 %v5118, %v5120
    %v5123 = vadd.f32 %v5119, %v5121
    %v5124 = vtanh.pop %v5122
    %v5125 = vtanh.pop %v5123
    %v5126 = vmul.f32 %v5115, %v5124
    %v5127 = vmul.f32 %v5117, %v5125
    %v5128 = vpack.c.bf16 %v5127, %v5126
    %5129 = vst [vmem:[#allocation3 + $0x20] sm:$0xff] %v5128
    %v5130 = vld [vmem:[#allocation2 + $0x180] sm:$0xff]
    %v5131 = vld [vmem:[#allocation2 + $0x188] sm:$0xff]
    %v5132 = vld [vmem:[#allocation2 + $0x190] sm:$0xff]
    %v5133 = vld [vmem:[#allocation2 + $0x198] sm:$0xff]
    %v5134 = vld [vmem:[#allocation2 + $0x1a0] sm:$0xff]
    %v5135 = vld [vmem:[#allocation2 + $0x1a8] sm:$0xff]
    %v5136 = vld [vmem:[#allocation2 + $0x1b0] sm:$0xff]
    %v5137 = vld [vmem:[#allocation2 + $0x1b8] sm:$0xff]
    %v5138 = vld [vmem:[%s3] sm:$0xff]
    %v5139 = vld [vmem:[%s3 + $0x8] sm:$0xff]
    %v5140 = vld [vmem:[%s3 + $0x10] sm:$0xff]
    %v5141 = vld [vmem:[%s3 + $0x18] sm:$0xff]
    %v5142 = vld [vmem:[%s3 + $0x20] sm:$0xff]
    %v5143 = vld [vmem:[%s3 + $0x28] sm:$0xff]
    %v5144 = vld [vmem:[%s3 + $0x30] sm:$0xff]
    %v5145 = vld [vmem:[%s3 + $0x38] sm:$0xff]
    %v5146 = vld [vmem:[%s3 + $0x40] sm:$0xff]
    %v5147 = vld [vmem:[%s3 + $0x48] sm:$0xff]
    %v5148 = vld [vmem:[%s3 + $0x50] sm:$0xff]
    %v5149 = vld [vmem:[%s3 + $0x58] sm:$0xff]
    %v5150 = vld [vmem:[%s3 + $0x60] sm:$0xff]
    %v5151 = vld [vmem:[%s3 + $0x68] sm:$0xff]
    %v5152 = vld [vmem:[%s3 + $0x70] sm:$0xff]
    %v5153 = vld [vmem:[%s3 + $0x78] sm:$0xff]
    %v5154 = vld [vmem:[%s3 + $0x80] sm:$0xff]
    %v5155 = vld [vmem:[%s3 + $0x88] sm:$0xff]
    %v5156 = vld [vmem:[%s3 + $0x90] sm:$0xff]
    %v5157 = vld [vmem:[%s3 + $0x98] sm:$0xff]
    %v5158 = vld [vmem:[%s3 + $0xa0] sm:$0xff]
    %v5159 = vld [vmem:[%s3 + $0xa8] sm:$0xff]
    %v5160 = vld [vmem:[%s3 + $0xb0] sm:$0xff]
    %v5161 = vld [vmem:[%s3 + $0xb8] sm:$0xff]
    %v5162 = vld [vmem:[%s3 + $0xc0] sm:$0xff]
    %v5163 = vld [vmem:[%s3 + $0xc8] sm:$0xff]
    %v5164 = vld [vmem:[%s3 + $0xd0] sm:$0xff]
    %v5165 = vld [vmem:[%s3 + $0xd8] sm:$0xff]
    %v5166 = vld [vmem:[%s3 + $0xe0] sm:$0xff]
    %v5167 = vld [vmem:[%s3 + $0xe8] sm:$0xff]
    %v5168 = vld [vmem:[%s3 + $0xf0] sm:$0xff]
    %v5169 = vld [vmem:[%s3 + $0xf8] sm:$0xff]
    %v5202 = vunpack.c.l.b16 %v5138
    %v5203 = vunpack.c.h.b16 %v5138
    %v5204 = vunpack.c.l.b16 %v5139
    %v5205 = vunpack.c.h.b16 %v5139
    %v5206 = vunpack.c.l.b16 %v5140
    %v5207 = vunpack.c.h.b16 %v5140
    %v5208 = vunpack.c.l.b16 %v5141
    %v5209 = vunpack.c.h.b16 %v5141
    %v5210 = vunpack.c.l.b16 %v5142
    %v5211 = vunpack.c.h.b16 %v5142
    %v5212 = vunpack.c.l.b16 %v5143
    %v5213 = vunpack.c.h.b16 %v5143
    %v5214 = vunpack.c.l.b16 %v5144
    %v5215 = vunpack.c.h.b16 %v5144
    %v5216 = vunpack.c.l.b16 %v5145
    %v5217 = vunpack.c.h.b16 %v5145
    %v5218 = vunpack.c.l.b16 %v5146
    %v5219 = vunpack.c.h.b16 %v5146
    %v5220 = vunpack.c.l.b16 %v5147
    %v5221 = vunpack.c.h.b16 %v5147
    %v5222 = vunpack.c.l.b16 %v5148
    %v5223 = vunpack.c.h.b16 %v5148
    %v5224 = vunpack.c.l.b16 %v5149
    %v5225 = vunpack.c.h.b16 %v5149
    %v5226 = vunpack.c.l.b16 %v5150
    %v5227 = vunpack.c.h.b16 %v5150
    %v5228 = vunpack.c.l.b16 %v5151
    %v5229 = vunpack.c.h.b16 %v5151
    %v5230 = vunpack.c.l.b16 %v5152
    %v5231 = vunpack.c.h.b16 %v5152
    %v5232 = vunpack.c.l.b16 %v5153
    %v5233 = vunpack.c.h.b16 %v5153
    %v5234 = vunpack.c.l.b16 %v5154
    %v5235 = vunpack.c.h.b16 %v5154
    %v5236 = vunpack.c.l.b16 %v5155
    %v5237 = vunpack.c.h.b16 %v5155
    %v5238 = vunpack.c.l.b16 %v5156
    %v5239 = vunpack.c.h.b16 %v5156
    %v5240 = vunpack.c.l.b16 %v5157
    %v5241 = vunpack.c.h.b16 %v5157
    %v5242 = vunpack.c.l.b16 %v5158
    %v5243 = vunpack.c.h.b16 %v5158
    %v5244 = vunpack.c.l.b16 %v5159
    %v5245 = vunpack.c.h.b16 %v5159
    %v5246 = vunpack.c.l.b16 %v5160
    %v5247 = vunpack.c.h.b16 %v5160
    %v5248 = vunpack.c.l.b16 %v5161
    %v5249 = vunpack.c.h.b16 %v5161
    %v5250 = vunpack.c.l.b16 %v5162
    %v5251 = vunpack.c.h.b16 %v5162
    %v5252 = vunpack.c.l.b16 %v5163
    %v5253 = vunpack.c.h.b16 %v5163
    %v5254 = vunpack.c.l.b16 %v5164
    %v5255 = vunpack.c.h.b16 %v5164
    %v5256 = vunpack.c.l.b16 %v5165
    %v5257 = vunpack.c.h.b16 %v5165
    %v5258 = vunpack.c.l.b16 %v5166
    %v5259 = vunpack.c.h.b16 %v5166
    %v5260 = vunpack.c.l.b16 %v5167
    %v5261 = vunpack.c.h.b16 %v5167
    %v5262 = vunpack.c.l.b16 %v5168
    %v5263 = vunpack.c.h.b16 %v5168
    %v5264 = vunpack.c.l.b16 %v5169
    %v5265 = vunpack.c.h.b16 %v5169
    %v5266 = vpack.c.b16 %v5206, %v5202
    %v5267 = vpack.c.b16 %v5207, %v5203
    %v5268 = vpack.c.b16 %v5208, %v5204
    %v5269 = vpack.c.b16 %v5209, %v5205
    %v5270 = vpack.c.b16 %v5214, %v5210
    %v5271 = vpack.c.b16 %v5215, %v5211
    %v5272 = vpack.c.b16 %v5216, %v5212
    %v5273 = vpack.c.b16 %v5217, %v5213
    %v5274 = vpack.c.b16 %v5222, %v5218
    %v5275 = vpack.c.b16 %v5223, %v5219
    %v5276 = vpack.c.b16 %v5224, %v5220
    %v5277 = vpack.c.b16 %v5225, %v5221
    %v5278 = vpack.c.b16 %v5230, %v5226
    %v5279 = vpack.c.b16 %v5231, %v5227
    %v5280 = vpack.c.b16 %v5232, %v5228
    %v5281 = vpack.c.b16 %v5233, %v5229
    %v5282 = vpack.c.b16 %v5238, %v5234
    %v5283 = vpack.c.b16 %v5239, %v5235
    %v5284 = vpack.c.b16 %v5240, %v5236
    %v5285 = vpack.c.b16 %v5241, %v5237
    %v5286 = vpack.c.b16 %v5246, %v5242
    %v5287 = vpack.c.b16 %v5247, %v5243
    %v5288 = vpack.c.b16 %v5248, %v5244
    %v5289 = vpack.c.b16 %v5249, %v5245
    %v5290 = vpack.c.b16 %v5254, %v5250
    %v5291 = vpack.c.b16 %v5255, %v5251
    %v5292 = vpack.c.b16 %v5256, %v5252
    %v5293 = vpack.c.b16 %v5257, %v5253
    %v5294 = vpack.c.b16 %v5262, %v5258
    %v5295 = vpack.c.b16 %v5263, %v5259
    %v5296 = vpack.c.b16 %v5264, %v5260
    %v5297 = vpack.c.b16 %v5265, %v5261
    %5330 = vmatprep.subr.bf16.mxu0 %v5267
    %5331 = vmatpush1.bf16.msra.mxu0 %v5266
    %5332 = vmatprep.subr.bf16.mxu0 %v5271
    %5333 = vmatpush1.bf16.msra.mxu0 %v5270
    %5334 = vmatprep.subr.bf16.mxu0 %v5275
    %5335 = vmatpush1.bf16.msra.mxu0 %v5274
    %5336 = vmatprep.subr.bf16.mxu0 %v5279
    %5337 = vmatpush1.bf16.msra.mxu0 %v5278
    %5338 = vmatprep.subr.bf16.mxu0 %v5283
    %5339 = vmatpush1.bf16.msra.mxu0 %v5282
    %5340 = vmatprep.subr.bf16.mxu0 %v5287
    %5341 = vmatpush1.bf16.msra.mxu0 %v5286
    %5342 = vmatprep.subr.bf16.mxu0 %v5291
    %5343 = vmatpush1.bf16.msra.mxu0 %v5290
    %5344 = vmatprep.subr.bf16.mxu0 %v5295
    %5345 = vmatpush1.bf16.msra.mxu0 %v5294
    %5346 = vmatprep.subr.bf16.mxu0 0
    %5347 = vmatpush1.bf16.msra.mxu0 0
    %5348 = vmatprep.subr.bf16.mxu0 0
    %5349 = vmatpush1.bf16.msra.mxu0 0
    %5350 = vmatprep.subr.bf16.mxu0 0
    %5351 = vmatpush1.bf16.msra.mxu0 0
    %5352 = vmatprep.subr.bf16.mxu0 0
    %5353 = vmatpush1.bf16.msra.mxu0 0
    %5354 = vmatprep.subr.bf16.mxu0 0
    %5355 = vmatpush1.bf16.msra.mxu0 0
    %5356 = vmatprep.subr.bf16.mxu0 0
    %5357 = vmatpush1.bf16.msra.mxu0 0
    %5358 = vmatprep.subr.bf16.mxu0 0
    %5359 = vmatpush1.bf16.msra.mxu0 0
    %5360 = vmatprep.subr.bf16.mxu0 0
    %5361 = vmatpush1.bf16.msra.mxu0 0
    %5362 = vmatprep.mubr.bf16.mxu0 0
    %5363 = vmatmul.mubr.bf16.gmra.mrb[0].mxu0 %v4587
    %v5364 = vpop.f32.mrb[0].mxu0
    %v5365 = vadd.f32 0.0, %v5364
    %v5366 = vpop.f32.mrb[0].mxu0
    %v5367 = vadd.f32 0.0, %v5366
    %v5368 = vpop.f32.mrb[0].mxu0
    %v5369 = vadd.f32 0.0, %v5368
    %v5370 = vpop.f32.mrb[0].mxu0
    %v5371 = vadd.f32 0.0, %v5370
    %5372 = vdwg.mxu0
    %5373 = vmatprep.subr.bf16.mxu0 %v5269
    %5374 = vmatpush1.bf16.msra.mxu0 %v5268
    %5375 = vmatprep.subr.bf16.mxu0 %v5273
    %5376 = vmatpush1.bf16.msra.mxu0 %v5272
    %5377 = vmatprep.subr.bf16.mxu0 %v5277
    %5378 = vmatpush1.bf16.msra.mxu0 %v5276
    %5379 = vmatprep.subr.bf16.mxu0 %v5281
    %5380 = vmatpush1.bf16.msra.mxu0 %v5280
    %5381 = vmatprep.subr.bf16.mxu0 %v5285
    %5382 = vmatpush1.bf16.msra.mxu0 %v5284
    %5383 = vmatprep.subr.bf16.mxu0 %v5289
    %5384 = vmatpush1.bf16.msra.mxu0 %v5288
    %5385 = vmatprep.subr.bf16.mxu0 %v5293
    %5386 = vmatpush1.bf16.msra.mxu0 %v5292
    %5387 = vmatprep.subr.bf16.mxu0 %v5297
    %5388 = vmatpush1.bf16.msra.mxu0 %v5296
    %5389 = vmatprep.subr.bf16.mxu0 0
    %5390 = vmatpush1.bf16.msra.mxu0 0
    %5391 = vmatprep.subr.bf16.mxu0 0
    %5392 = vmatpush1.bf16.msra.mxu0 0
    %5393 = vmatprep.subr.bf16.mxu0 0
    %5394 = vmatpush1.bf16.msra.mxu0 0
    %5395 = vmatprep.subr.bf16.mxu0 0
    %5396 = vmatpush1.bf16.msra.mxu0 0
    %5397 = vmatprep.subr.bf16.mxu0 0
    %5398 = vmatpush1.bf16.msra.mxu0 0
    %5399 = vmatprep.subr.bf16.mxu0 0
    %5400 = vmatpush1.bf16.msra.mxu0 0
    %5401 = vmatprep.subr.bf16.mxu0 0
    %5402 = vmatpush1.bf16.msra.mxu0 0
    %5403 = vmatprep.subr.bf16.mxu0 0
    %5404 = vmatpush1.bf16.msra.mxu0 0
    %5405 = vmatprep.mubr.bf16.mxu0 0
    %5406 = vmatmul.mubr.bf16.gmra.mrb[0].mxu0 %v4587
    %v5407 = vpop.f32.mrb[0].mxu0
    %v5408 = vadd.f32 0.0, %v5407
    %v5409 = vpop.f32.mrb[0].mxu0
    %v5410 = vadd.f32 0.0, %v5409
    %v5411 = vpop.f32.mrb[0].mxu0
    %v5412 = vadd.f32 0.0, %v5411
    %v5413 = vpop.f32.mrb[0].mxu0
    %v5414 = vadd.f32 0.0, %v5413
    %5415 = vdwg.mxu0
    %v5416 = vadd.f32 %v5130, %v5365
    %v5417 = vadd.f32 %v5131, %v5367
    %v5418 = vadd.f32 %v5132, %v5408
    %v5419 = vadd.f32 %v5133, %v5410
    %v5420 = vadd.f32 %v5134, %v5369
    %v5421 = vadd.f32 %v5135, %v5371
    %v5422 = vadd.f32 %v5136, %v5412
    %v5423 = vadd.f32 %v5137, %v5414
    %v5424 = vxor.u32 %v5416, 2147483648
    %v5425 = vxor.u32 %v5420, 2147483648
    %v5426 = vmul.f32 %v5424, 1.442695
    %v5427 = vpow.pop %v5426
    %v5428 = vmul.f32 %v5425, 1.442695
    %v5429 = vpow.pop %v5428
    %v5430 = vadd.f32 %v5427, 1.0
    %v5431 = vadd.f32 %v5429, 1.0
    %v5432 = vrcp.pop %v5430
    %v5433 = vmul.f32 1.0, %v5432
    %v5434 = vrcp.pop %v5431
    %v5435 = vmul.f32 1.0, %v5434
    %v5436 = vxor.u32 %v5417, 2147483648
    %v5437 = vxor.u32 %v5421, 2147483648
    %v5438 = vmul.f32 %v5436, 1.442695
    %v5439 = vpow.pop %v5438
    %v5440 = vmul.f32 %v5437, 1.442695
    %v5441 = vpow.pop %v5440
    %v5442 = vadd.f32 %v5439, 1.0
    %v5443 = vadd.f32 %v5441, 1.0
    %v5444 = vrcp.pop %v5442
    %v5445 = vmul.f32 1.0, %v5444
    %v5446 = vrcp.pop %v5443
    %v5447 = vmul.f32 1.0, %v5446
    %v5448 = vtanh.pop %v5418
    %v5449 = vtanh.pop %v5422
    %v5450 = vxor.u32 %v5419, 2147483648
    %v5451 = vxor.u32 %v5423, 2147483648
    %v5452 = vmul.f32 %v5450, 1.442695
    %v5453 = vpow.pop %v5452
    %v5454 = vmul.f32 %v5451, 1.442695
    %v5455 = vpow.pop %v5454
    %v5456 = vadd.f32 %v5453, 1.0
    %v5457 = vadd.f32 %v5455, 1.0
    %v5458 = vrcp.pop %v5456
    %v5459 = vmul.f32 1.0, %v5458
    %v5460 = vrcp.pop %v5457
    %v5461 = vmul.f32 1.0, %v5460
    %v5462 = vmul.f32 %v5445, %v4581
    %v5463 = vmul.f32 %v5447, %v4582
    %v5464 = vmul.f32 %v5433, %v5448
    %v5465 = vmul.f32 %v5435, %v5449
    %v5466 = vadd.f32 %v5462, %v5464
    %v5467 = vadd.f32 %v5463, %v5465
    %v5468 = vtanh.pop %v5466
    %v5469 = vtanh.pop %v5467
    %v5470 = vmul.f32 %v5459, %v5468
    %v5471 = vmul.f32 %v5461, %v5469
    %v5472 = vpack.c.bf16 %v5471, %v5470
    %v5473 = vld [vmem:[#allocation7] sm:$0xff]
    %v5474 = vld [vmem:[#allocation7 + $0x8] sm:$0xff]
    %v5475 = vld [vmem:[#allocation7 + $0x10] sm:$0xff]
    %v5476 = vld [vmem:[#allocation7 + $0x18] sm:$0xff]
    %v5477 = vld [vmem:[#allocation7 + $0x20] sm:$0xff]
    %v5478 = vld [vmem:[#allocation7 + $0x28] sm:$0xff]
    %v5479 = vld [vmem:[#allocation7 + $0x30] sm:$0xff]
    %v5480 = vld [vmem:[#allocation7 + $0x38] sm:$0xff]
    %v5481 = vld [vmem:[#allocation7 + $0x40] sm:$0xff]
    %v5482 = vld [vmem:[#allocation7 + $0x48] sm:$0xff]
    %v5483 = vld [vmem:[#allocation7 + $0x50] sm:$0xff]
    %v5484 = vld [vmem:[#allocation7 + $0x58] sm:$0xff]
    %v5485 = vld [vmem:[#allocation7 + $0x60] sm:$0xff]
    %v5486 = vld [vmem:[#allocation7 + $0x68] sm:$0xff]
    %v5487 = vld [vmem:[#allocation7 + $0x70] sm:$0xff]
    %v5488 = vld [vmem:[#allocation7 + $0x78] sm:$0xff]
    %v5489 = vld [vmem:[#allocation7 + $0x80] sm:$0xff]
    %v5490 = vld [vmem:[#allocation7 + $0x88] sm:$0xff]
    %v5491 = vld [vmem:[#allocation7 + $0x90] sm:$0xff]
    %v5492 = vld [vmem:[#allocation7 + $0x98] sm:$0xff]
    %v5493 = vld [vmem:[#allocation7 + $0xa0] sm:$0xff]
    %v5494 = vld [vmem:[#allocation7 + $0xa8] sm:$0xff]
    %v5495 = vld [vmem:[#allocation7 + $0xb0] sm:$0xff]
    %v5496 = vld [vmem:[#allocation7 + $0xb8] sm:$0xff]
    %v5497 = vld [vmem:[#allocation7 + $0xc0] sm:$0xff]
    %v5498 = vld [vmem:[#allocation7 + $0xc8] sm:$0xff]
    %v5499 = vld [vmem:[#allocation7 + $0xd0] sm:$0xff]
    %v5500 = vld [vmem:[#allocation7 + $0xd8] sm:$0xff]
    %v5501 = vld [vmem:[#allocation7 + $0xe0] sm:$0xff]
    %v5502 = vld [vmem:[#allocation7 + $0xe8] sm:$0xff]
    %v5503 = vld [vmem:[#allocation7 + $0xf0] sm:$0xff]
    %v5504 = vld [vmem:[#allocation7 + $0xf8] sm:$0xff]
    %v5505 = vld [vmem:[#allocation7 + $0x100] sm:$0xff]
    %v5506 = vld [vmem:[#allocation7 + $0x108] sm:$0xff]
    %v5507 = vld [vmem:[#allocation7 + $0x110] sm:$0xff]
    %v5508 = vld [vmem:[#allocation7 + $0x118] sm:$0xff]
    %v5509 = vld [vmem:[#allocation7 + $0x120] sm:$0xff]
    %v5510 = vld [vmem:[#allocation7 + $0x128] sm:$0xff]
    %v5511 = vld [vmem:[#allocation7 + $0x130] sm:$0xff]
    %v5512 = vld [vmem:[#allocation7 + $0x138] sm:$0xff]
    %v5513 = vld [vmem:[#allocation7 + $0x140] sm:$0xff]
    %v5514 = vld [vmem:[#allocation7 + $0x148] sm:$0xff]
    %v5515 = vld [vmem:[#allocation7 + $0x150] sm:$0xff]
    %v5516 = vld [vmem:[#allocation7 + $0x158] sm:$0xff]
    %v5517 = vld [vmem:[#allocation7 + $0x160] sm:$0xff]
    %v5518 = vld [vmem:[#allocation7 + $0x168] sm:$0xff]
    %v5519 = vld [vmem:[#allocation7 + $0x170] sm:$0xff]
    %v5520 = vld [vmem:[#allocation7 + $0x178] sm:$0xff]
    %v5521 = vld [vmem:[#allocation7 + $0x180] sm:$0xff]
    %v5522 = vld [vmem:[#allocation7 + $0x188] sm:$0xff]
    %v5523 = vld [vmem:[#allocation7 + $0x190] sm:$0xff]
    %v5524 = vld [vmem:[#allocation7 + $0x198] sm:$0xff]
    %v5525 = vld [vmem:[#allocation7 + $0x1a0] sm:$0xff]
    %v5526 = vld [vmem:[#allocation7 + $0x1a8] sm:$0xff]
    %v5527 = vld [vmem:[#allocation7 + $0x1b0] sm:$0xff]
    %v5528 = vld [vmem:[#allocation7 + $0x1b8] sm:$0xff]
    %v5529 = vld [vmem:[#allocation7 + $0x1c0] sm:$0xff]
    %v5530 = vld [vmem:[#allocation7 + $0x1c8] sm:$0xff]
    %v5531 = vld [vmem:[#allocation7 + $0x1d0] sm:$0xff]
    %v5532 = vld [vmem:[#allocation7 + $0x1d8] sm:$0xff]
    %v5533 = vld [vmem:[#allocation7 + $0x1e0] sm:$0xff]
    %v5534 = vld [vmem:[#allocation7 + $0x1e8] sm:$0xff]
    %v5535 = vld [vmem:[#allocation7 + $0x1f0] sm:$0xff]
    %v5536 = vld [vmem:[#allocation7 + $0x1f8] sm:$0xff]
    %v5537 = vld [vmem:[#allocation9] sm:$0xf]
    %v5539 = vlaneseq
    %v5540 = vshrl.u32 %v5539, 7
    %v5541 = vsub.s32 0, %v5540
    %v5542 = vrot.slane %v5537, %v5541
    %v5543 = vlaneseq
    %v5544 = vshrl.u32 %v5543, 7
    %v5545 = vsub.s32 1, %v5544
    %v5546 = vrot.slane %v5537, %v5545
    %v5547 = vlaneseq
    %v5548 = vshrl.u32 %v5547, 7
    %v5549 = vsub.s32 2, %v5548
    %v5550 = vrot.slane %v5537, %v5549
    %v5551 = vlaneseq
    %v5552 = vshrl.u32 %v5551, 7
    %v5553 = vsub.s32 3, %v5552
    %v5554 = vrot.slane %v5537, %v5553
    %v5623 = vunpack.c.l.b16 %v5473
    %v5624 = vunpack.c.h.b16 %v5473
    %v5625 = vunpack.c.l.b16 %v5474
    %v5626 = vunpack.c.h.b16 %v5474
    %v5627 = vunpack.c.l.b16 %v5475
    %v5628 = vunpack.c.h.b16 %v5475
    %v5629 = vunpack.c.l.b16 %v5476
    %v5630 = vunpack.c.h.b16 %v5476
    %v5631 = vunpack.c.l.b16 %v5477
    %v5632 = vunpack.c.h.b16 %v5477
    %v5633 = vunpack.c.l.b16 %v5478
    %v5634 = vunpack.c.h.b16 %v5478
    %v5635 = vunpack.c.l.b16 %v5479
    %v5636 = vunpack.c.h.b16 %v5479
    %v5637 = vunpack.c.l.b16 %v5480
    %v5638 = vunpack.c.h.b16 %v5480
    %v5639 = vunpack.c.l.b16 %v5481
    %v5640 = vunpack.c.h.b16 %v5481
    %v5641 = vunpack.c.l.b16 %v5482
    %v5642 = vunpack.c.h.b16 %v5482
    %v5643 = vunpack.c.l.b16 %v5483
    %v5644 = vunpack.c.h.b16 %v5483
    %v5645 = vunpack.c.l.b16 %v5484
    %v5646 = vunpack.c.h.b16 %v5484
    %v5647 = vunpack.c.l.b16 %v5485
    %v5648 = vunpack.c.h.b16 %v5485
    %v5649 = vunpack.c.l.b16 %v5486
    %v5650 = vunpack.c.h.b16 %v5486
    %v5651 = vunpack.c.l.b16 %v5487
    %v5652 = vunpack.c.h.b16 %v5487
    %v5653 = vunpack.c.l.b16 %v5488
    %v5654 = vunpack.c.h.b16 %v5488
    %v5655 = vunpack.c.l.b16 %v5489
    %v5656 = vunpack.c.h.b16 %v5489
    %v5657 = vunpack.c.l.b16 %v5490
    %v5658 = vunpack.c.h.b16 %v5490
    %v5659 = vunpack.c.l.b16 %v5491
    %v5660 = vunpack.c.h.b16 %v5491
    %v5661 = vunpack.c.l.b16 %v5492
    %v5662 = vunpack.c.h.b16 %v5492
    %v5663 = vunpack.c.l.b16 %v5493
    %v5664 = vunpack.c.h.b16 %v5493
    %v5665 = vunpack.c.l.b16 %v5494
    %v5666 = vunpack.c.h.b16 %v5494
    %v5667 = vunpack.c.l.b16 %v5495
    %v5668 = vunpack.c.h.b16 %v5495
    %v5669 = vunpack.c.l.b16 %v5496
    %v5670 = vunpack.c.h.b16 %v5496
    %v5671 = vunpack.c.l.b16 %v5497
    %v5672 = vunpack.c.h.b16 %v5497
    %v5673 = vunpack.c.l.b16 %v5498
    %v5674 = vunpack.c.h.b16 %v5498
    %v5675 = vunpack.c.l.b16 %v5499
    %v5676 = vunpack.c.h.b16 %v5499
    %v5677 = vunpack.c.l.b16 %v5500
    %v5678 = vunpack.c.h.b16 %v5500
    %v5679 = vunpack.c.l.b16 %v5501
    %v5680 = vunpack.c.h.b16 %v5501
    %v5681 = vunpack.c.l.b16 %v5502
    %v5682 = vunpack.c.h.b16 %v5502
    %v5683 = vunpack.c.l.b16 %v5503
    %v5684 = vunpack.c.h.b16 %v5503
    %v5685 = vunpack.c.l.b16 %v5504
    %v5686 = vunpack.c.h.b16 %v5504
    %v5687 = vunpack.c.l.b16 %v5505
    %v5688 = vunpack.c.h.b16 %v5505
    %v5689 = vunpack.c.l.b16 %v5506
    %v5690 = vunpack.c.h.b16 %v5506
    %v5691 = vunpack.c.l.b16 %v5507
    %v5692 = vunpack.c.h.b16 %v5507
    %v5693 = vunpack.c.l.b16 %v5508
    %v5694 = vunpack.c.h.b16 %v5508
    %v5695 = vunpack.c.l.b16 %v5509
    %v5696 = vunpack.c.h.b16 %v5509
    %v5697 = vunpack.c.l.b16 %v5510
    %v5698 = vunpack.c.h.b16 %v5510
    %v5699 = vunpack.c.l.b16 %v5511
    %v5700 = vunpack.c.h.b16 %v5511
    %v5701 = vunpack.c.l.b16 %v5512
    %v5702 = vunpack.c.h.b16 %v5512
    %v5703 = vunpack.c.l.b16 %v5513
    %v5704 = vunpack.c.h.b16 %v5513
    %v5705 = vunpack.c.l.b16 %v5514
    %v5706 = vunpack.c.h.b16 %v5514
    %v5707 = vunpack.c.l.b16 %v5515
    %v5708 = vunpack.c.h.b16 %v5515
    %v5709 = vunpack.c.l.b16 %v5516
    %v5710 = vunpack.c.h.b16 %v5516
    %v5711 = vunpack.c.l.b16 %v5517
    %v5712 = vunpack.c.h.b16 %v5517
    %v5713 = vunpack.c.l.b16 %v5518
    %v5714 = vunpack.c.h.b16 %v5518
    %v5715 = vunpack.c.l.b16 %v5519
    %v5716 = vunpack.c.h.b16 %v5519
    %v5717 = vunpack.c.l.b16 %v5520
    %v5718 = vunpack.c.h.b16 %v5520
    %v5719 = vunpack.c.l.b16 %v5521
    %v5720 = vunpack.c.h.b16 %v5521
    %v5721 = vunpack.c.l.b16 %v5522
    %v5722 = vunpack.c.h.b16 %v5522
    %v5723 = vunpack.c.l.b16 %v5523
    %v5724 = vunpack.c.h.b16 %v5523
    %v5725 = vunpack.c.l.b16 %v5524
    %v5726 = vunpack.c.h.b16 %v5524
    %v5727 = vunpack.c.l.b16 %v5525
    %v5728 = vunpack.c.h.b16 %v5525
    %v5729 = vunpack.c.l.b16 %v5526
    %v5730 = vunpack.c.h.b16 %v5526
    %v5731 = vunpack.c.l.b16 %v5527
    %v5732 = vunpack.c.h.b16 %v5527
    %v5733 = vunpack.c.l.b16 %v5528
    %v5734 = vunpack.c.h.b16 %v5528
    %v5735 = vunpack.c.l.b16 %v5529
    %v5736 = vunpack.c.h.b16 %v5529
    %v5737 = vunpack.c.l.b16 %v5530
    %v5738 = vunpack.c.h.b16 %v5530
    %v5739 = vunpack.c.l.b16 %v5531
    %v5740 = vunpack.c.h.b16 %v5531
    %v5741 = vunpack.c.l.b16 %v5532
    %v5742 = vunpack.c.h.b16 %v5532
    %v5743 = vunpack.c.l.b16 %v5533
    %v5744 = vunpack.c.h.b16 %v5533
    %v5745 = vunpack.c.l.b16 %v5534
    %v5746 = vunpack.c.h.b16 %v5534
    %v5747 = vunpack.c.l.b16 %v5535
    %v5748 = vunpack.c.h.b16 %v5535
    %v5749 = vunpack.c.l.b16 %v5536
    %v5750 = vunpack.c.h.b16 %v5536
    %v5751 = vpack.c.b16 %v5627, %v5623
    %v5752 = vpack.c.b16 %v5628, %v5624
    %v5753 = vpack.c.b16 %v5629, %v5625
    %v5754 = vpack.c.b16 %v5630, %v5626
    %v5755 = vpack.c.b16 %v5635, %v5631
    %v5756 = vpack.c.b16 %v5636, %v5632
    %v5757 = vpack.c.b16 %v5637, %v5633
    %v5758 = vpack.c.b16 %v5638, %v5634
    %v5759 = vpack.c.b16 %v5643, %v5639
    %v5760 = vpack.c.b16 %v5644, %v5640
    %v5761 = vpack.c.b16 %v5645, %v5641
    %v5762 = vpack.c.b16 %v5646, %v5642
    %v5763 = vpack.c.b16 %v5651, %v5647
    %v5764 = vpack.c.b16 %v5652, %v5648
    %v5765 = vpack.c.b16 %v5653, %v5649
    %v5766 = vpack.c.b16 %v5654, %v5650
    %v5767 = vpack.c.b16 %v5659, %v5655
    %v5768 = vpack.c.b16 %v5660, %v5656
    %v5769 = vpack.c.b16 %v5661, %v5657
    %v5770 = vpack.c.b16 %v5662, %v5658
    %v5771 = vpack.c.b16 %v5667, %v5663
    %v5772 = vpack.c.b16 %v5668, %v5664
    %v5773 = vpack.c.b16 %v5669, %v5665
    %v5774 = vpack.c.b16 %v5670, %v5666
    %v5775 = vpack.c.b16 %v5675, %v5671
    %v5776 = vpack.c.b16 %v5676, %v5672
    %v5777 = vpack.c.b16 %v5677, %v5673
    %v5778 = vpack.c.b16 %v5678, %v5674
    %v5779 = vpack.c.b16 %v5683, %v5679
    %v5780 = vpack.c.b16 %v5684, %v5680
    %v5781 = vpack.c.b16 %v5685, %v5681
    %v5782 = vpack.c.b16 %v5686, %v5682
    %v5783 = vpack.c.b16 %v5691, %v5687
    %v5784 = vpack.c.b16 %v5692, %v5688
    %v5785 = vpack.c.b16 %v5693, %v5689
    %v5786 = vpack.c.b16 %v5694, %v5690
    %v5787 = vpack.c.b16 %v5699, %v5695
    %v5788 = vpack.c.b16 %v5700, %v5696
    %v5789 = vpack.c.b16 %v5701, %v5697
    %v5790 = vpack.c.b16 %v5702, %v5698
    %v5791 = vpack.c.b16 %v5707, %v5703
    %v5792 = vpack.c.b16 %v5708, %v5704
    %v5793 = vpack.c.b16 %v5709, %v5705
    %v5794 = vpack.c.b16 %v5710, %v5706
    %v5795 = vpack.c.b16 %v5715, %v5711
    %v5796 = vpack.c.b16 %v5716, %v5712
    %v5797 = vpack.c.b16 %v5717, %v5713
    %v5798 = vpack.c.b16 %v5718, %v5714
    %v5799 = vpack.c.b16 %v5723, %v5719
    %v5800 = vpack.c.b16 %v5724, %v5720
    %v5801 = vpack.c.b16 %v5725, %v5721
    %v5802 = vpack.c.b16 %v5726, %v5722
    %v5803 = vpack.c.b16 %v5731, %v5727
    %v5804 = vpack.c.b16 %v5732, %v5728
    %v5805 = vpack.c.b16 %v5733, %v5729
    %v5806 = vpack.c.b16 %v5734, %v5730
    %v5807 = vpack.c.b16 %v5739, %v5735
    %v5808 = vpack.c.b16 %v5740, %v5736
    %v5809 = vpack.c.b16 %v5741, %v5737
    %v5810 = vpack.c.b16 %v5742, %v5738
    %v5811 = vpack.c.b16 %v5747, %v5743
    %v5812 = vpack.c.b16 %v5748, %v5744
    %v5813 = vpack.c.b16 %v5749, %v5745
    %v5814 = vpack.c.b16 %v5750, %v5746
    %5879 = vmatprep.subr.bf16.mxu0 %v5752
    %5880 = vmatpush1.bf16.msra.mxu0 %v5751
    %5881 = vmatprep.subr.bf16.mxu0 %v5756
    %5882 = vmatpush1.bf16.msra.mxu0 %v5755
    %5883 = vmatprep.subr.bf16.mxu0 %v5760
    %5884 = vmatpush1.bf16.msra.mxu0 %v5759
    %5885 = vmatprep.subr.bf16.mxu0 %v5764
    %5886 = vmatpush1.bf16.msra.mxu0 %v5763
    %5887 = vmatprep.subr.bf16.mxu0 %v5768
    %5888 = vmatpush1.bf16.msra.mxu0 %v5767
    %5889 = vmatprep.subr.bf16.mxu0 %v5772
    %5890 = vmatpush1.bf16.msra.mxu0 %v5771
    %5891 = vmatprep.subr.bf16.mxu0 %v5776
    %5892 = vmatpush1.bf16.msra.mxu0 %v5775
    %5893 = vmatprep.subr.bf16.mxu0 %v5780
    %5894 = vmatpush1.bf16.msra.mxu0 %v5779
    %5895 = vmatprep.subr.bf16.mxu0 %v5784
    %5896 = vmatpush1.bf16.msra.mxu0 %v5783
    %5897 = vmatprep.subr.bf16.mxu0 %v5788
    %5898 = vmatpush1.bf16.msra.mxu0 %v5787
    %5899 = vmatprep.subr.bf16.mxu0 %v5792
    %5900 = vmatpush1.bf16.msra.mxu0 %v5791
    %5901 = vmatprep.subr.bf16.mxu0 %v5796
    %5902 = vmatpush1.bf16.msra.mxu0 %v5795
    %5903 = vmatprep.subr.bf16.mxu0 %v5800
    %5904 = vmatpush1.bf16.msra.mxu0 %v5799
    %5905 = vmatprep.subr.bf16.mxu0 %v5804
    %5906 = vmatpush1.bf16.msra.mxu0 %v5803
    %5907 = vmatprep.subr.bf16.mxu0 %v5808
    %5908 = vmatpush1.bf16.msra.mxu0 %v5807
    %5909 = vmatprep.subr.bf16.mxu0 %v5812
    %5910 = vmatpush1.bf16.msra.mxu0 %v5811
    %5911 = vmatprep.mubr.bf16.mxu0 %v5128
    %5912 = vmatmul.mubr.bf16.gmra.mrb[0].mxu0 %v4587
    %v5913 = vpop.f32.mrb[0].mxu0
    %v5914 = vadd.f32 %v5542, %v5913
    %v5915 = vpop.f32.mrb[0].mxu0
    %v5916 = vadd.f32 %v5546, %v5915
    %v5917 = vpop.f32.mrb[0].mxu0
    %v5918 = vadd.f32 %v5542, %v5917
    %v5919 = vpop.f32.mrb[0].mxu0
    %v5920 = vadd.f32 %v5546, %v5919
    %5921 = vdwg.mxu0
    %5922 = vmatprep.subr.bf16.mxu0 %v5754
    %5923 = vmatpush1.bf16.msra.mxu0 %v5753
    %5924 = vmatprep.subr.bf16.mxu0 %v5758
    %5925 = vmatpush1.bf16.msra.mxu0 %v5757
    %5926 = vmatprep.subr.bf16.mxu0 %v5762
    %5927 = vmatpush1.bf16.msra.mxu0 %v5761
    %5928 = vmatprep.subr.bf16.mxu0 %v5766
    %5929 = vmatpush1.bf16.msra.mxu0 %v5765
    %5930 = vmatprep.subr.bf16.mxu0 %v5770
    %5931 = vmatpush1.bf16.msra.mxu0 %v5769
    %5932 = vmatprep.subr.bf16.mxu0 %v5774
    %5933 = vmatpush1.bf16.msra.mxu0 %v5773
    %5934 = vmatprep.subr.bf16.mxu0 %v5778
    %5935 = vmatpush1.bf16.msra.mxu0 %v5777
    %5936 = vmatprep.subr.bf16.mxu0 %v5782
    %5937 = vmatpush1.bf16.msra.mxu0 %v5781
    %5938 = vmatprep.subr.bf16.mxu0 %v5786
    %5939 = vmatpush1.bf16.msra.mxu0 %v5785
    %5940 = vmatprep.subr.bf16.mxu0 %v5790
    %5941 = vmatpush1.bf16.msra.mxu0 %v5789
    %5942 = vmatprep.subr.bf16.mxu0 %v5794
    %5943 = vmatpush1.bf16.msra.mxu0 %v5793
    %5944 = vmatprep.subr.bf16.mxu0 %v5798
    %5945 = vmatpush1.bf16.msra.mxu0 %v5797
    %5946 = vmatprep.subr.bf16.mxu0 %v5802
    %5947 = vmatpush1.bf16.msra.mxu0 %v5801
    %5948 = vmatprep.subr.bf16.mxu0 %v5806
    %5949 = vmatpush1.bf16.msra.mxu0 %v5805
    %5950 = vmatprep.subr.bf16.mxu0 %v5810
    %5951 = vmatpush1.bf16.msra.mxu0 %v5809
    %5952 = vmatprep.subr.bf16.mxu0 %v5814
    %5953 = vmatpush1.bf16.msra.mxu0 %v5813
    %5954 = vmatprep.mubr.bf16.mxu0 %v5128
    %5955 = vmatmul.mubr.bf16.gmra.mrb[0].mxu0 %v4587
    %v5956 = vpop.f32.mrb[0].mxu0
    %v5957 = vadd.f32 %v5550, %v5956
    %v5958 = vpop.f32.mrb[0].mxu0
    %v5959 = vadd.f32 %v5554, %v5958
    %v5960 = vpop.f32.mrb[0].mxu0
    %v5961 = vadd.f32 %v5550, %v5960
    %v5962 = vpop.f32.mrb[0].mxu0
    %v5963 = vadd.f32 %v5554, %v5962
    %5964 = vdwg.mxu0
    %v5965 = vxor.u32 %v5914, 2147483648
    %v5966 = vxor.u32 %v5918, 2147483648
    %v5967 = vmul.f32 %v5965, 1.442695
    %v5968 = vpow.pop %v5967
    %v5969 = vmul.f32 %v5966, 1.442695
    %v5970 = vpow.pop %v5969
    %v5971 = vadd.f32 %v5968, 1.0
    %v5972 = vadd.f32 %v5970, 1.0
    %v5973 = vrcp.pop %v5971
    %v5974 = vmul.f32 1.0, %v5973
    %v5975 = vrcp.pop %v5972
    %v5976 = vmul.f32 1.0, %v5975
    %v5977 = vxor.u32 %v5916, 2147483648
    %v5978 = vxor.u32 %v5920, 2147483648
    %v5979 = vmul.f32 %v5977, 1.442695
    %v5980 = vpow.pop %v5979
    %v5981 = vmul.f32 %v5978, 1.442695
    %v5982 = vpow.pop %v5981
    %v5983 = vadd.f32 %v5980, 1.0
    %v5984 = vadd.f32 %v5982, 1.0
    %v5985 = vrcp.pop %v5983
    %v5986 = vmul.f32 1.0, %v5985
    %v5987 = vrcp.pop %v5984
    %v5988 = vmul.f32 1.0, %v5987
    %v5989 = vtanh.pop %v5957
    %v5990 = vtanh.pop %v5961
    %v5991 = vxor.u32 %v5959, 2147483648
    %v5992 = vxor.u32 %v5963, 2147483648
    %v5993 = vmul.f32 %v5991, 1.442695
    %v5994 = vpow.pop %v5993
    %v5995 = vmul.f32 %v5992, 1.442695
    %v5996 = vpow.pop %v5995
    %v5997 = vadd.f32 %v5994, 1.0
    %v5998 = vadd.f32 %v5996, 1.0
    %v5999 = vrcp.pop %v5997
    %v6000 = vmul.f32 1.0, %v5999
    %v6001 = vrcp.pop %v5998
    %v6002 = vmul.f32 1.0, %v6001
    %v6003 = vmul.f32 %v5986, %v5122
    %v6004 = vmul.f32 %v5988, %v5123
    %v6005 = vmul.f32 %v5974, %v5989
    %v6006 = vmul.f32 %v5976, %v5990
    %v6007 = vadd.f32 %v6003, %v6005
    %v6008 = vadd.f32 %v6004, %v6006
    %v6009 = vtanh.pop %v6007
    %v6010 = vtanh.pop %v6008
    %v6011 = vmul.f32 %v6000, %v6009
    %v6012 = vmul.f32 %v6002, %v6010
    %v6013 = vpack.c.bf16 %v6012, %v6011
    %6014 = vst [vmem:[#allocation3 + $0x28] sm:$0xff] %v6013
    %v6015 = vld [vmem:[#allocation2 + $0x1c0] sm:$0xff]
    %v6016 = vld [vmem:[#allocation2 + $0x1c8] sm:$0xff]
    %v6017 = vld [vmem:[#allocation2 + $0x1d0] sm:$0xff]
    %v6018 = vld [vmem:[#allocation2 + $0x1d8] sm:$0xff]
    %v6019 = vld [vmem:[#allocation2 + $0x1e0] sm:$0xff]
    %v6020 = vld [vmem:[#allocation2 + $0x1e8] sm:$0xff]
    %v6021 = vld [vmem:[#allocation2 + $0x1f0] sm:$0xff]
    %v6022 = vld [vmem:[#allocation2 + $0x1f8] sm:$0xff]
    %v6023 = vld [vmem:[%s3] sm:$0xff]
    %v6024 = vld [vmem:[%s3 + $0x8] sm:$0xff]
    %v6025 = vld [vmem:[%s3 + $0x10] sm:$0xff]
    %v6026 = vld [vmem:[%s3 + $0x18] sm:$0xff]
    %v6027 = vld [vmem:[%s3 + $0x20] sm:$0xff]
    %v6028 = vld [vmem:[%s3 + $0x28] sm:$0xff]
    %v6029 = vld [vmem:[%s3 + $0x30] sm:$0xff]
    %v6030 = vld [vmem:[%s3 + $0x38] sm:$0xff]
    %v6031 = vld [vmem:[%s3 + $0x40] sm:$0xff]
    %v6032 = vld [vmem:[%s3 + $0x48] sm:$0xff]
    %v6033 = vld [vmem:[%s3 + $0x50] sm:$0xff]
    %v6034 = vld [vmem:[%s3 + $0x58] sm:$0xff]
    %v6035 = vld [vmem:[%s3 + $0x60] sm:$0xff]
    %v6036 = vld [vmem:[%s3 + $0x68] sm:$0xff]
    %v6037 = vld [vmem:[%s3 + $0x70] sm:$0xff]
    %v6038 = vld [vmem:[%s3 + $0x78] sm:$0xff]
    %v6039 = vld [vmem:[%s3 + $0x80] sm:$0xff]
    %v6040 = vld [vmem:[%s3 + $0x88] sm:$0xff]
    %v6041 = vld [vmem:[%s3 + $0x90] sm:$0xff]
    %v6042 = vld [vmem:[%s3 + $0x98] sm:$0xff]
    %v6043 = vld [vmem:[%s3 + $0xa0] sm:$0xff]
    %v6044 = vld [vmem:[%s3 + $0xa8] sm:$0xff]
    %v6045 = vld [vmem:[%s3 + $0xb0] sm:$0xff]
    %v6046 = vld [vmem:[%s3 + $0xb8] sm:$0xff]
    %v6047 = vld [vmem:[%s3 + $0xc0] sm:$0xff]
    %v6048 = vld [vmem:[%s3 + $0xc8] sm:$0xff]
    %v6049 = vld [vmem:[%s3 + $0xd0] sm:$0xff]
    %v6050 = vld [vmem:[%s3 + $0xd8] sm:$0xff]
    %v6051 = vld [vmem:[%s3 + $0xe0] sm:$0xff]
    %v6052 = vld [vmem:[%s3 + $0xe8] sm:$0xff]
    %v6053 = vld [vmem:[%s3 + $0xf0] sm:$0xff]
    %v6054 = vld [vmem:[%s3 + $0xf8] sm:$0xff]
    %v6087 = vunpack.c.l.b16 %v6023
    %v6088 = vunpack.c.h.b16 %v6023
    %v6089 = vunpack.c.l.b16 %v6024
    %v6090 = vunpack.c.h.b16 %v6024
    %v6091 = vunpack.c.l.b16 %v6025
    %v6092 = vunpack.c.h.b16 %v6025
    %v6093 = vunpack.c.l.b16 %v6026
    %v6094 = vunpack.c.h.b16 %v6026
    %v6095 = vunpack.c.l.b16 %v6027
    %v6096 = vunpack.c.h.b16 %v6027
    %v6097 = vunpack.c.l.b16 %v6028
    %v6098 = vunpack.c.h.b16 %v6028
    %v6099 = vunpack.c.l.b16 %v6029
    %v6100 = vunpack.c.h.b16 %v6029
    %v6101 = vunpack.c.l.b16 %v6030
    %v6102 = vunpack.c.h.b16 %v6030
    %v6103 = vunpack.c.l.b16 %v6031
    %v6104 = vunpack.c.h.b16 %v6031
    %v6105 = vunpack.c.l.b16 %v6032
    %v6106 = vunpack.c.h.b16 %v6032
    %v6107 = vunpack.c.l.b16 %v6033
    %v6108 = vunpack.c.h.b16 %v6033
    %v6109 = vunpack.c.l.b16 %v6034
    %v6110 = vunpack.c.h.b16 %v6034
    %v6111 = vunpack.c.l.b16 %v6035
    %v6112 = vunpack.c.h.b16 %v6035
    %v6113 = vunpack.c.l.b16 %v6036
    %v6114 = vunpack.c.h.b16 %v6036
    %v6115 = vunpack.c.l.b16 %v6037
    %v6116 = vunpack.c.h.b16 %v6037
    %v6117 = vunpack.c.l.b16 %v6038
    %v6118 = vunpack.c.h.b16 %v6038
    %v6119 = vunpack.c.l.b16 %v6039
    %v6120 = vunpack.c.h.b16 %v6039
    %v6121 = vunpack.c.l.b16 %v6040
    %v6122 = vunpack.c.h.b16 %v6040
    %v6123 = vunpack.c.l.b16 %v6041
    %v6124 = vunpack.c.h.b16 %v6041
    %v6125 = vunpack.c.l.b16 %v6042
    %v6126 = vunpack.c.h.b16 %v6042
    %v6127 = vunpack.c.l.b16 %v6043
    %v6128 = vunpack.c.h.b16 %v6043
    %v6129 = vunpack.c.l.b16 %v6044
    %v6130 = vunpack.c.h.b16 %v6044
    %v6131 = vunpack.c.l.b16 %v6045
    %v6132 = vunpack.c.h.b16 %v6045
    %v6133 = vunpack.c.l.b16 %v6046
    %v6134 = vunpack.c.h.b16 %v6046
    %v6135 = vunpack.c.l.b16 %v6047
    %v6136 = vunpack.c.h.b16 %v6047
    %v6137 = vunpack.c.l.b16 %v6048
    %v6138 = vunpack.c.h.b16 %v6048
    %v6139 = vunpack.c.l.b16 %v6049
    %v6140 = vunpack.c.h.b16 %v6049
    %v6141 = vunpack.c.l.b16 %v6050
    %v6142 = vunpack.c.h.b16 %v6050
    %v6143 = vunpack.c.l.b16 %v6051
    %v6144 = vunpack.c.h.b16 %v6051
    %v6145 = vunpack.c.l.b16 %v6052
    %v6146 = vunpack.c.h.b16 %v6052
    %v6147 = vunpack.c.l.b16 %v6053
    %v6148 = vunpack.c.h.b16 %v6053
    %v6149 = vunpack.c.l.b16 %v6054
    %v6150 = vunpack.c.h.b16 %v6054
    %v6151 = vpack.c.b16 %v6091, %v6087
    %v6152 = vpack.c.b16 %v6092, %v6088
    %v6153 = vpack.c.b16 %v6093, %v6089
    %v6154 = vpack.c.b16 %v6094, %v6090
    %v6155 = vpack.c.b16 %v6099, %v6095
    %v6156 = vpack.c.b16 %v6100, %v6096
    %v6157 = vpack.c.b16 %v6101, %v6097
    %v6158 = vpack.c.b16 %v6102, %v6098
    %v6159 = vpack.c.b16 %v6107, %v6103
    %v6160 = vpack.c.b16 %v6108, %v6104
    %v6161 = vpack.c.b16 %v6109, %v6105
    %v6162 = vpack.c.b16 %v6110, %v6106
    %v6163 = vpack.c.b16 %v6115, %v6111
    %v6164 = vpack.c.b16 %v6116, %v6112
    %v6165 = vpack.c.b16 %v6117, %v6113
    %v6166 = vpack.c.b16 %v6118, %v6114
    %v6167 = vpack.c.b16 %v6123, %v6119
    %v6168 = vpack.c.b16 %v6124, %v6120
    %v6169 = vpack.c.b16 %v6125, %v6121
    %v6170 = vpack.c.b16 %v6126, %v6122
    %v6171 = vpack.c.b16 %v6131, %v6127
    %v6172 = vpack.c.b16 %v6132, %v6128
    %v6173 = vpack.c.b16 %v6133, %v6129
    %v6174 = vpack.c.b16 %v6134, %v6130
    %v6175 = vpack.c.b16 %v6139, %v6135
    %v6176 = vpack.c.b16 %v6140, %v6136
    %v6177 = vpack.c.b16 %v6141, %v6137
    %v6178 = vpack.c.b16 %v6142, %v6138
    %v6179 = vpack.c.b16 %v6147, %v6143
    %v6180 = vpack.c.b16 %v6148, %v6144
    %v6181 = vpack.c.b16 %v6149, %v6145
    %v6182 = vpack.c.b16 %v6150, %v6146
    %6215 = vmatprep.subr.bf16.mxu0 %v6152
    %6216 = vmatpush1.bf16.msra.mxu0 %v6151
    %6217 = vmatprep.subr.bf16.mxu0 %v6156
    %6218 = vmatpush1.bf16.msra.mxu0 %v6155
    %6219 = vmatprep.subr.bf16.mxu0 %v6160
    %6220 = vmatpush1.bf16.msra.mxu0 %v6159
    %6221 = vmatprep.subr.bf16.mxu0 %v6164
    %6222 = vmatpush1.bf16.msra.mxu0 %v6163
    %6223 = vmatprep.subr.bf16.mxu0 %v6168
    %6224 = vmatpush1.bf16.msra.mxu0 %v6167
    %6225 = vmatprep.subr.bf16.mxu0 %v6172
    %6226 = vmatpush1.bf16.msra.mxu0 %v6171
    %6227 = vmatprep.subr.bf16.mxu0 %v6176
    %6228 = vmatpush1.bf16.msra.mxu0 %v6175
    %6229 = vmatprep.subr.bf16.mxu0 %v6180
    %6230 = vmatpush1.bf16.msra.mxu0 %v6179
    %6231 = vmatprep.subr.bf16.mxu0 0
    %6232 = vmatpush1.bf16.msra.mxu0 0
    %6233 = vmatprep.subr.bf16.mxu0 0
    %6234 = vmatpush1.bf16.msra.mxu0 0
    %6235 = vmatprep.subr.bf16.mxu0 0
    %6236 = vmatpush1.bf16.msra.mxu0 0
    %6237 = vmatprep.subr.bf16.mxu0 0
    %6238 = vmatpush1.bf16.msra.mxu0 0
    %6239 = vmatprep.subr.bf16.mxu0 0
    %6240 = vmatpush1.bf16.msra.mxu0 0
    %6241 = vmatprep.subr.bf16.mxu0 0
    %6242 = vmatpush1.bf16.msra.mxu0 0
    %6243 = vmatprep.subr.bf16.mxu0 0
    %6244 = vmatpush1.bf16.msra.mxu0 0
    %6245 = vmatprep.subr.bf16.mxu0 0
    %6246 = vmatpush1.bf16.msra.mxu0 0
    %6247 = vmatprep.mubr.bf16.mxu0 0
    %6248 = vmatmul.mubr.bf16.gmra.mrb[0].mxu0 %v5472
    %v6249 = vpop.f32.mrb[0].mxu0
    %v6250 = vadd.f32 0.0, %v6249
    %v6251 = vpop.f32.mrb[0].mxu0
    %v6252 = vadd.f32 0.0, %v6251
    %v6253 = vpop.f32.mrb[0].mxu0
    %v6254 = vadd.f32 0.0, %v6253
    %v6255 = vpop.f32.mrb[0].mxu0
    %v6256 = vadd.f32 0.0, %v6255
    %6257 = vdwg.mxu0
    %6258 = vmatprep.subr.bf16.mxu0 %v6154
    %6259 = vmatpush1.bf16.msra.mxu0 %v6153
    %6260 = vmatprep.subr.bf16.mxu0 %v6158
    %6261 = vmatpush1.bf16.msra.mxu0 %v6157
    %6262 = vmatprep.subr.bf16.mxu0 %v6162
    %6263 = vmatpush1.bf16.msra.mxu0 %v6161
    %6264 = vmatprep.subr.bf16.mxu0 %v6166
    %6265 = vmatpush1.bf16.msra.mxu0 %v6165
    %6266 = vmatprep.subr.bf16.mxu0 %v6170
    %6267 = vmatpush1.bf16.msra.mxu0 %v6169
    %6268 = vmatprep.subr.bf16.mxu0 %v6174
    %6269 = vmatpush1.bf16.msra.mxu0 %v6173
    %6270 = vmatprep.subr.bf16.mxu0 %v6178
    %6271 = vmatpush1.bf16.msra.mxu0 %v6177
    %6272 = vmatprep.subr.bf16.mxu0 %v6182
    %6273 = vmatpush1.bf16.msra.mxu0 %v6181
    %6274 = vmatprep.subr.bf16.mxu0 0
    %6275 = vmatpush1.bf16.msra.mxu0 0
    %6276 = vmatprep.subr.bf16.mxu0 0
    %6277 = vmatpush1.bf16.msra.mxu0 0
    %6278 = vmatprep.subr.bf16.mxu0 0
    %6279 = vmatpush1.bf16.msra.mxu0 0
    %6280 = vmatprep.subr.bf16.mxu0 0
    %6281 = vmatpush1.bf16.msra.mxu0 0
    %6282 = vmatprep.subr.bf16.mxu0 0
    %6283 = vmatpush1.bf16.msra.mxu0 0
    %6284 = vmatprep.subr.bf16.mxu0 0
    %6285 = vmatpush1.bf16.msra.mxu0 0
    %6286 = vmatprep.subr.bf16.mxu0 0
    %6287 = vmatpush1.bf16.msra.mxu0 0
    %6288 = vmatprep.subr.bf16.mxu0 0
    %6289 = vmatpush1.bf16.msra.mxu0 0
    %6290 = vmatprep.mubr.bf16.mxu0 0
    %6291 = vmatmul.mubr.bf16.gmra.mrb[0].mxu0 %v5472
    %v6292 = vpop.f32.mrb[0].mxu0
    %v6293 = vadd.f32 0.0, %v6292
    %v6294 = vpop.f32.mrb[0].mxu0
    %v6295 = vadd.f32 0.0, %v6294
    %v6296 = vpop.f32.mrb[0].mxu0
    %v6297 = vadd.f32 0.0, %v6296
    %v6298 = vpop.f32.mrb[0].mxu0
    %v6299 = vadd.f32 0.0, %v6298
    %6300 = vdwg.mxu0
    %v6301 = vadd.f32 %v6015, %v6250
    %v6302 = vadd.f32 %v6016, %v6252
    %v6303 = vadd.f32 %v6017, %v6293
    %v6304 = vadd.f32 %v6018, %v6295
    %v6305 = vadd.f32 %v6019, %v6254
    %v6306 = vadd.f32 %v6020, %v6256
    %v6307 = vadd.f32 %v6021, %v6297
    %v6308 = vadd.f32 %v6022, %v6299
    %v6309 = vxor.u32 %v6301, 2147483648
    %v6310 = vxor.u32 %v6305, 2147483648
    %v6311 = vmul.f32 %v6309, 1.442695
    %v6312 = vpow.pop %v6311
    %v6313 = vmul.f32 %v6310, 1.442695
    %v6314 = vpow.pop %v6313
    %v6315 = vadd.f32 %v6312, 1.0
    %v6316 = vadd.f32 %v6314, 1.0
    %v6317 = vrcp.pop %v6315
    %v6318 = vmul.f32 1.0, %v6317
    %v6319 = vrcp.pop %v6316
    %v6320 = vmul.f32 1.0, %v6319
    %v6321 = vxor.u32 %v6302, 2147483648
    %v6322 = vxor.u32 %v6306, 2147483648
    %v6323 = vmul.f32 %v6321, 1.442695
    %v6324 = vpow.pop %v6323
    %v6325 = vmul.f32 %v6322, 1.442695
    %v6326 = vpow.pop %v6325
    %v6327 = vadd.f32 %v6324, 1.0
    %v6328 = vadd.f32 %v6326, 1.0
    %v6329 = vrcp.pop %v6327
    %v6330 = vmul.f32 1.0, %v6329
    %v6331 = vrcp.pop %v6328
    %v6332 = vmul.f32 1.0, %v6331
    %v6333 = vtanh.pop %v6303
    %v6334 = vtanh.pop %v6307
    %v6335 = vxor.u32 %v6304, 2147483648
    %v6336 = vxor.u32 %v6308, 2147483648
    %v6337 = vmul.f32 %v6335, 1.442695
    %v6338 = vpow.pop %v6337
    %v6339 = vmul.f32 %v6336, 1.442695
    %v6340 = vpow.pop %v6339
    %v6341 = vadd.f32 %v6338, 1.0
    %v6342 = vadd.f32 %v6340, 1.0
    %v6343 = vrcp.pop %v6341
    %v6344 = vmul.f32 1.0, %v6343
    %v6345 = vrcp.pop %v6342
    %v6346 = vmul.f32 1.0, %v6345
    %v6347 = vmul.f32 %v6330, %v5466
    %v6348 = vmul.f32 %v6332, %v5467
    %v6349 = vmul.f32 %v6318, %v6333
    %v6350 = vmul.f32 %v6320, %v6334
    %v6351 = vadd.f32 %v6347, %v6349
    %v6352 = vadd.f32 %v6348, %v6350
    %v6353 = vtanh.pop %v6351
    %v6354 = vtanh.pop %v6352
    %v6355 = vmul.f32 %v6344, %v6353
    %v6356 = vmul.f32 %v6346, %v6354
    %v6357 = vpack.c.bf16 %v6356, %v6355
    %v6358 = vld [vmem:[#allocation7] sm:$0xff]
    %v6359 = vld [vmem:[#allocation7 + $0x8] sm:$0xff]
    %v6360 = vld [vmem:[#allocation7 + $0x10] sm:$0xff]
    %v6361 = vld [vmem:[#allocation7 + $0x18] sm:$0xff]
    %v6362 = vld [vmem:[#allocation7 + $0x20] sm:$0xff]
    %v6363 = vld [vmem:[#allocation7 + $0x28] sm:$0xff]
    %v6364 = vld [vmem:[#allocation7 + $0x30] sm:$0xff]
    %v6365 = vld [vmem:[#allocation7 + $0x38] sm:$0xff]
    %v6366 = vld [vmem:[#allocation7 + $0x40] sm:$0xff]
    %v6367 = vld [vmem:[#allocation7 + $0x48] sm:$0xff]
    %v6368 = vld [vmem:[#allocation7 + $0x50] sm:$0xff]
    %v6369 = vld [vmem:[#allocation7 + $0x58] sm:$0xff]
    %v6370 = vld [vmem:[#allocation7 + $0x60] sm:$0xff]
    %v6371 = vld [vmem:[#allocation7 + $0x68] sm:$0xff]
    %v6372 = vld [vmem:[#allocation7 + $0x70] sm:$0xff]
    %v6373 = vld [vmem:[#allocation7 + $0x78] sm:$0xff]
    %v6374 = vld [vmem:[#allocation7 + $0x80] sm:$0xff]
    %v6375 = vld [vmem:[#allocation7 + $0x88] sm:$0xff]
    %v6376 = vld [vmem:[#allocation7 + $0x90] sm:$0xff]
    %v6377 = vld [vmem:[#allocation7 + $0x98] sm:$0xff]
    %v6378 = vld [vmem:[#allocation7 + $0xa0] sm:$0xff]
    %v6379 = vld [vmem:[#allocation7 + $0xa8] sm:$0xff]
    %v6380 = vld [vmem:[#allocation7 + $0xb0] sm:$0xff]
    %v6381 = vld [vmem:[#allocation7 + $0xb8] sm:$0xff]
    %v6382 = vld [vmem:[#allocation7 + $0xc0] sm:$0xff]
    %v6383 = vld [vmem:[#allocation7 + $0xc8] sm:$0xff]
    %v6384 = vld [vmem:[#allocation7 + $0xd0] sm:$0xff]
    %v6385 = vld [vmem:[#allocation7 + $0xd8] sm:$0xff]
    %v6386 = vld [vmem:[#allocation7 + $0xe0] sm:$0xff]
    %v6387 = vld [vmem:[#allocation7 + $0xe8] sm:$0xff]
    %v6388 = vld [vmem:[#allocation7 + $0xf0] sm:$0xff]
    %v6389 = vld [vmem:[#allocation7 + $0xf8] sm:$0xff]
    %v6390 = vld [vmem:[#allocation7 + $0x100] sm:$0xff]
    %v6391 = vld [vmem:[#allocation7 + $0x108] sm:$0xff]
    %v6392 = vld [vmem:[#allocation7 + $0x110] sm:$0xff]
    %v6393 = vld [vmem:[#allocation7 + $0x118] sm:$0xff]
    %v6394 = vld [vmem:[#allocation7 + $0x120] sm:$0xff]
    %v6395 = vld [vmem:[#allocation7 + $0x128] sm:$0xff]
    %v6396 = vld [vmem:[#allocation7 + $0x130] sm:$0xff]
    %v6397 = vld [vmem:[#allocation7 + $0x138] sm:$0xff]
    %v6398 = vld [vmem:[#allocation7 + $0x140] sm:$0xff]
    %v6399 = vld [vmem:[#allocation7 + $0x148] sm:$0xff]
    %v6400 = vld [vmem:[#allocation7 + $0x150] sm:$0xff]
    %v6401 = vld [vmem:[#allocation7 + $0x158] sm:$0xff]
    %v6402 = vld [vmem:[#allocation7 + $0x160] sm:$0xff]
    %v6403 = vld [vmem:[#allocation7 + $0x168] sm:$0xff]
    %v6404 = vld [vmem:[#allocation7 + $0x170] sm:$0xff]
    %v6405 = vld [vmem:[#allocation7 + $0x178] sm:$0xff]
    %v6406 = vld [vmem:[#allocation7 + $0x180] sm:$0xff]
    %v6407 = vld [vmem:[#allocation7 + $0x188] sm:$0xff]
    %v6408 = vld [vmem:[#allocation7 + $0x190] sm:$0xff]
    %v6409 = vld [vmem:[#allocation7 + $0x198] sm:$0xff]
    %v6410 = vld [vmem:[#allocation7 + $0x1a0] sm:$0xff]
    %v6411 = vld [vmem:[#allocation7 + $0x1a8] sm:$0xff]
    %v6412 = vld [vmem:[#allocation7 + $0x1b0] sm:$0xff]
    %v6413 = vld [vmem:[#allocation7 + $0x1b8] sm:$0xff]
    %v6414 = vld [vmem:[#allocation7 + $0x1c0] sm:$0xff]
    %v6415 = vld [vmem:[#allocation7 + $0x1c8] sm:$0xff]
    %v6416 = vld [vmem:[#allocation7 + $0x1d0] sm:$0xff]
    %v6417 = vld [vmem:[#allocation7 + $0x1d8] sm:$0xff]
    %v6418 = vld [vmem:[#allocation7 + $0x1e0] sm:$0xff]
    %v6419 = vld [vmem:[#allocation7 + $0x1e8] sm:$0xff]
    %v6420 = vld [vmem:[#allocation7 + $0x1f0] sm:$0xff]
    %v6421 = vld [vmem:[#allocation7 + $0x1f8] sm:$0xff]
    %v6422 = vld [vmem:[#allocation9] sm:$0xf]
    %v6424 = vlaneseq
    %v6425 = vshrl.u32 %v6424, 7
    %v6426 = vsub.s32 0, %v6425
    %v6427 = vrot.slane %v6422, %v6426
    %v6428 = vlaneseq
    %v6429 = vshrl.u32 %v6428, 7
    %v6430 = vsub.s32 1, %v6429
    %v6431 = vrot.slane %v6422, %v6430
    %v6432 = vlaneseq
    %v6433 = vshrl.u32 %v6432, 7
    %v6434 = vsub.s32 2, %v6433
    %v6435 = vrot.slane %v6422, %v6434
    %v6436 = vlaneseq
    %v6437 = vshrl.u32 %v6436, 7
    %v6438 = vsub.s32 3, %v6437
    %v6439 = vrot.slane %v6422, %v6438
    %v6508 = vunpack.c.l.b16 %v6358
    %v6509 = vunpack.c.h.b16 %v6358
    %v6510 = vunpack.c.l.b16 %v6359
    %v6511 = vunpack.c.h.b16 %v6359
    %v6512 = vunpack.c.l.b16 %v6360
    %v6513 = vunpack.c.h.b16 %v6360
    %v6514 = vunpack.c.l.b16 %v6361
    %v6515 = vunpack.c.h.b16 %v6361
    %v6516 = vunpack.c.l.b16 %v6362
    %v6517 = vunpack.c.h.b16 %v6362
    %v6518 = vunpack.c.l.b16 %v6363
    %v6519 = vunpack.c.h.b16 %v6363
    %v6520 = vunpack.c.l.b16 %v6364
    %v6521 = vunpack.c.h.b16 %v6364
    %v6522 = vunpack.c.l.b16 %v6365
    %v6523 = vunpack.c.h.b16 %v6365
    %v6524 = vunpack.c.l.b16 %v6366
    %v6525 = vunpack.c.h.b16 %v6366
    %v6526 = vunpack.c.l.b16 %v6367
    %v6527 = vunpack.c.h.b16 %v6367
    %v6528 = vunpack.c.l.b16 %v6368
    %v6529 = vunpack.c.h.b16 %v6368
    %v6530 = vunpack.c.l.b16 %v6369
    %v6531 = vunpack.c.h.b16 %v6369
    %v6532 = vunpack.c.l.b16 %v6370
    %v6533 = vunpack.c.h.b16 %v6370
    %v6534 = vunpack.c.l.b16 %v6371
    %v6535 = vunpack.c.h.b16 %v6371
    %v6536 = vunpack.c.l.b16 %v6372
    %v6537 = vunpack.c.h.b16 %v6372
    %v6538 = vunpack.c.l.b16 %v6373
    %v6539 = vunpack.c.h.b16 %v6373
    %v6540 = vunpack.c.l.b16 %v6374
    %v6541 = vunpack.c.h.b16 %v6374
    %v6542 = vunpack.c.l.b16 %v6375
    %v6543 = vunpack.c.h.b16 %v6375
    %v6544 = vunpack.c.l.b16 %v6376
    %v6545 = vunpack.c.h.b16 %v6376
    %v6546 = vunpack.c.l.b16 %v6377
    %v6547 = vunpack.c.h.b16 %v6377
    %v6548 = vunpack.c.l.b16 %v6378
    %v6549 = vunpack.c.h.b16 %v6378
    %v6550 = vunpack.c.l.b16 %v6379
    %v6551 = vunpack.c.h.b16 %v6379
    %v6552 = vunpack.c.l.b16 %v6380
    %v6553 = vunpack.c.h.b16 %v6380
    %v6554 = vunpack.c.l.b16 %v6381
    %v6555 = vunpack.c.h.b16 %v6381
    %v6556 = vunpack.c.l.b16 %v6382
    %v6557 = vunpack.c.h.b16 %v6382
    %v6558 = vunpack.c.l.b16 %v6383
    %v6559 = vunpack.c.h.b16 %v6383
    %v6560 = vunpack.c.l.b16 %v6384
    %v6561 = vunpack.c.h.b16 %v6384
    %v6562 = vunpack.c.l.b16 %v6385
    %v6563 = vunpack.c.h.b16 %v6385
    %v6564 = vunpack.c.l.b16 %v6386
    %v6565 = vunpack.c.h.b16 %v6386
    %v6566 = vunpack.c.l.b16 %v6387
    %v6567 = vunpack.c.h.b16 %v6387
    %v6568 = vunpack.c.l.b16 %v6388
    %v6569 = vunpack.c.h.b16 %v6388
    %v6570 = vunpack.c.l.b16 %v6389
    %v6571 = vunpack.c.h.b16 %v6389
    %v6572 = vunpack.c.l.b16 %v6390
    %v6573 = vunpack.c.h.b16 %v6390
    %v6574 = vunpack.c.l.b16 %v6391
    %v6575 = vunpack.c.h.b16 %v6391
    %v6576 = vunpack.c.l.b16 %v6392
    %v6577 = vunpack.c.h.b16 %v6392
    %v6578 = vunpack.c.l.b16 %v6393
    %v6579 = vunpack.c.h.b16 %v6393
    %v6580 = vunpack.c.l.b16 %v6394
    %v6581 = vunpack.c.h.b16 %v6394
    %v6582 = vunpack.c.l.b16 %v6395
    %v6583 = vunpack.c.h.b16 %v6395
    %v6584 = vunpack.c.l.b16 %v6396
    %v6585 = vunpack.c.h.b16 %v6396
    %v6586 = vunpack.c.l.b16 %v6397
    %v6587 = vunpack.c.h.b16 %v6397
    %v6588 = vunpack.c.l.b16 %v6398
    %v6589 = vunpack.c.h.b16 %v6398
    %v6590 = vunpack.c.l.b16 %v6399
    %v6591 = vunpack.c.h.b16 %v6399
    %v6592 = vunpack.c.l.b16 %v6400
    %v6593 = vunpack.c.h.b16 %v6400
    %v6594 = vunpack.c.l.b16 %v6401
    %v6595 = vunpack.c.h.b16 %v6401
    %v6596 = vunpack.c.l.b16 %v6402
    %v6597 = vunpack.c.h.b16 %v6402
    %v6598 = vunpack.c.l.b16 %v6403
    %v6599 = vunpack.c.h.b16 %v6403
    %v6600 = vunpack.c.l.b16 %v6404
    %v6601 = vunpack.c.h.b16 %v6404
    %v6602 = vunpack.c.l.b16 %v6405
    %v6603 = vunpack.c.h.b16 %v6405
    %v6604 = vunpack.c.l.b16 %v6406
    %v6605 = vunpack.c.h.b16 %v6406
    %v6606 = vunpack.c.l.b16 %v6407
    %v6607 = vunpack.c.h.b16 %v6407
    %v6608 = vunpack.c.l.b16 %v6408
    %v6609 = vunpack.c.h.b16 %v6408
    %v6610 = vunpack.c.l.b16 %v6409
    %v6611 = vunpack.c.h.b16 %v6409
    %v6612 = vunpack.c.l.b16 %v6410
    %v6613 = vunpack.c.h.b16 %v6410
    %v6614 = vunpack.c.l.b16 %v6411
    %v6615 = vunpack.c.h.b16 %v6411
    %v6616 = vunpack.c.l.b16 %v6412
    %v6617 = vunpack.c.h.b16 %v6412
    %v6618 = vunpack.c.l.b16 %v6413
    %v6619 = vunpack.c.h.b16 %v6413
    %v6620 = vunpack.c.l.b16 %v6414
    %v6621 = vunpack.c.h.b16 %v6414
    %v6622 = vunpack.c.l.b16 %v6415
    %v6623 = vunpack.c.h.b16 %v6415
    %v6624 = vunpack.c.l.b16 %v6416
    %v6625 = vunpack.c.h.b16 %v6416
    %v6626 = vunpack.c.l.b16 %v6417
    %v6627 = vunpack.c.h.b16 %v6417
    %v6628 = vunpack.c.l.b16 %v6418
    %v6629 = vunpack.c.h.b16 %v6418
    %v6630 = vunpack.c.l.b16 %v6419
    %v6631 = vunpack.c.h.b16 %v6419
    %v6632 = vunpack.c.l.b16 %v6420
    %v6633 = vunpack.c.h.b16 %v6420
    %v6634 = vunpack.c.l.b16 %v6421
    %v6635 = vunpack.c.h.b16 %v6421
    %v6636 = vpack.c.b16 %v6512, %v6508
    %v6637 = vpack.c.b16 %v6513, %v6509
    %v6638 = vpack.c.b16 %v6514, %v6510
    %v6639 = vpack.c.b16 %v6515, %v6511
    %v6640 = vpack.c.b16 %v6520, %v6516
    %v6641 = vpack.c.b16 %v6521, %v6517
    %v6642 = vpack.c.b16 %v6522, %v6518
    %v6643 = vpack.c.b16 %v6523, %v6519
    %v6644 = vpack.c.b16 %v6528, %v6524
    %v6645 = vpack.c.b16 %v6529, %v6525
    %v6646 = vpack.c.b16 %v6530, %v6526
    %v6647 = vpack.c.b16 %v6531, %v6527
    %v6648 = vpack.c.b16 %v6536, %v6532
    %v6649 = vpack.c.b16 %v6537, %v6533
    %v6650 = vpack.c.b16 %v6538, %v6534
    %v6651 = vpack.c.b16 %v6539, %v6535
    %v6652 = vpack.c.b16 %v6544, %v6540
    %v6653 = vpack.c.b16 %v6545, %v6541
    %v6654 = vpack.c.b16 %v6546, %v6542
    %v6655 = vpack.c.b16 %v6547, %v6543
    %v6656 = vpack.c.b16 %v6552, %v6548
    %v6657 = vpack.c.b16 %v6553, %v6549
    %v6658 = vpack.c.b16 %v6554, %v6550
    %v6659 = vpack.c.b16 %v6555, %v6551
    %v6660 = vpack.c.b16 %v6560, %v6556
    %v6661 = vpack.c.b16 %v6561, %v6557
    %v6662 = vpack.c.b16 %v6562, %v6558
    %v6663 = vpack.c.b16 %v6563, %v6559
    %v6664 = vpack.c.b16 %v6568, %v6564
    %v6665 = vpack.c.b16 %v6569, %v6565
    %v6666 = vpack.c.b16 %v6570, %v6566
    %v6667 = vpack.c.b16 %v6571, %v6567
    %v6668 = vpack.c.b16 %v6576, %v6572
    %v6669 = vpack.c.b16 %v6577, %v6573
    %v6670 = vpack.c.b16 %v6578, %v6574
    %v6671 = vpack.c.b16 %v6579, %v6575
    %v6672 = vpack.c.b16 %v6584, %v6580
    %v6673 = vpack.c.b16 %v6585, %v6581
    %v6674 = vpack.c.b16 %v6586, %v6582
    %v6675 = vpack.c.b16 %v6587, %v6583
    %v6676 = vpack.c.b16 %v6592, %v6588
    %v6677 = vpack.c.b16 %v6593, %v6589
    %v6678 = vpack.c.b16 %v6594, %v6590
    %v6679 = vpack.c.b16 %v6595, %v6591
    %v6680 = vpack.c.b16 %v6600, %v6596
    %v6681 = vpack.c.b16 %v6601, %v6597
    %v6682 = vpack.c.b16 %v6602, %v6598
    %v6683 = vpack.c.b16 %v6603, %v6599
    %v6684 = vpack.c.b16 %v6608, %v6604
    %v6685 = vpack.c.b16 %v6609, %v6605
    %v6686 = vpack.c.b16 %v6610, %v6606
    %v6687 = vpack.c.b16 %v6611, %v6607
    %v6688 = vpack.c.b16 %v6616, %v6612
    %v6689 = vpack.c.b16 %v6617, %v6613
    %v6690 = vpack.c.b16 %v6618, %v6614
    %v6691 = vpack.c.b16 %v6619, %v6615
    %v6692 = vpack.c.b16 %v6624, %v6620
    %v6693 = vpack.c.b16 %v6625, %v6621
    %v6694 = vpack.c.b16 %v6626, %v6622
    %v6695 = vpack.c.b16 %v6627, %v6623
    %v6696 = vpack.c.b16 %v6632, %v6628
    %v6697 = vpack.c.b16 %v6633, %v6629
    %v6698 = vpack.c.b16 %v6634, %v6630
    %v6699 = vpack.c.b16 %v6635, %v6631
    %6764 = vmatprep.subr.bf16.mxu0 %v6637
    %6765 = vmatpush1.bf16.msra.mxu0 %v6636
    %6766 = vmatprep.subr.bf16.mxu0 %v6641
    %6767 = vmatpush1.bf16.msra.mxu0 %v6640
    %6768 = vmatprep.subr.bf16.mxu0 %v6645
    %6769 = vmatpush1.bf16.msra.mxu0 %v6644
    %6770 = vmatprep.subr.bf16.mxu0 %v6649
    %6771 = vmatpush1.bf16.msra.mxu0 %v6648
    %6772 = vmatprep.subr.bf16.mxu0 %v6653
    %6773 = vmatpush1.bf16.msra.mxu0 %v6652
    %6774 = vmatprep.subr.bf16.mxu0 %v6657
    %6775 = vmatpush1.bf16.msra.mxu0 %v6656
    %6776 = vmatprep.subr.bf16.mxu0 %v6661
    %6777 = vmatpush1.bf16.msra.mxu0 %v6660
    %6778 = vmatprep.subr.bf16.mxu0 %v6665
    %6779 = vmatpush1.bf16.msra.mxu0 %v6664
    %6780 = vmatprep.subr.bf16.mxu0 %v6669
    %6781 = vmatpush1.bf16.msra.mxu0 %v6668
    %6782 = vmatprep.subr.bf16.mxu0 %v6673
    %6783 = vmatpush1.bf16.msra.mxu0 %v6672
    %6784 = vmatprep.subr.bf16.mxu0 %v6677
    %6785 = vmatpush1.bf16.msra.mxu0 %v6676
    %6786 = vmatprep.subr.bf16.mxu0 %v6681
    %6787 = vmatpush1.bf16.msra.mxu0 %v6680
    %6788 = vmatprep.subr.bf16.mxu0 %v6685
    %6789 = vmatpush1.bf16.msra.mxu0 %v6684
    %6790 = vmatprep.subr.bf16.mxu0 %v6689
    %6791 = vmatpush1.bf16.msra.mxu0 %v6688
    %6792 = vmatprep.subr.bf16.mxu0 %v6693
    %6793 = vmatpush1.bf16.msra.mxu0 %v6692
    %6794 = vmatprep.subr.bf16.mxu0 %v6697
    %6795 = vmatpush1.bf16.msra.mxu0 %v6696
    %6796 = vmatprep.mubr.bf16.mxu0 %v6013
    %6797 = vmatmul.mubr.bf16.gmra.mrb[0].mxu0 %v5472
    %v6798 = vpop.f32.mrb[0].mxu0
    %v6799 = vadd.f32 %v6427, %v6798
    %v6800 = vpop.f32.mrb[0].mxu0
    %v6801 = vadd.f32 %v6431, %v6800
    %v6802 = vpop.f32.mrb[0].mxu0
    %v6803 = vadd.f32 %v6427, %v6802
    %v6804 = vpop.f32.mrb[0].mxu0
    %v6805 = vadd.f32 %v6431, %v6804
    %6806 = vdwg.mxu0
    %6807 = vmatprep.subr.bf16.mxu0 %v6639
    %6808 = vmatpush1.bf16.msra.mxu0 %v6638
    %6809 = vmatprep.subr.bf16.mxu0 %v6643
    %6810 = vmatpush1.bf16.msra.mxu0 %v6642
    %6811 = vmatprep.subr.bf16.mxu0 %v6647
    %6812 = vmatpush1.bf16.msra.mxu0 %v6646
    %6813 = vmatprep.subr.bf16.mxu0 %v6651
    %6814 = vmatpush1.bf16.msra.mxu0 %v6650
    %6815 = vmatprep.subr.bf16.mxu0 %v6655
    %6816 = vmatpush1.bf16.msra.mxu0 %v6654
    %6817 = vmatprep.subr.bf16.mxu0 %v6659
    %6818 = vmatpush1.bf16.msra.mxu0 %v6658
    %6819 = vmatprep.subr.bf16.mxu0 %v6663
    %6820 = vmatpush1.bf16.msra.mxu0 %v6662
    %6821 = vmatprep.subr.bf16.mxu0 %v6667
    %6822 = vmatpush1.bf16.msra.mxu0 %v6666
    %6823 = vmatprep.subr.bf16.mxu0 %v6671
    %6824 = vmatpush1.bf16.msra.mxu0 %v6670
    %6825 = vmatprep.subr.bf16.mxu0 %v6675
    %6826 = vmatpush1.bf16.msra.mxu0 %v6674
    %6827 = vmatprep.subr.bf16.mxu0 %v6679
    %6828 = vmatpush1.bf16.msra.mxu0 %v6678
    %6829 = vmatprep.subr.bf16.mxu0 %v6683
    %6830 = vmatpush1.bf16.msra.mxu0 %v6682
    %6831 = vmatprep.subr.bf16.mxu0 %v6687
    %6832 = vmatpush1.bf16.msra.mxu0 %v6686
    %6833 = vmatprep.subr.bf16.mxu0 %v6691
    %6834 = vmatpush1.bf16.msra.mxu0 %v6690
    %6835 = vmatprep.subr.bf16.mxu0 %v6695
    %6836 = vmatpush1.bf16.msra.mxu0 %v6694
    %6837 = vmatprep.subr.bf16.mxu0 %v6699
    %6838 = vmatpush1.bf16.msra.mxu0 %v6698
    %6839 = vmatprep.mubr.bf16.mxu0 %v6013
    %6840 = vmatmul.mubr.bf16.gmra.mrb[0].mxu0 %v5472
    %v6841 = vpop.f32.mrb[0].mxu0
    %v6842 = vadd.f32 %v6435, %v6841
    %v6843 = vpop.f32.mrb[0].mxu0
    %v6844 = vadd.f32 %v6439, %v6843
    %v6845 = vpop.f32.mrb[0].mxu0
    %v6846 = vadd.f32 %v6435, %v6845
    %v6847 = vpop.f32.mrb[0].mxu0
    %v6848 = vadd.f32 %v6439, %v6847
    %6849 = vdwg.mxu0
    %v6850 = vxor.u32 %v6799, 2147483648
    %v6851 = vxor.u32 %v6803, 2147483648
    %v6852 = vmul.f32 %v6850, 1.442695
    %v6853 = vpow.pop %v6852
    %v6854 = vmul.f32 %v6851, 1.442695
    %v6855 = vpow.pop %v6854
    %v6856 = vadd.f32 %v6853, 1.0
    %v6857 = vadd.f32 %v6855, 1.0
    %v6858 = vrcp.pop %v6856
    %v6859 = vmul.f32 1.0, %v6858
    %v6860 = vrcp.pop %v6857
    %v6861 = vmul.f32 1.0, %v6860
    %v6862 = vxor.u32 %v6801, 2147483648
    %v6863 = vxor.u32 %v6805, 2147483648
    %v6864 = vmul.f32 %v6862, 1.442695
    %v6865 = vpow.pop %v6864
    %v6866 = vmul.f32 %v6863, 1.442695
    %v6867 = vpow.pop %v6866
    %v6868 = vadd.f32 %v6865, 1.0
    %v6869 = vadd.f32 %v6867, 1.0
    %v6870 = vrcp.pop %v6868
    %v6871 = vmul.f32 1.0, %v6870
    %v6872 = vrcp.pop %v6869
    %v6873 = vmul.f32 1.0, %v6872
    %v6874 = vtanh.pop %v6842
    %v6875 = vtanh.pop %v6846
    %v6876 = vxor.u32 %v6844, 2147483648
    %v6877 = vxor.u32 %v6848, 2147483648
    %v6878 = vmul.f32 %v6876, 1.442695
    %v6879 = vpow.pop %v6878
    %v6880 = vmul.f32 %v6877, 1.442695
    %v6881 = vpow.pop %v6880
    %v6882 = vadd.f32 %v6879, 1.0
    %v6883 = vadd.f32 %v6881, 1.0
    %v6884 = vrcp.pop %v6882
    %v6885 = vmul.f32 1.0, %v6884
    %v6886 = vrcp.pop %v6883
    %v6887 = vmul.f32 1.0, %v6886
    %v6888 = vmul.f32 %v6871, %v6007
    %v6889 = vmul.f32 %v6873, %v6008
    %v6890 = vmul.f32 %v6859, %v6874
    %v6891 = vmul.f32 %v6861, %v6875
    %v6892 = vadd.f32 %v6888, %v6890
    %v6893 = vadd.f32 %v6889, %v6891
    %v6894 = vtanh.pop %v6892
    %v6895 = vtanh.pop %v6893
    %v6896 = vmul.f32 %v6885, %v6894
    %v6897 = vmul.f32 %v6887, %v6895
    %v6898 = vpack.c.bf16 %v6897, %v6896
    %6899 = vst [vmem:[#allocation3 + $0x30] sm:$0xff] %v6898
    %v6900 = vld [vmem:[#allocation7] sm:$0xff]
    %v6901 = vld [vmem:[#allocation7 + $0x8] sm:$0xff]
    %v6902 = vld [vmem:[#allocation7 + $0x10] sm:$0xff]
    %v6903 = vld [vmem:[#allocation7 + $0x18] sm:$0xff]
    %v6904 = vld [vmem:[#allocation7 + $0x20] sm:$0xff]
    %v6905 = vld [vmem:[#allocation7 + $0x28] sm:$0xff]
    %v6906 = vld [vmem:[#allocation7 + $0x30] sm:$0xff]
    %v6907 = vld [vmem:[#allocation7 + $0x38] sm:$0xff]
    %v6908 = vld [vmem:[#allocation7 + $0x40] sm:$0xff]
    %v6909 = vld [vmem:[#allocation7 + $0x48] sm:$0xff]
    %v6910 = vld [vmem:[#allocation7 + $0x50] sm:$0xff]
    %v6911 = vld [vmem:[#allocation7 + $0x58] sm:$0xff]
    %v6912 = vld [vmem:[#allocation7 + $0x60] sm:$0xff]
    %v6913 = vld [vmem:[#allocation7 + $0x68] sm:$0xff]
    %v6914 = vld [vmem:[#allocation7 + $0x70] sm:$0xff]
    %v6915 = vld [vmem:[#allocation7 + $0x78] sm:$0xff]
    %v6916 = vld [vmem:[#allocation7 + $0x80] sm:$0xff]
    %v6917 = vld [vmem:[#allocation7 + $0x88] sm:$0xff]
    %v6918 = vld [vmem:[#allocation7 + $0x90] sm:$0xff]
    %v6919 = vld [vmem:[#allocation7 + $0x98] sm:$0xff]
    %v6920 = vld [vmem:[#allocation7 + $0xa0] sm:$0xff]
    %v6921 = vld [vmem:[#allocation7 + $0xa8] sm:$0xff]
    %v6922 = vld [vmem:[#allocation7 + $0xb0] sm:$0xff]
    %v6923 = vld [vmem:[#allocation7 + $0xb8] sm:$0xff]
    %v6924 = vld [vmem:[#allocation7 + $0xc0] sm:$0xff]
    %v6925 = vld [vmem:[#allocation7 + $0xc8] sm:$0xff]
    %v6926 = vld [vmem:[#allocation7 + $0xd0] sm:$0xff]
    %v6927 = vld [vmem:[#allocation7 + $0xd8] sm:$0xff]
    %v6928 = vld [vmem:[#allocation7 + $0xe0] sm:$0xff]
    %v6929 = vld [vmem:[#allocation7 + $0xe8] sm:$0xff]
    %v6930 = vld [vmem:[#allocation7 + $0xf0] sm:$0xff]
    %v6931 = vld [vmem:[#allocation7 + $0xf8] sm:$0xff]
    %v6932 = vld [vmem:[#allocation7 + $0x100] sm:$0xff]
    %v6933 = vld [vmem:[#allocation7 + $0x108] sm:$0xff]
    %v6934 = vld [vmem:[#allocation7 + $0x110] sm:$0xff]
    %v6935 = vld [vmem:[#allocation7 + $0x118] sm:$0xff]
    %v6936 = vld [vmem:[#allocation7 + $0x120] sm:$0xff]
    %v6937 = vld [vmem:[#allocation7 + $0x128] sm:$0xff]
    %v6938 = vld [vmem:[#allocation7 + $0x130] sm:$0xff]
    %v6939 = vld [vmem:[#allocation7 + $0x138] sm:$0xff]
    %v6940 = vld [vmem:[#allocation7 + $0x140] sm:$0xff]
    %v6941 = vld [vmem:[#allocation7 + $0x148] sm:$0xff]
    %v6942 = vld [vmem:[#allocation7 + $0x150] sm:$0xff]
    %v6943 = vld [vmem:[#allocation7 + $0x158] sm:$0xff]
    %v6944 = vld [vmem:[#allocation7 + $0x160] sm:$0xff]
    %v6945 = vld [vmem:[#allocation7 + $0x168] sm:$0xff]
    %v6946 = vld [vmem:[#allocation7 + $0x170] sm:$0xff]
    %v6947 = vld [vmem:[#allocation7 + $0x178] sm:$0xff]
    %v6948 = vld [vmem:[#allocation7 + $0x180] sm:$0xff]
    %v6949 = vld [vmem:[#allocation7 + $0x188] sm:$0xff]
    %v6950 = vld [vmem:[#allocation7 + $0x190] sm:$0xff]
    %v6951 = vld [vmem:[#allocation7 + $0x198] sm:$0xff]
    %v6952 = vld [vmem:[#allocation7 + $0x1a0] sm:$0xff]
    %v6953 = vld [vmem:[#allocation7 + $0x1a8] sm:$0xff]
    %v6954 = vld [vmem:[#allocation7 + $0x1b0] sm:$0xff]
    %v6955 = vld [vmem:[#allocation7 + $0x1b8] sm:$0xff]
    %v6956 = vld [vmem:[#allocation7 + $0x1c0] sm:$0xff]
    %v6957 = vld [vmem:[#allocation7 + $0x1c8] sm:$0xff]
    %v6958 = vld [vmem:[#allocation7 + $0x1d0] sm:$0xff]
    %v6959 = vld [vmem:[#allocation7 + $0x1d8] sm:$0xff]
    %v6960 = vld [vmem:[#allocation7 + $0x1e0] sm:$0xff]
    %v6961 = vld [vmem:[#allocation7 + $0x1e8] sm:$0xff]
    %v6962 = vld [vmem:[#allocation7 + $0x1f0] sm:$0xff]
    %v6963 = vld [vmem:[#allocation7 + $0x1f8] sm:$0xff]
    %v6964 = vld [vmem:[#allocation9] sm:$0xf]
    %v6966 = vlaneseq
    %v6967 = vshrl.u32 %v6966, 7
    %v6968 = vsub.s32 0, %v6967
    %v6969 = vrot.slane %v6964, %v6968
    %v6970 = vlaneseq
    %v6971 = vshrl.u32 %v6970, 7
    %v6972 = vsub.s32 1, %v6971
    %v6973 = vrot.slane %v6964, %v6972
    %v6974 = vlaneseq
    %v6975 = vshrl.u32 %v6974, 7
    %v6976 = vsub.s32 2, %v6975
    %v6977 = vrot.slane %v6964, %v6976
    %v6978 = vlaneseq
    %v6979 = vshrl.u32 %v6978, 7
    %v6980 = vsub.s32 3, %v6979
    %v6981 = vrot.slane %v6964, %v6980
    %v7050 = vunpack.c.l.b16 %v6900
    %v7051 = vunpack.c.h.b16 %v6900
    %v7052 = vunpack.c.l.b16 %v6901
    %v7053 = vunpack.c.h.b16 %v6901
    %v7054 = vunpack.c.l.b16 %v6902
    %v7055 = vunpack.c.h.b16 %v6902
    %v7056 = vunpack.c.l.b16 %v6903
    %v7057 = vunpack.c.h.b16 %v6903
    %v7058 = vunpack.c.l.b16 %v6904
    %v7059 = vunpack.c.h.b16 %v6904
    %v7060 = vunpack.c.l.b16 %v6905
    %v7061 = vunpack.c.h.b16 %v6905
    %v7062 = vunpack.c.l.b16 %v6906
    %v7063 = vunpack.c.h.b16 %v6906
    %v7064 = vunpack.c.l.b16 %v6907
    %v7065 = vunpack.c.h.b16 %v6907
    %v7066 = vunpack.c.l.b16 %v6908
    %v7067 = vunpack.c.h.b16 %v6908
    %v7068 = vunpack.c.l.b16 %v6909
    %v7069 = vunpack.c.h.b16 %v6909
    %v7070 = vunpack.c.l.b16 %v6910
    %v7071 = vunpack.c.h.b16 %v6910
    %v7072 = vunpack.c.l.b16 %v6911
    %v7073 = vunpack.c.h.b16 %v6911
    %v7074 = vunpack.c.l.b16 %v6912
    %v7075 = vunpack.c.h.b16 %v6912
    %v7076 = vunpack.c.l.b16 %v6913
    %v7077 = vunpack.c.h.b16 %v6913
    %v7078 = vunpack.c.l.b16 %v6914
    %v7079 = vunpack.c.h.b16 %v6914
    %v7080 = vunpack.c.l.b16 %v6915
    %v7081 = vunpack.c.h.b16 %v6915
    %v7082 = vunpack.c.l.b16 %v6916
    %v7083 = vunpack.c.h.b16 %v6916
    %v7084 = vunpack.c.l.b16 %v6917
    %v7085 = vunpack.c.h.b16 %v6917
    %v7086 = vunpack.c.l.b16 %v6918
    %v7087 = vunpack.c.h.b16 %v6918
    %v7088 = vunpack.c.l.b16 %v6919
    %v7089 = vunpack.c.h.b16 %v6919
    %v7090 = vunpack.c.l.b16 %v6920
    %v7091 = vunpack.c.h.b16 %v6920
    %v7092 = vunpack.c.l.b16 %v6921
    %v7093 = vunpack.c.h.b16 %v6921
    %v7094 = vunpack.c.l.b16 %v6922
    %v7095 = vunpack.c.h.b16 %v6922
    %v7096 = vunpack.c.l.b16 %v6923
    %v7097 = vunpack.c.h.b16 %v6923
    %v7098 = vunpack.c.l.b16 %v6924
    %v7099 = vunpack.c.h.b16 %v6924
    %v7100 = vunpack.c.l.b16 %v6925
    %v7101 = vunpack.c.h.b16 %v6925
    %v7102 = vunpack.c.l.b16 %v6926
    %v7103 = vunpack.c.h.b16 %v6926
    %v7104 = vunpack.c.l.b16 %v6927
    %v7105 = vunpack.c.h.b16 %v6927
    %v7106 = vunpack.c.l.b16 %v6928
    %v7107 = vunpack.c.h.b16 %v6928
    %v7108 = vunpack.c.l.b16 %v6929
    %v7109 = vunpack.c.h.b16 %v6929
    %v7110 = vunpack.c.l.b16 %v6930
    %v7111 = vunpack.c.h.b16 %v6930
    %v7112 = vunpack.c.l.b16 %v6931
    %v7113 = vunpack.c.h.b16 %v6931
    %v7114 = vunpack.c.l.b16 %v6932
    %v7115 = vunpack.c.h.b16 %v6932
    %v7116 = vunpack.c.l.b16 %v6933
    %v7117 = vunpack.c.h.b16 %v6933
    %v7118 = vunpack.c.l.b16 %v6934
    %v7119 = vunpack.c.h.b16 %v6934
    %v7120 = vunpack.c.l.b16 %v6935
    %v7121 = vunpack.c.h.b16 %v6935
    %v7122 = vunpack.c.l.b16 %v6936
    %v7123 = vunpack.c.h.b16 %v6936
    %v7124 = vunpack.c.l.b16 %v6937
    %v7125 = vunpack.c.h.b16 %v6937
    %v7126 = vunpack.c.l.b16 %v6938
    %v7127 = vunpack.c.h.b16 %v6938
    %v7128 = vunpack.c.l.b16 %v6939
    %v7129 = vunpack.c.h.b16 %v6939
    %v7130 = vunpack.c.l.b16 %v6940
    %v7131 = vunpack.c.h.b16 %v6940
    %v7132 = vunpack.c.l.b16 %v6941
    %v7133 = vunpack.c.h.b16 %v6941
    %v7134 = vunpack.c.l.b16 %v6942
    %v7135 = vunpack.c.h.b16 %v6942
    %v7136 = vunpack.c.l.b16 %v6943
    %v7137 = vunpack.c.h.b16 %v6943
    %v7138 = vunpack.c.l.b16 %v6944
    %v7139 = vunpack.c.h.b16 %v6944
    %v7140 = vunpack.c.l.b16 %v6945
    %v7141 = vunpack.c.h.b16 %v6945
    %v7142 = vunpack.c.l.b16 %v6946
    %v7143 = vunpack.c.h.b16 %v6946
    %v7144 = vunpack.c.l.b16 %v6947
    %v7145 = vunpack.c.h.b16 %v6947
    %v7146 = vunpack.c.l.b16 %v6948
    %v7147 = vunpack.c.h.b16 %v6948
    %v7148 = vunpack.c.l.b16 %v6949
    %v7149 = vunpack.c.h.b16 %v6949
    %v7150 = vunpack.c.l.b16 %v6950
    %v7151 = vunpack.c.h.b16 %v6950
    %v7152 = vunpack.c.l.b16 %v6951
    %v7153 = vunpack.c.h.b16 %v6951
    %v7154 = vunpack.c.l.b16 %v6952
    %v7155 = vunpack.c.h.b16 %v6952
    %v7156 = vunpack.c.l.b16 %v6953
    %v7157 = vunpack.c.h.b16 %v6953
    %v7158 = vunpack.c.l.b16 %v6954
    %v7159 = vunpack.c.h.b16 %v6954
    %v7160 = vunpack.c.l.b16 %v6955
    %v7161 = vunpack.c.h.b16 %v6955
    %v7162 = vunpack.c.l.b16 %v6956
    %v7163 = vunpack.c.h.b16 %v6956
    %v7164 = vunpack.c.l.b16 %v6957
    %v7165 = vunpack.c.h.b16 %v6957
    %v7166 = vunpack.c.l.b16 %v6958
    %v7167 = vunpack.c.h.b16 %v6958
    %v7168 = vunpack.c.l.b16 %v6959
    %v7169 = vunpack.c.h.b16 %v6959
    %v7170 = vunpack.c.l.b16 %v6960
    %v7171 = vunpack.c.h.b16 %v6960
    %v7172 = vunpack.c.l.b16 %v6961
    %v7173 = vunpack.c.h.b16 %v6961
    %v7174 = vunpack.c.l.b16 %v6962
    %v7175 = vunpack.c.h.b16 %v6962
    %v7176 = vunpack.c.l.b16 %v6963
    %v7177 = vunpack.c.h.b16 %v6963
    %v7178 = vpack.c.b16 %v7054, %v7050
    %v7179 = vpack.c.b16 %v7055, %v7051
    %v7180 = vpack.c.b16 %v7056, %v7052
    %v7181 = vpack.c.b16 %v7057, %v7053
    %v7182 = vpack.c.b16 %v7062, %v7058
    %v7183 = vpack.c.b16 %v7063, %v7059
    %v7184 = vpack.c.b16 %v7064, %v7060
    %v7185 = vpack.c.b16 %v7065, %v7061
    %v7186 = vpack.c.b16 %v7070, %v7066
    %v7187 = vpack.c.b16 %v7071, %v7067
    %v7188 = vpack.c.b16 %v7072, %v7068
    %v7189 = vpack.c.b16 %v7073, %v7069
    %v7190 = vpack.c.b16 %v7078, %v7074
    %v7191 = vpack.c.b16 %v7079, %v7075
    %v7192 = vpack.c.b16 %v7080, %v7076
    %v7193 = vpack.c.b16 %v7081, %v7077
    %v7194 = vpack.c.b16 %v7086, %v7082
    %v7195 = vpack.c.b16 %v7087, %v7083
    %v7196 = vpack.c.b16 %v7088, %v7084
    %v7197 = vpack.c.b16 %v7089, %v7085
    %v7198 = vpack.c.b16 %v7094, %v7090
    %v7199 = vpack.c.b16 %v7095, %v7091
    %v7200 = vpack.c.b16 %v7096, %v7092
    %v7201 = vpack.c.b16 %v7097, %v7093
    %v7202 = vpack.c.b16 %v7102, %v7098
    %v7203 = vpack.c.b16 %v7103, %v7099
    %v7204 = vpack.c.b16 %v7104, %v7100
    %v7205 = vpack.c.b16 %v7105, %v7101
    %v7206 = vpack.c.b16 %v7110, %v7106
    %v7207 = vpack.c.b16 %v7111, %v7107
    %v7208 = vpack.c.b16 %v7112, %v7108
    %v7209 = vpack.c.b16 %v7113, %v7109
    %v7210 = vpack.c.b16 %v7118, %v7114
    %v7211 = vpack.c.b16 %v7119, %v7115
    %v7212 = vpack.c.b16 %v7120, %v7116
    %v7213 = vpack.c.b16 %v7121, %v7117
    %v7214 = vpack.c.b16 %v7126, %v7122
    %v7215 = vpack.c.b16 %v7127, %v7123
    %v7216 = vpack.c.b16 %v7128, %v7124
    %v7217 = vpack.c.b16 %v7129, %v7125
    %v7218 = vpack.c.b16 %v7134, %v7130
    %v7219 = vpack.c.b16 %v7135, %v7131
    %v7220 = vpack.c.b16 %v7136, %v7132
    %v7221 = vpack.c.b16 %v7137, %v7133
    %v7222 = vpack.c.b16 %v7142, %v7138
    %v7223 = vpack.c.b16 %v7143, %v7139
    %v7224 = vpack.c.b16 %v7144, %v7140
    %v7225 = vpack.c.b16 %v7145, %v7141
    %v7226 = vpack.c.b16 %v7150, %v7146
    %v7227 = vpack.c.b16 %v7151, %v7147
    %v7228 = vpack.c.b16 %v7152, %v7148
    %v7229 = vpack.c.b16 %v7153, %v7149
    %v7230 = vpack.c.b16 %v7158, %v7154
    %v7231 = vpack.c.b16 %v7159, %v7155
    %v7232 = vpack.c.b16 %v7160, %v7156
    %v7233 = vpack.c.b16 %v7161, %v7157
    %v7234 = vpack.c.b16 %v7166, %v7162
    %v7235 = vpack.c.b16 %v7167, %v7163
    %v7236 = vpack.c.b16 %v7168, %v7164
    %v7237 = vpack.c.b16 %v7169, %v7165
    %v7238 = vpack.c.b16 %v7174, %v7170
    %v7239 = vpack.c.b16 %v7175, %v7171
    %v7240 = vpack.c.b16 %v7176, %v7172
    %v7241 = vpack.c.b16 %v7177, %v7173
    %7306 = vmatprep.subr.bf16.mxu0 %v7179
    %7307 = vmatpush1.bf16.msra.mxu0 %v7178
    %7308 = vmatprep.subr.bf16.mxu0 %v7183
    %7309 = vmatpush1.bf16.msra.mxu0 %v7182
    %7310 = vmatprep.subr.bf16.mxu0 %v7187
    %7311 = vmatpush1.bf16.msra.mxu0 %v7186
    %7312 = vmatprep.subr.bf16.mxu0 %v7191
    %7313 = vmatpush1.bf16.msra.mxu0 %v7190
    %7314 = vmatprep.subr.bf16.mxu0 %v7195
    %7315 = vmatpush1.bf16.msra.mxu0 %v7194
    %7316 = vmatprep.subr.bf16.mxu0 %v7199
    %7317 = vmatpush1.bf16.msra.mxu0 %v7198
    %7318 = vmatprep.subr.bf16.mxu0 %v7203
    %7319 = vmatpush1.bf16.msra.mxu0 %v7202
    %7320 = vmatprep.subr.bf16.mxu0 %v7207
    %7321 = vmatpush1.bf16.msra.mxu0 %v7206
    %7322 = vmatprep.subr.bf16.mxu0 %v7211
    %7323 = vmatpush1.bf16.msra.mxu0 %v7210
    %7324 = vmatprep.subr.bf16.mxu0 %v7215
    %7325 = vmatpush1.bf16.msra.mxu0 %v7214
    %7326 = vmatprep.subr.bf16.mxu0 %v7219
    %7327 = vmatpush1.bf16.msra.mxu0 %v7218
    %7328 = vmatprep.subr.bf16.mxu0 %v7223
    %7329 = vmatpush1.bf16.msra.mxu0 %v7222
    %7330 = vmatprep.subr.bf16.mxu0 %v7227
    %7331 = vmatpush1.bf16.msra.mxu0 %v7226
    %7332 = vmatprep.subr.bf16.mxu0 %v7231
    %7333 = vmatpush1.bf16.msra.mxu0 %v7230
    %7334 = vmatprep.subr.bf16.mxu0 %v7235
    %7335 = vmatpush1.bf16.msra.mxu0 %v7234
    %7336 = vmatprep.subr.bf16.mxu0 %v7239
    %7337 = vmatpush1.bf16.msra.mxu0 %v7238
    %7338 = vmatprep.mubr.bf16.mxu0 %v6898
    %7339 = vmatmul.mubr.bf16.gmra.mrb[0].mxu0 %v6357
    %v7340 = vpop.f32.mrb[0].mxu0
    %v7341 = vadd.f32 %v6969, %v7340
    %v7342 = vpop.f32.mrb[0].mxu0
    %v7343 = vadd.f32 %v6973, %v7342
    %v7344 = vpop.f32.mrb[0].mxu0
    %v7345 = vadd.f32 %v6969, %v7344
    %v7346 = vpop.f32.mrb[0].mxu0
    %v7347 = vadd.f32 %v6973, %v7346
    %7348 = vdwg.mxu0
    %7349 = vmatprep.subr.bf16.mxu0 %v7181
    %7350 = vmatpush1.bf16.msra.mxu0 %v7180
    %7351 = vmatprep.subr.bf16.mxu0 %v7185
    %7352 = vmatpush1.bf16.msra.mxu0 %v7184
    %7353 = vmatprep.subr.bf16.mxu0 %v7189
    %7354 = vmatpush1.bf16.msra.mxu0 %v7188
    %7355 = vmatprep.subr.bf16.mxu0 %v7193
    %7356 = vmatpush1.bf16.msra.mxu0 %v7192
    %7357 = vmatprep.subr.bf16.mxu0 %v7197
    %7358 = vmatpush1.bf16.msra.mxu0 %v7196
    %7359 = vmatprep.subr.bf16.mxu0 %v7201
    %7360 = vmatpush1.bf16.msra.mxu0 %v7200
    %7361 = vmatprep.subr.bf16.mxu0 %v7205
    %7362 = vmatpush1.bf16.msra.mxu0 %v7204
    %7363 = vmatprep.subr.bf16.mxu0 %v7209
    %7364 = vmatpush1.bf16.msra.mxu0 %v7208
    %7365 = vmatprep.subr.bf16.mxu0 %v7213
    %7366 = vmatpush1.bf16.msra.mxu0 %v7212
    %7367 = vmatprep.subr.bf16.mxu0 %v7217
    %7368 = vmatpush1.bf16.msra.mxu0 %v7216
    %7369 = vmatprep.subr.bf16.mxu0 %v7221
    %7370 = vmatpush1.bf16.msra.mxu0 %v7220
    %7371 = vmatprep.subr.bf16.mxu0 %v7225
    %7372 = vmatpush1.bf16.msra.mxu0 %v7224
    %7373 = vmatprep.subr.bf16.mxu0 %v7229
    %7374 = vmatpush1.bf16.msra.mxu0 %v7228
    %7375 = vmatprep.subr.bf16.mxu0 %v7233
    %7376 = vmatpush1.bf16.msra.mxu0 %v7232
    %7377 = vmatprep.subr.bf16.mxu0 %v7237
    %7378 = vmatpush1.bf16.msra.mxu0 %v7236
    %7379 = vmatprep.subr.bf16.mxu0 %v7241
    %7380 = vmatpush1.bf16.msra.mxu0 %v7240
    %7381 = vmatprep.mubr.bf16.mxu0 %v6898
    %7382 = vmatmul.mubr.bf16.gmra.mrb[0].mxu0 %v6357
    %v7383 = vpop.f32.mrb[0].mxu0
    %v7384 = vadd.f32 %v6977, %v7383
    %v7385 = vpop.f32.mrb[0].mxu0
    %v7386 = vadd.f32 %v6981, %v7385
    %v7387 = vpop.f32.mrb[0].mxu0
    %v7388 = vadd.f32 %v6977, %v7387
    %v7389 = vpop.f32.mrb[0].mxu0
    %v7390 = vadd.f32 %v6981, %v7389
    %7391 = vdwg.mxu0
    %v7392 = vxor.u32 %v7341, 2147483648
    %v7393 = vxor.u32 %v7345, 2147483648
    %v7394 = vmul.f32 %v7392, 1.442695
    %v7395 = vpow.pop %v7394
    %v7396 = vmul.f32 %v7393, 1.442695
    %v7397 = vpow.pop %v7396
    %v7398 = vadd.f32 %v7395, 1.0
    %v7399 = vadd.f32 %v7397, 1.0
    %v7400 = vrcp.pop %v7398
    %v7401 = vmul.f32 1.0, %v7400
    %v7402 = vrcp.pop %v7399
    %v7403 = vmul.f32 1.0, %v7402
    %v7404 = vxor.u32 %v7343, 2147483648
    %v7405 = vxor.u32 %v7347, 2147483648
    %v7406 = vmul.f32 %v7404, 1.442695
    %v7407 = vpow.pop %v7406
    %v7408 = vmul.f32 %v7405, 1.442695
    %v7409 = vpow.pop %v7408
    %v7410 = vadd.f32 %v7407, 1.0
    %v7411 = vadd.f32 %v7409, 1.0
    %v7412 = vrcp.pop %v7410
    %v7413 = vmul.f32 1.0, %v7412
    %v7414 = vrcp.pop %v7411
    %v7415 = vmul.f32 1.0, %v7414
    %v7416 = vtanh.pop %v7384
    %v7417 = vtanh.pop %v7388
    %v7418 = vxor.u32 %v7386, 2147483648
    %v7419 = vxor.u32 %v7390, 2147483648
    %v7420 = vmul.f32 %v7418, 1.442695
    %v7421 = vpow.pop %v7420
    %v7422 = vmul.f32 %v7419, 1.442695
    %v7423 = vpow.pop %v7422
    %v7424 = vadd.f32 %v7421, 1.0
    %v7425 = vadd.f32 %v7423, 1.0
    %v7426 = vrcp.pop %v7424
    %v7427 = vmul.f32 1.0, %v7426
    %v7428 = vrcp.pop %v7425
    %v7429 = vmul.f32 1.0, %v7428
    %v7430 = vmul.f32 %v7413, %v6892
    %v7431 = vmul.f32 %v7415, %v6893
    %v7432 = vmul.f32 %v7401, %v7416
    %v7433 = vmul.f32 %v7403, %v7417
    %v7434 = vadd.f32 %v7430, %v7432
    %v7435 = vadd.f32 %v7431, %v7433
    %v7436 = vtanh.pop %v7434
    %v7437 = vtanh.pop %v7435
    %v7438 = vmul.f32 %v7427, %v7436
    %v7439 = vmul.f32 %v7429, %v7437
    %v7440 = vpack.c.bf16 %v7439, %v7438
    %7441 = vst [vmem:[#allocation3 + $0x38] sm:$0xff] %v7440
    %v7442 = vld [vmem:[#allocation3] sm:$0xff]
    %v7443 = vld [vmem:[#allocation3 + $0x8] sm:$0xff]
    %v7444 = vld [vmem:[#allocation3 + $0x10] sm:$0xff]
    %v7445 = vld [vmem:[#allocation3 + $0x18] sm:$0xff]
    %v7446 = vld [vmem:[#allocation3 + $0x20] sm:$0xff]
    %v7447 = vld [vmem:[#allocation3 + $0x28] sm:$0xff]
    %v7448 = vld [vmem:[#allocation3 + $0x30] sm:$0xff]
    %v7449 = vld [vmem:[#allocation3 + $0x38] sm:$0xff]
    %v7450 = vld [vmem:[#allocation10] sm:$0xf]
    %v7451 = vld [vmem:[#allocation10 + $0x10] sm:$0xf]
    %v7452 = vld [vmem:[#allocation10 + $0x20] sm:$0xf]
    %v7453 = vld [vmem:[#allocation10 + $0x30] sm:$0xf]
    %v7454 = vld [vmem:[#allocation10 + $0x40] sm:$0xf]
    %v7455 = vld [vmem:[#allocation10 + $0x50] sm:$0xf]
    %v7456 = vld [vmem:[#allocation10 + $0x60] sm:$0xf]
    %v7457 = vld [vmem:[#allocation10 + $0x70] sm:$0xf]
    %v7458 = vld [vmem:[#allocation10 + $0x80] sm:$0xf]
    %v7459 = vld [vmem:[#allocation10 + $0x90] sm:$0xf]
    %v7460 = vld [vmem:[#allocation10 + $0xa0] sm:$0xf]
    %v7461 = vld [vmem:[#allocation10 + $0xb0] sm:$0xf]
    %v7462 = vld [vmem:[#allocation10 + $0xc0] sm:$0xf]
    %v7463 = vld [vmem:[#allocation10 + $0xd0] sm:$0xf]
    %v7464 = vld [vmem:[#allocation10 + $0xe0] sm:$0xf]
    %v7465 = vld [vmem:[#allocation10 + $0xf0] sm:$0xf]
    %v7466 = vld [vmem:[#allocation10 + $0x4] sm:$0xf]
    %v7467 = vld [vmem:[#allocation10 + $0x14] sm:$0xf]
    %v7468 = vld [vmem:[#allocation10 + $0x24] sm:$0xf]
    %v7469 = vld [vmem:[#allocation10 + $0x34] sm:$0xf]
    %v7470 = vld [vmem:[#allocation10 + $0x44] sm:$0xf]
    %v7471 = vld [vmem:[#allocation10 + $0x54] sm:$0xf]
    %v7472 = vld [vmem:[#allocation10 + $0x64] sm:$0xf]
    %v7473 = vld [vmem:[#allocation10 + $0x74] sm:$0xf]
    %v7474 = vld [vmem:[#allocation10 + $0x84] sm:$0xf]
    %v7475 = vld [vmem:[#allocation10 + $0x94] sm:$0xf]
    %v7476 = vld [vmem:[#allocation10 + $0xa4] sm:$0xf]
    %v7477 = vld [vmem:[#allocation10 + $0xb4] sm:$0xf]
    %v7478 = vld [vmem:[#allocation10 + $0xc4] sm:$0xf]
    %v7479 = vld [vmem:[#allocation10 + $0xd4] sm:$0xf]
    %v7480 = vld [vmem:[#allocation10 + $0xe4] sm:$0xf]
    %v7481 = vld [vmem:[#allocation10 + $0xf4] sm:$0xf]
    %v7482 = vld [vmem:[#allocation10 + $0x8] sm:$0xf]
    %v7483 = vld [vmem:[#allocation10 + $0x18] sm:$0xf]
    %v7484 = vld [vmem:[#allocation10 + $0x28] sm:$0xf]
    %v7485 = vld [vmem:[#allocation10 + $0x38] sm:$0xf]
    %v7486 = vld [vmem:[#allocation10 + $0x48] sm:$0xf]
    %v7487 = vld [vmem:[#allocation10 + $0x58] sm:$0xf]
    %v7488 = vld [vmem:[#allocation10 + $0x68] sm:$0xf]
    %v7489 = vld [vmem:[#allocation10 + $0x78] sm:$0xf]
    %v7490 = vld [vmem:[#allocation10 + $0x88] sm:$0xf]
    %v7491 = vld [vmem:[#allocation10 + $0x98] sm:$0xf]
    %v7492 = vld [vmem:[#allocation10 + $0xa8] sm:$0xf]
    %v7493 = vld [vmem:[#allocation10 + $0xb8] sm:$0xf]
    %v7494 = vld [vmem:[#allocation10 + $0xc8] sm:$0xf]
    %v7495 = vld [vmem:[#allocation10 + $0xd8] sm:$0xf]
    %v7496 = vld [vmem:[#allocation10 + $0xe8] sm:$0xf]
    %v7497 = vld [vmem:[#allocation10 + $0xf8] sm:$0xf]
    %v7498 = vld [vmem:[#allocation10 + $0xc] sm:$0xf]
    %v7499 = vld [vmem:[#allocation10 + $0x1c] sm:$0xf]
    %v7500 = vld [vmem:[#allocation10 + $0x2c] sm:$0xf]
    %v7501 = vld [vmem:[#allocation10 + $0x3c] sm:$0xf]
    %v7502 = vld [vmem:[#allocation10 + $0x4c] sm:$0xf]
    %v7503 = vld [vmem:[#allocation10 + $0x5c] sm:$0xf]
    %v7504 = vld [vmem:[#allocation10 + $0x6c] sm:$0xf]
    %v7505 = vld [vmem:[#allocation10 + $0x7c] sm:$0xf]
    %v7506 = vld [vmem:[#allocation10 + $0x8c] sm:$0xf]
    %v7507 = vld [vmem:[#allocation10 + $0x9c] sm:$0xf]
    %v7508 = vld [vmem:[#allocation10 + $0xac] sm:$0xf]
    %v7509 = vld [vmem:[#allocation10 + $0xbc] sm:$0xf]
    %v7510 = vld [vmem:[#allocation10 + $0xcc] sm:$0xf]
    %v7511 = vld [vmem:[#allocation10 + $0xdc] sm:$0xf]
    %v7512 = vld [vmem:[#allocation10 + $0xec] sm:$0xf]
    %v7513 = vld [vmem:[#allocation10 + $0xfc] sm:$0xf]
    %v7514 = vld [vmem:[#allocation12] sm:$0x1]
    %v7515 = vld [vmem:[#allocation12 + $0x1] sm:$0x1]
    %v7516 = vld [vmem:[#allocation12 + $0x2] sm:$0x1]
    %v7517 = vld [vmem:[#allocation12 + $0x3] sm:$0x1]
    %v7519 = vlaneseq
    %v7520 = vshrl.u32 %v7519, 7
    %v7521 = vsub.s32 0, %v7520
    %v7522 = vrot.slane %v7514, %v7521
    %v7540 = vunpack.c.l.b16 %v7450
    %v7541 = vunpack.c.l.b16 %v7451
    %v7542 = vunpack.c.l.b16 %v7452
    %v7543 = vunpack.c.l.b16 %v7453
    %v7544 = vunpack.c.l.b16 %v7454
    %v7545 = vunpack.c.l.b16 %v7455
    %v7546 = vunpack.c.l.b16 %v7456
    %v7547 = vunpack.c.l.b16 %v7457
    %v7548 = vunpack.c.l.b16 %v7458
    %v7549 = vunpack.c.l.b16 %v7459
    %v7550 = vunpack.c.l.b16 %v7460
    %v7551 = vunpack.c.l.b16 %v7461
    %v7552 = vunpack.c.l.b16 %v7462
    %v7553 = vunpack.c.l.b16 %v7463
    %v7554 = vunpack.c.l.b16 %v7464
    %v7555 = vunpack.c.l.b16 %v7465
    %v7556 = vpack.c.b16 %v7541, %v7540
    %v7557 = vpack.c.b16 %v7543, %v7542
    %v7558 = vpack.c.b16 %v7545, %v7544
    %v7559 = vpack.c.b16 %v7547, %v7546
    %v7560 = vpack.c.b16 %v7549, %v7548
    %v7561 = vpack.c.b16 %v7551, %v7550
    %v7562 = vpack.c.b16 %v7553, %v7552
    %v7563 = vpack.c.b16 %v7555, %v7554
    %7572 = vmatprep.subr.bf16.mxu0 0
    %7573 = vmatpush1.bf16.msra.mxu0 %v7556
    %7574 = vmatprep.subr.bf16.mxu0 0
    %7575 = vmatpush1.bf16.msra.mxu0 %v7557
    %7576 = vmatprep.subr.bf16.mxu0 0
    %7577 = vmatpush1.bf16.msra.mxu0 %v7558
    %7578 = vmatprep.subr.bf16.mxu0 0
    %7579 = vmatpush1.bf16.msra.mxu0 %v7559
    %7580 = vmatprep.subr.bf16.mxu0 0
    %7581 = vmatpush1.bf16.msra.mxu0 %v7560
    %7582 = vmatprep.subr.bf16.mxu0 0
    %7583 = vmatpush1.bf16.msra.mxu0 %v7561
    %7584 = vmatprep.subr.bf16.mxu0 0
    %7585 = vmatpush1.bf16.msra.mxu0 %v7562
    %7586 = vmatprep.subr.bf16.mxu0 0
    %7587 = vmatpush1.bf16.msra.mxu0 %v7563
    %7588 = vmatprep.subr.bf16.mxu0 0
    %7589 = vmatpush1.bf16.msra.mxu0 0
    %7590 = vmatprep.subr.bf16.mxu0 0
    %7591 = vmatpush1.bf16.msra.mxu0 0
    %7592 = vmatprep.subr.bf16.mxu0 0
    %7593 = vmatpush1.bf16.msra.mxu0 0
    %7594 = vmatprep.subr.bf16.mxu0 0
    %7595 = vmatpush1.bf16.msra.mxu0 0
    %7596 = vmatprep.subr.bf16.mxu0 0
    %7597 = vmatpush1.bf16.msra.mxu0 0
    %7598 = vmatprep.subr.bf16.mxu0 0
    %7599 = vmatpush1.bf16.msra.mxu0 0
    %7600 = vmatprep.subr.bf16.mxu0 0
    %7601 = vmatpush1.bf16.msra.mxu0 0
    %7602 = vmatprep.subr.bf16.mxu0 0
    %7603 = vmatpush1.bf16.msra.mxu0 0
    %7604 = vmatprep.mubr.bf16.mxu0 0
    %7605 = vmatmul.mubr.bf16.gmra.mrb[0].mxu0 %v7440
    %v7606 = vpop.f32.mrb[0].mxu0
    %v7607 = vadd.f32 %v7522, %v7606
    %v7608 = vpop.f32.mrb[0].mxu0
    %v7609 = vpop.f32.mrb[0].mxu0
    %v7610 = vadd.f32 %v7522, %v7609
    %v7611 = vpop.f32.mrb[0].mxu0
    %7612 = vdwg.mxu0
    %v7614 = vlaneseq
    %v7615 = vshrl.u32 %v7614, 7
    %v7616 = vsub.s32 0, %v7615
    %v7617 = vrot.slane %v7515, %v7616
    %v7635 = vunpack.c.l.b16 %v7466
    %v7636 = vunpack.c.l.b16 %v7467
    %v7637 = vunpack.c.l.b16 %v7468
    %v7638 = vunpack.c.l.b16 %v7469
    %v7639 = vunpack.c.l.b16 %v7470
    %v7640 = vunpack.c.l.b16 %v7471
    %v7641 = vunpack.c.l.b16 %v7472
    %v7642 = vunpack.c.l.b16 %v7473
    %v7643 = vunpack.c.l.b16 %v7474
    %v7644 = vunpack.c.l.b16 %v7475
    %v7645 = vunpack.c.l.b16 %v7476
    %v7646 = vunpack.c.l.b16 %v7477
    %v7647 = vunpack.c.l.b16 %v7478
    %v7648 = vunpack.c.l.b16 %v7479
    %v7649 = vunpack.c.l.b16 %v7480
    %v7650 = vunpack.c.l.b16 %v7481
    %v7651 = vpack.c.b16 %v7636, %v7635
    %v7652 = vpack.c.b16 %v7638, %v7637
    %v7653 = vpack.c.b16 %v7640, %v7639
    %v7654 = vpack.c.b16 %v7642, %v7641
    %v7655 = vpack.c.b16 %v7644, %v7643
    %v7656 = vpack.c.b16 %v7646, %v7645
    %v7657 = vpack.c.b16 %v7648, %v7647
    %v7658 = vpack.c.b16 %v7650, %v7649
    %7667 = vmatprep.subr.bf16.mxu0 0
    %7668 = vmatpush1.bf16.msra.mxu0 %v7651
    %7669 = vmatprep.subr.bf16.mxu0 0
    %7670 = vmatpush1.bf16.msra.mxu0 %v7652
    %7671 = vmatprep.subr.bf16.mxu0 0
    %7672 = vmatpush1.bf16.msra.mxu0 %v7653
    %7673 = vmatprep.subr.bf16.mxu0 0
    %7674 = vmatpush1.bf16.msra.mxu0 %v7654
    %7675 = vmatprep.subr.bf16.mxu0 0
    %7676 = vmatpush1.bf16.msra.mxu0 %v7655
    %7677 = vmatprep.subr.bf16.mxu0 0
    %7678 = vmatpush1.bf16.msra.mxu0 %v7656
    %7679 = vmatprep.subr.bf16.mxu0 0
    %7680 = vmatpush1.bf16.msra.mxu0 %v7657
    %7681 = vmatprep.subr.bf16.mxu0 0
    %7682 = vmatpush1.bf16.msra.mxu0 %v7658
    %7683 = vmatprep.subr.bf16.mxu0 0
    %7684 = vmatpush1.bf16.msra.mxu0 0
    %7685 = vmatprep.subr.bf16.mxu0 0
    %7686 = vmatpush1.bf16.msra.mxu0 0
    %7687 = vmatprep.subr.bf16.mxu0 0
    %7688 = vmatpush1.bf16.msra.mxu0 0
    %7689 = vmatprep.subr.bf16.mxu0 0
    %7690 = vmatpush1.bf16.msra.mxu0 0
    %7691 = vmatprep.subr.bf16.mxu0 0
    %7692 = vmatpush1.bf16.msra.mxu0 0
    %7693 = vmatprep.subr.bf16.mxu0 0
    %7694 = vmatpush1.bf16.msra.mxu0 0
    %7695 = vmatprep.subr.bf16.mxu0 0
    %7696 = vmatpush1.bf16.msra.mxu0 0
    %7697 = vmatprep.subr.bf16.mxu0 0
    %7698 = vmatpush1.bf16.msra.mxu0 0
    %7699 = vmatprep.mubr.bf16.mxu0 0
    %7700 = vmatmul.mubr.bf16.gmra.mrb[0].mxu0 %v7442
    %v7701 = vpop.f32.mrb[0].mxu0
    %v7702 = vadd.f32 %v7617, %v7701
    %v7703 = vpop.f32.mrb[0].mxu0
    %v7704 = vpop.f32.mrb[0].mxu0
    %v7705 = vadd.f32 %v7617, %v7704
    %v7706 = vpop.f32.mrb[0].mxu0
    %7707 = vmatprep.mubr.bf16.mxu0 0
    %7708 = vmatmul.mubr.bf16.gmra.mrb[0].mxu0 %v7443
    %v7709 = vpop.f32.mrb[0].mxu0
    %v7710 = vadd.f32 %v7617, %v7709
    %v7711 = vpop.f32.mrb[0].mxu0
    %v7712 = vpop.f32.mrb[0].mxu0
    %v7713 = vadd.f32 %v7617, %v7712
    %v7714 = vpop.f32.mrb[0].mxu0
    %7715 = vmatprep.mubr.bf16.mxu0 0
    %7716 = vmatmul.mubr.bf16.gmra.mrb[0].mxu0 %v7444
    %v7717 = vpop.f32.mrb[0].mxu0
    %v7718 = vadd.f32 %v7617, %v7717
    %v7719 = vpop.f32.mrb[0].mxu0
    %v7720 = vpop.f32.mrb[0].mxu0
    %v7721 = vadd.f32 %v7617, %v7720
    %v7722 = vpop.f32.mrb[0].mxu0
    %7723 = vmatprep.mubr.bf16.mxu0 0
    %7724 = vmatmul.mubr.bf16.gmra.mrb[0].mxu0 %v7445
    %v7725 = vpop.f32.mrb[0].mxu0
    %v7726 = vadd.f32 %v7617, %v7725
    %v7727 = vpop.f32.mrb[0].mxu0
    %v7728 = vpop.f32.mrb[0].mxu0
    %v7729 = vadd.f32 %v7617, %v7728
    %v7730 = vpop.f32.mrb[0].mxu0
    %7731 = vmatprep.mubr.bf16.mxu0 0
    %7732 = vmatmul.mubr.bf16.gmra.mrb[0].mxu0 %v7446
    %v7733 = vpop.f32.mrb[0].mxu0
    %v7734 = vadd.f32 %v7617, %v7733
    %v7735 = vpop.f32.mrb[0].mxu0
    %v7736 = vpop.f32.mrb[0].mxu0
    %v7737 = vadd.f32 %v7617, %v7736
    %v7738 = vpop.f32.mrb[0].mxu0
    %7739 = vmatprep.mubr.bf16.mxu0 0
    %7740 = vmatmul.mubr.bf16.gmra.mrb[0].mxu0 %v7447
    %v7741 = vpop.f32.mrb[0].mxu0
    %v7742 = vadd.f32 %v7617, %v7741
    %v7743 = vpop.f32.mrb[0].mxu0
    %v7744 = vpop.f32.mrb[0].mxu0
    %v7745 = vadd.f32 %v7617, %v7744
    %v7746 = vpop.f32.mrb[0].mxu0
    %7747 = vmatprep.mubr.bf16.mxu0 0
    %7748 = vmatmul.mubr.bf16.gmra.mrb[0].mxu0 %v7448
    %v7749 = vpop.f32.mrb[0].mxu0
    %v7750 = vadd.f32 %v7617, %v7749
    %v7751 = vpop.f32.mrb[0].mxu0
    %v7752 = vpop.f32.mrb[0].mxu0
    %v7753 = vadd.f32 %v7617, %v7752
    %v7754 = vpop.f32.mrb[0].mxu0
    %7755 = vmatprep.mubr.bf16.mxu0 0
    %7756 = vmatmul.mubr.bf16.gmra.mrb[0].mxu0 %v7449
    %v7757 = vpop.f32.mrb[0].mxu0
    %v7758 = vadd.f32 %v7617, %v7757
    %v7759 = vpop.f32.mrb[0].mxu0
    %v7760 = vpop.f32.mrb[0].mxu0
    %v7761 = vadd.f32 %v7617, %v7760
    %v7762 = vpop.f32.mrb[0].mxu0
    %7763 = vdwg.mxu0
    %v7765 = vlaneseq
    %v7766 = vshrl.u32 %v7765, 7
    %v7767 = vsub.s32 0, %v7766
    %v7768 = vrot.slane %v7516, %v7767
    %v7786 = vunpack.c.l.b16 %v7482
    %v7787 = vunpack.c.l.b16 %v7483
    %v7788 = vunpack.c.l.b16 %v7484
    %v7789 = vunpack.c.l.b16 %v7485
    %v7790 = vunpack.c.l.b16 %v7486
    %v7791 = vunpack.c.l.b16 %v7487
    %v7792 = vunpack.c.l.b16 %v7488
    %v7793 = vunpack.c.l.b16 %v7489
    %v7794 = vunpack.c.l.b16 %v7490
    %v7795 = vunpack.c.l.b16 %v7491
    %v7796 = vunpack.c.l.b16 %v7492
    %v7797 = vunpack.c.l.b16 %v7493
    %v7798 = vunpack.c.l.b16 %v7494
    %v7799 = vunpack.c.l.b16 %v7495
    %v7800 = vunpack.c.l.b16 %v7496
    %v7801 = vunpack.c.l.b16 %v7497
    %v7802 = vpack.c.b16 %v7787, %v7786
    %v7803 = vpack.c.b16 %v7789, %v7788
    %v7804 = vpack.c.b16 %v7791, %v7790
    %v7805 = vpack.c.b16 %v7793, %v7792
    %v7806 = vpack.c.b16 %v7795, %v7794
    %v7807 = vpack.c.b16 %v7797, %v7796
    %v7808 = vpack.c.b16 %v7799, %v7798
    %v7809 = vpack.c.b16 %v7801, %v7800
    %7818 = vmatprep.subr.bf16.mxu0 0
    %7819 = vmatpush1.bf16.msra.mxu0 %v7802
    %7820 = vmatprep.subr.bf16.mxu0 0
    %7821 = vmatpush1.bf16.msra.mxu0 %v7803
    %7822 = vmatprep.subr.bf16.mxu0 0
    %7823 = vmatpush1.bf16.msra.mxu0 %v7804
    %7824 = vmatprep.subr.bf16.mxu0 0
    %7825 = vmatpush1.bf16.msra.mxu0 %v7805
    %7826 = vmatprep.subr.bf16.mxu0 0
    %7827 = vmatpush1.bf16.msra.mxu0 %v7806
    %7828 = vmatprep.subr.bf16.mxu0 0
    %7829 = vmatpush1.bf16.msra.mxu0 %v7807
    %7830 = vmatprep.subr.bf16.mxu0 0
    %7831 = vmatpush1.bf16.msra.mxu0 %v7808
    %7832 = vmatprep.subr.bf16.mxu0 0
    %7833 = vmatpush1.bf16.msra.mxu0 %v7809
    %7834 = vmatprep.subr.bf16.mxu0 0
    %7835 = vmatpush1.bf16.msra.mxu0 0
    %7836 = vmatprep.subr.bf16.mxu0 0
    %7837 = vmatpush1.bf16.msra.mxu0 0
    %7838 = vmatprep.subr.bf16.mxu0 0
    %7839 = vmatpush1.bf16.msra.mxu0 0
    %7840 = vmatprep.subr.bf16.mxu0 0
    %7841 = vmatpush1.bf16.msra.mxu0 0
    %7842 = vmatprep.subr.bf16.mxu0 0
    %7843 = vmatpush1.bf16.msra.mxu0 0
    %7844 = vmatprep.subr.bf16.mxu0 0
    %7845 = vmatpush1.bf16.msra.mxu0 0
    %7846 = vmatprep.subr.bf16.mxu0 0
    %7847 = vmatpush1.bf16.msra.mxu0 0
    %7848 = vmatprep.subr.bf16.mxu0 0
    %7849 = vmatpush1.bf16.msra.mxu0 0
    %7850 = vmatprep.mubr.bf16.mxu0 0
    %7851 = vmatmul.mubr.bf16.gmra.mrb[0].mxu0 %v7442
    %v7852 = vpop.f32.mrb[0].mxu0
    %v7853 = vadd.f32 %v7768, %v7852
    %v7854 = vpop.f32.mrb[0].mxu0
    %v7855 = vpop.f32.mrb[0].mxu0
    %v7856 = vadd.f32 %v7768, %v7855
    %v7857 = vpop.f32.mrb[0].mxu0
    %7858 = vmatprep.mubr.bf16.mxu0 0
    %7859 = vmatmul.mubr.bf16.gmra.mrb[0].mxu0 %v7443
    %v7860 = vpop.f32.mrb[0].mxu0
    %v7861 = vadd.f32 %v7768, %v7860
    %v7862 = vpop.f32.mrb[0].mxu0
    %v7863 = vpop.f32.mrb[0].mxu0
    %v7864 = vadd.f32 %v7768, %v7863
    %v7865 = vpop.f32.mrb[0].mxu0
    %7866 = vmatprep.mubr.bf16.mxu0 0
    %7867 = vmatmul.mubr.bf16.gmra.mrb[0].mxu0 %v7444
    %v7868 = vpop.f32.mrb[0].mxu0
    %v7869 = vadd.f32 %v7768, %v7868
    %v7870 = vpop.f32.mrb[0].mxu0
    %v7871 = vpop.f32.mrb[0].mxu0
    %v7872 = vadd.f32 %v7768, %v7871
    %v7873 = vpop.f32.mrb[0].mxu0
    %7874 = vmatprep.mubr.bf16.mxu0 0
    %7875 = vmatmul.mubr.bf16.gmra.mrb[0].mxu0 %v7445
    %v7876 = vpop.f32.mrb[0].mxu0
    %v7877 = vadd.f32 %v7768, %v7876
    %v7878 = vpop.f32.mrb[0].mxu0
    %v7879 = vpop.f32.mrb[0].mxu0
    %v7880 = vadd.f32 %v7768, %v7879
    %v7881 = vpop.f32.mrb[0].mxu0
    %7882 = vmatprep.mubr.bf16.mxu0 0
    %7883 = vmatmul.mubr.bf16.gmra.mrb[0].mxu0 %v7446
    %v7884 = vpop.f32.mrb[0].mxu0
    %v7885 = vadd.f32 %v7768, %v7884
    %v7886 = vpop.f32.mrb[0].mxu0
    %v7887 = vpop.f32.mrb[0].mxu0
    %v7888 = vadd.f32 %v7768, %v7887
    %v7889 = vpop.f32.mrb[0].mxu0
    %7890 = vmatprep.mubr.bf16.mxu0 0
    %7891 = vmatmul.mubr.bf16.gmra.mrb[0].mxu0 %v7447
    %v7892 = vpop.f32.mrb[0].mxu0
    %v7893 = vadd.f32 %v7768, %v7892
    %v7894 = vpop.f32.mrb[0].mxu0
    %v7895 = vpop.f32.mrb[0].mxu0
    %v7896 = vadd.f32 %v7768, %v7895
    %v7897 = vpop.f32.mrb[0].mxu0
    %7898 = vmatprep.mubr.bf16.mxu0 0
    %7899 = vmatmul.mubr.bf16.gmra.mrb[0].mxu0 %v7448
    %v7900 = vpop.f32.mrb[0].mxu0
    %v7901 = vadd.f32 %v7768, %v7900
    %v7902 = vpop.f32.mrb[0].mxu0
    %v7903 = vpop.f32.mrb[0].mxu0
    %v7904 = vadd.f32 %v7768, %v7903
    %v7905 = vpop.f32.mrb[0].mxu0
    %7906 = vmatprep.mubr.bf16.mxu0 0
    %7907 = vmatmul.mubr.bf16.gmra.mrb[0].mxu0 %v7449
    %v7908 = vpop.f32.mrb[0].mxu0
    %v7909 = vadd.f32 %v7768, %v7908
    %v7910 = vpop.f32.mrb[0].mxu0
    %v7911 = vpop.f32.mrb[0].mxu0
    %v7912 = vadd.f32 %v7768, %v7911
    %v7913 = vpop.f32.mrb[0].mxu0
    %7914 = vdwg.mxu0
    %v7915 = vmul.f32 %v7702, %v7607
    %v7916 = vmul.f32 %v7705, %v7610
    %v7917 = vmul.f32 %v7710, %v7607
    %v7918 = vmul.f32 %v7713, %v7610
    %v7919 = vmul.f32 %v7718, %v7607
    %v7920 = vmul.f32 %v7721, %v7610
    %v7921 = vmul.f32 %v7726, %v7607
    %v7922 = vmul.f32 %v7729, %v7610
    %v7923 = vmul.f32 %v7734, %v7607
    %v7924 = vmul.f32 %v7737, %v7610
    %v7925 = vmul.f32 %v7742, %v7607
    %v7926 = vmul.f32 %v7745, %v7610
    %v7927 = vmul.f32 %v7750, %v7607
    %v7928 = vmul.f32 %v7753, %v7610
    %v7929 = vmul.f32 %v7758, %v7607
    %v7930 = vmul.f32 %v7761, %v7610
    %v7931 = vpack.c.bf16 %v7916, %v7915
    %v7932 = vpack.c.bf16 %v7918, %v7917
    %v7933 = vpack.c.bf16 %v7920, %v7919
    %v7934 = vpack.c.bf16 %v7922, %v7921
    %v7935 = vpack.c.bf16 %v7924, %v7923
    %v7936 = vpack.c.bf16 %v7926, %v7925
    %v7937 = vpack.c.bf16 %v7928, %v7927
    %v7938 = vpack.c.bf16 %v7930, %v7929
    %v7939 = vld [vmem:[%s9] sm:$0xf]
    %v7940 = vld [vmem:[%s9 + $0x4] sm:$0xf]
    %v7941 = vld [vmem:[%s9 + $0x8] sm:$0xf]
    %v7942 = vld [vmem:[%s9 + $0xc] sm:$0xf]
    %v7943 = vld [vmem:[%s9 + $0x10] sm:$0xf]
    %v7944 = vld [vmem:[%s9 + $0x14] sm:$0xf]
    %v7945 = vld [vmem:[%s9 + $0x18] sm:$0xf]
    %v7946 = vld [vmem:[%s9 + $0x1c] sm:$0xf]
    %v7947 = vld [vmem:[%s9 + $0x20] sm:$0xf]
    %v7948 = vld [vmem:[%s9 + $0x24] sm:$0xf]
    %v7949 = vld [vmem:[%s9 + $0x28] sm:$0xf]
    %v7950 = vld [vmem:[%s9 + $0x2c] sm:$0xf]
    %v7951 = vld [vmem:[%s9 + $0x30] sm:$0xf]
    %v7952 = vld [vmem:[%s9 + $0x34] sm:$0xf]
    %v7953 = vld [vmem:[%s9 + $0x38] sm:$0xf]
    %v7954 = vld [vmem:[%s9 + $0x3c] sm:$0xf]
    %v7971 = vunpack.c.l.b16 %v7939
    %v7972 = vunpack.c.l.b16 %v7940
    %v7973 = vunpack.c.l.b16 %v7941
    %v7974 = vunpack.c.l.b16 %v7942
    %v7975 = vunpack.c.l.b16 %v7943
    %v7976 = vunpack.c.l.b16 %v7944
    %v7977 = vunpack.c.l.b16 %v7945
    %v7978 = vunpack.c.l.b16 %v7946
    %v7979 = vunpack.c.l.b16 %v7947
    %v7980 = vunpack.c.l.b16 %v7948
    %v7981 = vunpack.c.l.b16 %v7949
    %v7982 = vunpack.c.l.b16 %v7950
    %v7983 = vunpack.c.l.b16 %v7951
    %v7984 = vunpack.c.l.b16 %v7952
    %v7985 = vunpack.c.l.b16 %v7953
    %v7986 = vunpack.c.l.b16 %v7954
    %v7987 = vpack.c.b16 %v7972, %v7971
    %v7988 = vpack.c.b16 %v7974, %v7973
    %v7989 = vpack.c.b16 %v7976, %v7975
    %v7990 = vpack.c.b16 %v7978, %v7977
    %v7991 = vpack.c.b16 %v7980, %v7979
    %v7992 = vpack.c.b16 %v7982, %v7981
    %v7993 = vpack.c.b16 %v7984, %v7983
    %v7994 = vpack.c.b16 %v7986, %v7985
    %8003 = vmatprep.subr.bf16.mxu0 0
    %8004 = vmatpush1.bf16.msra.mxu0 %v7987
    %8005 = vmatprep.subr.bf16.mxu0 0
    %8006 = vmatpush1.bf16.msra.mxu0 %v7988
    %8007 = vmatprep.subr.bf16.mxu0 0
    %8008 = vmatpush1.bf16.msra.mxu0 %v7989
    %8009 = vmatprep.subr.bf16.mxu0 0
    %8010 = vmatpush1.bf16.msra.mxu0 %v7990
    %8011 = vmatprep.subr.bf16.mxu0 0
    %8012 = vmatpush1.bf16.msra.mxu0 %v7991
    %8013 = vmatprep.subr.bf16.mxu0 0
    %8014 = vmatpush1.bf16.msra.mxu0 %v7992
    %8015 = vmatprep.subr.bf16.mxu0 0
    %8016 = vmatpush1.bf16.msra.mxu0 %v7993
    %8017 = vmatprep.subr.bf16.mxu0 0
    %8018 = vmatpush1.bf16.msra.mxu0 %v7994
    %8019 = vmatprep.subr.bf16.mxu0 0
    %8020 = vmatpush1.bf16.msra.mxu0 0
    %8021 = vmatprep.subr.bf16.mxu0 0
    %8022 = vmatpush1.bf16.msra.mxu0 0
    %8023 = vmatprep.subr.bf16.mxu0 0
    %8024 = vmatpush1.bf16.msra.mxu0 0
    %8025 = vmatprep.subr.bf16.mxu0 0
    %8026 = vmatpush1.bf16.msra.mxu0 0
    %8027 = vmatprep.subr.bf16.mxu0 0
    %8028 = vmatpush1.bf16.msra.mxu0 0
    %8029 = vmatprep.subr.bf16.mxu0 0
    %8030 = vmatpush1.bf16.msra.mxu0 0
    %8031 = vmatprep.subr.bf16.mxu0 0
    %8032 = vmatpush1.bf16.msra.mxu0 0
    %8033 = vmatprep.subr.bf16.mxu0 0
    %8034 = vmatpush1.bf16.msra.mxu0 0
    %8035 = vmatprep.mubr.bf16.mxu0 0
    %8036 = vmatmul.mubr.bf16.gmra.mrb[0].mxu0 %v7931
    %v8037 = vpop.f32.mrb[0].mxu0
    %v8038 = vadd.f32 0.0, %v8037
    %v8039 = vpop.f32.mrb[0].mxu0
    %v8040 = vpop.f32.mrb[0].mxu0
    %v8041 = vadd.f32 0.0, %v8040
    %v8042 = vpop.f32.mrb[0].mxu0
    %8043 = vmatprep.mubr.bf16.mxu0 0
    %8044 = vmatmul.mubr.bf16.gmra.mrb[0].mxu0 %v7932
    %v8045 = vpop.f32.mrb[0].mxu0
    %v8046 = vadd.f32 0.0, %v8045
    %v8047 = vpop.f32.mrb[0].mxu0
    %v8048 = vpop.f32.mrb[0].mxu0
    %v8049 = vadd.f32 0.0, %v8048
    %v8050 = vpop.f32.mrb[0].mxu0
    %8051 = vmatprep.mubr.bf16.mxu0 0
    %8052 = vmatmul.mubr.bf16.gmra.mrb[0].mxu0 %v7933
    %v8053 = vpop.f32.mrb[0].mxu0
    %v8054 = vadd.f32 0.0, %v8053
    %v8055 = vpop.f32.mrb[0].mxu0
    %v8056 = vpop.f32.mrb[0].mxu0
    %v8057 = vadd.f32 0.0, %v8056
    %v8058 = vpop.f32.mrb[0].mxu0
    %8059 = vmatprep.mubr.bf16.mxu0 0
    %8060 = vmatmul.mubr.bf16.gmra.mrb[0].mxu0 %v7934
    %v8061 = vpop.f32.mrb[0].mxu0
    %v8062 = vadd.f32 0.0, %v8061
    %v8063 = vpop.f32.mrb[0].mxu0
    %v8064 = vpop.f32.mrb[0].mxu0
    %v8065 = vadd.f32 0.0, %v8064
    %v8066 = vpop.f32.mrb[0].mxu0
    %8067 = vmatprep.mubr.bf16.mxu0 0
    %8068 = vmatmul.mubr.bf16.gmra.mrb[0].mxu0 %v7935
    %v8069 = vpop.f32.mrb[0].mxu0
    %v8070 = vadd.f32 0.0, %v8069
    %v8071 = vpop.f32.mrb[0].mxu0
    %v8072 = vpop.f32.mrb[0].mxu0
    %v8073 = vadd.f32 0.0, %v8072
    %v8074 = vpop.f32.mrb[0].mxu0
    %8075 = vmatprep.mubr.bf16.mxu0 0
    %8076 = vmatmul.mubr.bf16.gmra.mrb[0].mxu0 %v7936
    %v8077 = vpop.f32.mrb[0].mxu0
    %v8078 = vadd.f32 0.0, %v8077
    %v8079 = vpop.f32.mrb[0].mxu0
    %v8080 = vpop.f32.mrb[0].mxu0
    %v8081 = vadd.f32 0.0, %v8080
    %v8082 = vpop.f32.mrb[0].mxu0
    %8083 = vmatprep.mubr.bf16.mxu0 0
    %8084 = vmatmul.mubr.bf16.gmra.mrb[0].mxu0 %v7937
    %v8085 = vpop.f32.mrb[0].mxu0
    %v8086 = vadd.f32 0.0, %v8085
    %v8087 = vpop.f32.mrb[0].mxu0
    %v8088 = vpop.f32.mrb[0].mxu0
    %v8089 = vadd.f32 0.0, %v8088
    %v8090 = vpop.f32.mrb[0].mxu0
    %8091 = vmatprep.mubr.bf16.mxu0 0
    %8092 = vmatmul.mubr.bf16.gmra.mrb[0].mxu0 %v7938
    %v8093 = vpop.f32.mrb[0].mxu0
    %v8094 = vadd.f32 0.0, %v8093
    %v8095 = vpop.f32.mrb[0].mxu0
    %v8096 = vpop.f32.mrb[0].mxu0
    %v8097 = vadd.f32 0.0, %v8096
    %v8098 = vpop.f32.mrb[0].mxu0
    %8099 = vdwg.mxu0
    %v8100 = vmul.f32 %v8038, 0.25
    %v8101 = vmul.f32 %v8041, 0.25
    %v8102 = vmul.f32 %v8046, 0.25
    %v8103 = vmul.f32 %v8049, 0.25
    %v8104 = vmul.f32 %v8054, 0.25
    %v8105 = vmul.f32 %v8057, 0.25
    %v8106 = vmul.f32 %v8062, 0.25
    %v8107 = vmul.f32 %v8065, 0.25
    %v8108 = vmul.f32 %v8070, 0.25
    %v8109 = vmul.f32 %v8073, 0.25
    %v8110 = vmul.f32 %v8078, 0.25
    %v8111 = vmul.f32 %v8081, 0.25
    %v8112 = vmul.f32 %v8086, 0.25
    %v8113 = vmul.f32 %v8089, 0.25
    %v8114 = vmul.f32 %v8094, 0.25
    %v8115 = vmul.f32 %v8097, 0.25
    %vm8116 = vcmask 64512
    %v8117 = vsel %vm8116, %v8100, -inf
    %v8118 = vsel %vm8116, %v8102, -inf
    %v8119 = vsel %vm8116, %v8104, -inf
    %v8120 = vmax.f32 %v8117, %v8119
    %v8121 = vsel %vm8116, %v8106, -inf
    %v8122 = vmax.f32 %v8118, %v8121
    %v8123 = vsel %vm8116, %v8108, -inf
    %v8124 = vmax.f32 %v8120, %v8123
    %v8125 = vsel %vm8116, %v8110, -inf
    %v8126 = vmax.f32 %v8122, %v8125
    %v8127 = vsel %vm8116, %v8112, -inf
    %v8128 = vmax.f32 %v8124, %v8127
    %v8129 = vsel %vm8116, %v8114, -inf
    %v8130 = vmax.f32 %v8126, %v8129
    %v8131 = vmax.f32 %v8128, %v8130
    %v8132 = vsel %vm8116, %v8101, -inf
    %v8133 = vsel %vm8116, %v8103, -inf
    %v8134 = vsel %vm8116, %v8105, -inf
    %v8135 = vmax.f32 %v8132, %v8134
    %v8136 = vsel %vm8116, %v8107, -inf
    %v8137 = vmax.f32 %v8133, %v8136
    %v8138 = vsel %vm8116, %v8109, -inf
    %v8139 = vmax.f32 %v8135, %v8138
    %v8140 = vsel %vm8116, %v8111, -inf
    %v8141 = vmax.f32 %v8137, %v8140
    %v8142 = vsel %vm8116, %v8113, -inf
    %v8143 = vmax.f32 %v8139, %v8142
    %v8144 = vsel %vm8116, %v8115, -inf
    %v8145 = vmax.f32 %v8141, %v8144
    %v8146 = vmax.f32 %v8143, %v8145
    %v8147 = vsub.f32 %v8100, %v8131
    %v8148 = vsub.f32 %v8101, %v8146
    %v8149 = vsub.f32 %v8102, %v8131
    %v8150 = vsub.f32 %v8103, %v8146
    %v8151 = vsub.f32 %v8104, %v8131
    %v8152 = vsub.f32 %v8105, %v8146
    %v8153 = vsub.f32 %v8106, %v8131
    %v8154 = vsub.f32 %v8107, %v8146
    %v8155 = vsub.f32 %v8108, %v8131
    %v8156 = vsub.f32 %v8109, %v8146
    %v8157 = vsub.f32 %v8110, %v8131
    %v8158 = vsub.f32 %v8111, %v8146
    %v8159 = vsub.f32 %v8112, %v8131
    %v8160 = vsub.f32 %v8113, %v8146
    %v8161 = vsub.f32 %v8114, %v8131
    %v8162 = vsub.f32 %v8115, %v8146
    %v8163 = vmul.f32 %v8147, 1.442695
    %v8164 = vpow.pop %v8163
    %v8165 = vmul.f32 %v8148, 1.442695
    %v8166 = vpow.pop %v8165
    %v8167 = vmul.f32 %v8149, 1.442695
    %v8168 = vpow.pop %v8167
    %v8169 = vmul.f32 %v8150, 1.442695
    %v8170 = vpow.pop %v8169
    %v8171 = vmul.f32 %v8151, 1.442695
    %v8172 = vpow.pop %v8171
    %v8173 = vmul.f32 %v8152, 1.442695
    %v8174 = vpow.pop %v8173
    %v8175 = vmul.f32 %v8153, 1.442695
    %v8176 = vpow.pop %v8175
    %v8177 = vmul.f32 %v8154, 1.442695
    %v8178 = vpow.pop %v8177
    %v8179 = vmul.f32 %v8155, 1.442695
    %v8180 = vpow.pop %v8179
    %v8181 = vmul.f32 %v8156, 1.442695
    %v8182 = vpow.pop %v8181
    %v8183 = vmul.f32 %v8157, 1.442695
    %v8184 = vpow.pop %v8183
    %v8185 = vmul.f32 %v8158, 1.442695
    %v8186 = vpow.pop %v8185
    %v8187 = vmul.f32 %v8159, 1.442695
    %v8188 = vpow.pop %v8187
    %v8189 = vmul.f32 %v8160, 1.442695
    %v8190 = vpow.pop %v8189
    %v8191 = vmul.f32 %v8161, 1.442695
    %v8192 = vpow.pop %v8191
    %v8193 = vmul.f32 %v8162, 1.442695
    %v8194 = vpow.pop %v8193
    %v8195 = vsel %vm8116, %v8164, 0.0
    %v8196 = vsel %vm8116, %v8168, 0.0
    %v8197 = vadd.f32 %v8195, %v8196
    %v8198 = vsel %vm8116, %v8172, 0.0
    %v8199 = vadd.f32 %v8197, %v8198
    %v8200 = vsel %vm8116, %v8176, 0.0
    %v8201 = vadd.f32 %v8199, %v8200
    %v8202 = vsel %vm8116, %v8180, 0.0
    %v8203 = vadd.f32 %v8201, %v8202
    %v8204 = vsel %vm8116, %v8184, 0.0
    %v8205 = vadd.f32 %v8203, %v8204
    %v8206 = vsel %vm8116, %v8188, 0.0
    %v8207 = vadd.f32 %v8205, %v8206
    %v8208 = vsel %vm8116, %v8192, 0.0
    %v8209 = vadd.f32 %v8207, %v8208
    %v8210 = vsel %vm8116, %v8166, 0.0
    %v8211 = vsel %vm8116, %v8170, 0.0
    %v8212 = vadd.f32 %v8210, %v8211
    %v8213 = vsel %vm8116, %v8174, 0.0
    %v8214 = vadd.f32 %v8212, %v8213
    %v8215 = vsel %vm8116, %v8178, 0.0
    %v8216 = vadd.f32 %v8214, %v8215
    %v8217 = vsel %vm8116, %v8182, 0.0
    %v8218 = vadd.f32 %v8216, %v8217
    %v8219 = vsel %vm8116, %v8186, 0.0
    %v8220 = vadd.f32 %v8218, %v8219
    %v8221 = vsel %vm8116, %v8190, 0.0
    %v8222 = vadd.f32 %v8220, %v8221
    %v8223 = vsel %vm8116, %v8194, 0.0
    %v8224 = vadd.f32 %v8222, %v8223
    %v8225 = vrcp.pop %v8209
    %v8226 = vmul.f32 %v8164, %v8225
    %v8227 = vrcp.pop %v8224
    %v8228 = vmul.f32 %v8166, %v8227
    %v8229 = vmul.f32 %v8168, %v8225
    %v8230 = vmul.f32 %v8170, %v8227
    %v8231 = vmul.f32 %v8172, %v8225
    %v8232 = vmul.f32 %v8174, %v8227
    %v8233 = vmul.f32 %v8176, %v8225
    %v8234 = vmul.f32 %v8178, %v8227
    %v8235 = vmul.f32 %v8180, %v8225
    %v8236 = vmul.f32 %v8182, %v8227
    %v8237 = vmul.f32 %v8184, %v8225
    %v8238 = vmul.f32 %v8186, %v8227
    %v8239 = vmul.f32 %v8188, %v8225
    %v8240 = vmul.f32 %v8190, %v8227
    %v8241 = vmul.f32 %v8192, %v8225
    %v8242 = vmul.f32 %v8194, %v8227
    %v8243 = vpack.c.bf16 %v8228, %v8226
    %v8244 = vpack.c.bf16 %v8230, %v8229
    %v8245 = vpack.c.bf16 %v8232, %v8231
    %v8246 = vpack.c.bf16 %v8234, %v8233
    %v8247 = vpack.c.bf16 %v8236, %v8235
    %v8248 = vpack.c.bf16 %v8238, %v8237
    %v8249 = vpack.c.bf16 %v8240, %v8239
    %v8250 = vpack.c.bf16 %v8242, %v8241
    %v8251 = vld [vmem:[#allocation13] sm:$0xf]
    %v8253 = vsel %vm8116, %v8243, 0
    %v8256 = vsel %vm8116, %v8244, 0
    %v8259 = vsel %vm8116, %v8245, 0
    %v8262 = vsel %vm8116, %v8246, 0
    %v8265 = vsel %vm8116, %v8247, 0
    %v8268 = vsel %vm8116, %v8248, 0
    %v8271 = vsel %vm8116, %v8249, 0
    %v8274 = vsel %vm8116, %v8250, 0
    %vm8276 = vcmask 1043456
    %v8278 = vsel %vm8276, %v8251, 0
    %8280 = vmatprep.subr.bf16.mxu0 0
    %8281 = vmatpush1.bf16.msra.mxu0 %v8278
    %8282 = vmatprep.subr.bf16.mxu0 0
    %8283 = vmatpush1.bf16.msra.mxu0 0
    %8284 = vmatprep.subr.bf16.mxu0 0
    %8285 = vmatpush1.bf16.msra.mxu0 0
    %8286 = vmatprep.subr.bf16.mxu0 0
    %8287 = vmatpush1.bf16.msra.mxu0 0
    %8288 = vmatprep.subr.bf16.mxu0 0
    %8289 = vmatpush1.bf16.msra.mxu0 0
    %8290 = vmatprep.subr.bf16.mxu0 0
    %8291 = vmatpush1.bf16.msra.mxu0 0
    %8292 = vmatprep.subr.bf16.mxu0 0
    %8293 = vmatpush1.bf16.msra.mxu0 0
    %8294 = vmatprep.subr.bf16.mxu0 0
    %8295 = vmatpush1.bf16.msra.mxu0 0
    %8296 = vmatprep.subr.bf16.mxu0 0
    %8297 = vmatpush1.bf16.msra.mxu0 0
    %8298 = vmatprep.subr.bf16.mxu0 0
    %8299 = vmatpush1.bf16.msra.mxu0 0
    %8300 = vmatprep.subr.bf16.mxu0 0
    %8301 = vmatpush1.bf16.msra.mxu0 0
    %8302 = vmatprep.subr.bf16.mxu0 0
    %8303 = vmatpush1.bf16.msra.mxu0 0
    %8304 = vmatprep.subr.bf16.mxu0 0
    %8305 = vmatpush1.bf16.msra.mxu0 0
    %8306 = vmatprep.subr.bf16.mxu0 0
    %8307 = vmatpush1.bf16.msra.mxu0 0
    %8308 = vmatprep.subr.bf16.mxu0 0
    %8309 = vmatpush1.bf16.msra.mxu0 0
    %8310 = vmatprep.subr.bf16.mxu0 0
    %8311 = vmatpush1.bf16.msra.mxu0 0
    %8312 = vmatprep.mubr.bf16.mxu0 0
    %8313 = vmatmul.mubr.bf16.gmra.mrb[0].mxu0 %v8253
    %v8314 = vpop.f32.mrb[0].mxu0
    %v8315 = vadd.f32 0.0, %v8314
    %v8316 = vpop.f32.mrb[0].mxu0
    %v8317 = vpop.f32.mrb[0].mxu0
    %v8318 = vadd.f32 0.0, %v8317
    %v8319 = vpop.f32.mrb[0].mxu0
    %8320 = vmatprep.mubr.bf16.mxu0 0
    %8321 = vmatmul.mubr.bf16.gmra.mrb[0].mxu0 %v8256
    %v8322 = vpop.f32.mrb[0].mxu0
    %v8323 = vadd.f32 0.0, %v8322
    %v8324 = vpop.f32.mrb[0].mxu0
    %v8325 = vpop.f32.mrb[0].mxu0
    %v8326 = vadd.f32 0.0, %v8325
    %v8327 = vpop.f32.mrb[0].mxu0
    %8328 = vmatprep.mubr.bf16.mxu0 0
    %8329 = vmatmul.mubr.bf16.gmra.mrb[0].mxu0 %v8259
    %v8330 = vpop.f32.mrb[0].mxu0
    %v8331 = vadd.f32 0.0, %v8330
    %v8332 = vpop.f32.mrb[0].mxu0
    %v8333 = vpop.f32.mrb[0].mxu0
    %v8334 = vadd.f32 0.0, %v8333
    %v8335 = vpop.f32.mrb[0].mxu0
    %8336 = vmatprep.mubr.bf16.mxu0 0
    %8337 = vmatmul.mubr.bf16.gmra.mrb[0].mxu0 %v8262
    %v8338 = vpop.f32.mrb[0].mxu0
    %v8339 = vadd.f32 0.0, %v8338
    %v8340 = vpop.f32.mrb[0].mxu0
    %v8341 = vpop.f32.mrb[0].mxu0
    %v8342 = vadd.f32 0.0, %v8341
    %v8343 = vpop.f32.mrb[0].mxu0
    %8344 = vmatprep.mubr.bf16.mxu0 0
    %8345 = vmatmul.mubr.bf16.gmra.mrb[0].mxu0 %v8265
    %v8346 = vpop.f32.mrb[0].mxu0
    %v8347 = vadd.f32 0.0, %v8346
    %v8348 = vpop.f32.mrb[0].mxu0
    %v8349 = vpop.f32.mrb[0].mxu0
    %v8350 = vadd.f32 0.0, %v8349
    %v8351 = vpop.f32.mrb[0].mxu0
    %8352 = vmatprep.mubr.bf16.mxu0 0
    %8353 = vmatmul.mubr.bf16.gmra.mrb[0].mxu0 %v8268
    %v8354 = vpop.f32.mrb[0].mxu0
    %v8355 = vadd.f32 0.0, %v8354
    %v8356 = vpop.f32.mrb[0].mxu0
    %v8357 = vpop.f32.mrb[0].mxu0
    %v8358 = vadd.f32 0.0, %v8357
    %v8359 = vpop.f32.mrb[0].mxu0
    %8360 = vmatprep.mubr.bf16.mxu0 0
    %8361 = vmatmul.mubr.bf16.gmra.mrb[0].mxu0 %v8271
    %v8362 = vpop.f32.mrb[0].mxu0
    %v8363 = vadd.f32 0.0, %v8362
    %v8364 = vpop.f32.mrb[0].mxu0
    %v8365 = vpop.f32.mrb[0].mxu0
    %v8366 = vadd.f32 0.0, %v8365
    %v8367 = vpop.f32.mrb[0].mxu0
    %8368 = vmatprep.mubr.bf16.mxu0 0
    %8369 = vmatmul.mubr.bf16.gmra.mrb[0].mxu0 %v8274
    %v8370 = vpop.f32.mrb[0].mxu0
    %v8371 = vadd.f32 0.0, %v8370
    %v8372 = vpop.f32.mrb[0].mxu0
    %v8373 = vpop.f32.mrb[0].mxu0
    %v8374 = vadd.f32 0.0, %v8373
    %v8375 = vpop.f32.mrb[0].mxu0
    %8376 = vdwg.mxu0
    %v8377 = vmul.f32 %v8315, %v7853
    %v8378 = vmul.f32 %v8318, %v7856
    %v8379 = vmul.f32 %v8323, %v7861
    %v8380 = vmul.f32 %v8326, %v7864
    %v8381 = vmul.f32 %v8331, %v7869
    %v8382 = vmul.f32 %v8334, %v7872
    %v8383 = vmul.f32 %v8339, %v7877
    %v8384 = vmul.f32 %v8342, %v7880
    %v8385 = vmul.f32 %v8347, %v7885
    %v8386 = vmul.f32 %v8350, %v7888
    %v8387 = vmul.f32 %v8355, %v7893
    %v8388 = vmul.f32 %v8358, %v7896
    %v8389 = vmul.f32 %v8363, %v7901
    %v8390 = vmul.f32 %v8366, %v7904
    %v8391 = vmul.f32 %v8371, %v7909
    %v8392 = vmul.f32 %v8374, %v7912
    %v8393 = vadd.f32 %v8377, %v8379
    %v8394 = vadd.f32 %v8393, %v8381
    %v8395 = vadd.f32 %v8394, %v8383
    %v8396 = vadd.f32 %v8395, %v8385
    %v8397 = vadd.f32 %v8396, %v8387
    %v8398 = vadd.f32 %v8397, %v8389
    %v8399 = vadd.f32 %v8398, %v8391
    %v8400 = vadd.f32 %v8378, %v8380
    %v8401 = vadd.f32 %v8400, %v8382
    %v8402 = vadd.f32 %v8401, %v8384
    %v8403 = vadd.f32 %v8402, %v8386
    %v8404 = vadd.f32 %v8403, %v8388
    %v8405 = vadd.f32 %v8404, %v8390
    %v8406 = vadd.f32 %v8405, %v8392
    %v8407 = vpack.c.bf16 %v8406, %v8399
    %v8409 = vlaneseq
    %v8410 = vshrl.u32 %v8409, 7
    %v8411 = vsub.s32 0, %v8410
    %v8412 = vrot.slane %v7517, %v8411
    %v8430 = vunpack.c.l.b16 %v7498
    %v8431 = vunpack.c.l.b16 %v7499
    %v8432 = vunpack.c.l.b16 %v7500
    %v8433 = vunpack.c.l.b16 %v7501
    %v8434 = vunpack.c.l.b16 %v7502
    %v8435 = vunpack.c.l.b16 %v7503
    %v8436 = vunpack.c.l.b16 %v7504
    %v8437 = vunpack.c.l.b16 %v7505
    %v8438 = vunpack.c.l.b16 %v7506
    %v8439 = vunpack.c.l.b16 %v7507
    %v8440 = vunpack.c.l.b16 %v7508
    %v8441 = vunpack.c.l.b16 %v7509
    %v8442 = vunpack.c.l.b16 %v7510
    %v8443 = vunpack.c.l.b16 %v7511
    %v8444 = vunpack.c.l.b16 %v7512
    %v8445 = vunpack.c.l.b16 %v7513
    %v8446 = vpack.c.b16 %v8431, %v8430
    %v8447 = vpack.c.b16 %v8433, %v8432
    %v8448 = vpack.c.b16 %v8435, %v8434
    %v8449 = vpack.c.b16 %v8437, %v8436
    %v8450 = vpack.c.b16 %v8439, %v8438
    %v8451 = vpack.c.b16 %v8441, %v8440
    %v8452 = vpack.c.b16 %v8443, %v8442
    %v8453 = vpack.c.b16 %v8445, %v8444
    %8462 = vmatprep.subr.bf16.mxu0 0
    %8463 = vmatpush1.bf16.msra.mxu0 %v8446
    %8464 = vmatprep.subr.bf16.mxu0 0
    %8465 = vmatpush1.bf16.msra.mxu0 %v8447
    %8466 = vmatprep.subr.bf16.mxu0 0
    %8467 = vmatpush1.bf16.msra.mxu0 %v8448
    %8468 = vmatprep.subr.bf16.mxu0 0
    %8469 = vmatpush1.bf16.msra.mxu0 %v8449
    %8470 = vmatprep.subr.bf16.mxu0 0
    %8471 = vmatpush1.bf16.msra.mxu0 %v8450
    %8472 = vmatprep.subr.bf16.mxu0 0
    %8473 = vmatpush1.bf16.msra.mxu0 %v8451
    %8474 = vmatprep.subr.bf16.mxu0 0
    %8475 = vmatpush1.bf16.msra.mxu0 %v8452
    %8476 = vmatprep.subr.bf16.mxu0 0
    %8477 = vmatpush1.bf16.msra.mxu0 %v8453
    %8478 = vmatprep.subr.bf16.mxu0 0
    %8479 = vmatpush1.bf16.msra.mxu0 0
    %8480 = vmatprep.subr.bf16.mxu0 0
    %8481 = vmatpush1.bf16.msra.mxu0 0
    %8482 = vmatprep.subr.bf16.mxu0 0
    %8483 = vmatpush1.bf16.msra.mxu0 0
    %8484 = vmatprep.subr.bf16.mxu0 0
    %8485 = vmatpush1.bf16.msra.mxu0 0
    %8486 = vmatprep.subr.bf16.mxu0 0
    %8487 = vmatpush1.bf16.msra.mxu0 0
    %8488 = vmatprep.subr.bf16.mxu0 0
    %8489 = vmatpush1.bf16.msra.mxu0 0
    %8490 = vmatprep.subr.bf16.mxu0 0
    %8491 = vmatpush1.bf16.msra.mxu0 0
    %8492 = vmatprep.subr.bf16.mxu0 0
    %8493 = vmatpush1.bf16.msra.mxu0 0
    %8494 = vmatprep.mubr.bf16.mxu0 0
    %8495 = vmatmul.mubr.bf16.gmra.mrb[0].mxu0 %v8407
    %v8496 = vpop.f32.mrb[0].mxu0
    %v8497 = vadd.f32 %v8412, %v8496
    %v8498 = vpop.f32.mrb[0].mxu0
    %v8499 = vpop.f32.mrb[0].mxu0
    %v8500 = vadd.f32 %v8412, %v8499
    %v8501 = vpop.f32.mrb[0].mxu0
    %8502 = vdwg.mxu0
    %v8503 = vld [vmem:[%s1] sm:$0xff]
    %v8504 = vld [vmem:[%s1 + $0x8] sm:$0xff]
    %v8505 = vpack.c.bf16 %v8504, %v8503
    %v8506 = vld [vmem:[#allocation15] sm:$0xf]
    %v8507 = vld [vmem:[#allocation15 + $0x4] sm:$0x1]
    %v8508 = vld [vmem:[%s12] sm:$0x1]
    %v8510 = vlaneseq
    %v8511 = vshrl.u32 %v8510, 7
    %v8512 = vsub.s32 0, %v8511
    %v8513 = vrot.slane %v8508, %v8512
    %v8517 = vunpack.c.l.b16 %v8506
    %v8518 = vunpack.c.l.b16 %v8507
    %v8519 = vpack.c.b16 %v8518, %v8517
    %v8521 = vsel %vm226, %v8505, 0
    %v8524 = vsel %vm251, %v8519, 0
    %8526 = vmatprep.subr.bf16.mxu0 0
    %8527 = vmatpush1.bf16.msra.mxu0 %v8524
    %8528 = vmatprep.subr.bf16.mxu0 0
    %8529 = vmatpush1.bf16.msra.mxu0 0
    %8530 = vmatprep.subr.bf16.mxu0 0
    %8531 = vmatpush1.bf16.msra.mxu0 0
    %8532 = vmatprep.subr.bf16.mxu0 0
    %8533 = vmatpush1.bf16.msra.mxu0 0
    %8534 = vmatprep.subr.bf16.mxu0 0
    %8535 = vmatpush1.bf16.msra.mxu0 0
    %8536 = vmatprep.subr.bf16.mxu0 0
    %8537 = vmatpush1.bf16.msra.mxu0 0
    %8538 = vmatprep.subr.bf16.mxu0 0
    %8539 = vmatpush1.bf16.msra.mxu0 0
    %8540 = vmatprep.subr.bf16.mxu0 0
    %8541 = vmatpush1.bf16.msra.mxu0 0
    %8542 = vmatprep.subr.bf16.mxu0 0
    %8543 = vmatpush1.bf16.msra.mxu0 0
    %8544 = vmatprep.subr.bf16.mxu0 0
    %8545 = vmatpush1.bf16.msra.mxu0 0
    %8546 = vmatprep.subr.bf16.mxu0 0
    %8547 = vmatpush1.bf16.msra.mxu0 0
    %8548 = vmatprep.subr.bf16.mxu0 0
    %8549 = vmatpush1.bf16.msra.mxu0 0
    %8550 = vmatprep.subr.bf16.mxu0 0
    %8551 = vmatpush1.bf16.msra.mxu0 0
    %8552 = vmatprep.subr.bf16.mxu0 0
    %8553 = vmatpush1.bf16.msra.mxu0 0
    %8554 = vmatprep.subr.bf16.mxu0 0
    %8555 = vmatpush1.bf16.msra.mxu0 0
    %8556 = vmatprep.subr.bf16.mxu0 0
    %8557 = vmatpush1.bf16.msra.mxu0 0
    %8558 = vmatprep.mubr.bf16.mxu0 0
    %8559 = vmatmul.mubr.bf16.gmra.mrb[0].mxu0 %v8521
    %v8560 = vpop.f32.mrb[0].mxu0
    %v8561 = vadd.f32 %v8513, %v8560
    %v8562 = vpop.f32.mrb[0].mxu0
    %v8563 = vpop.f32.mrb[0].mxu0
    %v8564 = vadd.f32 %v8513, %v8563
    %v8565 = vpop.f32.mrb[0].mxu0
    %8566 = vdwg.mxu0
    %v8567 = vmax.f32 %v8561, 0.0
    %v8568 = vmax.f32 %v8564, 0.0
    %v8569 = vpack.c.bf16 %v8568, %v8567
    %v8570 = vld [vmem:[%s13] sm:$0xf]
    %v8571 = vld [vmem:[%s13 + $0x4] sm:$0xf]
    %v8572 = vld [vmem:[%s13 + $0x8] sm:$0xf]
    %v8573 = vld [vmem:[%s13 + $0xc] sm:$0xf]
    %v8574 = vld [vmem:[%s13 + $0x10] sm:$0xf]
    %v8575 = vld [vmem:[%s13 + $0x14] sm:$0xf]
    %v8576 = vld [vmem:[%s13 + $0x18] sm:$0xf]
    %v8577 = vld [vmem:[%s13 + $0x1c] sm:$0xf]
    %v8578 = vld [vmem:[%s14] sm:$0x1]
    %v8580 = vlaneseq
    %v8581 = vshrl.u32 %v8580, 7
    %v8582 = vsub.s32 0, %v8581
    %v8583 = vrot.slane %v8578, %v8582
    %v8593 = vunpack.c.l.b16 %v8570
    %v8594 = vunpack.c.l.b16 %v8571
    %v8595 = vunpack.c.l.b16 %v8572
    %v8596 = vunpack.c.l.b16 %v8573
    %v8597 = vunpack.c.l.b16 %v8574
    %v8598 = vunpack.c.l.b16 %v8575
    %v8599 = vunpack.c.l.b16 %v8576
    %v8600 = vunpack.c.l.b16 %v8577
    %v8601 = vpack.c.b16 %v8594, %v8593
    %v8602 = vpack.c.b16 %v8596, %v8595
    %v8603 = vpack.c.b16 %v8598, %v8597
    %v8604 = vpack.c.b16 %v8600, %v8599
    %vm8609 = vcmask 523264
    %v8611 = vsel %vm8609, %v8569, 0
    %8613 = vmatprep.subr.bf16.mxu0 0
    %8614 = vmatpush1.bf16.msra.mxu0 %v8601
    %8615 = vmatprep.subr.bf16.mxu0 0
    %8616 = vmatpush1.bf16.msra.mxu0 %v8602
    %8617 = vmatprep.subr.bf16.mxu0 0
    %8618 = vmatpush1.bf16.msra.mxu0 %v8603
    %8619 = vmatprep.subr.bf16.mxu0 0
    %8620 = vmatpush1.bf16.msra.mxu0 %v8604
    %8621 = vmatprep.subr.bf16.mxu0 0
    %8622 = vmatpush1.bf16.msra.mxu0 0
    %8623 = vmatprep.subr.bf16.mxu0 0
    %8624 = vmatpush1.bf16.msra.mxu0 0
    %8625 = vmatprep.subr.bf16.mxu0 0
    %8626 = vmatpush1.bf16.msra.mxu0 0
    %8627 = vmatprep.subr.bf16.mxu0 0
    %8628 = vmatpush1.bf16.msra.mxu0 0
    %8629 = vmatprep.subr.bf16.mxu0 0
    %8630 = vmatpush1.bf16.msra.mxu0 0
    %8631 = vmatprep.subr.bf16.mxu0 0
    %8632 = vmatpush1.bf16.msra.mxu0 0
    %8633 = vmatprep.subr.bf16.mxu0 0
    %8634 = vmatpush1.bf16.msra.mxu0 0
    %8635 = vmatprep.subr.bf16.mxu0 0
    %8636 = vmatpush1.bf16.msra.mxu0 0
    %8637 = vmatprep.subr.bf16.mxu0 0
    %8638 = vmatpush1.bf16.msra.mxu0 0
    %8639 = vmatprep.subr.bf16.mxu0 0
    %8640 = vmatpush1.bf16.msra.mxu0 0
    %8641 = vmatprep.subr.bf16.mxu0 0
    %8642 = vmatpush1.bf16.msra.mxu0 0
    %8643 = vmatprep.subr.bf16.mxu0 0
    %8644 = vmatpush1.bf16.msra.mxu0 0
    %8645 = vmatprep.mubr.bf16.mxu0 0
    %8646 = vmatmul.mubr.bf16.gmra.mrb[0].mxu0 %v8611
    %v8647 = vpop.f32.mrb[0].mxu0
    %v8648 = vadd.f32 %v8583, %v8647
    %v8649 = vpop.f32.mrb[0].mxu0
    %v8650 = vpop.f32.mrb[0].mxu0
    %v8651 = vadd.f32 %v8583, %v8650
    %v8652 = vpop.f32.mrb[0].mxu0
    %8653 = vdwg.mxu0
    %v8654 = vmax.f32 %v8648, 0.0
    %v8655 = vmax.f32 %v8651, 0.0
    %v8656 = vpack.c.bf16 %v8500, %v8497
    %v8657 = vld [vmem:[%s15] sm:$0xf]
    %v8658 = vld [vmem:[%s15 + $0x4] sm:$0xf]
    %v8659 = vld [vmem:[%s15 + $0x8] sm:$0xf]
    %v8660 = vld [vmem:[%s15 + $0xc] sm:$0xf]
    %v8661 = vld [vmem:[%s15 + $0x10] sm:$0xf]
    %v8662 = vld [vmem:[%s15 + $0x14] sm:$0xf]
    %v8663 = vld [vmem:[%s15 + $0x18] sm:$0xf]
    %v8664 = vld [vmem:[%s15 + $0x1c] sm:$0xf]
    %v8665 = vld [vmem:[%s15 + $0x20] sm:$0xf]
    %v8666 = vld [vmem:[%s15 + $0x24] sm:$0xf]
    %v8667 = vld [vmem:[%s15 + $0x28] sm:$0xf]
    %v8668 = vld [vmem:[%s15 + $0x2c] sm:$0xf]
    %v8669 = vld [vmem:[%s15 + $0x30] sm:$0xf]
    %v8670 = vld [vmem:[%s15 + $0x34] sm:$0xf]
    %v8671 = vld [vmem:[%s15 + $0x38] sm:$0xf]
    %v8672 = vld [vmem:[%s15 + $0x3c] sm:$0xf]
    %v8673 = vpack.c.bf16 %v8655, %v8654
    %v8674 = vld [vmem:[%s16] sm:$0xf]
    %v8675 = vld [vmem:[%s16 + $0x4] sm:$0xf]
    %v8676 = vld [vmem:[%s16 + $0x8] sm:$0xf]
    %v8677 = vld [vmem:[%s16 + $0xc] sm:$0xf]
    %v8682 = vunpack.c.l.b16 %v8674
    %v8683 = vunpack.c.l.b16 %v8675
    %v8684 = vunpack.c.l.b16 %v8676
    %v8685 = vunpack.c.l.b16 %v8677
    %v8686 = vpack.c.b16 %v8683, %v8682
    %v8687 = vpack.c.b16 %v8685, %v8684
    %vm8690 = vcmask 261120
    %v8692 = vsel %vm8690, %v8673, 0
    %8694 = vmatprep.subr.bf16.mxu0 0
    %8695 = vmatpush1.bf16.msra.mxu0 %v8686
    %8696 = vmatprep.subr.bf16.mxu0 0
    %8697 = vmatpush1.bf16.msra.mxu0 %v8687
    %8698 = vmatprep.subr.bf16.mxu0 0
    %8699 = vmatpush1.bf16.msra.mxu0 0
    %8700 = vmatprep.subr.bf16.mxu0 0
    %8701 = vmatpush1.bf16.msra.mxu0 0
    %8702 = vmatprep.subr.bf16.mxu0 0
    %8703 = vmatpush1.bf16.msra.mxu0 0
    %8704 = vmatprep.subr.bf16.mxu0 0
    %8705 = vmatpush1.bf16.msra.mxu0 0
    %8706 = vmatprep.subr.bf16.mxu0 0
    %8707 = vmatpush1.bf16.msra.mxu0 0
    %8708 = vmatprep.subr.bf16.mxu0 0
    %8709 = vmatpush1.bf16.msra.mxu0 0
    %8710 = vmatprep.subr.bf16.mxu0 0
    %8711 = vmatpush1.bf16.msra.mxu0 0
    %8712 = vmatprep.subr.bf16.mxu0 0
    %8713 = vmatpush1.bf16.msra.mxu0 0
    %8714 = vmatprep.subr.bf16.mxu0 0
    %8715 = vmatpush1.bf16.msra.mxu0 0
    %8716 = vmatprep.subr.bf16.mxu0 0
    %8717 = vmatpush1.bf16.msra.mxu0 0
    %8718 = vmatprep.subr.bf16.mxu0 0
    %8719 = vmatpush1.bf16.msra.mxu0 0
    %8720 = vmatprep.subr.bf16.mxu0 0
    %8721 = vmatpush1.bf16.msra.mxu0 0
    %8722 = vmatprep.subr.bf16.mxu0 0
    %8723 = vmatpush1.bf16.msra.mxu0 0
    %8724 = vmatprep.subr.bf16.mxu0 0
    %8725 = vmatpush1.bf16.msra.mxu0 0
    %8726 = vmatprep.mubr.bf16.mxu0 0
    %8727 = vmatmul.mubr.bf16.gmra.mrb[0].mxu0 %v8692
    %v8728 = vpop.f32.mrb[0].mxu0
    %v8729 = vadd.f32 0.0, %v8728
    %v8730 = vpop.f32.mrb[0].mxu0
    %v8731 = vpop.f32.mrb[0].mxu0
    %v8732 = vadd.f32 0.0, %v8731
    %v8733 = vpop.f32.mrb[0].mxu0
    %8734 = vdwg.mxu0
    %v8751 = vunpack.c.l.b16 %v8657
    %v8752 = vunpack.c.l.b16 %v8658
    %v8753 = vunpack.c.l.b16 %v8659
    %v8754 = vunpack.c.l.b16 %v8660
    %v8755 = vunpack.c.l.b16 %v8661
    %v8756 = vunpack.c.l.b16 %v8662
    %v8757 = vunpack.c.l.b16 %v8663
    %v8758 = vunpack.c.l.b16 %v8664
    %v8759 = vunpack.c.l.b16 %v8665
    %v8760 = vunpack.c.l.b16 %v8666
    %v8761 = vunpack.c.l.b16 %v8667
    %v8762 = vunpack.c.l.b16 %v8668
    %v8763 = vunpack.c.l.b16 %v8669
    %v8764 = vunpack.c.l.b16 %v8670
    %v8765 = vunpack.c.l.b16 %v8671
    %v8766 = vunpack.c.l.b16 %v8672
    %v8767 = vpack.c.b16 %v8752, %v8751
    %v8768 = vpack.c.b16 %v8754, %v8753
    %v8769 = vpack.c.b16 %v8756, %v8755
    %v8770 = vpack.c.b16 %v8758, %v8757
    %v8771 = vpack.c.b16 %v8760, %v8759
    %v8772 = vpack.c.b16 %v8762, %v8761
    %v8773 = vpack.c.b16 %v8764, %v8763
    %v8774 = vpack.c.b16 %v8766, %v8765
    %8783 = vmatprep.subr.bf16.mxu0 0
    %8784 = vmatpush1.bf16.msra.mxu0 %v8767
    %8785 = vmatprep.subr.bf16.mxu0 0
    %8786 = vmatpush1.bf16.msra.mxu0 %v8768
    %8787 = vmatprep.subr.bf16.mxu0 0
    %8788 = vmatpush1.bf16.msra.mxu0 %v8769
    %8789 = vmatprep.subr.bf16.mxu0 0
    %8790 = vmatpush1.bf16.msra.mxu0 %v8770
    %8791 = vmatprep.subr.bf16.mxu0 0
    %8792 = vmatpush1.bf16.msra.mxu0 %v8771
    %8793 = vmatprep.subr.bf16.mxu0 0
    %8794 = vmatpush1.bf16.msra.mxu0 %v8772
    %8795 = vmatprep.subr.bf16.mxu0 0
    %8796 = vmatpush1.bf16.msra.mxu0 %v8773
    %8797 = vmatprep.subr.bf16.mxu0 0
    %8798 = vmatpush1.bf16.msra.mxu0 %v8774
    %8799 = vmatprep.subr.bf16.mxu0 0
    %8800 = vmatpush1.bf16.msra.mxu0 0
    %8801 = vmatprep.subr.bf16.mxu0 0
    %8802 = vmatpush1.bf16.msra.mxu0 0
    %8803 = vmatprep.subr.bf16.mxu0 0
    %8804 = vmatpush1.bf16.msra.mxu0 0
    %8805 = vmatprep.subr.bf16.mxu0 0
    %8806 = vmatpush1.bf16.msra.mxu0 0
    %8807 = vmatprep.subr.bf16.mxu0 0
    %8808 = vmatpush1.bf16.msra.mxu0 0
    %8809 = vmatprep.subr.bf16.mxu0 0
    %8810 = vmatpush1.bf16.msra.mxu0 0
    %8811 = vmatprep.subr.bf16.mxu0 0
    %8812 = vmatpush1.bf16.msra.mxu0 0
    %8813 = vmatprep.subr.bf16.mxu0 0
    %8814 = vmatpush1.bf16.msra.mxu0 0
    %8815 = vmatprep.mubr.bf16.mxu0 0
    %8816 = vmatmul.mubr.bf16.gmra.mrb[0].mxu0 %v8656
    %v8817 = vpop.f32.mrb[0].mxu0
    %v8818 = vadd.f32 %v8729, %v8817
    %v8819 = vpop.f32.mrb[0].mxu0
    %v8820 = vpop.f32.mrb[0].mxu0
    %v8821 = vadd.f32 %v8732, %v8820
    %v8822 = vpop.f32.mrb[0].mxu0
    %8823 = vdwg.mxu0
    %v8824 = vld [vmem:[%s17] sm:$0x1]
    %v8826 = vlaneseq
    %v8827 = vshrl.u32 %v8826, 7
    %v8828 = vsub.s32 0, %v8827
    %v8829 = vrot.slane %v8824, %v8828
    %v8831 = vadd.f32 %v8818, %v8829
    %v8832 = vadd.f32 %v8821, %v8829
    %v8833 = vmax.f32 %v8831, 0.0
    %v8834 = vmax.f32 %v8832, 0.0
    %v8835 = vpack.c.bf16 %v8834, %v8833
    %v8836 = vld [vmem:[%s18] sm:$0xf]
    %v8837 = vld [vmem:[%s18 + $0x4] sm:$0xf]
    %v8838 = vld [vmem:[%s18 + $0x8] sm:$0xf]
    %v8839 = vld [vmem:[%s18 + $0xc] sm:$0xf]
    %v8840 = vld [vmem:[%s18 + $0x10] sm:$0xf]
    %v8841 = vld [vmem:[%s18 + $0x14] sm:$0xf]
    %v8842 = vld [vmem:[%s18 + $0x18] sm:$0xf]
    %v8843 = vld [vmem:[%s18 + $0x1c] sm:$0xf]
    %v8844 = vld [vmem:[%s18 + $0x20] sm:$0xf]
    %v8845 = vld [vmem:[%s18 + $0x24] sm:$0xf]
    %v8846 = vld [vmem:[%s18 + $0x28] sm:$0xf]
    %v8847 = vld [vmem:[%s18 + $0x2c] sm:$0xf]
    %v8848 = vld [vmem:[%s18 + $0x30] sm:$0xf]
    %v8849 = vld [vmem:[%s18 + $0x34] sm:$0xf]
    %v8850 = vld [vmem:[%s18 + $0x38] sm:$0xf]
    %v8851 = vld [vmem:[%s18 + $0x3c] sm:$0xf]
    %v8852 = vld [vmem:[%s19] sm:$0x1]
    %v8854 = vlaneseq
    %v8855 = vshrl.u32 %v8854, 7
    %v8856 = vsub.s32 0, %v8855
    %v8857 = vrot.slane %v8852, %v8856
    %v8875 = vunpack.c.l.b16 %v8836
    %v8876 = vunpack.c.l.b16 %v8837
    %v8877 = vunpack.c.l.b16 %v8838
    %v8878 = vunpack.c.l.b16 %v8839
    %v8879 = vunpack.c.l.b16 %v8840
    %v8880 = vunpack.c.l.b16 %v8841
    %v8881 = vunpack.c.l.b16 %v8842
    %v8882 = vunpack.c.l.b16 %v8843
    %v8883 = vunpack.c.l.b16 %v8844
    %v8884 = vunpack.c.l.b16 %v8845
    %v8885 = vunpack.c.l.b16 %v8846
    %v8886 = vunpack.c.l.b16 %v8847
    %v8887 = vunpack.c.l.b16 %v8848
    %v8888 = vunpack.c.l.b16 %v8849
    %v8889 = vunpack.c.l.b16 %v8850
    %v8890 = vunpack.c.l.b16 %v8851
    %v8891 = vpack.c.b16 %v8876, %v8875
    %v8892 = vpack.c.b16 %v8878, %v8877
    %v8893 = vpack.c.b16 %v8880, %v8879
    %v8894 = vpack.c.b16 %v8882, %v8881
    %v8895 = vpack.c.b16 %v8884, %v8883
    %v8896 = vpack.c.b16 %v8886, %v8885
    %v8897 = vpack.c.b16 %v8888, %v8887
    %v8898 = vpack.c.b16 %v8890, %v8889
    %8907 = vmatprep.subr.bf16.mxu0 0
    %8908 = vmatpush1.bf16.msra.mxu0 %v8891
    %8909 = vmatprep.subr.bf16.mxu0 0
    %8910 = vmatpush1.bf16.msra.mxu0 %v8892
    %8911 = vmatprep.subr.bf16.mxu0 0
    %8912 = vmatpush1.bf16.msra.mxu0 %v8893
    %8913 = vmatprep.subr.bf16.mxu0 0
    %8914 = vmatpush1.bf16.msra.mxu0 %v8894
    %8915 = vmatprep.subr.bf16.mxu0 0
    %8916 = vmatpush1.bf16.msra.mxu0 %v8895
    %8917 = vmatprep.subr.bf16.mxu0 0
    %8918 = vmatpush1.bf16.msra.mxu0 %v8896
    %8919 = vmatprep.subr.bf16.mxu0 0
    %8920 = vmatpush1.bf16.msra.mxu0 %v8897
    %8921 = vmatprep.subr.bf16.mxu0 0
    %8922 = vmatpush1.bf16.msra.mxu0 %v8898
    %8923 = vmatprep.subr.bf16.mxu0 0
    %8924 = vmatpush1.bf16.msra.mxu0 0
    %8925 = vmatprep.subr.bf16.mxu0 0
    %8926 = vmatpush1.bf16.msra.mxu0 0
    %8927 = vmatprep.subr.bf16.mxu0 0
    %8928 = vmatpush1.bf16.msra.mxu0 0
    %8929 = vmatprep.subr.bf16.mxu0 0
    %8930 = vmatpush1.bf16.msra.mxu0 0
    %8931 = vmatprep.subr.bf16.mxu0 0
    %8932 = vmatpush1.bf16.msra.mxu0 0
    %8933 = vmatprep.subr.bf16.mxu0 0
    %8934 = vmatpush1.bf16.msra.mxu0 0
    %8935 = vmatprep.subr.bf16.mxu0 0
    %8936 = vmatpush1.bf16.msra.mxu0 0
    %8937 = vmatprep.subr.bf16.mxu0 0
    %8938 = vmatpush1.bf16.msra.mxu0 0
    %8939 = vmatprep.mubr.bf16.mxu0 0
    %8940 = vmatmul.mubr.bf16.gmra.mrb[0].mxu0 %v8835
    %v8941 = vpop.f32.mrb[0].mxu0
    %v8942 = vadd.f32 %v8857, %v8941
    %v8943 = vpop.f32.mrb[0].mxu0
    %v8944 = vpop.f32.mrb[0].mxu0
    %v8945 = vadd.f32 %v8857, %v8944
    %v8946 = vpop.f32.mrb[0].mxu0
    %8947 = vdwg.mxu0
    %v8948 = vmax.f32 %v8942, 0.0
    %v8949 = vmax.f32 %v8945, 0.0
    %v8950 = vpack.c.bf16 %v8949, %v8948
    %v8951 = vld [vmem:[%s20] sm:$0xf]
    %v8952 = vld [vmem:[%s20 + $0x4] sm:$0xf]
    %v8953 = vld [vmem:[%s20 + $0x8] sm:$0xf]
    %v8954 = vld [vmem:[%s20 + $0xc] sm:$0xf]
    %v8955 = vld [vmem:[%s20 + $0x10] sm:$0xf]
    %v8956 = vld [vmem:[%s20 + $0x14] sm:$0xf]
    %v8957 = vld [vmem:[%s20 + $0x18] sm:$0xf]
    %v8958 = vld [vmem:[%s20 + $0x1c] sm:$0xf]
    %v8959 = vld [vmem:[%s21] sm:$0x1]
    %v8961 = vlaneseq
    %v8962 = vshrl.u32 %v8961, 7
    %v8963 = vsub.s32 0, %v8962
    %v8964 = vrot.slane %v8959, %v8963
    %v8974 = vunpack.c.l.b16 %v8951
    %v8975 = vunpack.c.l.b16 %v8952
    %v8976 = vunpack.c.l.b16 %v8953
    %v8977 = vunpack.c.l.b16 %v8954
    %v8978 = vunpack.c.l.b16 %v8955
    %v8979 = vunpack.c.l.b16 %v8956
    %v8980 = vunpack.c.l.b16 %v8957
    %v8981 = vunpack.c.l.b16 %v8958
    %v8982 = vpack.c.b16 %v8975, %v8974
    %v8983 = vpack.c.b16 %v8977, %v8976
    %v8984 = vpack.c.b16 %v8979, %v8978
    %v8985 = vpack.c.b16 %v8981, %v8980
    %v8991 = vsel %vm8609, %v8950, 0
    %8993 = vmatprep.subr.bf16.mxu0 0
    %8994 = vmatpush1.bf16.msra.mxu0 %v8982
    %8995 = vmatprep.subr.bf16.mxu0 0
    %8996 = vmatpush1.bf16.msra.mxu0 %v8983
    %8997 = vmatprep.subr.bf16.mxu0 0
    %8998 = vmatpush1.bf16.msra.mxu0 %v8984
    %8999 = vmatprep.subr.bf16.mxu0 0
    %9000 = vmatpush1.bf16.msra.mxu0 %v8985
    %9001 = vmatprep.subr.bf16.mxu0 0
    %9002 = vmatpush1.bf16.msra.mxu0 0
    %9003 = vmatprep.subr.bf16.mxu0 0
    %9004 = vmatpush1.bf16.msra.mxu0 0
    %9005 = vmatprep.subr.bf16.mxu0 0
    %9006 = vmatpush1.bf16.msra.mxu0 0
    %9007 = vmatprep.subr.bf16.mxu0 0
    %9008 = vmatpush1.bf16.msra.mxu0 0
    %9009 = vmatprep.subr.bf16.mxu0 0
    %9010 = vmatpush1.bf16.msra.mxu0 0
    %9011 = vmatprep.subr.bf16.mxu0 0
    %9012 = vmatpush1.bf16.msra.mxu0 0
    %9013 = vmatprep.subr.bf16.mxu0 0
    %9014 = vmatpush1.bf16.msra.mxu0 0
    %9015 = vmatprep.subr.bf16.mxu0 0
    %9016 = vmatpush1.bf16.msra.mxu0 0
    %9017 = vmatprep.subr.bf16.mxu0 0
    %9018 = vmatpush1.bf16.msra.mxu0 0
    %9019 = vmatprep.subr.bf16.mxu0 0
    %9020 = vmatpush1.bf16.msra.mxu0 0
    %9021 = vmatprep.subr.bf16.mxu0 0
    %9022 = vmatpush1.bf16.msra.mxu0 0
    %9023 = vmatprep.subr.bf16.mxu0 0
    %9024 = vmatpush1.bf16.msra.mxu0 0
    %9025 = vmatprep.mubr.bf16.mxu0 0
    %9026 = vmatmul.mubr.bf16.gmra.mrb[0].mxu0 %v8991
    %v9027 = vpop.f32.mrb[0].mxu0
    %v9028 = vadd.f32 %v8964, %v9027
    %v9029 = vpop.f32.mrb[0].mxu0
    %v9030 = vpop.f32.mrb[0].mxu0
    %v9031 = vadd.f32 %v8964, %v9030
    %v9032 = vpop.f32.mrb[0].mxu0
    %9033 = vdwg.mxu0
    %v9034 = vxor.u32 %v9028, 2147483648
    %v9035 = vxor.u32 %v9031, 2147483648
    %v9036 = vmul.f32 %v9034, 1.442695
    %v9037 = vpow.pop %v9036
    %v9038 = vmul.f32 %v9035, 1.442695
    %v9039 = vpow.pop %v9038
    %v9040 = vadd.f32 %v9037, 1.0
    %v9041 = vadd.f32 %v9039, 1.0
    %v9042 = vrcp.pop %v9040
    %v9043 = vmul.f32 1.0, %v9042
    %v9044 = vrcp.pop %v9041
    %v9045 = vmul.f32 1.0, %v9044
    %9046 = vst.msk [vmem:[#allocation16] sm:$0xff] %vm226, %v9043
    %9047 = vst.msk [vmem:[#allocation16 + $0x8] sm:$0xff] %vm226, %v9045
    // Predicated region
    $region118: #{tpu_custom_call.1} parent=1 // pred_check
      _
    $region119: #{tpu_custom_call.1} parent=1 // pred_check_branch
      %9049 = sbr.rel (0) target = $region121
    $region120: #{tpu_custom_call.1} parent=1 // pred_region
      %s9051 = ssub.s32 256, 256
      %9052 = vsyncadd [#allocation6], %s9051
      %s9053 = sshll.u32 [#allocation16], 4
      %s9054 = int_to_ptr.vmem [resolvable:$true] %s9053
      %9059 = dma.vmem_to_hbm [thread:$0]  %s9054, 256, %s22, [#allocation6], 128, 128, 8
    $region121: #{tpu_custom_call.1} parent=1 // pred_fallthru
      _
    // Predicated region
    $region122: #{tpu_custom_call.1} parent=1 // pred_check
      _
    $region123: #{tpu_custom_call.1} parent=1 // pred_check_branch
      %9061 = sbr.rel (0) target = $region125
    $region124: #{tpu_custom_call.1} parent=1 // pred_region
      %9062 = dma.done [#allocation6], 256
    $region125: #{tpu_custom_call.1} parent=1 // pred_fallthru
      _
    %9063 = vsyncpa [#allocation5], 1
    %9064 = vsyncpa [#allocation8], 1
    %9065 = vsyncpa [#allocation11], 1
    %9066 = vsyncpa [#allocation14], 1
    %9067 = vsyncpa [#allocation6], 1

</llo_original>
